<compile_context>
chip_gen: v7x
topology: tpu7x:2x2x1
jax: 0.10.0
libtpu: 0.0.40
codegen_flags: <defaults>
</compile_context>

<pallas_src>
import functools
import math

import jax
import jax.numpy as jnp
from jax.experimental import pallas as pl
from jax.experimental.pallas import tpu as pltpu


_VMEM_LIMIT = 32 * 1024 * 1024  # well above per-batch working set on all gens


def _dim_sem(n_steps: int):
    # megacore / 2-TC split only pays off with >=2 grid steps
    return ("parallel",) if n_steps > 1 else ("arbitrary",)


def _target_row_tile() -> int:
    # v5e/v6e: 128 MiB VMEM -> larger streaming tiles approach the HBM
    # roofline; v7x: 64 MiB -> keep tiles smaller.
    try:
        vmem = pltpu.get_tpu_info().vmem_capacity_bytes
    except Exception:
        vmem = 128 * 1024 * 1024
    return 512 if vmem >= 96 * 1024 * 1024 else 256


def _k1_batch_tile(batch: int, seq: int) -> int:
    if seq % 8 != 0:
        return 1  # keep the in-kernel leading-dim reshapes layout-trivial
    return max(1, min(batch, _target_row_tile() // max(seq, 1)))


# ----------------------------------------------------------------------------
# [K1] fused emb_proj * sqrt(d_model) + sinusoidal positional encoding
#      operates on (B, S, E) blocks; position comes from an integer iota over
#      the S axis (no float floor / integer division).

def _proj_scale_pe_kernel(x_ref, w_ref, b_ref, o_ref, *, scale, d_model):
    nb, seq, emb_dim = x_ref.shape
    x2 = x_ref[...].reshape(nb * seq, emb_dim).astype(jnp.bfloat16)
    acc = jnp.dot(x2, w_ref[...], preferred_element_type=jnp.float32)
    acc = (acc + b_ref[...]) * scale                         # (nb*S, D) fp32

    # PE computed once per tile, shared across the nb batch rows.
    col = jax.lax.broadcasted_iota(jnp.int32, (1, d_model), 1)
    inv_freq = jnp.exp((col - (col & 1)).astype(jnp.float32)
                       * (-math.log(10000.0) / d_model))      # (1, D)
    phase = (col & 1).astype(jnp.float32) * (math.pi * 0.5)   # cos = sin(x+pi/2)
    pos = jax.lax.broadcasted_iota(jnp.int32, (seq, 1), 0).astype(jnp.float32)
    pe = jnp.sin(pos * inv_freq + phase)                      # (S, D)

    o_ref[...] = (acc.reshape(nb, seq, d_model) + pe[None]).astype(o_ref.dtype)


def fused_emb_proj_pos_encode(x3d, w_bf16, b, *, d_model):
    assert d_model % 2 == 0, "sinusoidal PE requires an even d_model"
    batch, seq, emb_dim = x3d.shape
    nb = _k1_batch_tile(batch, seq)
    grid = (pl.cdiv(batch, nb),)
    rows = batch * seq
    kernel = functools.partial(_proj_scale_pe_kernel,
                               scale=math.sqrt(d_model), d_model=d_model)
    cost = pl.CostEstimate(
        flops=2 * rows * emb_dim * d_model,
        transcendentals=grid[0] * (seq * d_model + d_model),
        bytes_accessed=rows * emb_dim * 4 + emb_dim * d_model * 2
                       + d_model * 4 + rows * d_model * 4)
    return pl.pallas_call(
        kernel,
        out_shape=jax.ShapeDtypeStruct((batch, seq, d_model), jnp.float32),
        grid=grid,
        in_specs=[
            pl.BlockSpec((nb, seq, emb_dim), lambda i: (i, 0, 0)),
            pl.BlockSpec((emb_dim, d_model), lambda i: (0, 0)),
            pl.BlockSpec((1, d_model), lambda i: (0, 0)),
        ],
        out_specs=pl.BlockSpec((nb, seq, d_model), lambda i: (i, 0, 0)),
        compiler_params=pltpu.CompilerParams(
            dimension_semantics=_dim_sem(grid[0]),
            vmem_limit_bytes=_VMEM_LIMIT),
        cost_estimate=cost,
    )(x3d, w_bf16, b.reshape(1, d_model))


# ----------------------------------------------------------------------------
# [K2] fully fused encoder layer (post-norm, ReLU, eval-mode dropout=identity)

def _ln_f32(z, g, b, eps):
    mu = jnp.mean(z, axis=-1, keepdims=True)
    zc = z - mu
    var = jnp.mean(zc * zc, axis=-1, keepdims=True)
    return zc * jax.lax.rsqrt(var + eps) * g + b


def _encoder_layer_kernel(x_ref, wqkv_ref, bqkv_ref, wout_ref, bout_ref,
                          ln1g_ref, ln1b_ref, wff1_ref, bff1_ref,
                          wff2_ref, bff2_ref, ln2g_ref, ln2b_ref,
                          *rest, nhead, eps, final_ln):
    if final_ln:
        lnfg_ref, lnfb_ref, o_ref = rest
    else:
        (o_ref,) = rest

    x = x_ref[0].astype(jnp.float32)               # (S, D) fp32 residual stream
    seq, d_model = x.shape
    dh = d_model // nhead
    x_bf = x.astype(jnp.bfloat16)
    scale = 1.0 / math.sqrt(dh)

    # --- self-attention: per-head QKV proj -> softmax -> PV -> out-proj ------
    attn = jnp.zeros((seq, d_model), jnp.float32)
    for h in range(nhead):                         # static unroll (tiny H)
        q = jnp.dot(x_bf, wqkv_ref[h],
                    preferred_element_type=jnp.float32) + bqkv_ref[h]
        k = jnp.dot(x_bf, wqkv_ref[nhead + h],
                    preferred_element_type=jnp.float32) + bqkv_ref[nhead + h]
        v = jnp.dot(x_bf, wqkv_ref[2 * nhead + h],
                    preferred_element_type=jnp.float32) + bqkv_ref[2 * nhead + h]
        s = jax.lax.dot_general(
            q.astype(jnp.bfloat16), k.astype(jnp.bfloat16),
            (((1,), (1,)), ((), ())),
            preferred_element_type=jnp.float32) * scale        # (S, S)
        m = jnp.max(s, axis=-1, keepdims=True)
        p = jnp.exp(s - m)
        p = p * pl.reciprocal(jnp.sum(p, axis=-1, keepdims=True), approx=True)
        o_h = jnp.dot(p.astype(jnp.bfloat16), v.astype(jnp.bfloat16),
                      preferred_element_type=jnp.float32)       # (S, dh)
        attn = attn + jnp.dot(o_h.astype(jnp.bfloat16), wout_ref[h],
                              preferred_element_type=jnp.float32)
    attn = attn + bout_ref[...]

    x1 = _ln_f32(x + attn, ln1g_ref[...], ln1b_ref[...], eps)

    # --- fused FFN: linear1 + ReLU + linear2 + residual + LayerNorm ----------
    hmid = jnp.dot(x1.astype(jnp.bfloat16), wff1_ref[...],
                   preferred_element_type=jnp.float32) + bff1_ref[...]
    hmid = jnp.maximum(hmid, 0.0)
    ff = jnp.dot(hmid.astype(jnp.bfloat16), wff2_ref[...],
                 preferred_element_type=jnp.float32) + bff2_ref[...]
    x2 = _ln_f32(x1 + ff, ln2g_ref[...], ln2b_ref[...], eps)

    if final_ln:  # final encoder-stack LayerNorm fused into the last layer
        x2 = _ln_f32(x2, lnfg_ref[...], lnfb_ref[...], eps)

    o_ref[0] = x2.astype(o_ref.dtype)


def encoder_layer(x, lp, *, nhead, lnf=None, eps=1e-5):
    batch, seq, d_model = x.shape
    dh = d_model // nhead
    nhid = lp["w_ff1"].shape[1]
    bf16 = jnp.bfloat16

    # Pack weights so every in-kernel head access is a leading-axis ref index
    # (no sub-128 slices of the lane dimension) and weights ship as bf16.
    wqkv = (lp["w_qkv"].reshape(d_model, 3, nhead, dh)
            .transpose(1, 2, 0, 3)
            .reshape(3 * nhead, d_model, dh).astype(bf16))      # (3H, D, dh)
    bqkv = lp["b_qkv"].reshape(3 * nhead, 1, dh)                # (3H, 1, dh)
    wout = lp["w_out"].reshape(nhead, dh, d_model).astype(bf16)  # (H, dh, D)

    args = [
        x,
        wqkv, bqkv, wout, lp["b_out"].reshape(1, d_model),
        lp["ln1_g"].reshape(1, d_model), lp["ln1_b"].reshape(1, d_model),
        lp["w_ff1"].astype(bf16), lp["b_ff1"].reshape(1, nhid),
        lp["w_ff2"].astype(bf16), lp["b_ff2"].reshape(1, d_model),
        lp["ln2_g"].reshape(1, d_model), lp["ln2_b"].reshape(1, d_model),
    ]
    if lnf is not None:
        args += [lnf[0].reshape(1, d_model), lnf[1].reshape(1, d_model)]

    def const_spec(a):
        return pl.BlockSpec(tuple(a.shape), lambda b, n=a.ndim: (0,) * n)

    in_specs = ([pl.BlockSpec((1, seq, d_model), lambda b: (b, 0, 0))]
                + [const_spec(a) for a in args[1:]])

    flops = batch * (2 * seq * d_model * 3 * d_model
                     + 4 * nhead * seq * seq * dh
                     + 2 * seq * d_model * d_model
                     + 4 * seq * d_model * nhid)
    trans = batch * (nhead * seq * seq + 8 * seq)
    bytes_acc = (2 * batch * seq * d_model * 4
                 + sum(int(a.size) * a.dtype.itemsize for a in args[1:]))

    kernel = functools.partial(_encoder_layer_kernel, nhead=nhead, eps=eps,
                               final_ln=lnf is not None)
    return pl.pallas_call(
        kernel,
        out_shape=jax.ShapeDtypeStruct((batch, seq, d_model), x.dtype),
        grid=(batch,),
        in_specs=in_specs,
        out_specs=pl.BlockSpec((1, seq, d_model), lambda b: (b, 0, 0)),
        # Residual stream is updated in place; x is never read after this call.
        input_output_aliases={0: 0},
        compiler_params=pltpu.CompilerParams(
            dimension_semantics=_dim_sem(batch),
            vmem_limit_bytes=_VMEM_LIMIT),
        cost_estimate=pl.CostEstimate(flops=int(flops), transcendentals=int(trans),
                                      bytes_accessed=int(bytes_acc)),
    )(*args)


# ----------------------------------------------------------------------------
# parameters + forward

def init_params(key, *, vocab, text_emb_dim, ninp, nhead, nhid, nlayers):
    assert ninp % nhead == 0
    keys = jax.random.split(key, 3 + nlayers)

    def dense(k, fan_in, shape):
        return jax.random.normal(k, shape, jnp.float32) / math.sqrt(fan_in)

    p = {
        "vocab_emb": 0.1 * jax.random.normal(keys[0], (vocab, text_emb_dim),
                                             jnp.float32),
        "w_proj": dense(keys[1], text_emb_dim, (text_emb_dim, ninp)),
        "b_proj": 0.02 * jax.random.normal(keys[1], (ninp,), jnp.float32),
        "layers": [],
    }
    for l in range(nlayers):
        lk = jax.random.split(keys[2 + l], 12)
        p["layers"].append(dict(
            w_qkv=dense(lk[0], ninp, (ninp, 3 * ninp)),
            b_qkv=0.02 * jax.random.normal(lk[1], (3 * ninp,), jnp.float32),
            w_out=dense(lk[2], ninp, (ninp, ninp)),
            b_out=0.02 * jax.random.normal(lk[3], (ninp,), jnp.float32),
            ln1_g=1.0 + 0.05 * jax.random.normal(lk[4], (ninp,), jnp.float32),
            ln1_b=0.02 * jax.random.normal(lk[5], (ninp,), jnp.float32),
            w_ff1=dense(lk[6], ninp, (ninp, nhid)),
            b_ff1=0.02 * jax.random.normal(lk[7], (nhid,), jnp.float32),
            w_ff2=dense(lk[8], nhid, (nhid, ninp)),
            b_ff2=0.02 * jax.random.normal(lk[9], (ninp,), jnp.float32),
            ln2_g=1.0 + 0.05 * jax.random.normal(lk[10], (ninp,), jnp.float32),
            ln2_b=0.02 * jax.random.normal(lk[11], (ninp,), jnp.float32),
        ))
    fk = jax.random.split(keys[2 + nlayers], 2)
    p["lnf_g"] = 1.0 + 0.05 * jax.random.normal(fk[0], (ninp,), jnp.float32)
    p["lnf_b"] = 0.02 * jax.random.normal(fk[1], (ninp,), jnp.float32)
    return p


def transformer_question_encoder_forward(tokens, params, *, nhead):
    S, B = tokens.shape
    D = params["w_proj"].shape[1]
    # TODO(synk): the vocab-embedding gather is left to XLA (data-dependent
    # gather has no efficient BlockSpec form at these sizes).
    emb = jnp.take(params["vocab_emb"], tokens.T, axis=0)        # (B, S, E)
    # [K1] emb_proj * sqrt(D) + sinusoidal PE, fused, in (B, S, D) layout.
    x = fused_emb_proj_pos_encode(emb, params["w_proj"].astype(jnp.bfloat16),
                                  params["b_proj"], d_model=D)
    # TODO(synk): dropout layers run in eval mode (identity); PyTorch
    # training-mode RNG has no bit-exact Pallas equivalent.
    nlayers = len(params["layers"])
    for li, lp in enumerate(params["layers"]):
        lnf = ((params["lnf_g"], params["lnf_b"])
               if li == nlayers - 1 else None)
        x = encoder_layer(x, lp, nhead=nhead, lnf=lnf)           # (B, S, D)
    return jnp.transpose(x, (1, 0, 2))                           # (S, B, D)


# ----------------------------------------------------------------------------
# pure-JAX references: bf16-matched (same matmul-operand casts as the kernels)
# and full-fp32 (sanity check).

def _reference_forward(tokens, params, *, nhead, bf16_matmul):
    S, B = tokens.shape
    D = params["w_proj"].shape[1]
    dh = D // nhead
    hp = jax.lax.Precision.HIGHEST

    if bf16_matmul:
        def mm(a, b):
            return jnp.dot(a.astype(jnp.bfloat16), b.astype(jnp.bfloat16),
                           preferred_element_type=jnp.float32)

        def ein(eq, a, b):
            return jnp.einsum(eq, a.astype(jnp.bfloat16), b.astype(jnp.bfloat16),
                              preferred_element_type=jnp.float32)
    else:
        def mm(a, b):
            return jnp.dot(a, b, precision=hp)

        def ein(eq, a, b):
            return jnp.einsum(eq, a, b, precision=hp)

    emb = jnp.take(params["vocab_emb"], tokens, axis=0)          # (S, B, E)
    x = (mm(emb.reshape(S * B, -1), params["w_proj"])
         + params["b_proj"]) * math.sqrt(D)
    x = x.reshape(S, B, D)
    pos = jnp.arange(S, dtype=jnp.float32)[:, None]
    div = jnp.exp(jnp.arange(0, D, 2, dtype=jnp.float32)
                  * (-math.log(10000.0) / D))
    pe = jnp.zeros((S, D), jnp.float32)
    pe = pe.at[:, 0::2].set(jnp.sin(pos * div))
    pe = pe.at[:, 1::2].set(jnp.cos(pos * div))
    x = (x + pe[:, None, :]).reshape(S * B, D)

    def ln(z, g, b):
        mu = jnp.mean(z, axis=-1, keepdims=True)
        zc = z - mu
        var = jnp.mean(zc * zc, axis=-1, keepdims=True)
        return zc * jax.lax.rsqrt(var + 1e-5) * g + b

    for lp in params["layers"]:
        qkv = mm(x, lp["w_qkv"]) + lp["b_qkv"]
        q, k, v = jnp.split(qkv, 3, axis=-1)

        def heads(t):
            return t.reshape(S, B, nhead, dh).transpose(1, 2, 0, 3)  # (B,H,S,dh)

        qh, kh, vh = heads(q), heads(k), heads(v)
        s = ein("bhqd,bhkd->bhqk", qh, kh) / math.sqrt(dh)
        p = jax.nn.softmax(s, axis=-1)
        o = ein("bhqk,bhkd->bhqd", p, vh)
        o = o.transpose(2, 0, 1, 3).reshape(S * B, D)
        attn = mm(o, lp["w_out"]) + lp["b_out"]
        x = ln(x + attn, lp["ln1_g"], lp["ln1_b"])
        h1 = jax.nn.relu(mm(x, lp["w_ff1"]) + lp["b_ff1"])
        h2 = mm(h1, lp["w_ff2"]) + lp["b_ff2"]
        x = ln(x + h2, lp["ln2_g"], lp["ln2_b"])
    x = ln(x, params["lnf_g"], params["lnf_b"])
    return x.reshape(S, B, D)


if __name__ == "__main__":
    vocab = 50
    text_emb_dim = 32
    ninp = 128        # multiple of 128 -> lane-dense activation slabs
    nhead = 4
    nhid = 256
    nlayers = 2
    seq_len = 8
    batch = 2

    key = jax.random.PRNGKey(0)
    k_tok, k_par = jax.random.split(key)
    tokens = jax.random.randint(k_tok, (seq_len, batch), 0, vocab, dtype=jnp.int32)
    params = init_params(k_par, vocab=vocab, text_emb_dim=text_emb_dim,
                         ninp=ninp, nhead=nhead, nhid=nhid, nlayers=nlayers)

    fwd = jax.jit(functools.partial(transformer_question_encoder_forward,
                                    nhead=nhead))
    out = jax.block_until_ready(fwd(tokens, params))
    assert out.shape == (seq_len, batch, ninp)

    # Tight check against a reference with the SAME bf16 matmul-operand casts.
    ref_bf16 = jax.block_until_ready(
        _reference_forward(tokens, params, nhead=nhead, bf16_matmul=True))
    err_matched = float(jnp.max(jnp.abs(out - ref_bf16)))
    assert err_matched < 2e-2, f"mismatch vs bf16-matched ref: {err_matched}"

    # Looser sanity check against the all-fp32 reference.
    ref_f32 = jax.block_until_ready(
        _reference_forward(tokens, params, nhead=nhead, bf16_matmul=False))
    err_f32 = float(jnp.max(jnp.abs(out - ref_f32)))
    assert err_f32 < 1e-1, f"mismatch vs fp32 ref: {err_f32}"

    print("KERNEL_OK")
</pallas_src>

<mosaic_0001>
module attributes {stable_mosaic.version = 11 : i64} {
  func.func @_proj_scale_pe_kernel(%arg0: i32, %arg1: memref<2x8x32xf32, #tpu.memory_space<vmem>>, %arg2: memref<32x128xbf16, #tpu.memory_space<vmem>>, %arg3: memref<1x128xf32, #tpu.memory_space<vmem>>, %arg4: memref<2x8x128xf32, #tpu.memory_space<vmem>>) attributes {dimension_semantics = [#tpu.dimension_semantics<arbitrary>], iteration_bounds = array<i64: 1>, scalar_prefetch = 0 : i64, scratch_operands = 0 : i64, tpu.core_type = #tpu.core_type<tc>, window_params = [{transform_indices = @transform_0, window_bounds = array<i64: 2, 8, 32>}, {pipeline_mode = #tpu.pipeline_mode<synchronous>, transform_indices = @transform_1, window_bounds = array<i64: 32, 128>}, {pipeline_mode = #tpu.pipeline_mode<synchronous>, transform_indices = @transform_2, window_bounds = array<i64: 1, 128>}, {transform_indices = @transform_3, window_bounds = array<i64: 2, 8, 128>}]} {
    %c0 = arith.constant 0 : index
    %c0_0 = arith.constant 0 : index
    %c0_1 = arith.constant 0 : index
    %0 = vector.load %arg1[%c0, %c0_0, %c0_1] : memref<2x8x32xf32, #tpu.memory_space<vmem>>, vector<2x8x32xf32>
    %1 = vector.shape_cast %0 : vector<2x8x32xf32> to vector<16x32xf32>
    %2 = arith.truncf %1 : vector<16x32xf32> to vector<16x32xbf16>
    %c0_2 = arith.constant 0 : index
    %c0_3 = arith.constant 0 : index
    %3 = vector.load %arg2[%c0_2, %c0_3] : memref<32x128xbf16, #tpu.memory_space<vmem>>, vector<32x128xbf16>
    %cst = arith.constant dense<0.000000e+00> : vector<16x128xf32>
    %4 = tpu.matmul %2, %3, %cst {dimension_numbers = #tpu.dot_dimension_numbers<[1], [0], [0], [1], [0, 0, 1, 1], [], []>} : vector<16x32xbf16>, vector<32x128xbf16>, vector<16x128xf32> -> vector<16x128xf32>
    %c0_4 = arith.constant 0 : index
    %c0_5 = arith.constant 0 : index
    %5 = vector.load %arg3[%c0_4, %c0_5] : memref<1x128xf32, #tpu.memory_space<vmem>>, vector<1x128xf32>
    %6 = vector.broadcast %5 : vector<1x128xf32> to vector<16x128xf32>
    %7 = arith.addf %4, %6 : vector<16x128xf32>
    %cst_6 = arith.constant 11.3137083 : f32
    %8 = vector.broadcast %cst_6 : f32 to vector<16x128xf32>
    %9 = arith.mulf %7, %8 : vector<16x128xf32>
    %10 = tpu.iota {dimensions = array<i32: 1>} : vector<1x128xi32>
    %c1_i32 = arith.constant 1 : i32
    %11 = vector.broadcast %c1_i32 : i32 to vector<1x128xi32>
    %12 = arith.andi %10, %11 : vector<1x128xi32>
    %13 = arith.subi %10, %12 : vector<1x128xi32>
    %14 = arith.sitofp %13 : vector<1x128xi32> to vector<1x128xf32>
    %cst_7 = arith.constant -0.0719557852 : f32
    %15 = vector.broadcast %cst_7 : f32 to vector<1x128xf32>
    %16 = arith.mulf %14, %15 : vector<1x128xf32>
    %17 = math.exp %16 : vector<1x128xf32>
    %c1_i32_8 = arith.constant 1 : i32
    %18 = vector.broadcast %c1_i32_8 : i32 to vector<1x128xi32>
    %19 = arith.andi %10, %18 : vector<1x128xi32>
    %20 = arith.sitofp %19 : vector<1x128xi32> to vector<1x128xf32>
    %cst_9 = arith.constant 1.57079637 : f32
    %21 = vector.broadcast %cst_9 : f32 to vector<1x128xf32>
    %22 = arith.mulf %20, %21 : vector<1x128xf32>
    %23 = tpu.iota {dimensions = array<i32: 0>} : vector<8x1xi32>
    %24 = arith.sitofp %23 : vector<8x1xi32> to vector<8x1xf32>
    %25 = vector.broadcast %24 : vector<8x1xf32> to vector<8x128xf32>
    %26 = vector.broadcast %17 : vector<1x128xf32> to vector<8x128xf32>
    %27 = arith.mulf %25, %26 : vector<8x128xf32>
    %28 = vector.broadcast %22 : vector<1x128xf32> to vector<8x128xf32>
    %29 = arith.addf %27, %28 : vector<8x128xf32>
    %30 = math.sin %29 : vector<8x128xf32>
    %31 = vector.shape_cast %9 : vector<16x128xf32> to vector<2x8x128xf32>
    %32 = vector.shape_cast %30 : vector<8x128xf32> to vector<1x8x128xf32>
    %33 = vector.broadcast %32 : vector<1x8x128xf32> to vector<2x8x128xf32>
    %34 = arith.addf %31, %33 : vector<2x8x128xf32>
    %c0_10 = arith.constant 0 : index
    %c0_11 = arith.constant 0 : index
    %c0_12 = arith.constant 0 : index
    %35 = vector.load %arg4[%c0_10, %c0_11, %c0_12] : memref<2x8x128xf32, #tpu.memory_space<vmem>>, vector<2x8x128xf32>
    tpu.vector_store %arg4[%c0_10, %c0_11, %c0_12], %34 {strides = array<i32>} : memref<2x8x128xf32, #tpu.memory_space<vmem>>, vector<2x8x128xf32>,
    return
  }
  func.func @transform_0(%arg0: i32) -> (i32, i32, i32) {
    %c0_i32 = arith.constant 0 : i32
    %c0_i32_0 = arith.constant 0 : i32
    %c0_i32_1 = arith.constant 0 : i32
    return %arg0, %c0_i32, %c0_i32_0 : i32, i32, i32
  }
  func.func @transform_1(%arg0: i32) -> (i32, i32) {
    %c0_i32 = arith.constant 0 : i32
    %c0_i32_0 = arith.constant 0 : i32
    %c0_i32_1 = arith.constant 0 : i32
    return %c0_i32, %c0_i32_0 : i32, i32
  }
  func.func @transform_2(%arg0: i32) -> (i32, i32) {
    %c0_i32 = arith.constant 0 : i32
    %c0_i32_0 = arith.constant 0 : i32
    %c0_i32_1 = arith.constant 0 : i32
    return %c0_i32, %c0_i32_0 : i32, i32
  }
  func.func @transform_3(%arg0: i32) -> (i32, i32, i32) {
    %c0_i32 = arith.constant 0 : i32
    %c0_i32_0 = arith.constant 0 : i32
    %c0_i32_1 = arith.constant 0 : i32
    return %arg0, %c0_i32, %c0_i32_0 : i32, i32, i32
  }
}

module attributes {stable_mosaic.version = 11 : i64} {
  func.func @_encoder_layer_kernel(%arg0: i32, %arg1: memref<1x8x128xf32, #tpu.memory_space<vmem>>, %arg2: memref<12x128x32xbf16, #tpu.memory_space<vmem>>, %arg3: memref<12x1x32xf32, #tpu.memory_space<vmem>>, %arg4: memref<4x32x128xbf16, #tpu.memory_space<vmem>>, %arg5: memref<1x128xf32, #tpu.memory_space<vmem>>, %arg6: memref<1x128xf32, #tpu.memory_space<vmem>>, %arg7: memref<1x128xf32, #tpu.memory_space<vmem>>, %arg8: memref<128x256xbf16, #tpu.memory_space<vmem>>, %arg9: memref<1x256xf32, #tpu.memory_space<vmem>>, %arg10: memref<256x128xbf16, #tpu.memory_space<vmem>>, %arg11: memref<1x128xf32, #tpu.memory_space<vmem>>, %arg12: memref<1x128xf32, #tpu.memory_space<vmem>>, %arg13: memref<1x128xf32, #tpu.memory_space<vmem>>, %arg14: memref<1x8x128xf32, #tpu.memory_space<vmem>>) attributes {dimension_semantics = [#tpu.dimension_semantics<parallel>], iteration_bounds = array<i64: 2>, scalar_prefetch = 0 : i64, scratch_operands = 0 : i64, tpu.core_type = #tpu.core_type<tc>, window_params = [{transform_indices = @transform_0, window_bounds = array<i64: 1, 8, 128>}, {pipeline_mode = #tpu.pipeline_mode<synchronous>, transform_indices = @transform_1, window_bounds = array<i64: 12, 128, 32>}, {pipeline_mode = #tpu.pipeline_mode<synchronous>, transform_indices = @transform_2, window_bounds = array<i64: 12, 1, 32>}, {pipeline_mode = #tpu.pipeline_mode<synchronous>, transform_indices = @transform_3, window_bounds = array<i64: 4, 32, 128>}, {pipeline_mode = #tpu.pipeline_mode<synchronous>, transform_indices = @transform_4, window_bounds = array<i64: 1, 128>}, {pipeline_mode = #tpu.pipeline_mode<synchronous>, transform_indices = @transform_5, window_bounds = array<i64: 1, 128>}, {pipeline_mode = #tpu.pipeline_mode<synchronous>, transform_indices = @transform_6, window_bounds = array<i64: 1, 128>}, {pipeline_mode = #tpu.pipeline_mode<synchronous>, transform_indices = @transform_7, window_bounds = array<i64: 128, 256>}, {pipeline_mode = #tpu.pipeline_mode<synchronous>, transform_indices = @transform_8, window_bounds = array<i64: 1, 256>}, {pipeline_mode = #tpu.pipeline_mode<synchronous>, transform_indices = @transform_9, window_bounds = array<i64: 256, 128>}, {pipeline_mode = #tpu.pipeline_mode<synchronous>, transform_indices = @transform_10, window_bounds = array<i64: 1, 128>}, {pipeline_mode = #tpu.pipeline_mode<synchronous>, transform_indices = @transform_11, window_bounds = array<i64: 1, 128>}, {pipeline_mode = #tpu.pipeline_mode<synchronous>, transform_indices = @transform_12, window_bounds = array<i64: 1, 128>}, {transform_indices = @transform_13, window_bounds = array<i64: 1, 8, 128>}]} {
    %c0 = arith.constant 0 : index
    %c0_0 = arith.constant 0 : index
    %c0_1 = arith.constant 0 : index
    %0 = vector.load %arg1[%c0, %c0_0, %c0_1] : memref<1x8x128xf32, #tpu.memory_space<vmem>>, vector<1x8x128xf32>
    %1 = vector.shape_cast %0 : vector<1x8x128xf32> to vector<8x128xf32>
    %2 = arith.truncf %1 : vector<8x128xf32> to vector<8x128xbf16>
    %cst = arith.constant 0.000000e+00 : f32
    %3 = vector.broadcast %cst : f32 to vector<8x128xf32>
    %c0_2 = arith.constant 0 : index
    %c0_3 = arith.constant 0 : index
    %c0_4 = arith.constant 0 : index
    %4 = vector.load %arg2[%c0_2, %c0_3, %c0_4] : memref<12x128x32xbf16, #tpu.memory_space<vmem>>, vector<1x128x32xbf16>
    %5 = vector.shape_cast %4 : vector<1x128x32xbf16> to vector<128x32xbf16>
    %cst_5 = arith.constant dense<0.000000e+00> : vector<8x32xf32>
    %6 = tpu.matmul %2, %5, %cst_5 {dimension_numbers = #tpu.dot_dimension_numbers<[1], [0], [0], [1], [0, 0, 1, 1], [], []>} : vector<8x128xbf16>, vector<128x32xbf16>, vector<8x32xf32> -> vector<8x32xf32>
    %c0_6 = arith.constant 0 : index
    %c0_7 = arith.constant 0 : index
    %c0_8 = arith.constant 0 : index
    %7 = vector.load %arg3[%c0_6, %c0_7, %c0_8] : memref<12x1x32xf32, #tpu.memory_space<vmem>>, vector<1x1x32xf32>
    %8 = vector.shape_cast %7 : vector<1x1x32xf32> to vector<1x32xf32>
    %9 = vector.broadcast %8 : vector<1x32xf32> to vector<8x32xf32>
    %10 = arith.addf %6, %9 : vector<8x32xf32>
    %c4 = arith.constant 4 : index
    %c0_9 = arith.constant 0 : index
    %c0_10 = arith.constant 0 : index
    %11 = vector.load %arg2[%c4, %c0_9, %c0_10] : memref<12x128x32xbf16, #tpu.memory_space<vmem>>, vector<1x128x32xbf16>
    %12 = vector.shape_cast %11 : vector<1x128x32xbf16> to vector<128x32xbf16>
    %cst_11 = arith.constant dense<0.000000e+00> : vector<8x32xf32>
    %13 = tpu.matmul %2, %12, %cst_11 {dimension_numbers = #tpu.dot_dimension_numbers<[1], [0], [0], [1], [0, 0, 1, 1], [], []>} : vector<8x128xbf16>, vector<128x32xbf16>, vector<8x32xf32> -> vector<8x32xf32>
    %c4_12 = arith.constant 4 : index
    %c0_13 = arith.constant 0 : index
    %c0_14 = arith.constant 0 : index
    %14 = vector.load %arg3[%c4_12, %c0_13, %c0_14] : memref<12x1x32xf32, #tpu.memory_space<vmem>>, vector<1x1x32xf32>
    %15 = vector.shape_cast %14 : vector<1x1x32xf32> to vector<1x32xf32>
    %16 = vector.broadcast %15 : vector<1x32xf32> to vector<8x32xf32>
    %17 = arith.addf %13, %16 : vector<8x32xf32>
    %c8 = arith.constant 8 : index
    %c0_15 = arith.constant 0 : index
    %c0_16 = arith.constant 0 : index
    %18 = vector.load %arg2[%c8, %c0_15, %c0_16] : memref<12x128x32xbf16, #tpu.memory_space<vmem>>, vector<1x128x32xbf16>
    %19 = vector.shape_cast %18 : vector<1x128x32xbf16> to vector<128x32xbf16>
    %cst_17 = arith.constant dense<0.000000e+00> : vector<8x32xf32>
    %20 = tpu.matmul %2, %19, %cst_17 {dimension_numbers = #tpu.dot_dimension_numbers<[1], [0], [0], [1], [0, 0, 1, 1], [], []>} : vector<8x128xbf16>, vector<128x32xbf16>, vector<8x32xf32> -> vector<8x32xf32>
    %c8_18 = arith.constant 8 : index
    %c0_19 = arith.constant 0 : index
    %c0_20 = arith.constant 0 : index
    %21 = vector.load %arg3[%c8_18, %c0_19, %c0_20] : memref<12x1x32xf32, #tpu.memory_space<vmem>>, vector<1x1x32xf32>
    %22 = vector.shape_cast %21 : vector<1x1x32xf32> to vector<1x32xf32>
    %23 = vector.broadcast %22 : vector<1x32xf32> to vector<8x32xf32>
    %24 = arith.addf %20, %23 : vector<8x32xf32>
    %25 = arith.truncf %10 : vector<8x32xf32> to vector<8x32xbf16>
    %26 = arith.truncf %17 : vector<8x32xf32> to vector<8x32xbf16>
    %cst_21 = arith.constant dense<0.000000e+00> : vector<8x8xf32>
    %27 = tpu.matmul %25, %26, %cst_21 {dimension_numbers = #tpu.dot_dimension_numbers<[1], [1], [0], [0], [0, 0, 1, 0], [], []>} : vector<8x32xbf16>, vector<8x32xbf16>, vector<8x8xf32> -> vector<8x8xf32>
    %cst_22 = arith.constant 0.176776692 : f32
    %28 = vector.broadcast %cst_22 : f32 to vector<8x8xf32>
    %29 = arith.mulf %27, %28 : vector<8x8xf32>
    %cst_23 = arith.constant dense<0xFF800000> : vector<8xf32>
    %30 = vector.multi_reduction <maximumf>, %29, %cst_23 [1] : vector<8x8xf32> to vector<8xf32>
    %31 = vector.shape_cast %30 : vector<8xf32> to vector<8x1xf32>
    %32 = vector.broadcast %31 : vector<8x1xf32> to vector<8x8xf32>
    %33 = arith.subf %29, %32 : vector<8x8xf32>
    %34 = math.exp %33 : vector<8x8xf32>
    %cst_24 = arith.constant dense<0.000000e+00> : vector<8xf32>
    %35 = vector.multi_reduction <add>, %34, %cst_24 [1] : vector<8x8xf32> to vector<8xf32>
    %36 = vector.shape_cast %35 : vector<8xf32> to vector<8x1xf32>
    %37 = tpu.reciprocal %36 {approx = true} : vector<8x1xf32> -> vector<8x1xf32>
    %38 = vector.broadcast %37 : vector<8x1xf32> to vector<8x8xf32>
    %39 = arith.mulf %34, %38 : vector<8x8xf32>
    %40 = arith.truncf %39 : vector<8x8xf32> to vector<8x8xbf16>
    %41 = arith.truncf %24 : vector<8x32xf32> to vector<8x32xbf16>
    %cst_25 = arith.constant dense<0.000000e+00> : vector<8x32xf32>
    %42 = tpu.matmul %40, %41, %cst_25 {dimension_numbers = #tpu.dot_dimension_numbers<[1], [0], [0], [1], [0, 0, 1, 1], [], []>} : vector<8x8xbf16>, vector<8x32xbf16>, vector<8x32xf32> -> vector<8x32xf32>
    %43 = arith.truncf %42 : vector<8x32xf32> to vector<8x32xbf16>
    %c0_26 = arith.constant 0 : index
    %c0_27 = arith.constant 0 : index
    %c0_28 = arith.constant 0 : index
    %44 = vector.load %arg4[%c0_26, %c0_27, %c0_28] : memref<4x32x128xbf16, #tpu.memory_space<vmem>>, vector<1x32x128xbf16>
    %45 = vector.shape_cast %44 : vector<1x32x128xbf16> to vector<32x128xbf16>
    %cst_29 = arith.constant dense<0.000000e+00> : vector<8x128xf32>
    %46 = tpu.matmul %43, %45, %cst_29 {dimension_numbers = #tpu.dot_dimension_numbers<[1], [0], [0], [1], [0, 0, 1, 1], [], []>} : vector<8x32xbf16>, vector<32x128xbf16>, vector<8x128xf32> -> vector<8x128xf32>
    %47 = arith.addf %3, %46 : vector<8x128xf32>
    %c1 = arith.constant 1 : index
    %c0_30 = arith.constant 0 : index
    %c0_31 = arith.constant 0 : index
    %48 = vector.load %arg2[%c1, %c0_30, %c0_31] : memref<12x128x32xbf16, #tpu.memory_space<vmem>>, vector<1x128x32xbf16>
    %49 = vector.shape_cast %48 : vector<1x128x32xbf16> to vector<128x32xbf16>
    %cst_32 = arith.constant dense<0.000000e+00> : vector<8x32xf32>
    %50 = tpu.matmul %2, %49, %cst_32 {dimension_numbers = #tpu.dot_dimension_numbers<[1], [0], [0], [1], [0, 0, 1, 1], [], []>} : vector<8x128xbf16>, vector<128x32xbf16>, vector<8x32xf32> -> vector<8x32xf32>
    %c1_33 = arith.constant 1 : index
    %c0_34 = arith.constant 0 : index
    %c0_35 = arith.constant 0 : index
    %51 = vector.load %arg3[%c1_33, %c0_34, %c0_35] : memref<12x1x32xf32, #tpu.memory_space<vmem>>, vector<1x1x32xf32>
    %52 = vector.shape_cast %51 : vector<1x1x32xf32> to vector<1x32xf32>
    %53 = vector.broadcast %52 : vector<1x32xf32> to vector<8x32xf32>
    %54 = arith.addf %50, %53 : vector<8x32xf32>
    %c5 = arith.constant 5 : index
    %c0_36 = arith.constant 0 : index
    %c0_37 = arith.constant 0 : index
    %55 = vector.load %arg2[%c5, %c0_36, %c0_37] : memref<12x128x32xbf16, #tpu.memory_space<vmem>>, vector<1x128x32xbf16>
    %56 = vector.shape_cast %55 : vector<1x128x32xbf16> to vector<128x32xbf16>
    %cst_38 = arith.constant dense<0.000000e+00> : vector<8x32xf32>
    %57 = tpu.matmul %2, %56, %cst_38 {dimension_numbers = #tpu.dot_dimension_numbers<[1], [0], [0], [1], [0, 0, 1, 1], [], []>} : vector<8x128xbf16>, vector<128x32xbf16>, vector<8x32xf32> -> vector<8x32xf32>
    %c5_39 = arith.constant 5 : index
    %c0_40 = arith.constant 0 : index
    %c0_41 = arith.constant 0 : index
    %58 = vector.load %arg3[%c5_39, %c0_40, %c0_41] : memref<12x1x32xf32, #tpu.memory_space<vmem>>, vector<1x1x32xf32>
    %59 = vector.shape_cast %58 : vector<1x1x32xf32> to vector<1x32xf32>
    %60 = vector.broadcast %59 : vector<1x32xf32> to vector<8x32xf32>
    %61 = arith.addf %57, %60 : vector<8x32xf32>
    %c9 = arith.constant 9 : index
    %c0_42 = arith.constant 0 : index
    %c0_43 = arith.constant 0 : index
    %62 = vector.load %arg2[%c9, %c0_42, %c0_43] : memref<12x128x32xbf16, #tpu.memory_space<vmem>>, vector<1x128x32xbf16>
    %63 = vector.shape_cast %62 : vector<1x128x32xbf16> to vector<128x32xbf16>
    %cst_44 = arith.constant dense<0.000000e+00> : vector<8x32xf32>
    %64 = tpu.matmul %2, %63, %cst_44 {dimension_numbers = #tpu.dot_dimension_numbers<[1], [0], [0], [1], [0, 0, 1, 1], [], []>} : vector<8x128xbf16>, vector<128x32xbf16>, vector<8x32xf32> -> vector<8x32xf32>
    %c9_45 = arith.constant 9 : index
    %c0_46 = arith.constant 0 : index
    %c0_47 = arith.constant 0 : index
    %65 = vector.load %arg3[%c9_45, %c0_46, %c0_47] : memref<12x1x32xf32, #tpu.memory_space<vmem>>, vector<1x1x32xf32>
    %66 = vector.shape_cast %65 : vector<1x1x32xf32> to vector<1x32xf32>
    %67 = vector.broadcast %66 : vector<1x32xf32> to vector<8x32xf32>
    %68 = arith.addf %64, %67 : vector<8x32xf32>
    %69 = arith.truncf %54 : vector<8x32xf32> to vector<8x32xbf16>
    %70 = arith.truncf %61 : vector<8x32xf32> to vector<8x32xbf16>
    %cst_48 = arith.constant dense<0.000000e+00> : vector<8x8xf32>
    %71 = tpu.matmul %69, %70, %cst_48 {dimension_numbers = #tpu.dot_dimension_numbers<[1], [1], [0], [0], [0, 0, 1, 0], [], []>} : vector<8x32xbf16>, vector<8x32xbf16>, vector<8x8xf32> -> vector<8x8xf32>
    %cst_49 = arith.constant 0.176776692 : f32
    %72 = vector.broadcast %cst_49 : f32 to vector<8x8xf32>
    %73 = arith.mulf %71, %72 : vector<8x8xf32>
    %cst_50 = arith.constant dense<0xFF800000> : vector<8xf32>
    %74 = vector.multi_reduction <maximumf>, %73, %cst_50 [1] : vector<8x8xf32> to vector<8xf32>
    %75 = vector.shape_cast %74 : vector<8xf32> to vector<8x1xf32>
    %76 = vector.broadcast %75 : vector<8x1xf32> to vector<8x8xf32>
    %77 = arith.subf %73, %76 : vector<8x8xf32>
    %78 = math.exp %77 : vector<8x8xf32>
    %cst_51 = arith.constant dense<0.000000e+00> : vector<8xf32>
    %79 = vector.multi_reduction <add>, %78, %cst_51 [1] : vector<8x8xf32> to vector<8xf32>
    %80 = vector.shape_cast %79 : vector<8xf32> to vector<8x1xf32>
    %81 = tpu.reciprocal %80 {approx = true} : vector<8x1xf32> -> vector<8x1xf32>
    %82 = vector.broadcast %81 : vector<8x1xf32> to vector<8x8xf32>
    %83 = arith.mulf %78, %82 : vector<8x8xf32>
    %84 = arith.truncf %83 : vector<8x8xf32> to vector<8x8xbf16>
    %85 = arith.truncf %68 : vector<8x32xf32> to vector<8x32xbf16>
    %cst_52 = arith.constant dense<0.000000e+00> : vector<8x32xf32>
    %86 = tpu.matmul %84, %85, %cst_52 {dimension_numbers = #tpu.dot_dimension_numbers<[1], [0], [0], [1], [0, 0, 1, 1], [], []>} : vector<8x8xbf16>, vector<8x32xbf16>, vector<8x32xf32> -> vector<8x32xf32>
    %87 = arith.truncf %86 : vector<8x32xf32> to vector<8x32xbf16>
    %c1_53 = arith.constant 1 : index
    %c0_54 = arith.constant 0 : index
    %c0_55 = arith.constant 0 : index
    %88 = vector.load %arg4[%c1_53, %c0_54, %c0_55] : memref<4x32x128xbf16, #tpu.memory_space<vmem>>, vector<1x32x128xbf16>
    %89 = vector.shape_cast %88 : vector<1x32x128xbf16> to vector<32x128xbf16>
    %cst_56 = arith.constant dense<0.000000e+00> : vector<8x128xf32>
    %90 = tpu.matmul %87, %89, %cst_56 {dimension_numbers = #tpu.dot_dimension_numbers<[1], [0], [0], [1], [0, 0, 1, 1], [], []>} : vector<8x32xbf16>, vector<32x128xbf16>, vector<8x128xf32> -> vector<8x128xf32>
    %91 = arith.addf %47, %90 : vector<8x128xf32>
    %c2 = arith.constant 2 : index
    %c0_57 = arith.constant 0 : index
    %c0_58 = arith.constant 0 : index
    %92 = vector.load %arg2[%c2, %c0_57, %c0_58] : memref<12x128x32xbf16, #tpu.memory_space<vmem>>, vector<1x128x32xbf16>
    %93 = vector.shape_cast %92 : vector<1x128x32xbf16> to vector<128x32xbf16>
    %cst_59 = arith.constant dense<0.000000e+00> : vector<8x32xf32>
    %94 = tpu.matmul %2, %93, %cst_59 {dimension_numbers = #tpu.dot_dimension_numbers<[1], [0], [0], [1], [0, 0, 1, 1], [], []>} : vector<8x128xbf16>, vector<128x32xbf16>, vector<8x32xf32> -> vector<8x32xf32>
    %c2_60 = arith.constant 2 : index
    %c0_61 = arith.constant 0 : index
    %c0_62 = arith.constant 0 : index
    %95 = vector.load %arg3[%c2_60, %c0_61, %c0_62] : memref<12x1x32xf32, #tpu.memory_space<vmem>>, vector<1x1x32xf32>
    %96 = vector.shape_cast %95 : vector<1x1x32xf32> to vector<1x32xf32>
    %97 = vector.broadcast %96 : vector<1x32xf32> to vector<8x32xf32>
    %98 = arith.addf %94, %97 : vector<8x32xf32>
    %c6 = arith.constant 6 : index
    %c0_63 = arith.constant 0 : index
    %c0_64 = arith.constant 0 : index
    %99 = vector.load %arg2[%c6, %c0_63, %c0_64] : memref<12x128x32xbf16, #tpu.memory_space<vmem>>, vector<1x128x32xbf16>
    %100 = vector.shape_cast %99 : vector<1x128x32xbf16> to vector<128x32xbf16>
    %cst_65 = arith.constant dense<0.000000e+00> : vector<8x32xf32>
    %101 = tpu.matmul %2, %100, %cst_65 {dimension_numbers = #tpu.dot_dimension_numbers<[1], [0], [0], [1], [0, 0, 1, 1], [], []>} : vector<8x128xbf16>, vector<128x32xbf16>, vector<8x32xf32> -> vector<8x32xf32>
    %c6_66 = arith.constant 6 : index
    %c0_67 = arith.constant 0 : index
    %c0_68 = arith.constant 0 : index
    %102 = vector.load %arg3[%c6_66, %c0_67, %c0_68] : memref<12x1x32xf32, #tpu.memory_space<vmem>>, vector<1x1x32xf32>
    %103 = vector.shape_cast %102 : vector<1x1x32xf32> to vector<1x32xf32>
    %104 = vector.broadcast %103 : vector<1x32xf32> to vector<8x32xf32>
    %105 = arith.addf %101, %104 : vector<8x32xf32>
    %c10 = arith.constant 10 : index
    %c0_69 = arith.constant 0 : index
    %c0_70 = arith.constant 0 : index
    %106 = vector.load %arg2[%c10, %c0_69, %c0_70] : memref<12x128x32xbf16, #tpu.memory_space<vmem>>, vector<1x128x32xbf16>
    %107 = vector.shape_cast %106 : vector<1x128x32xbf16> to vector<128x32xbf16>
    %cst_71 = arith.constant dense<0.000000e+00> : vector<8x32xf32>
    %108 = tpu.matmul %2, %107, %cst_71 {dimension_numbers = #tpu.dot_dimension_numbers<[1], [0], [0], [1], [0, 0, 1, 1], [], []>} : vector<8x128xbf16>, vector<128x32xbf16>, vector<8x32xf32> -> vector<8x32xf32>
    %c10_72 = arith.constant 10 : index
    %c0_73 = arith.constant 0 : index
    %c0_74 = arith.constant 0 : index
    %109 = vector.load %arg3[%c10_72, %c0_73, %c0_74] : memref<12x1x32xf32, #tpu.memory_space<vmem>>, vector<1x1x32xf32>
    %110 = vector.shape_cast %109 : vector<1x1x32xf32> to vector<1x32xf32>
    %111 = vector.broadcast %110 : vector<1x32xf32> to vector<8x32xf32>
    %112 = arith.addf %108, %111 : vector<8x32xf32>
    %113 = arith.truncf %98 : vector<8x32xf32> to vector<8x32xbf16>
    %114 = arith.truncf %105 : vector<8x32xf32> to vector<8x32xbf16>
    %cst_75 = arith.constant dense<0.000000e+00> : vector<8x8xf32>
    %115 = tpu.matmul %113, %114, %cst_75 {dimension_numbers = #tpu.dot_dimension_numbers<[1], [1], [0], [0], [0, 0, 1, 0], [], []>} : vector<8x32xbf16>, vector<8x32xbf16>, vector<8x8xf32> -> vector<8x8xf32>
    %cst_76 = arith.constant 0.176776692 : f32
    %116 = vector.broadcast %cst_76 : f32 to vector<8x8xf32>
    %117 = arith.mulf %115, %116 : vector<8x8xf32>
    %cst_77 = arith.constant dense<0xFF800000> : vector<8xf32>
    %118 = vector.multi_reduction <maximumf>, %117, %cst_77 [1] : vector<8x8xf32> to vector<8xf32>
    %119 = vector.shape_cast %118 : vector<8xf32> to vector<8x1xf32>
    %120 = vector.broadcast %119 : vector<8x1xf32> to vector<8x8xf32>
    %121 = arith.subf %117, %120 : vector<8x8xf32>
    %122 = math.exp %121 : vector<8x8xf32>
    %cst_78 = arith.constant dense<0.000000e+00> : vector<8xf32>
    %123 = vector.multi_reduction <add>, %122, %cst_78 [1] : vector<8x8xf32> to vector<8xf32>
    %124 = vector.shape_cast %123 : vector<8xf32> to vector<8x1xf32>
    %125 = tpu.reciprocal %124 {approx = true} : vector<8x1xf32> -> vector<8x1xf32>
    %126 = vector.broadcast %125 : vector<8x1xf32> to vector<8x8xf32>
    %127 = arith.mulf %122, %126 : vector<8x8xf32>
    %128 = arith.truncf %127 : vector<8x8xf32> to vector<8x8xbf16>
    %129 = arith.truncf %112 : vector<8x32xf32> to vector<8x32xbf16>
    %cst_79 = arith.constant dense<0.000000e+00> : vector<8x32xf32>
    %130 = tpu.matmul %128, %129, %cst_79 {dimension_numbers = #tpu.dot_dimension_numbers<[1], [0], [0], [1], [0, 0, 1, 1], [], []>} : vector<8x8xbf16>, vector<8x32xbf16>, vector<8x32xf32> -> vector<8x32xf32>
    %131 = arith.truncf %130 : vector<8x32xf32> to vector<8x32xbf16>
    %c2_80 = arith.constant 2 : index
    %c0_81 = arith.constant 0 : index
    %c0_82 = arith.constant 0 : index
    %132 = vector.load %arg4[%c2_80, %c0_81, %c0_82] : memref<4x32x128xbf16, #tpu.memory_space<vmem>>, vector<1x32x128xbf16>
    %133 = vector.shape_cast %132 : vector<1x32x128xbf16> to vector<32x128xbf16>
    %cst_83 = arith.constant dense<0.000000e+00> : vector<8x128xf32>
    %134 = tpu.matmul %131, %133, %cst_83 {dimension_numbers = #tpu.dot_dimension_numbers<[1], [0], [0], [1], [0, 0, 1, 1], [], []>} : vector<8x32xbf16>, vector<32x128xbf16>, vector<8x128xf32> -> vector<8x128xf32>
    %135 = arith.addf %91, %134 : vector<8x128xf32>
    %c3 = arith.constant 3 : index
    %c0_84 = arith.constant 0 : index
    %c0_85 = arith.constant 0 : index
    %136 = vector.load %arg2[%c3, %c0_84, %c0_85] : memref<12x128x32xbf16, #tpu.memory_space<vmem>>, vector<1x128x32xbf16>
    %137 = vector.shape_cast %136 : vector<1x128x32xbf16> to vector<128x32xbf16>
    %cst_86 = arith.constant dense<0.000000e+00> : vector<8x32xf32>
    %138 = tpu.matmul %2, %137, %cst_86 {dimension_numbers = #tpu.dot_dimension_numbers<[1], [0], [0], [1], [0, 0, 1, 1], [], []>} : vector<8x128xbf16>, vector<128x32xbf16>, vector<8x32xf32> -> vector<8x32xf32>
    %c3_87 = arith.constant 3 : index
    %c0_88 = arith.constant 0 : index
    %c0_89 = arith.constant 0 : index
    %139 = vector.load %arg3[%c3_87, %c0_88, %c0_89] : memref<12x1x32xf32, #tpu.memory_space<vmem>>, vector<1x1x32xf32>
    %140 = vector.shape_cast %139 : vector<1x1x32xf32> to vector<1x32xf32>
    %141 = vector.broadcast %140 : vector<1x32xf32> to vector<8x32xf32>
    %142 = arith.addf %138, %141 : vector<8x32xf32>
    %c7 = arith.constant 7 : index
    %c0_90 = arith.constant 0 : index
    %c0_91 = arith.constant 0 : index
    %143 = vector.load %arg2[%c7, %c0_90, %c0_91] : memref<12x128x32xbf16, #tpu.memory_space<vmem>>, vector<1x128x32xbf16>
    %144 = vector.shape_cast %143 : vector<1x128x32xbf16> to vector<128x32xbf16>
    %cst_92 = arith.constant dense<0.000000e+00> : vector<8x32xf32>
    %145 = tpu.matmul %2, %144, %cst_92 {dimension_numbers = #tpu.dot_dimension_numbers<[1], [0], [0], [1], [0, 0, 1, 1], [], []>} : vector<8x128xbf16>, vector<128x32xbf16>, vector<8x32xf32> -> vector<8x32xf32>
    %c7_93 = arith.constant 7 : index
    %c0_94 = arith.constant 0 : index
    %c0_95 = arith.constant 0 : index
    %146 = vector.load %arg3[%c7_93, %c0_94, %c0_95] : memref<12x1x32xf32, #tpu.memory_space<vmem>>, vector<1x1x32xf32>
    %147 = vector.shape_cast %146 : vector<1x1x32xf32> to vector<1x32xf32>
    %148 = vector.broadcast %147 : vector<1x32xf32> to vector<8x32xf32>
    %149 = arith.addf %145, %148 : vector<8x32xf32>
    %c11 = arith.constant 11 : index
    %c0_96 = arith.constant 0 : index
    %c0_97 = arith.constant 0 : index
    %150 = vector.load %arg2[%c11, %c0_96, %c0_97] : memref<12x128x32xbf16, #tpu.memory_space<vmem>>, vector<1x128x32xbf16>
    %151 = vector.shape_cast %150 : vector<1x128x32xbf16> to vector<128x32xbf16>
    %cst_98 = arith.constant dense<0.000000e+00> : vector<8x32xf32>
    %152 = tpu.matmul %2, %151, %cst_98 {dimension_numbers = #tpu.dot_dimension_numbers<[1], [0], [0], [1], [0, 0, 1, 1], [], []>} : vector<8x128xbf16>, vector<128x32xbf16>, vector<8x32xf32> -> vector<8x32xf32>
    %c11_99 = arith.constant 11 : index
    %c0_100 = arith.constant 0 : index
    %c0_101 = arith.constant 0 : index
    %153 = vector.load %arg3[%c11_99, %c0_100, %c0_101] : memref<12x1x32xf32, #tpu.memory_space<vmem>>, vector<1x1x32xf32>
    %154 = vector.shape_cast %153 : vector<1x1x32xf32> to vector<1x32xf32>
    %155 = vector.broadcast %154 : vector<1x32xf32> to vector<8x32xf32>
    %156 = arith.addf %152, %155 : vector<8x32xf32>
    %157 = arith.truncf %142 : vector<8x32xf32> to vector<8x32xbf16>
    %158 = arith.truncf %149 : vector<8x32xf32> to vector<8x32xbf16>
    %cst_102 = arith.constant dense<0.000000e+00> : vector<8x8xf32>
    %159 = tpu.matmul %157, %158, %cst_102 {dimension_numbers = #tpu.dot_dimension_numbers<[1], [1], [0], [0], [0, 0, 1, 0], [], []>} : vector<8x32xbf16>, vector<8x32xbf16>, vector<8x8xf32> -> vector<8x8xf32>
    %cst_103 = arith.constant 0.176776692 : f32
    %160 = vector.broadcast %cst_103 : f32 to vector<8x8xf32>
    %161 = arith.mulf %159, %160 : vector<8x8xf32>
    %cst_104 = arith.constant dense<0xFF800000> : vector<8xf32>
    %162 = vector.multi_reduction <maximumf>, %161, %cst_104 [1] : vector<8x8xf32> to vector<8xf32>
    %163 = vector.shape_cast %162 : vector<8xf32> to vector<8x1xf32>
    %164 = vector.broadcast %163 : vector<8x1xf32> to vector<8x8xf32>
    %165 = arith.subf %161, %164 : vector<8x8xf32>
    %166 = math.exp %165 : vector<8x8xf32>
    %cst_105 = arith.constant dense<0.000000e+00> : vector<8xf32>
    %167 = vector.multi_reduction <add>, %166, %cst_105 [1] : vector<8x8xf32> to vector<8xf32>
    %168 = vector.shape_cast %167 : vector<8xf32> to vector<8x1xf32>
    %169 = tpu.reciprocal %168 {approx = true} : vector<8x1xf32> -> vector<8x1xf32>
    %170 = vector.broadcast %169 : vector<8x1xf32> to vector<8x8xf32>
    %171 = arith.mulf %166, %170 : vector<8x8xf32>
    %172 = arith.truncf %171 : vector<8x8xf32> to vector<8x8xbf16>
    %173 = arith.truncf %156 : vector<8x32xf32> to vector<8x32xbf16>
    %cst_106 = arith.constant dense<0.000000e+00> : vector<8x32xf32>
    %174 = tpu.matmul %172, %173, %cst_106 {dimension_numbers = #tpu.dot_dimension_numbers<[1], [0], [0], [1], [0, 0, 1, 1], [], []>} : vector<8x8xbf16>, vector<8x32xbf16>, vector<8x32xf32> -> vector<8x32xf32>
    %175 = arith.truncf %174 : vector<8x32xf32> to vector<8x32xbf16>
    %c3_107 = arith.constant 3 : index
    %c0_108 = arith.constant 0 : index
    %c0_109 = arith.constant 0 : index
    %176 = vector.load %arg4[%c3_107, %c0_108, %c0_109] : memref<4x32x128xbf16, #tpu.memory_space<vmem>>, vector<1x32x128xbf16>
    %177 = vector.shape_cast %176 : vector<1x32x128xbf16> to vector<32x128xbf16>
    %cst_110 = arith.constant dense<0.000000e+00> : vector<8x128xf32>
    %178 = tpu.matmul %175, %177, %cst_110 {dimension_numbers = #tpu.dot_dimension_numbers<[1], [0], [0], [1], [0, 0, 1, 1], [], []>} : vector<8x32xbf16>, vector<32x128xbf16>, vector<8x128xf32> -> vector<8x128xf32>
    %179 = arith.addf %135, %178 : vector<8x128xf32>
    %c0_111 = arith.constant 0 : index
    %c0_112 = arith.constant 0 : index
    %180 = vector.load %arg5[%c0_111, %c0_112] : memref<1x128xf32, #tpu.memory_space<vmem>>, vector<1x128xf32>
    %181 = vector.broadcast %180 : vector<1x128xf32> to vector<8x128xf32>
    %182 = arith.addf %179, %181 : vector<8x128xf32>
    %183 = arith.addf %1, %182 : vector<8x128xf32>
    %c0_113 = arith.constant 0 : index
    %c0_114 = arith.constant 0 : index
    %184 = vector.load %arg6[%c0_113, %c0_114] : memref<1x128xf32, #tpu.memory_space<vmem>>, vector<1x128xf32>
    %c0_115 = arith.constant 0 : index
    %c0_116 = arith.constant 0 : index
    %185 = vector.load %arg7[%c0_115, %c0_116] : memref<1x128xf32, #tpu.memory_space<vmem>>, vector<1x128xf32>
    %cst_117 = arith.constant dense<0.000000e+00> : vector<8xf32>
    %186 = vector.multi_reduction <add>, %183, %cst_117 [1] : vector<8x128xf32> to vector<8xf32>
    %187 = vector.shape_cast %186 : vector<8xf32> to vector<8x1xf32>
    %cst_118 = arith.constant 1.280000e+02 : f32
    %188 = vector.broadcast %cst_118 : f32 to vector<8x1xf32>
    %189 = arith.divf %187, %188 : vector<8x1xf32>
    %190 = vector.broadcast %189 : vector<8x1xf32> to vector<8x128xf32>
    %191 = arith.subf %183, %190 : vector<8x128xf32>
    %192 = arith.mulf %191, %191 : vector<8x128xf32>
    %cst_119 = arith.constant dense<0.000000e+00> : vector<8xf32>
    %193 = vector.multi_reduction <add>, %192, %cst_119 [1] : vector<8x128xf32> to vector<8xf32>
    %194 = vector.shape_cast %193 : vector<8xf32> to vector<8x1xf32>
    %cst_120 = arith.constant 1.280000e+02 : f32
    %195 = vector.broadcast %cst_120 : f32 to vector<8x1xf32>
    %196 = arith.divf %194, %195 : vector<8x1xf32>
    %cst_121 = arith.constant 9.99999974E-6 : f32
    %197 = vector.broadcast %cst_121 : f32 to vector<8x1xf32>
    %198 = arith.addf %196, %197 : vector<8x1xf32>
    %199 = math.rsqrt %198 : vector<8x1xf32>
    %200 = vector.broadcast %199 : vector<8x1xf32> to vector<8x128xf32>
    %201 = arith.mulf %191, %200 : vector<8x128xf32>
    %202 = vector.broadcast %184 : vector<1x128xf32> to vector<8x128xf32>
    %203 = arith.mulf %201, %202 : vector<8x128xf32>
    %204 = vector.broadcast %185 : vector<1x128xf32> to vector<8x128xf32>
    %205 = arith.addf %203, %204 : vector<8x128xf32>
    %206 = arith.truncf %205 : vector<8x128xf32> to vector<8x128xbf16>
    %c0_122 = arith.constant 0 : index
    %c0_123 = arith.constant 0 : index
    %207 = vector.load %arg8[%c0_122, %c0_123] : memref<128x256xbf16, #tpu.memory_space<vmem>>, vector<128x256xbf16>
    %cst_124 = arith.constant dense<0.000000e+00> : vector<8x256xf32>
    %208 = tpu.matmul %206, %207, %cst_124 {dimension_numbers = #tpu.dot_dimension_numbers<[1], [0], [0], [1], [0, 0, 1, 1], [], []>} : vector<8x128xbf16>, vector<128x256xbf16>, vector<8x256xf32> -> vector<8x256xf32>
    %c0_125 = arith.constant 0 : index
    %c0_126 = arith.constant 0 : index
    %209 = vector.load %arg9[%c0_125, %c0_126] : memref<1x256xf32, #tpu.memory_space<vmem>>, vector<1x256xf32>
    %210 = vector.broadcast %209 : vector<1x256xf32> to vector<8x256xf32>
    %211 = arith.addf %208, %210 : vector<8x256xf32>
    %cst_127 = arith.constant 0.000000e+00 : f32
    %212 = vector.broadcast %cst_127 : f32 to vector<8x256xf32>
    %213 = arith.maximumf %211, %212 : vector<8x256xf32>
    %214 = arith.truncf %213 : vector<8x256xf32> to vector<8x256xbf16>
    %c0_128 = arith.constant 0 : index
    %c0_129 = arith.constant 0 : index
    %215 = vector.load %arg10[%c0_128, %c0_129] : memref<256x128xbf16, #tpu.memory_space<vmem>>, vector<256x128xbf16>
    %cst_130 = arith.constant dense<0.000000e+00> : vector<8x128xf32>
    %216 = tpu.matmul %214, %215, %cst_130 {dimension_numbers = #tpu.dot_dimension_numbers<[1], [0], [0], [1], [0, 0, 1, 1], [], []>} : vector<8x256xbf16>, vector<256x128xbf16>, vector<8x128xf32> -> vector<8x128xf32>
    %c0_131 = arith.constant 0 : index
    %c0_132 = arith.constant 0 : index
    %217 = vector.load %arg11[%c0_131, %c0_132] : memref<1x128xf32, #tpu.memory_space<vmem>>, vector<1x128xf32>
    %218 = vector.broadcast %217 : vector<1x128xf32> to vector<8x128xf32>
    %219 = arith.addf %216, %218 : vector<8x128xf32>
    %220 = arith.addf %205, %219 : vector<8x128xf32>
    %c0_133 = arith.constant 0 : index
    %c0_134 = arith.constant 0 : index
    %221 = vector.load %arg12[%c0_133, %c0_134] : memref<1x128xf32, #tpu.memory_space<vmem>>, vector<1x128xf32>
    %c0_135 = arith.constant 0 : index
    %c0_136 = arith.constant 0 : index
    %222 = vector.load %arg13[%c0_135, %c0_136] : memref<1x128xf32, #tpu.memory_space<vmem>>, vector<1x128xf32>
    %cst_137 = arith.constant dense<0.000000e+00> : vector<8xf32>
    %223 = vector.multi_reduction <add>, %220, %cst_137 [1] : vector<8x128xf32> to vector<8xf32>
    %224 = vector.shape_cast %223 : vector<8xf32> to vector<8x1xf32>
    %cst_138 = arith.constant 1.280000e+02 : f32
    %225 = vector.broadcast %cst_138 : f32 to vector<8x1xf32>
    %226 = arith.divf %224, %225 : vector<8x1xf32>
    %227 = vector.broadcast %226 : vector<8x1xf32> to vector<8x128xf32>
    %228 = arith.subf %220, %227 : vector<8x128xf32>
    %229 = arith.mulf %228, %228 : vector<8x128xf32>
    %cst_139 = arith.constant dense<0.000000e+00> : vector<8xf32>
    %230 = vector.multi_reduction <add>, %229, %cst_139 [1] : vector<8x128xf32> to vector<8xf32>
    %231 = vector.shape_cast %230 : vector<8xf32> to vector<8x1xf32>
    %cst_140 = arith.constant 1.280000e+02 : f32
    %232 = vector.broadcast %cst_140 : f32 to vector<8x1xf32>
    %233 = arith.divf %231, %232 : vector<8x1xf32>
    %cst_141 = arith.constant 9.99999974E-6 : f32
    %234 = vector.broadcast %cst_141 : f32 to vector<8x1xf32>
    %235 = arith.addf %233, %234 : vector<8x1xf32>
    %236 = math.rsqrt %235 : vector<8x1xf32>
    %237 = vector.broadcast %236 : vector<8x1xf32> to vector<8x128xf32>
    %238 = arith.mulf %228, %237 : vector<8x128xf32>
    %239 = vector.broadcast %221 : vector<1x128xf32> to vector<8x128xf32>
    %240 = arith.mulf %238, %239 : vector<8x128xf32>
    %241 = vector.broadcast %222 : vector<1x128xf32> to vector<8x128xf32>
    %242 = arith.addf %240, %241 : vector<8x128xf32>
    %c0_142 = arith.constant 0 : index
    %c0_143 = arith.constant 0 : index
    %c0_144 = arith.constant 0 : index
    %243 = vector.load %arg14[%c0_142, %c0_143, %c0_144] : memref<1x8x128xf32, #tpu.memory_space<vmem>>, vector<1x8x128xf32>
    %244 = vector.shape_cast %243 : vector<1x8x128xf32> to vector<8x128xf32>
    %245 = vector.shape_cast %242 : vector<8x128xf32> to vector<1x8x128xf32>
    tpu.vector_store %arg14[%c0_142, %c0_143, %c0_144], %245 {strides = array<i32>} : memref<1x8x128xf32, #tpu.memory_space<vmem>>, vector<1x8x128xf32>,
    return
  }
  func.func @transform_0(%arg0: i32) -> (i32, i32, i32) {
    %c0_i32 = arith.constant 0 : i32
    %c0_i32_0 = arith.constant 0 : i32
    %c0_i32_1 = arith.constant 0 : i32
    return %arg0, %c0_i32, %c0_i32_0 : i32, i32, i32
  }
  func.func @transform_1(%arg0: i32) -> (i32, i32, i32) {
    %c0_i32 = arith.constant 0 : i32
    %c0_i32_0 = arith.constant 0 : i32
    %c0_i32_1 = arith.constant 0 : i32
    %c0_i32_2 = arith.constant 0 : i32
    return %c0_i32, %c0_i32_0, %c0_i32_1 : i32, i32, i32
  }
  func.func @transform_2(%arg0: i32) -> (i32, i32, i32) {
    %c0_i32 = arith.constant 0 : i32
    %c0_i32_0 = arith.constant 0 : i32
    %c0_i32_1 = arith.constant 0 : i32
    %c0_i32_2 = arith.constant 0 : i32
    return %c0_i32, %c0_i32_0, %c0_i32_1 : i32, i32, i32
  }
  func.func @transform_3(%arg0: i32) -> (i32, i32, i32) {
    %c0_i32 = arith.constant 0 : i32
    %c0_i32_0 = arith.constant 0 : i32
    %c0_i32_1 = arith.constant 0 : i32
    %c0_i32_2 = arith.constant 0 : i32
    return %c0_i32, %c0_i32_0, %c0_i32_1 : i32, i32, i32
  }
  func.func @transform_4(%arg0: i32) -> (i32, i32) {
    %c0_i32 = arith.constant 0 : i32
    %c0_i32_0 = arith.constant 0 : i32
    %c0_i32_1 = arith.constant 0 : i32
    return %c0_i32, %c0_i32_0 : i32, i32
  }
  func.func @transform_5(%arg0: i32) -> (i32, i32) {
    %c0_i32 = arith.constant 0 : i32
    %c0_i32_0 = arith.constant 0 : i32
    %c0_i32_1 = arith.constant 0 : i32
    return %c0_i32, %c0_i32_0 : i32, i32
  }
  func.func @transform_6(%arg0: i32) -> (i32, i32) {
    %c0_i32 = arith.constant 0 : i32
    %c0_i32_0 = arith.constant 0 : i32
    %c0_i32_1 = arith.constant 0 : i32
    return %c0_i32, %c0_i32_0 : i32, i32
  }
  func.func @transform_7(%arg0: i32) -> (i32, i32) {
    %c0_i32 = arith.constant 0 : i32
    %c0_i32_0 = arith.constant 0 : i32
    %c0_i32_1 = arith.constant 0 : i32
    return %c0_i32, %c0_i32_0 : i32, i32
  }
  func.func @transform_8(%arg0: i32) -> (i32, i32) {
    %c0_i32 = arith.constant 0 : i32
    %c0_i32_0 = arith.constant 0 : i32
    %c0_i32_1 = arith.constant 0 : i32
    return %c0_i32, %c0_i32_0 : i32, i32
  }
  func.func @transform_9(%arg0: i32) -> (i32, i32) {
    %c0_i32 = arith.constant 0 : i32
    %c0_i32_0 = arith.constant 0 : i32
    %c0_i32_1 = arith.constant 0 : i32
    return %c0_i32, %c0_i32_0 : i32, i32
  }
  func.func @transform_10(%arg0: i32) -> (i32, i32) {
    %c0_i32 = arith.constant 0 : i32
    %c0_i32_0 = arith.constant 0 : i32
    %c0_i32_1 = arith.constant 0 : i32
    return %c0_i32, %c0_i32_0 : i32, i32
  }
  func.func @transform_11(%arg0: i32) -> (i32, i32) {
    %c0_i32 = arith.constant 0 : i32
    %c0_i32_0 = arith.constant 0 : i32
    %c0_i32_1 = arith.constant 0 : i32
    return %c0_i32, %c0_i32_0 : i32, i32
  }
  func.func @transform_12(%arg0: i32) -> (i32, i32) {
    %c0_i32 = arith.constant 0 : i32
    %c0_i32_0 = arith.constant 0 : i32
    %c0_i32_1 = arith.constant 0 : i32
    return %c0_i32, %c0_i32_0 : i32, i32
  }
  func.func @transform_13(%arg0: i32) -> (i32, i32, i32) {
    %c0_i32 = arith.constant 0 : i32
    %c0_i32_0 = arith.constant 0 : i32
    %c0_i32_1 = arith.constant 0 : i32
    return %arg0, %c0_i32, %c0_i32_0 : i32, i32, i32
  }
}

module attributes {stable_mosaic.version = 11 : i64} {
  func.func @_encoder_layer_kernel(%arg0: i32, %arg1: memref<1x8x128xf32, #tpu.memory_space<vmem>>, %arg2: memref<12x128x32xbf16, #tpu.memory_space<vmem>>, %arg3: memref<12x1x32xf32, #tpu.memory_space<vmem>>, %arg4: memref<4x32x128xbf16, #tpu.memory_space<vmem>>, %arg5: memref<1x128xf32, #tpu.memory_space<vmem>>, %arg6: memref<1x128xf32, #tpu.memory_space<vmem>>, %arg7: memref<1x128xf32, #tpu.memory_space<vmem>>, %arg8: memref<128x256xbf16, #tpu.memory_space<vmem>>, %arg9: memref<1x256xf32, #tpu.memory_space<vmem>>, %arg10: memref<256x128xbf16, #tpu.memory_space<vmem>>, %arg11: memref<1x128xf32, #tpu.memory_space<vmem>>, %arg12: memref<1x128xf32, #tpu.memory_space<vmem>>, %arg13: memref<1x128xf32, #tpu.memory_space<vmem>>, %arg14: memref<1x128xf32, #tpu.memory_space<vmem>>, %arg15: memref<1x128xf32, #tpu.memory_space<vmem>>, %arg16: memref<1x8x128xf32, #tpu.memory_space<vmem>>) attributes {dimension_semantics = [#tpu.dimension_semantics<parallel>], iteration_bounds = array<i64: 2>, scalar_prefetch = 0 : i64, scratch_operands = 0 : i64, tpu.core_type = #tpu.core_type<tc>, window_params = [{transform_indices = @transform_0, window_bounds = array<i64: 1, 8, 128>}, {pipeline_mode = #tpu.pipeline_mode<synchronous>, transform_indices = @transform_1, window_bounds = array<i64: 12, 128, 32>}, {pipeline_mode = #tpu.pipeline_mode<synchronous>, transform_indices = @transform_2, window_bounds = array<i64: 12, 1, 32>}, {pipeline_mode = #tpu.pipeline_mode<synchronous>, transform_indices = @transform_3, window_bounds = array<i64: 4, 32, 128>}, {pipeline_mode = #tpu.pipeline_mode<synchronous>, transform_indices = @transform_4, window_bounds = array<i64: 1, 128>}, {pipeline_mode = #tpu.pipeline_mode<synchronous>, transform_indices = @transform_5, window_bounds = array<i64: 1, 128>}, {pipeline_mode = #tpu.pipeline_mode<synchronous>, transform_indices = @transform_6, window_bounds = array<i64: 1, 128>}, {pipeline_mode = #tpu.pipeline_mode<synchronous>, transform_indices = @transform_7, window_bounds = array<i64: 128, 256>}, {pipeline_mode = #tpu.pipeline_mode<synchronous>, transform_indices = @transform_8, window_bounds = array<i64: 1, 256>}, {pipeline_mode = #tpu.pipeline_mode<synchronous>, transform_indices = @transform_9, window_bounds = array<i64: 256, 128>}, {pipeline_mode = #tpu.pipeline_mode<synchronous>, transform_indices = @transform_10, window_bounds = array<i64: 1, 128>}, {pipeline_mode = #tpu.pipeline_mode<synchronous>, transform_indices = @transform_11, window_bounds = array<i64: 1, 128>}, {pipeline_mode = #tpu.pipeline_mode<synchronous>, transform_indices = @transform_12, window_bounds = array<i64: 1, 128>}, {pipeline_mode = #tpu.pipeline_mode<synchronous>, transform_indices = @transform_13, window_bounds = array<i64: 1, 128>}, {pipeline_mode = #tpu.pipeline_mode<synchronous>, transform_indices = @transform_14, window_bounds = array<i64: 1, 128>}, {transform_indices = @transform_15, window_bounds = array<i64: 1, 8, 128>}]} {
    %c0 = arith.constant 0 : index
    %c0_0 = arith.constant 0 : index
    %c0_1 = arith.constant 0 : index
    %0 = vector.load %arg1[%c0, %c0_0, %c0_1] : memref<1x8x128xf32, #tpu.memory_space<vmem>>, vector<1x8x128xf32>
    %1 = vector.shape_cast %0 : vector<1x8x128xf32> to vector<8x128xf32>
    %2 = arith.truncf %1 : vector<8x128xf32> to vector<8x128xbf16>
    %cst = arith.constant 0.000000e+00 : f32
    %3 = vector.broadcast %cst : f32 to vector<8x128xf32>
    %c0_2 = arith.constant 0 : index
    %c0_3 = arith.constant 0 : index
    %c0_4 = arith.constant 0 : index
    %4 = vector.load %arg2[%c0_2, %c0_3, %c0_4] : memref<12x128x32xbf16, #tpu.memory_space<vmem>>, vector<1x128x32xbf16>
    %5 = vector.shape_cast %4 : vector<1x128x32xbf16> to vector<128x32xbf16>
    %cst_5 = arith.constant dense<0.000000e+00> : vector<8x32xf32>
    %6 = tpu.matmul %2, %5, %cst_5 {dimension_numbers = #tpu.dot_dimension_numbers<[1], [0], [0], [1], [0, 0, 1, 1], [], []>} : vector<8x128xbf16>, vector<128x32xbf16>, vector<8x32xf32> -> vector<8x32xf32>
    %c0_6 = arith.constant 0 : index
    %c0_7 = arith.constant 0 : index
    %c0_8 = arith.constant 0 : index
    %7 = vector.load %arg3[%c0_6, %c0_7, %c0_8] : memref<12x1x32xf32, #tpu.memory_space<vmem>>, vector<1x1x32xf32>
    %8 = vector.shape_cast %7 : vector<1x1x32xf32> to vector<1x32xf32>
    %9 = vector.broadcast %8 : vector<1x32xf32> to vector<8x32xf32>
    %10 = arith.addf %6, %9 : vector<8x32xf32>
    %c4 = arith.constant 4 : index
    %c0_9 = arith.constant 0 : index
    %c0_10 = arith.constant 0 : index
    %11 = vector.load %arg2[%c4, %c0_9, %c0_10] : memref<12x128x32xbf16, #tpu.memory_space<vmem>>, vector<1x128x32xbf16>
    %12 = vector.shape_cast %11 : vector<1x128x32xbf16> to vector<128x32xbf16>
    %cst_11 = arith.constant dense<0.000000e+00> : vector<8x32xf32>
    %13 = tpu.matmul %2, %12, %cst_11 {dimension_numbers = #tpu.dot_dimension_numbers<[1], [0], [0], [1], [0, 0, 1, 1], [], []>} : vector<8x128xbf16>, vector<128x32xbf16>, vector<8x32xf32> -> vector<8x32xf32>
    %c4_12 = arith.constant 4 : index
    %c0_13 = arith.constant 0 : index
    %c0_14 = arith.constant 0 : index
    %14 = vector.load %arg3[%c4_12, %c0_13, %c0_14] : memref<12x1x32xf32, #tpu.memory_space<vmem>>, vector<1x1x32xf32>
    %15 = vector.shape_cast %14 : vector<1x1x32xf32> to vector<1x32xf32>
    %16 = vector.broadcast %15 : vector<1x32xf32> to vector<8x32xf32>
    %17 = arith.addf %13, %16 : vector<8x32xf32>
    %c8 = arith.constant 8 : index
    %c0_15 = arith.constant 0 : index
    %c0_16 = arith.constant 0 : index
    %18 = vector.load %arg2[%c8, %c0_15, %c0_16] : memref<12x128x32xbf16, #tpu.memory_space<vmem>>, vector<1x128x32xbf16>
    %19 = vector.shape_cast %18 : vector<1x128x32xbf16> to vector<128x32xbf16>
    %cst_17 = arith.constant dense<0.000000e+00> : vector<8x32xf32>
    %20 = tpu.matmul %2, %19, %cst_17 {dimension_numbers = #tpu.dot_dimension_numbers<[1], [0], [0], [1], [0, 0, 1, 1], [], []>} : vector<8x128xbf16>, vector<128x32xbf16>, vector<8x32xf32> -> vector<8x32xf32>
    %c8_18 = arith.constant 8 : index
    %c0_19 = arith.constant 0 : index
    %c0_20 = arith.constant 0 : index
    %21 = vector.load %arg3[%c8_18, %c0_19, %c0_20] : memref<12x1x32xf32, #tpu.memory_space<vmem>>, vector<1x1x32xf32>
    %22 = vector.shape_cast %21 : vector<1x1x32xf32> to vector<1x32xf32>
    %23 = vector.broadcast %22 : vector<1x32xf32> to vector<8x32xf32>
    %24 = arith.addf %20, %23 : vector<8x32xf32>
    %25 = arith.truncf %10 : vector<8x32xf32> to vector<8x32xbf16>
    %26 = arith.truncf %17 : vector<8x32xf32> to vector<8x32xbf16>
    %cst_21 = arith.constant dense<0.000000e+00> : vector<8x8xf32>
    %27 = tpu.matmul %25, %26, %cst_21 {dimension_numbers = #tpu.dot_dimension_numbers<[1], [1], [0], [0], [0, 0, 1, 0], [], []>} : vector<8x32xbf16>, vector<8x32xbf16>, vector<8x8xf32> -> vector<8x8xf32>
    %cst_22 = arith.constant 0.176776692 : f32
    %28 = vector.broadcast %cst_22 : f32 to vector<8x8xf32>
    %29 = arith.mulf %27, %28 : vector<8x8xf32>
    %cst_23 = arith.constant dense<0xFF800000> : vector<8xf32>
    %30 = vector.multi_reduction <maximumf>, %29, %cst_23 [1] : vector<8x8xf32> to vector<8xf32>
    %31 = vector.shape_cast %30 : vector<8xf32> to vector<8x1xf32>
    %32 = vector.broadcast %31 : vector<8x1xf32> to vector<8x8xf32>
    %33 = arith.subf %29, %32 : vector<8x8xf32>
    %34 = math.exp %33 : vector<8x8xf32>
    %cst_24 = arith.constant dense<0.000000e+00> : vector<8xf32>
    %35 = vector.multi_reduction <add>, %34, %cst_24 [1] : vector<8x8xf32> to vector<8xf32>
    %36 = vector.shape_cast %35 : vector<8xf32> to vector<8x1xf32>
    %37 = tpu.reciprocal %36 {approx = true} : vector<8x1xf32> -> vector<8x1xf32>
    %38 = vector.broadcast %37 : vector<8x1xf32> to vector<8x8xf32>
    %39 = arith.mulf %34, %38 : vector<8x8xf32>
    %40 = arith.truncf %39 : vector<8x8xf32> to vector<8x8xbf16>
    %41 = arith.truncf %24 : vector<8x32xf32> to vector<8x32xbf16>
    %cst_25 = arith.constant dense<0.000000e+00> : vector<8x32xf32>
    %42 = tpu.matmul %40, %41, %cst_25 {dimension_numbers = #tpu.dot_dimension_numbers<[1], [0], [0], [1], [0, 0, 1, 1], [], []>} : vector<8x8xbf16>, vector<8x32xbf16>, vector<8x32xf32> -> vector<8x32xf32>
    %43 = arith.truncf %42 : vector<8x32xf32> to vector<8x32xbf16>
    %c0_26 = arith.constant 0 : index
    %c0_27 = arith.constant 0 : index
    %c0_28 = arith.constant 0 : index
    %44 = vector.load %arg4[%c0_26, %c0_27, %c0_28] : memref<4x32x128xbf16, #tpu.memory_space<vmem>>, vector<1x32x128xbf16>
    %45 = vector.shape_cast %44 : vector<1x32x128xbf16> to vector<32x128xbf16>
    %cst_29 = arith.constant dense<0.000000e+00> : vector<8x128xf32>
    %46 = tpu.matmul %43, %45, %cst_29 {dimension_numbers = #tpu.dot_dimension_numbers<[1], [0], [0], [1], [0, 0, 1, 1], [], []>} : vector<8x32xbf16>, vector<32x128xbf16>, vector<8x128xf32> -> vector<8x128xf32>
    %47 = arith.addf %3, %46 : vector<8x128xf32>
    %c1 = arith.constant 1 : index
    %c0_30 = arith.constant 0 : index
    %c0_31 = arith.constant 0 : index
    %48 = vector.load %arg2[%c1, %c0_30, %c0_31] : memref<12x128x32xbf16, #tpu.memory_space<vmem>>, vector<1x128x32xbf16>
    %49 = vector.shape_cast %48 : vector<1x128x32xbf16> to vector<128x32xbf16>
    %cst_32 = arith.constant dense<0.000000e+00> : vector<8x32xf32>
    %50 = tpu.matmul %2, %49, %cst_32 {dimension_numbers = #tpu.dot_dimension_numbers<[1], [0], [0], [1], [0, 0, 1, 1], [], []>} : vector<8x128xbf16>, vector<128x32xbf16>, vector<8x32xf32> -> vector<8x32xf32>
    %c1_33 = arith.constant 1 : index
    %c0_34 = arith.constant 0 : index
    %c0_35 = arith.constant 0 : index
    %51 = vector.load %arg3[%c1_33, %c0_34, %c0_35] : memref<12x1x32xf32, #tpu.memory_space<vmem>>, vector<1x1x32xf32>
    %52 = vector.shape_cast %51 : vector<1x1x32xf32> to vector<1x32xf32>
    %53 = vector.broadcast %52 : vector<1x32xf32> to vector<8x32xf32>
    %54 = arith.addf %50, %53 : vector<8x32xf32>
    %c5 = arith.constant 5 : index
    %c0_36 = arith.constant 0 : index
    %c0_37 = arith.constant 0 : index
    %55 = vector.load %arg2[%c5, %c0_36, %c0_37] : memref<12x128x32xbf16, #tpu.memory_space<vmem>>, vector<1x128x32xbf16>
    %56 = vector.shape_cast %55 : vector<1x128x32xbf16> to vector<128x32xbf16>
    %cst_38 = arith.constant dense<0.000000e+00> : vector<8x32xf32>
    %57 = tpu.matmul %2, %56, %cst_38 {dimension_numbers = #tpu.dot_dimension_numbers<[1], [0], [0], [1], [0, 0, 1, 1], [], []>} : vector<8x128xbf16>, vector<128x32xbf16>, vector<8x32xf32> -> vector<8x32xf32>
    %c5_39 = arith.constant 5 : index
    %c0_40 = arith.constant 0 : index
    %c0_41 = arith.constant 0 : index
    %58 = vector.load %arg3[%c5_39, %c0_40, %c0_41] : memref<12x1x32xf32, #tpu.memory_space<vmem>>, vector<1x1x32xf32>
    %59 = vector.shape_cast %58 : vector<1x1x32xf32> to vector<1x32xf32>
    %60 = vector.broadcast %59 : vector<1x32xf32> to vector<8x32xf32>
    %61 = arith.addf %57, %60 : vector<8x32xf32>
    %c9 = arith.constant 9 : index
    %c0_42 = arith.constant 0 : index
    %c0_43 = arith.constant 0 : index
    %62 = vector.load %arg2[%c9, %c0_42, %c0_43] : memref<12x128x32xbf16, #tpu.memory_space<vmem>>, vector<1x128x32xbf16>
    %63 = vector.shape_cast %62 : vector<1x128x32xbf16> to vector<128x32xbf16>
    %cst_44 = arith.constant dense<0.000000e+00> : vector<8x32xf32>
    %64 = tpu.matmul %2, %63, %cst_44 {dimension_numbers = #tpu.dot_dimension_numbers<[1], [0], [0], [1], [0, 0, 1, 1], [], []>} : vector<8x128xbf16>, vector<128x32xbf16>, vector<8x32xf32> -> vector<8x32xf32>
    %c9_45 = arith.constant 9 : index
    %c0_46 = arith.constant 0 : index
    %c0_47 = arith.constant 0 : index
    %65 = vector.load %arg3[%c9_45, %c0_46, %c0_47] : memref<12x1x32xf32, #tpu.memory_space<vmem>>, vector<1x1x32xf32>
    %66 = vector.shape_cast %65 : vector<1x1x32xf32> to vector<1x32xf32>
    %67 = vector.broadcast %66 : vector<1x32xf32> to vector<8x32xf32>
    %68 = arith.addf %64, %67 : vector<8x32xf32>
    %69 = arith.truncf %54 : vector<8x32xf32> to vector<8x32xbf16>
    %70 = arith.truncf %61 : vector<8x32xf32> to vector<8x32xbf16>
    %cst_48 = arith.constant dense<0.000000e+00> : vector<8x8xf32>
    %71 = tpu.matmul %69, %70, %cst_48 {dimension_numbers = #tpu.dot_dimension_numbers<[1], [1], [0], [0], [0, 0, 1, 0], [], []>} : vector<8x32xbf16>, vector<8x32xbf16>, vector<8x8xf32> -> vector<8x8xf32>
    %cst_49 = arith.constant 0.176776692 : f32
    %72 = vector.broadcast %cst_49 : f32 to vector<8x8xf32>
    %73 = arith.mulf %71, %72 : vector<8x8xf32>
    %cst_50 = arith.constant dense<0xFF800000> : vector<8xf32>
    %74 = vector.multi_reduction <maximumf>, %73, %cst_50 [1] : vector<8x8xf32> to vector<8xf32>
    %75 = vector.shape_cast %74 : vector<8xf32> to vector<8x1xf32>
    %76 = vector.broadcast %75 : vector<8x1xf32> to vector<8x8xf32>
    %77 = arith.subf %73, %76 : vector<8x8xf32>
    %78 = math.exp %77 : vector<8x8xf32>
    %cst_51 = arith.constant dense<0.000000e+00> : vector<8xf32>
    %79 = vector.multi_reduction <add>, %78, %cst_51 [1] : vector<8x8xf32> to vector<8xf32>
    %80 = vector.shape_cast %79 : vector<8xf32> to vector<8x1xf32>
    %81 = tpu.reciprocal %80 {approx = true} : vector<8x1xf32> -> vector<8x1xf32>
    %82 = vector.broadcast %81 : vector<8x1xf32> to vector<8x8xf32>
    %83 = arith.mulf %78, %82 : vector<8x8xf32>
    %84 = arith.truncf %83 : vector<8x8xf32> to vector<8x8xbf16>
    %85 = arith.truncf %68 : vector<8x32xf32> to vector<8x32xbf16>
    %cst_52 = arith.constant dense<0.000000e+00> : vector<8x32xf32>
    %86 = tpu.matmul %84, %85, %cst_52 {dimension_numbers = #tpu.dot_dimension_numbers<[1], [0], [0], [1], [0, 0, 1, 1], [], []>} : vector<8x8xbf16>, vector<8x32xbf16>, vector<8x32xf32> -> vector<8x32xf32>
    %87 = arith.truncf %86 : vector<8x32xf32> to vector<8x32xbf16>
    %c1_53 = arith.constant 1 : index
    %c0_54 = arith.constant 0 : index
    %c0_55 = arith.constant 0 : index
    %88 = vector.load %arg4[%c1_53, %c0_54, %c0_55] : memref<4x32x128xbf16, #tpu.memory_space<vmem>>, vector<1x32x128xbf16>
    %89 = vector.shape_cast %88 : vector<1x32x128xbf16> to vector<32x128xbf16>
    %cst_56 = arith.constant dense<0.000000e+00> : vector<8x128xf32>
    %90 = tpu.matmul %87, %89, %cst_56 {dimension_numbers = #tpu.dot_dimension_numbers<[1], [0], [0], [1], [0, 0, 1, 1], [], []>} : vector<8x32xbf16>, vector<32x128xbf16>, vector<8x128xf32> -> vector<8x128xf32>
    %91 = arith.addf %47, %90 : vector<8x128xf32>
    %c2 = arith.constant 2 : index
    %c0_57 = arith.constant 0 : index
    %c0_58 = arith.constant 0 : index
    %92 = vector.load %arg2[%c2, %c0_57, %c0_58] : memref<12x128x32xbf16, #tpu.memory_space<vmem>>, vector<1x128x32xbf16>
    %93 = vector.shape_cast %92 : vector<1x128x32xbf16> to vector<128x32xbf16>
    %cst_59 = arith.constant dense<0.000000e+00> : vector<8x32xf32>
    %94 = tpu.matmul %2, %93, %cst_59 {dimension_numbers = #tpu.dot_dimension_numbers<[1], [0], [0], [1], [0, 0, 1, 1], [], []>} : vector<8x128xbf16>, vector<128x32xbf16>, vector<8x32xf32> -> vector<8x32xf32>
    %c2_60 = arith.constant 2 : index
    %c0_61 = arith.constant 0 : index
    %c0_62 = arith.constant 0 : index
    %95 = vector.load %arg3[%c2_60, %c0_61, %c0_62] : memref<12x1x32xf32, #tpu.memory_space<vmem>>, vector<1x1x32xf32>
    %96 = vector.shape_cast %95 : vector<1x1x32xf32> to vector<1x32xf32>
    %97 = vector.broadcast %96 : vector<1x32xf32> to vector<8x32xf32>
    %98 = arith.addf %94, %97 : vector<8x32xf32>
    %c6 = arith.constant 6 : index
    %c0_63 = arith.constant 0 : index
    %c0_64 = arith.constant 0 : index
    %99 = vector.load %arg2[%c6, %c0_63, %c0_64] : memref<12x128x32xbf16, #tpu.memory_space<vmem>>, vector<1x128x32xbf16>
    %100 = vector.shape_cast %99 : vector<1x128x32xbf16> to vector<128x32xbf16>
    %cst_65 = arith.constant dense<0.000000e+00> : vector<8x32xf32>
    %101 = tpu.matmul %2, %100, %cst_65 {dimension_numbers = #tpu.dot_dimension_numbers<[1], [0], [0], [1], [0, 0, 1, 1], [], []>} : vector<8x128xbf16>, vector<128x32xbf16>, vector<8x32xf32> -> vector<8x32xf32>
    %c6_66 = arith.constant 6 : index
    %c0_67 = arith.constant 0 : index
    %c0_68 = arith.constant 0 : index
    %102 = vector.load %arg3[%c6_66, %c0_67, %c0_68] : memref<12x1x32xf32, #tpu.memory_space<vmem>>, vector<1x1x32xf32>
    %103 = vector.shape_cast %102 : vector<1x1x32xf32> to vector<1x32xf32>
    %104 = vector.broadcast %103 : vector<1x32xf32> to vector<8x32xf32>
    %105 = arith.addf %101, %104 : vector<8x32xf32>
    %c10 = arith.constant 10 : index
    %c0_69 = arith.constant 0 : index
    %c0_70 = arith.constant 0 : index
    %106 = vector.load %arg2[%c10, %c0_69, %c0_70] : memref<12x128x32xbf16, #tpu.memory_space<vmem>>, vector<1x128x32xbf16>
    %107 = vector.shape_cast %106 : vector<1x128x32xbf16> to vector<128x32xbf16>
    %cst_71 = arith.constant dense<0.000000e+00> : vector<8x32xf32>
    %108 = tpu.matmul %2, %107, %cst_71 {dimension_numbers = #tpu.dot_dimension_numbers<[1], [0], [0], [1], [0, 0, 1, 1], [], []>} : vector<8x128xbf16>, vector<128x32xbf16>, vector<8x32xf32> -> vector<8x32xf32>
    %c10_72 = arith.constant 10 : index
    %c0_73 = arith.constant 0 : index
    %c0_74 = arith.constant 0 : index
    %109 = vector.load %arg3[%c10_72, %c0_73, %c0_74] : memref<12x1x32xf32, #tpu.memory_space<vmem>>, vector<1x1x32xf32>
    %110 = vector.shape_cast %109 : vector<1x1x32xf32> to vector<1x32xf32>
    %111 = vector.broadcast %110 : vector<1x32xf32> to vector<8x32xf32>
    %112 = arith.addf %108, %111 : vector<8x32xf32>
    %113 = arith.truncf %98 : vector<8x32xf32> to vector<8x32xbf16>
    %114 = arith.truncf %105 : vector<8x32xf32> to vector<8x32xbf16>
    %cst_75 = arith.constant dense<0.000000e+00> : vector<8x8xf32>
    %115 = tpu.matmul %113, %114, %cst_75 {dimension_numbers = #tpu.dot_dimension_numbers<[1], [1], [0], [0], [0, 0, 1, 0], [], []>} : vector<8x32xbf16>, vector<8x32xbf16>, vector<8x8xf32> -> vector<8x8xf32>
    %cst_76 = arith.constant 0.176776692 : f32
    %116 = vector.broadcast %cst_76 : f32 to vector<8x8xf32>
    %117 = arith.mulf %115, %116 : vector<8x8xf32>
    %cst_77 = arith.constant dense<0xFF800000> : vector<8xf32>
    %118 = vector.multi_reduction <maximumf>, %117, %cst_77 [1] : vector<8x8xf32> to vector<8xf32>
    %119 = vector.shape_cast %118 : vector<8xf32> to vector<8x1xf32>
    %120 = vector.broadcast %119 : vector<8x1xf32> to vector<8x8xf32>
    %121 = arith.subf %117, %120 : vector<8x8xf32>
    %122 = math.exp %121 : vector<8x8xf32>
    %cst_78 = arith.constant dense<0.000000e+00> : vector<8xf32>
    %123 = vector.multi_reduction <add>, %122, %cst_78 [1] : vector<8x8xf32> to vector<8xf32>
    %124 = vector.shape_cast %123 : vector<8xf32> to vector<8x1xf32>
    %125 = tpu.reciprocal %124 {approx = true} : vector<8x1xf32> -> vector<8x1xf32>
    %126 = vector.broadcast %125 : vector<8x1xf32> to vector<8x8xf32>
    %127 = arith.mulf %122, %126 : vector<8x8xf32>
    %128 = arith.truncf %127 : vector<8x8xf32> to vector<8x8xbf16>
    %129 = arith.truncf %112 : vector<8x32xf32> to vector<8x32xbf16>
    %cst_79 = arith.constant dense<0.000000e+00> : vector<8x32xf32>
    %130 = tpu.matmul %128, %129, %cst_79 {dimension_numbers = #tpu.dot_dimension_numbers<[1], [0], [0], [1], [0, 0, 1, 1], [], []>} : vector<8x8xbf16>, vector<8x32xbf16>, vector<8x32xf32> -> vector<8x32xf32>
    %131 = arith.truncf %130 : vector<8x32xf32> to vector<8x32xbf16>
    %c2_80 = arith.constant 2 : index
    %c0_81 = arith.constant 0 : index
    %c0_82 = arith.constant 0 : index
    %132 = vector.load %arg4[%c2_80, %c0_81, %c0_82] : memref<4x32x128xbf16, #tpu.memory_space<vmem>>, vector<1x32x128xbf16>
    %133 = vector.shape_cast %132 : vector<1x32x128xbf16> to vector<32x128xbf16>
    %cst_83 = arith.constant dense<0.000000e+00> : vector<8x128xf32>
    %134 = tpu.matmul %131, %133, %cst_83 {dimension_numbers = #tpu.dot_dimension_numbers<[1], [0], [0], [1], [0, 0, 1, 1], [], []>} : vector<8x32xbf16>, vector<32x128xbf16>, vector<8x128xf32> -> vector<8x128xf32>
    %135 = arith.addf %91, %134 : vector<8x128xf32>
    %c3 = arith.constant 3 : index
    %c0_84 = arith.constant 0 : index
    %c0_85 = arith.constant 0 : index
    %136 = vector.load %arg2[%c3, %c0_84, %c0_85] : memref<12x128x32xbf16, #tpu.memory_space<vmem>>, vector<1x128x32xbf16>
    %137 = vector.shape_cast %136 : vector<1x128x32xbf16> to vector<128x32xbf16>
    %cst_86 = arith.constant dense<0.000000e+00> : vector<8x32xf32>
    %138 = tpu.matmul %2, %137, %cst_86 {dimension_numbers = #tpu.dot_dimension_numbers<[1], [0], [0], [1], [0, 0, 1, 1], [], []>} : vector<8x128xbf16>, vector<128x32xbf16>, vector<8x32xf32> -> vector<8x32xf32>
    %c3_87 = arith.constant 3 : index
    %c0_88 = arith.constant 0 : index
    %c0_89 = arith.constant 0 : index
    %139 = vector.load %arg3[%c3_87, %c0_88, %c0_89] : memref<12x1x32xf32, #tpu.memory_space<vmem>>, vector<1x1x32xf32>
    %140 = vector.shape_cast %139 : vector<1x1x32xf32> to vector<1x32xf32>
    %141 = vector.broadcast %140 : vector<1x32xf32> to vector<8x32xf32>
    %142 = arith.addf %138, %141 : vector<8x32xf32>
    %c7 = arith.constant 7 : index
    %c0_90 = arith.constant 0 : index
    %c0_91 = arith.constant 0 : index
    %143 = vector.load %arg2[%c7, %c0_90, %c0_91] : memref<12x128x32xbf16, #tpu.memory_space<vmem>>, vector<1x128x32xbf16>
    %144 = vector.shape_cast %143 : vector<1x128x32xbf16> to vector<128x32xbf16>
    %cst_92 = arith.constant dense<0.000000e+00> : vector<8x32xf32>
    %145 = tpu.matmul %2, %144, %cst_92 {dimension_numbers = #tpu.dot_dimension_numbers<[1], [0], [0], [1], [0, 0, 1, 1], [], []>} : vector<8x128xbf16>, vector<128x32xbf16>, vector<8x32xf32> -> vector<8x32xf32>
    %c7_93 = arith.constant 7 : index
    %c0_94 = arith.constant 0 : index
    %c0_95 = arith.constant 0 : index
    %146 = vector.load %arg3[%c7_93, %c0_94, %c0_95] : memref<12x1x32xf32, #tpu.memory_space<vmem>>, vector<1x1x32xf32>
    %147 = vector.shape_cast %146 : vector<1x1x32xf32> to vector<1x32xf32>
    %148 = vector.broadcast %147 : vector<1x32xf32> to vector<8x32xf32>
    %149 = arith.addf %145, %148 : vector<8x32xf32>
    %c11 = arith.constant 11 : index
    %c0_96 = arith.constant 0 : index
    %c0_97 = arith.constant 0 : index
    %150 = vector.load %arg2[%c11, %c0_96, %c0_97] : memref<12x128x32xbf16, #tpu.memory_space<vmem>>, vector<1x128x32xbf16>
    %151 = vector.shape_cast %150 : vector<1x128x32xbf16> to vector<128x32xbf16>
    %cst_98 = arith.constant dense<0.000000e+00> : vector<8x32xf32>
    %152 = tpu.matmul %2, %151, %cst_98 {dimension_numbers = #tpu.dot_dimension_numbers<[1], [0], [0], [1], [0, 0, 1, 1], [], []>} : vector<8x128xbf16>, vector<128x32xbf16>, vector<8x32xf32> -> vector<8x32xf32>
    %c11_99 = arith.constant 11 : index
    %c0_100 = arith.constant 0 : index
    %c0_101 = arith.constant 0 : index
    %153 = vector.load %arg3[%c11_99, %c0_100, %c0_101] : memref<12x1x32xf32, #tpu.memory_space<vmem>>, vector<1x1x32xf32>
    %154 = vector.shape_cast %153 : vector<1x1x32xf32> to vector<1x32xf32>
    %155 = vector.broadcast %154 : vector<1x32xf32> to vector<8x32xf32>
    %156 = arith.addf %152, %155 : vector<8x32xf32>
    %157 = arith.truncf %142 : vector<8x32xf32> to vector<8x32xbf16>
    %158 = arith.truncf %149 : vector<8x32xf32> to vector<8x32xbf16>
    %cst_102 = arith.constant dense<0.000000e+00> : vector<8x8xf32>
    %159 = tpu.matmul %157, %158, %cst_102 {dimension_numbers = #tpu.dot_dimension_numbers<[1], [1], [0], [0], [0, 0, 1, 0], [], []>} : vector<8x32xbf16>, vector<8x32xbf16>, vector<8x8xf32> -> vector<8x8xf32>
    %cst_103 = arith.constant 0.176776692 : f32
    %160 = vector.broadcast %cst_103 : f32 to vector<8x8xf32>
    %161 = arith.mulf %159, %160 : vector<8x8xf32>
    %cst_104 = arith.constant dense<0xFF800000> : vector<8xf32>
    %162 = vector.multi_reduction <maximumf>, %161, %cst_104 [1] : vector<8x8xf32> to vector<8xf32>
    %163 = vector.shape_cast %162 : vector<8xf32> to vector<8x1xf32>
    %164 = vector.broadcast %163 : vector<8x1xf32> to vector<8x8xf32>
    %165 = arith.subf %161, %164 : vector<8x8xf32>
    %166 = math.exp %165 : vector<8x8xf32>
    %cst_105 = arith.constant dense<0.000000e+00> : vector<8xf32>
    %167 = vector.multi_reduction <add>, %166, %cst_105 [1] : vector<8x8xf32> to vector<8xf32>
    %168 = vector.shape_cast %167 : vector<8xf32> to vector<8x1xf32>
    %169 = tpu.reciprocal %168 {approx = true} : vector<8x1xf32> -> vector<8x1xf32>
    %170 = vector.broadcast %169 : vector<8x1xf32> to vector<8x8xf32>
    %171 = arith.mulf %166, %170 : vector<8x8xf32>
    %172 = arith.truncf %171 : vector<8x8xf32> to vector<8x8xbf16>
    %173 = arith.truncf %156 : vector<8x32xf32> to vector<8x32xbf16>
    %cst_106 = arith.constant dense<0.000000e+00> : vector<8x32xf32>
    %174 = tpu.matmul %172, %173, %cst_106 {dimension_numbers = #tpu.dot_dimension_numbers<[1], [0], [0], [1], [0, 0, 1, 1], [], []>} : vector<8x8xbf16>, vector<8x32xbf16>, vector<8x32xf32> -> vector<8x32xf32>
    %175 = arith.truncf %174 : vector<8x32xf32> to vector<8x32xbf16>
    %c3_107 = arith.constant 3 : index
    %c0_108 = arith.constant 0 : index
    %c0_109 = arith.constant 0 : index
    %176 = vector.load %arg4[%c3_107, %c0_108, %c0_109] : memref<4x32x128xbf16, #tpu.memory_space<vmem>>, vector<1x32x128xbf16>
    %177 = vector.shape_cast %176 : vector<1x32x128xbf16> to vector<32x128xbf16>
    %cst_110 = arith.constant dense<0.000000e+00> : vector<8x128xf32>
    %178 = tpu.matmul %175, %177, %cst_110 {dimension_numbers = #tpu.dot_dimension_numbers<[1], [0], [0], [1], [0, 0, 1, 1], [], []>} : vector<8x32xbf16>, vector<32x128xbf16>, vector<8x128xf32> -> vector<8x128xf32>
    %179 = arith.addf %135, %178 : vector<8x128xf32>
    %c0_111 = arith.constant 0 : index
    %c0_112 = arith.constant 0 : index
    %180 = vector.load %arg5[%c0_111, %c0_112] : memref<1x128xf32, #tpu.memory_space<vmem>>, vector<1x128xf32>
    %181 = vector.broadcast %180 : vector<1x128xf32> to vector<8x128xf32>
    %182 = arith.addf %179, %181 : vector<8x128xf32>
    %183 = arith.addf %1, %182 : vector<8x128xf32>
    %c0_113 = arith.constant 0 : index
    %c0_114 = arith.constant 0 : index
    %184 = vector.load %arg6[%c0_113, %c0_114] : memref<1x128xf32, #tpu.memory_space<vmem>>, vector<1x128xf32>
    %c0_115 = arith.constant 0 : index
    %c0_116 = arith.constant 0 : index
    %185 = vector.load %arg7[%c0_115, %c0_116] : memref<1x128xf32, #tpu.memory_space<vmem>>, vector<1x128xf32>
    %cst_117 = arith.constant dense<0.000000e+00> : vector<8xf32>
    %186 = vector.multi_reduction <add>, %183, %cst_117 [1] : vector<8x128xf32> to vector<8xf32>
    %187 = vector.shape_cast %186 : vector<8xf32> to vector<8x1xf32>
    %cst_118 = arith.constant 1.280000e+02 : f32
    %188 = vector.broadcast %cst_118 : f32 to vector<8x1xf32>
    %189 = arith.divf %187, %188 : vector<8x1xf32>
    %190 = vector.broadcast %189 : vector<8x1xf32> to vector<8x128xf32>
    %191 = arith.subf %183, %190 : vector<8x128xf32>
    %192 = arith.mulf %191, %191 : vector<8x128xf32>
    %cst_119 = arith.constant dense<0.000000e+00> : vector<8xf32>
    %193 = vector.multi_reduction <add>, %192, %cst_119 [1] : vector<8x128xf32> to vector<8xf32>
    %194 = vector.shape_cast %193 : vector<8xf32> to vector<8x1xf32>
    %cst_120 = arith.constant 1.280000e+02 : f32
    %195 = vector.broadcast %cst_120 : f32 to vector<8x1xf32>
    %196 = arith.divf %194, %195 : vector<8x1xf32>
    %cst_121 = arith.constant 9.99999974E-6 : f32
    %197 = vector.broadcast %cst_121 : f32 to vector<8x1xf32>
    %198 = arith.addf %196, %197 : vector<8x1xf32>
    %199 = math.rsqrt %198 : vector<8x1xf32>
    %200 = vector.broadcast %199 : vector<8x1xf32> to vector<8x128xf32>
    %201 = arith.mulf %191, %200 : vector<8x128xf32>
    %202 = vector.broadcast %184 : vector<1x128xf32> to vector<8x128xf32>
    %203 = arith.mulf %201, %202 : vector<8x128xf32>
    %204 = vector.broadcast %185 : vector<1x128xf32> to vector<8x128xf32>
    %205 = arith.addf %203, %204 : vector<8x128xf32>
    %206 = arith.truncf %205 : vector<8x128xf32> to vector<8x128xbf16>
    %c0_122 = arith.constant 0 : index
    %c0_123 = arith.constant 0 : index
    %207 = vector.load %arg8[%c0_122, %c0_123] : memref<128x256xbf16, #tpu.memory_space<vmem>>, vector<128x256xbf16>
    %cst_124 = arith.constant dense<0.000000e+00> : vector<8x256xf32>
    %208 = tpu.matmul %206, %207, %cst_124 {dimension_numbers = #tpu.dot_dimension_numbers<[1], [0], [0], [1], [0, 0, 1, 1], [], []>} : vector<8x128xbf16>, vector<128x256xbf16>, vector<8x256xf32> -> vector<8x256xf32>
    %c0_125 = arith.constant 0 : index
    %c0_126 = arith.constant 0 : index
    %209 = vector.load %arg9[%c0_125, %c0_126] : memref<1x256xf32, #tpu.memory_space<vmem>>, vector<1x256xf32>
    %210 = vector.broadcast %209 : vector<1x256xf32> to vector<8x256xf32>
    %211 = arith.addf %208, %210 : vector<8x256xf32>
    %cst_127 = arith.constant 0.000000e+00 : f32
    %212 = vector.broadcast %cst_127 : f32 to vector<8x256xf32>
    %213 = arith.maximumf %211, %212 : vector<8x256xf32>
    %214 = arith.truncf %213 : vector<8x256xf32> to vector<8x256xbf16>
    %c0_128 = arith.constant 0 : index
    %c0_129 = arith.constant 0 : index
    %215 = vector.load %arg10[%c0_128, %c0_129] : memref<256x128xbf16, #tpu.memory_space<vmem>>, vector<256x128xbf16>
    %cst_130 = arith.constant dense<0.000000e+00> : vector<8x128xf32>
    %216 = tpu.matmul %214, %215, %cst_130 {dimension_numbers = #tpu.dot_dimension_numbers<[1], [0], [0], [1], [0, 0, 1, 1], [], []>} : vector<8x256xbf16>, vector<256x128xbf16>, vector<8x128xf32> -> vector<8x128xf32>
    %c0_131 = arith.constant 0 : index
    %c0_132 = arith.constant 0 : index
    %217 = vector.load %arg11[%c0_131, %c0_132] : memref<1x128xf32, #tpu.memory_space<vmem>>, vector<1x128xf32>
    %218 = vector.broadcast %217 : vector<1x128xf32> to vector<8x128xf32>
    %219 = arith.addf %216, %218 : vector<8x128xf32>
    %220 = arith.addf %205, %219 : vector<8x128xf32>
    %c0_133 = arith.constant 0 : index
    %c0_134 = arith.constant 0 : index
    %221 = vector.load %arg12[%c0_133, %c0_134] : memref<1x128xf32, #tpu.memory_space<vmem>>, vector<1x128xf32>
    %c0_135 = arith.constant 0 : index
    %c0_136 = arith.constant 0 : index
    %222 = vector.load %arg13[%c0_135, %c0_136] : memref<1x128xf32, #tpu.memory_space<vmem>>, vector<1x128xf32>
    %cst_137 = arith.constant dense<0.000000e+00> : vector<8xf32>
    %223 = vector.multi_reduction <add>, %220, %cst_137 [1] : vector<8x128xf32> to vector<8xf32>
    %224 = vector.shape_cast %223 : vector<8xf32> to vector<8x1xf32>
    %cst_138 = arith.constant 1.280000e+02 : f32
    %225 = vector.broadcast %cst_138 : f32 to vector<8x1xf32>
    %226 = arith.divf %224, %225 : vector<8x1xf32>
    %227 = vector.broadcast %226 : vector<8x1xf32> to vector<8x128xf32>
    %228 = arith.subf %220, %227 : vector<8x128xf32>
    %229 = arith.mulf %228, %228 : vector<8x128xf32>
    %cst_139 = arith.constant dense<0.000000e+00> : vector<8xf32>
    %230 = vector.multi_reduction <add>, %229, %cst_139 [1] : vector<8x128xf32> to vector<8xf32>
    %231 = vector.shape_cast %230 : vector<8xf32> to vector<8x1xf32>
    %cst_140 = arith.constant 1.280000e+02 : f32
    %232 = vector.broadcast %cst_140 : f32 to vector<8x1xf32>
    %233 = arith.divf %231, %232 : vector<8x1xf32>
    %cst_141 = arith.constant 9.99999974E-6 : f32
    %234 = vector.broadcast %cst_141 : f32 to vector<8x1xf32>
    %235 = arith.addf %233, %234 : vector<8x1xf32>
    %236 = math.rsqrt %235 : vector<8x1xf32>
    %237 = vector.broadcast %236 : vector<8x1xf32> to vector<8x128xf32>
    %238 = arith.mulf %228, %237 : vector<8x128xf32>
    %239 = vector.broadcast %221 : vector<1x128xf32> to vector<8x128xf32>
    %240 = arith.mulf %238, %239 : vector<8x128xf32>
    %241 = vector.broadcast %222 : vector<1x128xf32> to vector<8x128xf32>
    %242 = arith.addf %240, %241 : vector<8x128xf32>
    %c0_142 = arith.constant 0 : index
    %c0_143 = arith.constant 0 : index
    %243 = vector.load %arg14[%c0_142, %c0_143] : memref<1x128xf32, #tpu.memory_space<vmem>>, vector<1x128xf32>
    %c0_144 = arith.constant 0 : index
    %c0_145 = arith.constant 0 : index
    %244 = vector.load %arg15[%c0_144, %c0_145] : memref<1x128xf32, #tpu.memory_space<vmem>>, vector<1x128xf32>
    %cst_146 = arith.constant dense<0.000000e+00> : vector<8xf32>
    %245 = vector.multi_reduction <add>, %242, %cst_146 [1] : vector<8x128xf32> to vector<8xf32>
    %246 = vector.shape_cast %245 : vector<8xf32> to vector<8x1xf32>
    %cst_147 = arith.constant 1.280000e+02 : f32
    %247 = vector.broadcast %cst_147 : f32 to vector<8x1xf32>
    %248 = arith.divf %246, %247 : vector<8x1xf32>
    %249 = vector.broadcast %248 : vector<8x1xf32> to vector<8x128xf32>
    %250 = arith.subf %242, %249 : vector<8x128xf32>
    %251 = arith.mulf %250, %250 : vector<8x128xf32>
    %cst_148 = arith.constant dense<0.000000e+00> : vector<8xf32>
    %252 = vector.multi_reduction <add>, %251, %cst_148 [1] : vector<8x128xf32> to vector<8xf32>
    %253 = vector.shape_cast %252 : vector<8xf32> to vector<8x1xf32>
    %cst_149 = arith.constant 1.280000e+02 : f32
    %254 = vector.broadcast %cst_149 : f32 to vector<8x1xf32>
    %255 = arith.divf %253, %254 : vector<8x1xf32>
    %cst_150 = arith.constant 9.99999974E-6 : f32
    %256 = vector.broadcast %cst_150 : f32 to vector<8x1xf32>
    %257 = arith.addf %255, %256 : vector<8x1xf32>
    %258 = math.rsqrt %257 : vector<8x1xf32>
    %259 = vector.broadcast %258 : vector<8x1xf32> to vector<8x128xf32>
    %260 = arith.mulf %250, %259 : vector<8x128xf32>
    %261 = vector.broadcast %243 : vector<1x128xf32> to vector<8x128xf32>
    %262 = arith.mulf %260, %261 : vector<8x128xf32>
    %263 = vector.broadcast %244 : vector<1x128xf32> to vector<8x128xf32>
    %264 = arith.addf %262, %263 : vector<8x128xf32>
    %c0_151 = arith.constant 0 : index
    %c0_152 = arith.constant 0 : index
    %c0_153 = arith.constant 0 : index
    %265 = vector.load %arg16[%c0_151, %c0_152, %c0_153] : memref<1x8x128xf32, #tpu.memory_space<vmem>>, vector<1x8x128xf32>
    %266 = vector.shape_cast %265 : vector<1x8x128xf32> to vector<8x128xf32>
    %267 = vector.shape_cast %264 : vector<8x128xf32> to vector<1x8x128xf32>
    tpu.vector_store %arg16[%c0_151, %c0_152, %c0_153], %267 {strides = array<i32>} : memref<1x8x128xf32, #tpu.memory_space<vmem>>, vector<1x8x128xf32>,
    return
  }
  func.func @transform_0(%arg0: i32) -> (i32, i32, i32) {
    %c0_i32 = arith.constant 0 : i32
    %c0_i32_0 = arith.constant 0 : i32
    %c0_i32_1 = arith.constant 0 : i32
    return %arg0, %c0_i32, %c0_i32_0 : i32, i32, i32
  }
  func.func @transform_1(%arg0: i32) -> (i32, i32, i32) {
    %c0_i32 = arith.constant 0 : i32
    %c0_i32_0 = arith.constant 0 : i32
    %c0_i32_1 = arith.constant 0 : i32
    %c0_i32_2 = arith.constant 0 : i32
    return %c0_i32, %c0_i32_0, %c0_i32_1 : i32, i32, i32
  }
  func.func @transform_2(%arg0: i32) -> (i32, i32, i32) {
    %c0_i32 = arith.constant 0 : i32
    %c0_i32_0 = arith.constant 0 : i32
    %c0_i32_1 = arith.constant 0 : i32
    %c0_i32_2 = arith.constant 0 : i32
    return %c0_i32, %c0_i32_0, %c0_i32_1 : i32, i32, i32
  }
  func.func @transform_3(%arg0: i32) -> (i32, i32, i32) {
    %c0_i32 = arith.constant 0 : i32
    %c0_i32_0 = arith.constant 0 : i32
    %c0_i32_1 = arith.constant 0 : i32
    %c0_i32_2 = arith.constant 0 : i32
    return %c0_i32, %c0_i32_0, %c0_i32_1 : i32, i32, i32
  }
  func.func @transform_4(%arg0: i32) -> (i32, i32) {
    %c0_i32 = arith.constant 0 : i32
    %c0_i32_0 = arith.constant 0 : i32
    %c0_i32_1 = arith.constant 0 : i32
    return %c0_i32, %c0_i32_0 : i32, i32
  }
  func.func @transform_5(%arg0: i32) -> (i32, i32) {
    %c0_i32 = arith.constant 0 : i32
    %c0_i32_0 = arith.constant 0 : i32
    %c0_i32_1 = arith.constant 0 : i32
    return %c0_i32, %c0_i32_0 : i32, i32
  }
  func.func @transform_6(%arg0: i32) -> (i32, i32) {
    %c0_i32 = arith.constant 0 : i32
    %c0_i32_0 = arith.constant 0 : i32
    %c0_i32_1 = arith.constant 0 : i32
    return %c0_i32, %c0_i32_0 : i32, i32
  }
  func.func @transform_7(%arg0: i32) -> (i32, i32) {
    %c0_i32 = arith.constant 0 : i32
    %c0_i32_0 = arith.constant 0 : i32
    %c0_i32_1 = arith.constant 0 : i32
    return %c0_i32, %c0_i32_0 : i32, i32
  }
  func.func @transform_8(%arg0: i32) -> (i32, i32) {
    %c0_i32 = arith.constant 0 : i32
    %c0_i32_0 = arith.constant 0 : i32
    %c0_i32_1 = arith.constant 0 : i32
    return %c0_i32, %c0_i32_0 : i32, i32
  }
  func.func @transform_9(%arg0: i32) -> (i32, i32) {
    %c0_i32 = arith.constant 0 : i32
    %c0_i32_0 = arith.constant 0 : i32
    %c0_i32_1 = arith.constant 0 : i32
    return %c0_i32, %c0_i32_0 : i32, i32
  }
  func.func @transform_10(%arg0: i32) -> (i32, i32) {
    %c0_i32 = arith.constant 0 : i32
    %c0_i32_0 = arith.constant 0 : i32
    %c0_i32_1 = arith.constant 0 : i32
    return %c0_i32, %c0_i32_0 : i32, i32
  }
  func.func @transform_11(%arg0: i32) -> (i32, i32) {
    %c0_i32 = arith.constant 0 : i32
    %c0_i32_0 = arith.constant 0 : i32
    %c0_i32_1 = arith.constant 0 : i32
    return %c0_i32, %c0_i32_0 : i32, i32
  }
  func.func @transform_12(%arg0: i32) -> (i32, i32) {
    %c0_i32 = arith.constant 0 : i32
    %c0_i32_0 = arith.constant 0 : i32
    %c0_i32_1 = arith.constant 0 : i32
    return %c0_i32, %c0_i32_0 : i32, i32
  }
  func.func @transform_13(%arg0: i32) -> (i32, i32) {
    %c0_i32 = arith.constant 0 : i32
    %c0_i32_0 = arith.constant 0 : i32
    %c0_i32_1 = arith.constant 0 : i32
    return %c0_i32, %c0_i32_0 : i32, i32
  }
  func.func @transform_14(%arg0: i32) -> (i32, i32) {
    %c0_i32 = arith.constant 0 : i32
    %c0_i32_0 = arith.constant 0 : i32
    %c0_i32_1 = arith.constant 0 : i32
    return %c0_i32, %c0_i32_0 : i32, i32
  }
  func.func @transform_15(%arg0: i32) -> (i32, i32, i32) {
    %c0_i32 = arith.constant 0 : i32
    %c0_i32_0 = arith.constant 0 : i32
    %c0_i32_1 = arith.constant 0 : i32
    return %arg0, %c0_i32, %c0_i32_0 : i32, i32, i32
  }
}

</mosaic_0001>

<llo_original>
// kernel: transformer_question_encoder_forward.3
$region0: #{transformer_question_encoder_forward.3}
  #allocation0 [shape = 'u32[]', space=smem, size = 0x4, offset = 0x4, fixed_abs, tag = 'smem constant byte address 0x4 - core index']
  #allocation1 [shape = 'u32[144,128]{1,0:T(1,128)}', space=vmem, size = 0x12000, scoped, tag = 'internal scratch']
  %s0 = inlined_call_operand.vmem [shape: f32[2,8,32], index: 0, kind: input, shape index: {}]
  %s1 = inlined_call_operand.vmem [shape: bf16[32,128], index: 1, kind: input, shape index: {}]
  %s2 = inlined_call_operand.vmem [shape: f32[1,128], index: 2, kind: input, shape index: {}]
  %s3 = inlined_call_operand.vmem [shape: f32[2,8,128], index: 3, kind: output, shape index: {}]
  %s4 = sld [smem:[#allocation0]]
  $region22: #{transformer_question_encoder_forward.3} parent=0
    _
  %s6 = ssub.s32 1, %s4
  %s7 = scalar_select 0, %s6, %s4
  // Predicated region
  $region2: #{transformer_question_encoder_forward.3} parent=0 // pred_check
    _
  $region3: #{transformer_question_encoder_forward.3} parent=0 // pred_check_branch
    %9 = sbr.rel (0) target = $region5
  $region4: #{transformer_question_encoder_forward.3} parent=0 // pred_region
    _
  $region5: #{transformer_question_encoder_forward.3} parent=0 // pred_fallthru
    _
  // Predicated region
  $region6: #{transformer_question_encoder_forward.3} parent=0 // pred_check
    _
  $region7: #{transformer_question_encoder_forward.3} parent=0 // pred_check_branch
    %11 = sbr.rel (0) target = $region9
  $region8: #{transformer_question_encoder_forward.3} parent=0 // pred_region
    _
  $region9: #{transformer_question_encoder_forward.3} parent=0 // pred_fallthru
    _
  // Predicated region
  $region10: #{transformer_question_encoder_forward.3} parent=0 // pred_check
    _
  $region11: #{transformer_question_encoder_forward.3} parent=0 // pred_check_branch
    %13 = sbr.rel (0) target = $region13
  $region12: #{transformer_question_encoder_forward.3} parent=0 // pred_region
    _
  $region13: #{transformer_question_encoder_forward.3} parent=0 // pred_fallthru
    _
  %v15 = vld [vmem:[%s0] sm:$0xff]
  %v16 = vld [vmem:[%s0 + $0x8] sm:$0xff]
  %v17 = vpack.c.bf16 %v16, %v15
  %v18 = vld [vmem:[%s1] sm:$0xf]
  %v19 = vld [vmem:[%s1 + $0x4] sm:$0xf]
  %v20 = vld [vmem:[%s1 + $0x8] sm:$0xf]
  %v21 = vld [vmem:[%s1 + $0xc] sm:$0xf]
  %v22 = vld [vmem:[%s2] sm:$0x1]
  %v24 = vlaneseq
  %v25 = vshrl.u32 %v24, 7
  %v26 = vsub.s32 0, %v25
  %v27 = vrot.slane %v22, %v26
  %v33 = vunpack.c.l.b16 %v18
  %v34 = vunpack.c.l.b16 %v19
  %v35 = vunpack.c.l.b16 %v20
  %v36 = vunpack.c.l.b16 %v21
  %v37 = vpack.c.b16 %v34, %v33
  %v38 = vpack.c.b16 %v36, %v35
  %vm41 = vcmask 261120
  %v43 = vsel %vm41, %v17, 0
  %45 = vmatprep.subr.bf16.mxu0 0
  %46 = vmatpush1.bf16.msra.mxu0 %v37
  %47 = vmatprep.subr.bf16.mxu0 0
  %48 = vmatpush1.bf16.msra.mxu0 %v38
  %49 = vmatprep.subr.bf16.mxu0 0
  %50 = vmatpush1.bf16.msra.mxu0 0
  %51 = vmatprep.subr.bf16.mxu0 0
  %52 = vmatpush1.bf16.msra.mxu0 0
  %53 = vmatprep.subr.bf16.mxu0 0
  %54 = vmatpush1.bf16.msra.mxu0 0
  %55 = vmatprep.subr.bf16.mxu0 0
  %56 = vmatpush1.bf16.msra.mxu0 0
  %57 = vmatprep.subr.bf16.mxu0 0
  %58 = vmatpush1.bf16.msra.mxu0 0
  %59 = vmatprep.subr.bf16.mxu0 0
  %60 = vmatpush1.bf16.msra.mxu0 0
  %61 = vmatprep.subr.bf16.mxu0 0
  %62 = vmatpush1.bf16.msra.mxu0 0
  %63 = vmatprep.subr.bf16.mxu0 0
  %64 = vmatpush1.bf16.msra.mxu0 0
  %65 = vmatprep.subr.bf16.mxu0 0
  %66 = vmatpush1.bf16.msra.mxu0 0
  %67 = vmatprep.subr.bf16.mxu0 0
  %68 = vmatpush1.bf16.msra.mxu0 0
  %69 = vmatprep.subr.bf16.mxu0 0
  %70 = vmatpush1.bf16.msra.mxu0 0
  %71 = vmatprep.subr.bf16.mxu0 0
  %72 = vmatpush1.bf16.msra.mxu0 0
  %73 = vmatprep.subr.bf16.mxu0 0
  %74 = vmatpush1.bf16.msra.mxu0 0
  %75 = vmatprep.subr.bf16.mxu0 0
  %76 = vmatpush1.bf16.msra.mxu0 0
  %77 = vmatprep.mubr.bf16.mxu0 0
  %78 = vmatmul.mubr.bf16.gmra.mrb[0].mxu0 %v43
  %v79 = vpop.f32.mrb[0].mxu0
  %v80 = vadd.f32 %v27, %v79
  %v81 = vpop.f32.mrb[0].mxu0
  %v82 = vpop.f32.mrb[0].mxu0
  %v83 = vadd.f32 %v27, %v82
  %v84 = vpop.f32.mrb[0].mxu0
  %85 = vdwg.mxu0
  %v86 = vmul.f32 %v80, 11.313708
  %v87 = vmul.f32 %v83, 11.313708
  %v88 = vlaneseq
  %v89 = vand.u32 %v88, 127
  %v90 = vand.u32 %v89, 1
  %v91 = vsub.s32 %v89, %v90
  %v92 = vcvt.s32.f32 %v91
  %v93 = vmul.f32 %v92, -0.071955785
  %v94 = vmul.f32 %v93, 1.442695
  %v95 = vpow.pop %v94
  %v96 = vcvt.s32.f32 %v90
  %v97 = vmul.f32 %v96, 1.5707964
  %v98 = vlaneseq
  %v99 = vshrl.u32 %v98, 7
  %v100 = vcvt.s32.f32 %v99
  %v101 = vmul.f32 %v100, %v95
  %v102 = vadd.f32 %v101, %v97
  %v103 = vand.u32 2147483647, %v102
  %vm104 = vcmp.le.f32.partialorder %v103, 0.7853982
  %vm105 = vcmp.lt.s32.totalorder %v102, 0
  %v106 = vand.u32 %v102, 2139095040
  %v107 = vshrl.u32 %v106, 23
  %v108 = vsub.s32 %v107, 127
  %v109 = vand.u32 2147483647, %v102
  %v110 = vand.u32 %v109, 8388607
  %v111 = vor.u32 %v110, 8388608
  %v112 = vsub.s32 0, %v111
  %v113 = vadd.s32 %v108, 1
  %vm114 = vcmp.gt.s32.totalorder %v113, 0
  %v115 = vsel %vm114, %v113, 0
  %v116 = vshrl.u32 %v115, 5
  %v117 = vand.u32 %v115, 31
  %v118 = vsub.s32 32, %v117
  %v119 = vshrl.u32 683565275, %v118
  %v120 = vshll.u32 683565275, %v117
  %v121 = vshrl.u32 2475754826, %v118
  %v122 = vor.u32 %v120, %v121
  %v123 = vshll.u32 2475754826, %v117
  %v124 = vshrl.u32 2131351028, %v118
  %v125 = vor.u32 %v123, %v124
  %v126 = vshll.u32 2131351028, %v117
  %v127 = vshrl.u32 2102212464, %v118
  %v128 = vor.u32 %v126, %v127
  %v129 = vshll.u32 2102212464, %v117
  %v130 = vshrl.u32 920167782, %v118
  %v131 = vor.u32 %v129, %v130
  %v132 = vshll.u32 920167782, %v117
  %v133 = vshrl.u32 1326507024, %v118
  %v134 = vor.u32 %v132, %v133
  %vm135 = vcmp.lt.s32.totalorder %v116, 1
  %vm136 = vcmp.lt.s32.totalorder %v116, 2
  %vm137 = vcmp.lt.s32.totalorder %v116, 3
  %vm138 = vcmp.lt.s32.totalorder %v116, 4
  %v139 = vsel %vm135, %v119, %v122
  %v140 = vsel %vm138, %v128, 2102212464
  %v141 = vsel %vm137, %v125, %v140
  %v142 = vsel %vm136, %v139, %v141
  %v143 = vsel %vm135, %v122, %v125
  %v144 = vsel %vm138, %v131, 920167782
  %v145 = vsel %vm137, %v128, %v144
  %v146 = vsel %vm136, %v143, %v145
  %v147 = vsel %vm135, %v125, %v128
  %v148 = vsel %vm138, %v134, 1326507024
  %v149 = vsel %vm137, %v131, %v148
  %v150 = vsel %vm136, %v147, %v149
  %v151 = vshll.u32 %v111, 8
  %v152 = vmul.u32.u64.compose %v151, %v150
  %v153 = vextract.low.u32 %v152
  %v154 = vextract.high.u32 %v152
  %v155 = vmul.u32.u64.compose %v151, %v146
  %v156 = vextract.low.u32 %v155
  %v157 = vextract.high.u32 %v155
  %v158 = vmul.u32 %v151, %v142
  %v159 = vadd.s32 %v154, %v156
  %vm160 = vc.u32 %v154, %v156
  %v161 = vadd.s32 %v157, 1
  %v162 = vsel %vm160, %v161, %v157
  %v163 = vadd.s32 %v158, %v162
  %v164 = vadd.s32 %v163, 536870912
  %v165 = vshrl.u32 %v164, 30
  %v166 = vshll.u32 %v165, 30
  %v167 = vsub.s32 %v163, %v166
  %vm168 = vcmp.lt.s32.totalorder %v167, 0
  %v169 = vsub.s32 0, %v167
  %v170 = vsel %vm168, %v169, %v167
  %v171 = vclz %v170
  %v172 = vsub.s32 %v171, 2
  %vm173 = vcmp.gt.s32.totalorder 0, %v172
  %v174 = vsel %vm173, 0, %v172
  %v175 = vsub.s32 32, %v174
  %v176 = vshll.u32 %v167, %v174
  %v177 = vshrl.u32 %v159, %v175
  %v178 = vor.u32 %v176, %v177
  %v179 = vsub.s32 4294967266, %v174
  %v180 = vadd.s32 %v179, 127
  %v181 = vshll.u32 %v180, 23
  %v182 = vor.u32 4788187, %v181
  %v183 = vand.u32 2147483647, %v182
  %v185 = vcvt.s32.f32 %v178
  %v186 = vmul.f32 %v185, %v183
  %v187 = vxor.u32 %v186, 2147483648
  %v188 = vsel %vm105, %v187, %v186
  %v189 = vsub.s32 4, %v165
  %v190 = vsel %vm105, %v189, %v165
  %v191 = vsel %vm104, %v102, %v188
  %v192 = vsel %vm104, 0, %v190
  %v193 = vcosq.f32.pop %v191
  %v194 = vsinq.f32.pop %v191
  %vm195 = vweird.f32 %v102
  %v196 = vadd.s32 %v192, 3
  %v197 = vand.u32 %v196, 3
  %vm198 = vcmp.lt.s32.totalorder %v197, 2
  %vm199 = vcmp.eq.s32.totalorder %v197, 0
  %v200 = vxor.u32 %v194, 2147483648
  %v201 = vsel %vm199, %v193, %v200
  %vm202 = vcmp.eq.s32.totalorder %v197, 2
  %v203 = vxor.u32 %v193, 2147483648
  %v204 = vsel %vm202, %v203, %v194
  %v205 = vsel %vm198, %v201, %v204
  %v206 = vsel %vm195, nan, %v205
  %v207 = vadd.f32 %v86, %v206
  %v208 = vadd.f32 %v87, %v206
  %209 = vst [vmem:[%s3] sm:$0xff] %v207
  %210 = vst [vmem:[%s3 + $0x8] sm:$0xff] %v208
  // Predicated region
  $region14: #{transformer_question_encoder_forward.3} parent=0 // pred_check
    _
  $region15: #{transformer_question_encoder_forward.3} parent=0 // pred_check_branch
    %212 = sbr.rel (0) target = $region17
  $region16: #{transformer_question_encoder_forward.3} parent=0 // pred_region
    _
  $region17: #{transformer_question_encoder_forward.3} parent=0 // pred_fallthru
    _
  // Predicated region
  $region18: #{transformer_question_encoder_forward.3} parent=0 // pred_check
    _
  $region19: #{transformer_question_encoder_forward.3} parent=0 // pred_check_branch
    %214 = sbr.rel (0) target = $region21
  $region20: #{transformer_question_encoder_forward.3} parent=0 // pred_region
    _
  $region21: #{transformer_question_encoder_forward.3} parent=0 // pred_fallthru
    _

// kernel: transformer_question_encoder_forward.4
$region0: #{transformer_question_encoder_forward.4}
  #allocation0 [shape = 'u32[]', space=smem, size = 0x4, offset = 0x4, fixed_abs, tag = 'smem constant byte address 0x4 - core index']
  #allocation1 [shape = 'u32[144,128]{1,0:T(1,128)}', space=vmem, size = 0x12000, scoped, tag = 'internal scratch']
  %s0 = inlined_call_operand.vmem [shape: f32[2,8,128], index: 0, kind: input, shape index: {}, may-alias: {0,13}]
  %s1 = inlined_call_operand.vmem [shape: bf16[12,128,32], index: 1, kind: input, shape index: {}]
  %s2 = inlined_call_operand.vmem [shape: f32[12,1,32], index: 2, kind: input, shape index: {}]
  %s3 = inlined_call_operand.vmem [shape: bf16[4,32,128], index: 3, kind: input, shape index: {}]
  %s4 = inlined_call_operand.vmem [shape: f32[1,128], index: 4, kind: input, shape index: {}]
  %s5 = inlined_call_operand.vmem [shape: f32[1,128], index: 5, kind: input, shape index: {}]
  %s6 = inlined_call_operand.vmem [shape: f32[1,128], index: 6, kind: input, shape index: {}]
  %s7 = inlined_call_operand.vmem [shape: bf16[128,256], index: 7, kind: input, shape index: {}]
  %s8 = inlined_call_operand.vmem [shape: f32[1,256], index: 8, kind: input, shape index: {}]
  %s9 = inlined_call_operand.vmem [shape: bf16[256,128], index: 9, kind: input, shape index: {}]
  %s10 = inlined_call_operand.vmem [shape: f32[1,128], index: 10, kind: input, shape index: {}]
  %s11 = inlined_call_operand.vmem [shape: f32[1,128], index: 11, kind: input, shape index: {}]
  %s12 = inlined_call_operand.vmem [shape: f32[1,128], index: 12, kind: input, shape index: {}]
  %s13 = inlined_call_operand.vmem [shape: f32[2,8,128], index: 13, kind: output, shape index: {}, may-alias: {0,13}]
  %s14 = sld [smem:[#allocation0]]
  $region85: #{transformer_question_encoder_forward.4} parent=0
    _
  %s16 = ssub.s32 1, %s14
  %s17 = scalar_select 0, %s16, %s14
  loop: start=0, step=1, limit=4
  $region2: #{transformer_question_encoder_forward.4} parent=0 // loop_pre_header
    _
  $region3: #{transformer_question_encoder_forward.4} parent=0 // loop_header
    %s19 = sphi 0, %s23
    %p20 = scmp.ge.s32.totalorder %s19, 4
    %s29 = sphi 0, %s31
    %s32 = sphi 0, %s29
    %s33 = sphi 0, %s32
    %s49 = sphi 0, %s33
    %s53 = sphi 0, %s53
    %s55 = sphi 0, %s53
    %s56 = sphi 0, %s55
    %s70 = sphi 0, %s56
    %s74 = sphi 0, %s74
    %s76 = sphi 0, %s74
    %s77 = sphi 0, %s76
    %s91 = sphi 0, %s77
    %s95 = sphi 0, %s95
    %s97 = sphi 0, %s95
    %s98 = sphi 0, %s97
    %s112 = sphi 0, %s98
    %s116 = sphi 0, %s116
    %s118 = sphi 0, %s116
    %s119 = sphi 0, %s118
    %s133 = sphi 0, %s119
    %s137 = sphi 0, %s137
    %s139 = sphi 0, %s137
    %s140 = sphi 0, %s139
    %s154 = sphi 0, %s140
    %s158 = sphi 0, %s158
    %s160 = sphi 0, %s158
    %s161 = sphi 0, %s160
    %s175 = sphi 0, %s161
    %s179 = sphi 0, %s179
    %s181 = sphi 0, %s179
    %s182 = sphi 0, %s181
    %s196 = sphi 0, %s182
    %s200 = sphi 0, %s200
    %s202 = sphi 0, %s200
    %s203 = sphi 0, %s202
    %s217 = sphi 0, %s203
    %s221 = sphi 0, %s221
    %s223 = sphi 0, %s221
    %s224 = sphi 0, %s223
    %s238 = sphi 0, %s224
    %s242 = sphi 0, %s242
    %s244 = sphi 0, %s242
    %s245 = sphi 0, %s244
    %s259 = sphi 0, %s245
    %s263 = sphi 0, %s263
    %s265 = sphi 0, %s263
    %s266 = sphi 0, %s265
    %s280 = sphi 0, %s266
    %s284 = sphi 0, %s284
    %s286 = sphi 0, %s284
    %s287 = sphi 0, %s286
    %s301 = sphi 0, %s287
    %s307 = sphi 0, %s309
    %s310 = sphi 0, %s307
    %s311 = sphi 0, %s310
    %s327 = sphi 0, %s311
  $region4: #{transformer_question_encoder_forward.4} parent=0 // loop_header_branch
    %22 = sbr.rel (%p20) target = $region8
  $region5: #{transformer_question_encoder_forward.4} parent=0 // loop_body
    %s24 = ssub.s32 %s19, 1
    %s25 = ssub.s32 %s19, 2
    %s26 = sadd.s32 %s19, 1
    %s27 = ssub.s32 %s19, %s26
    %p28 = scmp.eq.s32.totalorder %s27, 0
    %s30 = sadd.s32 %s29, 1
    %s31 = scalar_select %p28, %s29, %s30
    %p34 = pneg %p28
    %p35 = scmp.eq.s32.totalorder %s19, 1
    %p36 = por %p34, %p35
    %p37 = scmp.ne.s32.totalorder %s29, %s32
    %p38 = scmp.eq.s32.totalorder %s19, 0
    %p39 = por %p37, %p38
    %p40 = scmp.ne.s32.totalorder %s29, %s32
    %p41 = scmp.eq.s32.totalorder %s24, 1
    %p42 = por %p40, %p41
    %p43 = scmp.ne.s32.totalorder %s32, %s33
    %p44 = scmp.eq.s32.totalorder %s24, 0
    %p45 = por %p43, %p44
    %p46 = scmp.ne.s32.totalorder %s32, %s33
    %p47 = scmp.eq.s32.totalorder %s25, 1
    %p48 = por %p46, %p47
    %p50 = scmp.ne.s32.totalorder %s33, %s49
    %p51 = scmp.eq.s32.totalorder %s25, 0
    %p52 = por %p50, %p51
    %s54 = sadd.s32 %s53, 1
    %p57 = scmp.eq.s32.totalorder %s19, 1
    %p58 = scmp.ne.s32.totalorder %s53, %s55
    %p59 = scmp.eq.s32.totalorder %s19, 0
    %p60 = por %p58, %p59
    %p61 = scmp.ne.s32.totalorder %s53, %s55
    %p62 = scmp.eq.s32.totalorder %s24, 1
    %p63 = por %p61, %p62
    %p64 = scmp.ne.s32.totalorder %s55, %s56
    %p65 = scmp.eq.s32.totalorder %s24, 0
    %p66 = por %p64, %p65
    %p67 = scmp.ne.s32.totalorder %s55, %s56
    %p68 = scmp.eq.s32.totalorder %s25, 1
    %p69 = por %p67, %p68
    %p71 = scmp.ne.s32.totalorder %s56, %s70
    %p72 = scmp.eq.s32.totalorder %s25, 0
    %p73 = por %p71, %p72
    %s75 = sadd.s32 %s74, 1
    %p78 = scmp.eq.s32.totalorder %s19, 1
    %p79 = scmp.ne.s32.totalorder %s74, %s76
    %p80 = scmp.eq.s32.totalorder %s19, 0
    %p81 = por %p79, %p80
    %p82 = scmp.ne.s32.totalorder %s74, %s76
    %p83 = scmp.eq.s32.totalorder %s24, 1
    %p84 = por %p82, %p83
    %p85 = scmp.ne.s32.totalorder %s76, %s77
    %p86 = scmp.eq.s32.totalorder %s24, 0
    %p87 = por %p85, %p86
    %p88 = scmp.ne.s32.totalorder %s76, %s77
    %p89 = scmp.eq.s32.totalorder %s25, 1
    %p90 = por %p88, %p89
    %p92 = scmp.ne.s32.totalorder %s77, %s91
    %p93 = scmp.eq.s32.totalorder %s25, 0
    %p94 = por %p92, %p93
    %s96 = sadd.s32 %s95, 1
    %p99 = scmp.eq.s32.totalorder %s19, 1
    %p100 = scmp.ne.s32.totalorder %s95, %s97
    %p101 = scmp.eq.s32.totalorder %s19, 0
    %p102 = por %p100, %p101
    %p103 = scmp.ne.s32.totalorder %s95, %s97
    %p104 = scmp.eq.s32.totalorder %s24, 1
    %p105 = por %p103, %p104
    %p106 = scmp.ne.s32.totalorder %s97, %s98
    %p107 = scmp.eq.s32.totalorder %s24, 0
    %p108 = por %p106, %p107
    %p109 = scmp.ne.s32.totalorder %s97, %s98
    %p110 = scmp.eq.s32.totalorder %s25, 1
    %p111 = por %p109, %p110
    %p113 = scmp.ne.s32.totalorder %s98, %s112
    %p114 = scmp.eq.s32.totalorder %s25, 0
    %p115 = por %p113, %p114
    %s117 = sadd.s32 %s116, 1
    %p120 = scmp.eq.s32.totalorder %s19, 1
    %p121 = scmp.ne.s32.totalorder %s116, %s118
    %p122 = scmp.eq.s32.totalorder %s19, 0
    %p123 = por %p121, %p122
    %p124 = scmp.ne.s32.totalorder %s116, %s118
    %p125 = scmp.eq.s32.totalorder %s24, 1
    %p126 = por %p124, %p125
    %p127 = scmp.ne.s32.totalorder %s118, %s119
    %p128 = scmp.eq.s32.totalorder %s24, 0
    %p129 = por %p127, %p128
    %p130 = scmp.ne.s32.totalorder %s118, %s119
    %p131 = scmp.eq.s32.totalorder %s25, 1
    %p132 = por %p130, %p131
    %p134 = scmp.ne.s32.totalorder %s119, %s133
    %p135 = scmp.eq.s32.totalorder %s25, 0
    %p136 = por %p134, %p135
    %s138 = sadd.s32 %s137, 1
    %p141 = scmp.eq.s32.totalorder %s19, 1
    %p142 = scmp.ne.s32.totalorder %s137, %s139
    %p143 = scmp.eq.s32.totalorder %s19, 0
    %p144 = por %p142, %p143
    %p145 = scmp.ne.s32.totalorder %s137, %s139
    %p146 = scmp.eq.s32.totalorder %s24, 1
    %p147 = por %p145, %p146
    %p148 = scmp.ne.s32.totalorder %s139, %s140
    %p149 = scmp.eq.s32.totalorder %s24, 0
    %p150 = por %p148, %p149
    %p151 = scmp.ne.s32.totalorder %s139, %s140
    %p152 = scmp.eq.s32.totalorder %s25, 1
    %p153 = por %p151, %p152
    %p155 = scmp.ne.s32.totalorder %s140, %s154
    %p156 = scmp.eq.s32.totalorder %s25, 0
    %p157 = por %p155, %p156
    %s159 = sadd.s32 %s158, 1
    %p162 = scmp.eq.s32.totalorder %s19, 1
    %p163 = scmp.ne.s32.totalorder %s158, %s160
    %p164 = scmp.eq.s32.totalorder %s19, 0
    %p165 = por %p163, %p164
    %p166 = scmp.ne.s32.totalorder %s158, %s160
    %p167 = scmp.eq.s32.totalorder %s24, 1
    %p168 = por %p166, %p167
    %p169 = scmp.ne.s32.totalorder %s160, %s161
    %p170 = scmp.eq.s32.totalorder %s24, 0
    %p171 = por %p169, %p170
    %p172 = scmp.ne.s32.totalorder %s160, %s161
    %p173 = scmp.eq.s32.totalorder %s25, 1
    %p174 = por %p172, %p173
    %p176 = scmp.ne.s32.totalorder %s161, %s175
    %p177 = scmp.eq.s32.totalorder %s25, 0
    %p178 = por %p176, %p177
    %s180 = sadd.s32 %s179, 1
    %p183 = scmp.eq.s32.totalorder %s19, 1
    %p184 = scmp.ne.s32.totalorder %s179, %s181
    %p185 = scmp.eq.s32.totalorder %s19, 0
    %p186 = por %p184, %p185
    %p187 = scmp.ne.s32.totalorder %s179, %s181
    %p188 = scmp.eq.s32.totalorder %s24, 1
    %p189 = por %p187, %p188
    %p190 = scmp.ne.s32.totalorder %s181, %s182
    %p191 = scmp.eq.s32.totalorder %s24, 0
    %p192 = por %p190, %p191
    %p193 = scmp.ne.s32.totalorder %s181, %s182
    %p194 = scmp.eq.s32.totalorder %s25, 1
    %p195 = por %p193, %p194
    %p197 = scmp.ne.s32.totalorder %s182, %s196
    %p198 = scmp.eq.s32.totalorder %s25, 0
    %p199 = por %p197, %p198
    %s201 = sadd.s32 %s200, 1
    %p204 = scmp.eq.s32.totalorder %s19, 1
    %p205 = scmp.ne.s32.totalorder %s200, %s202
    %p206 = scmp.eq.s32.totalorder %s19, 0
    %p207 = por %p205, %p206
    %p208 = scmp.ne.s32.totalorder %s200, %s202
    %p209 = scmp.eq.s32.totalorder %s24, 1
    %p210 = por %p208, %p209
    %p211 = scmp.ne.s32.totalorder %s202, %s203
    %p212 = scmp.eq.s32.totalorder %s24, 0
    %p213 = por %p211, %p212
    %p214 = scmp.ne.s32.totalorder %s202, %s203
    %p215 = scmp.eq.s32.totalorder %s25, 1
    %p216 = por %p214, %p215
    %p218 = scmp.ne.s32.totalorder %s203, %s217
    %p219 = scmp.eq.s32.totalorder %s25, 0
    %p220 = por %p218, %p219
    %s222 = sadd.s32 %s221, 1
    %p225 = scmp.eq.s32.totalorder %s19, 1
    %p226 = scmp.ne.s32.totalorder %s221, %s223
    %p227 = scmp.eq.s32.totalorder %s19, 0
    %p228 = por %p226, %p227
    %p229 = scmp.ne.s32.totalorder %s221, %s223
    %p230 = scmp.eq.s32.totalorder %s24, 1
    %p231 = por %p229, %p230
    %p232 = scmp.ne.s32.totalorder %s223, %s224
    %p233 = scmp.eq.s32.totalorder %s24, 0
    %p234 = por %p232, %p233
    %p235 = scmp.ne.s32.totalorder %s223, %s224
    %p236 = scmp.eq.s32.totalorder %s25, 1
    %p237 = por %p235, %p236
    %p239 = scmp.ne.s32.totalorder %s224, %s238
    %p240 = scmp.eq.s32.totalorder %s25, 0
    %p241 = por %p239, %p240
    %s243 = sadd.s32 %s242, 1
    %p246 = scmp.eq.s32.totalorder %s19, 1
    %p247 = scmp.ne.s32.totalorder %s242, %s244
    %p248 = scmp.eq.s32.totalorder %s19, 0
    %p249 = por %p247, %p248
    %p250 = scmp.ne.s32.totalorder %s242, %s244
    %p251 = scmp.eq.s32.totalorder %s24, 1
    %p252 = por %p250, %p251
    %p253 = scmp.ne.s32.totalorder %s244, %s245
    %p254 = scmp.eq.s32.totalorder %s24, 0
    %p255 = por %p253, %p254
    %p256 = scmp.ne.s32.totalorder %s244, %s245
    %p257 = scmp.eq.s32.totalorder %s25, 1
    %p258 = por %p256, %p257
    %p260 = scmp.ne.s32.totalorder %s245, %s259
    %p261 = scmp.eq.s32.totalorder %s25, 0
    %p262 = por %p260, %p261
    %s264 = sadd.s32 %s263, 1
    %p267 = scmp.eq.s32.totalorder %s19, 1
    %p268 = scmp.ne.s32.totalorder %s263, %s265
    %p269 = scmp.eq.s32.totalorder %s19, 0
    %p270 = por %p268, %p269
    %p271 = scmp.ne.s32.totalorder %s263, %s265
    %p272 = scmp.eq.s32.totalorder %s24, 1
    %p273 = por %p271, %p272
    %p274 = scmp.ne.s32.totalorder %s265, %s266
    %p275 = scmp.eq.s32.totalorder %s24, 0
    %p276 = por %p274, %p275
    %p277 = scmp.ne.s32.totalorder %s265, %s266
    %p278 = scmp.eq.s32.totalorder %s25, 1
    %p279 = por %p277, %p278
    %p281 = scmp.ne.s32.totalorder %s266, %s280
    %p282 = scmp.eq.s32.totalorder %s25, 0
    %p283 = por %p281, %p282
    %s285 = sadd.s32 %s284, 1
    %p288 = scmp.eq.s32.totalorder %s19, 1
    %p289 = scmp.ne.s32.totalorder %s284, %s286
    %p290 = scmp.eq.s32.totalorder %s19, 0
    %p291 = por %p289, %p290
    %p292 = scmp.ne.s32.totalorder %s284, %s286
    %p293 = scmp.eq.s32.totalorder %s24, 1
    %p294 = por %p292, %p293
    %p295 = scmp.ne.s32.totalorder %s286, %s287
    %p296 = scmp.eq.s32.totalorder %s24, 0
    %p297 = por %p295, %p296
    %p298 = scmp.ne.s32.totalorder %s286, %s287
    %p299 = scmp.eq.s32.totalorder %s25, 1
    %p300 = por %p298, %p299
    %p302 = scmp.ne.s32.totalorder %s287, %s301
    %p303 = scmp.eq.s32.totalorder %s25, 0
    %p304 = por %p302, %p303
    %s305 = ssub.s32 %s19, %s26
    %p306 = scmp.eq.s32.totalorder %s305, 0
    %s308 = sadd.s32 %s307, 1
    %s309 = scalar_select %p306, %s307, %s308
    %p312 = pneg %p306
    %p313 = scmp.eq.s32.totalorder %s19, 1
    %p314 = por %p312, %p313
    %p315 = scmp.ne.s32.totalorder %s307, %s310
    %p316 = scmp.eq.s32.totalorder %s19, 0
    %p317 = por %p315, %p316
    %p318 = scmp.ne.s32.totalorder %s307, %s310
    %p319 = scmp.eq.s32.totalorder %s24, 1
    %p320 = por %p318, %p319
    %p321 = scmp.ne.s32.totalorder %s310, %s311
    %p322 = scmp.eq.s32.totalorder %s24, 0
    %p323 = por %p321, %p322
    %p324 = scmp.ne.s32.totalorder %s310, %s311
    %p325 = scmp.eq.s32.totalorder %s25, 1
    %p326 = por %p324, %p325
    %p328 = scmp.ne.s32.totalorder %s311, %s327
    %p329 = scmp.eq.s32.totalorder %s25, 0
    %p330 = por %p328, %p329
    %p331 = scmp.le.s32.totalorder 1, %s19
    %p332 = scmp.lt.s32.totalorder %s19, 3
    %p333 = pnand %p331, %p332
    %p334 = pneg %p333
    // Predicated region
    $region9: #{transformer_question_encoder_forward.4} parent=5 // pred_check
      _
    $region10: #{transformer_question_encoder_forward.4} parent=5 // pred_check_branch
      %336 = sbr.rel (%p333) target = $region12
    $region11: #{transformer_question_encoder_forward.4} parent=5 // pred_region
      %s337 = ssub.s32 %s19, 1
      // Predicated region
      $region13: #{transformer_question_encoder_forward.4} parent=11 // pred_check
        %p338 = pneg %p66
      $region14: #{transformer_question_encoder_forward.4} parent=11 // pred_check_branch
        %340 = sbr.rel (%p338) target = $region16
      $region15: #{transformer_question_encoder_forward.4} parent=11 // pred_region
        _
      $region16: #{transformer_question_encoder_forward.4} parent=11 // pred_fallthru
        _
      // Predicated region
      $region17: #{transformer_question_encoder_forward.4} parent=11 // pred_check
        %p341 = pneg %p87
      $region18: #{transformer_question_encoder_forward.4} parent=11 // pred_check_branch
        %343 = sbr.rel (%p341) target = $region20
      $region19: #{transformer_question_encoder_forward.4} parent=11 // pred_region
        _
      $region20: #{transformer_question_encoder_forward.4} parent=11 // pred_fallthru
        _
      // Predicated region
      $region21: #{transformer_question_encoder_forward.4} parent=11 // pred_check
        %p344 = pneg %p108
      $region22: #{transformer_question_encoder_forward.4} parent=11 // pred_check_branch
        %346 = sbr.rel (%p344) target = $region24
      $region23: #{transformer_question_encoder_forward.4} parent=11 // pred_region
        _
      $region24: #{transformer_question_encoder_forward.4} parent=11 // pred_fallthru
        _
      // Predicated region
      $region25: #{transformer_question_encoder_forward.4} parent=11 // pred_check
        %p347 = pneg %p129
      $region26: #{transformer_question_encoder_forward.4} parent=11 // pred_check_branch
        %349 = sbr.rel (%p347) target = $region28
      $region27: #{transformer_question_encoder_forward.4} parent=11 // pred_region
        _
      $region28: #{transformer_question_encoder_forward.4} parent=11 // pred_fallthru
        _
      // Predicated region
      $region29: #{transformer_question_encoder_forward.4} parent=11 // pred_check
        %p350 = pneg %p150
      $region30: #{transformer_question_encoder_forward.4} parent=11 // pred_check_branch
        %352 = sbr.rel (%p350) target = $region32
      $region31: #{transformer_question_encoder_forward.4} parent=11 // pred_region
        _
      $region32: #{transformer_question_encoder_forward.4} parent=11 // pred_fallthru
        _
      // Predicated region
      $region33: #{transformer_question_encoder_forward.4} parent=11 // pred_check
        %p353 = pneg %p171
      $region34: #{transformer_question_encoder_forward.4} parent=11 // pred_check_branch
        %355 = sbr.rel (%p353) target = $region36
      $region35: #{transformer_question_encoder_forward.4} parent=11 // pred_region
        _
      $region36: #{transformer_question_encoder_forward.4} parent=11 // pred_fallthru
        _
      // Predicated region
      $region37: #{transformer_question_encoder_forward.4} parent=11 // pred_check
        %p356 = pneg %p192
      $region38: #{transformer_question_encoder_forward.4} parent=11 // pred_check_branch
        %358 = sbr.rel (%p356) target = $region40
      $region39: #{transformer_question_encoder_forward.4} parent=11 // pred_region
        _
      $region40: #{transformer_question_encoder_forward.4} parent=11 // pred_fallthru
        _
      // Predicated region
      $region41: #{transformer_question_encoder_forward.4} parent=11 // pred_check
        %p359 = pneg %p213
      $region42: #{transformer_question_encoder_forward.4} parent=11 // pred_check_branch
        %361 = sbr.rel (%p359) target = $region44
      $region43: #{transformer_question_encoder_forward.4} parent=11 // pred_region
        _
      $region44: #{transformer_question_encoder_forward.4} parent=11 // pred_fallthru
        _
      // Predicated region
      $region45: #{transformer_question_encoder_forward.4} parent=11 // pred_check
        %p362 = pneg %p234
      $region46: #{transformer_question_encoder_forward.4} parent=11 // pred_check_branch
        %364 = sbr.rel (%p362) target = $region48
      $region47: #{transformer_question_encoder_forward.4} parent=11 // pred_region
        _
      $region48: #{transformer_question_encoder_forward.4} parent=11 // pred_fallthru
        _
      // Predicated region
      $region49: #{transformer_question_encoder_forward.4} parent=11 // pred_check
        %p365 = pneg %p255
      $region50: #{transformer_question_encoder_forward.4} parent=11 // pred_check_branch
        %367 = sbr.rel (%p365) target = $region52
      $region51: #{transformer_question_encoder_forward.4} parent=11 // pred_region
        _
      $region52: #{transformer_question_encoder_forward.4} parent=11 // pred_fallthru
        _
      // Predicated region
      $region53: #{transformer_question_encoder_forward.4} parent=11 // pred_check
        %p368 = pneg %p276
      $region54: #{transformer_question_encoder_forward.4} parent=11 // pred_check_branch
        %370 = sbr.rel (%p368) target = $region56
      $region55: #{transformer_question_encoder_forward.4} parent=11 // pred_region
        _
      $region56: #{transformer_question_encoder_forward.4} parent=11 // pred_fallthru
        _
      // Predicated region
      $region57: #{transformer_question_encoder_forward.4} parent=11 // pred_check
        %p371 = pneg %p297
      $region58: #{transformer_question_encoder_forward.4} parent=11 // pred_check_branch
        %373 = sbr.rel (%p371) target = $region60
      $region59: #{transformer_question_encoder_forward.4} parent=11 // pred_region
        _
      $region60: #{transformer_question_encoder_forward.4} parent=11 // pred_fallthru
        _
    $region12: #{transformer_question_encoder_forward.4} parent=5 // pred_fallthru
      _
    %p374 = scmp.lt.s32.totalorder %s19, 2
    // Predicated region
    $region61: #{transformer_question_encoder_forward.4} parent=5 // pred_check
      %p375 = pneg %p374
    $region62: #{transformer_question_encoder_forward.4} parent=5 // pred_check_branch
      %377 = sbr.rel (%p375) target = $region64
    $region63: #{transformer_question_encoder_forward.4} parent=5 // pred_region
      // Predicated region
      $region65: #{transformer_question_encoder_forward.4} parent=63 // pred_check
        %p378 = pneg %p39
      $region66: #{transformer_question_encoder_forward.4} parent=63 // pred_check_branch
        %380 = sbr.rel (%p378) target = $region68
      $region67: #{transformer_question_encoder_forward.4} parent=63 // pred_region
        %p381 = scmp.lt.s32.totalorder %s19, 1
        %s382 = scalar_select %p381, %s19, 1
        %s383 = smul.addr %s382, 8
        %s384 = scalar_lea.vmem %s0, %s383
      $region68: #{transformer_question_encoder_forward.4} parent=63 // pred_fallthru
        _
    $region64: #{transformer_question_encoder_forward.4} parent=5 // pred_fallthru
      _
    %p385 = scmp.le.s32.totalorder 1, %s19
    %p386 = scmp.lt.s32.totalorder %s19, 3
    %p387 = pnand %p385, %p386
    %p388 = pneg %p387
    // Predicated region
    $region69: #{transformer_question_encoder_forward.4} parent=5 // pred_check
      _
    $region70: #{transformer_question_encoder_forward.4} parent=5 // pred_check_branch
      %390 = sbr.rel (%p387) target = $region72
    $region71: #{transformer_question_encoder_forward.4} parent=5 // pred_region
      %s391 = ssub.s32 %s19, 1
      %p392 = scmp.lt.s32.totalorder %s24, 1
      %s393 = scalar_select %p392, %s24, 1
      %s394 = smul.addr %s393, 8
      %s395 = scalar_lea.vmem %s0, %s394
      %p396 = pneg %p45
      %p397 = pneg %p42
      %p398 = pneg %p66
      %p399 = pneg %p63
      %p400 = pneg %p87
      %p401 = pneg %p84
      %p402 = pneg %p108
      %p403 = pneg %p105
      %p404 = pneg %p129
      %p405 = pneg %p126
      %p406 = pneg %p150
      %p407 = pneg %p147
      %p408 = pneg %p171
      %p409 = pneg %p168
      %p410 = pneg %p192
      %p411 = pneg %p189
      %p412 = pneg %p213
      %p413 = pneg %p210
      %p414 = pneg %p234
      %p415 = pneg %p231
      %p416 = pneg %p255
      %p417 = pneg %p252
      %p418 = pneg %p276
      %p419 = pneg %p273
      %p420 = pneg %p297
      %p421 = pneg %p294
      %p422 = pneg %p323
      %p423 = pneg %p320
      %p424 = scmp.lt.s32.totalorder %s24, 1
      %s425 = scalar_select %p424, %s24, 1
      %s426 = smul.addr %s425, 8
      %s427 = scalar_lea.vmem %s13, %s426
      %p428 = scmp.lt.s32.totalorder %s24, 1
      %s429 = scalar_select %p428, %s24, 1
      %s430 = smul.addr %s429, 8
      %s431 = scalar_lea.vmem %s0, %s430
      %p432 = scmp.lt.s32.totalorder %s24, 1
      %s433 = scalar_select %p432, %s24, 1
      %s434 = smul.addr %s433, 8
      %s435 = scalar_lea.vmem %s13, %s434
      %v437 = vld [vmem:[%s431] sm:$0xff]
      %v438 = vpack.c.bf16 %v437, %v437
      %v439 = vld [vmem:[%s1] sm:$0xf]
      %v440 = vld [vmem:[%s1 + $0x4] sm:$0xf]
      %v441 = vld [vmem:[%s1 + $0x8] sm:$0xf]
      %v442 = vld [vmem:[%s1 + $0xc] sm:$0xf]
      %v443 = vld [vmem:[%s1 + $0x10] sm:$0xf]
      %v444 = vld [vmem:[%s1 + $0x14] sm:$0xf]
      %v445 = vld [vmem:[%s1 + $0x18] sm:$0xf]
      %v446 = vld [vmem:[%s1 + $0x1c] sm:$0xf]
      %v447 = vld [vmem:[%s1 + $0x20] sm:$0xf]
      %v448 = vld [vmem:[%s1 + $0x24] sm:$0xf]
      %v449 = vld [vmem:[%s1 + $0x28] sm:$0xf]
      %v450 = vld [vmem:[%s1 + $0x2c] sm:$0xf]
      %v451 = vld [vmem:[%s1 + $0x30] sm:$0xf]
      %v452 = vld [vmem:[%s1 + $0x34] sm:$0xf]
      %v453 = vld [vmem:[%s1 + $0x38] sm:$0xf]
      %v454 = vld [vmem:[%s1 + $0x3c] sm:$0xf]
      %v455 = vld [vmem:[%s2] sm:$0x1]
      %v457 = vlaneseq
      %v458 = vshrl.u32 %v457, 7
      %v459 = vsub.s32 0, %v458
      %v460 = vrot.slane %v455, %v459
      %v478 = vunpack.c.l.b16 %v439
      %v479 = vunpack.c.l.b16 %v440
      %v480 = vunpack.c.l.b16 %v441
      %v481 = vunpack.c.l.b16 %v442
      %v482 = vunpack.c.l.b16 %v443
      %v483 = vunpack.c.l.b16 %v444
      %v484 = vunpack.c.l.b16 %v445
      %v485 = vunpack.c.l.b16 %v446
      %v486 = vunpack.c.l.b16 %v447
      %v487 = vunpack.c.l.b16 %v448
      %v488 = vunpack.c.l.b16 %v449
      %v489 = vunpack.c.l.b16 %v450
      %v490 = vunpack.c.l.b16 %v451
      %v491 = vunpack.c.l.b16 %v452
      %v492 = vunpack.c.l.b16 %v453
      %v493 = vunpack.c.l.b16 %v454
      %v494 = vpack.c.b16 %v479, %v478
      %v495 = vpack.c.b16 %v481, %v480
      %v496 = vpack.c.b16 %v483, %v482
      %v497 = vpack.c.b16 %v485, %v484
      %v498 = vpack.c.b16 %v487, %v486
      %v499 = vpack.c.b16 %v489, %v488
      %v500 = vpack.c.b16 %v491, %v490
      %v501 = vpack.c.b16 %v493, %v492
      %510 = vmatprep.subr.bf16.mxu0 0
      %511 = vmatpush1.bf16.msra.mxu0 %v494
      %512 = vmatprep.subr.bf16.mxu0 0
      %513 = vmatpush1.bf16.msra.mxu0 %v495
      %514 = vmatprep.subr.bf16.mxu0 0
      %515 = vmatpush1.bf16.msra.mxu0 %v496
      %516 = vmatprep.subr.bf16.mxu0 0
      %517 = vmatpush1.bf16.msra.mxu0 %v497
      %518 = vmatprep.subr.bf16.mxu0 0
      %519 = vmatpush1.bf16.msra.mxu0 %v498
      %520 = vmatprep.subr.bf16.mxu0 0
      %521 = vmatpush1.bf16.msra.mxu0 %v499
      %522 = vmatprep.subr.bf16.mxu0 0
      %523 = vmatpush1.bf16.msra.mxu0 %v500
      %524 = vmatprep.subr.bf16.mxu0 0
      %525 = vmatpush1.bf16.msra.mxu0 %v501
      %526 = vmatprep.subr.bf16.mxu0 0
      %527 = vmatpush1.bf16.msra.mxu0 0
      %528 = vmatprep.subr.bf16.mxu0 0
      %529 = vmatpush1.bf16.msra.mxu0 0
      %530 = vmatprep.subr.bf16.mxu0 0
      %531 = vmatpush1.bf16.msra.mxu0 0
      %532 = vmatprep.subr.bf16.mxu0 0
      %533 = vmatpush1.bf16.msra.mxu0 0
      %534 = vmatprep.subr.bf16.mxu0 0
      %535 = vmatpush1.bf16.msra.mxu0 0
      %536 = vmatprep.subr.bf16.mxu0 0
      %537 = vmatpush1.bf16.msra.mxu0 0
      %538 = vmatprep.subr.bf16.mxu0 0
      %539 = vmatpush1.bf16.msra.mxu0 0
      %540 = vmatprep.subr.bf16.mxu0 0
      %541 = vmatpush1.bf16.msra.mxu0 0
      %542 = vmatprep.mubr.bf16.mxu0 0
      %543 = vmatmul.mubr.bf16.gmra.mrb[0].mxu0 %v438
      %v544 = vpop.f32.mrb[0].mxu0
      %v545 = vadd.f32 %v460, %v544
      %v546 = vpop.f32.mrb[0].mxu0
      %v547 = vpop.f32.mrb[0].mxu0
      %v548 = vpop.f32.mrb[0].mxu0
      %549 = vdwg.mxu0
      %s550 = scalar_lea.vmem %s1, 256
      %v551 = vld [vmem:[%s550] sm:$0xf]
      %v552 = vld [vmem:[%s550 + $0x4] sm:$0xf]
      %v553 = vld [vmem:[%s550 + $0x8] sm:$0xf]
      %v554 = vld [vmem:[%s550 + $0xc] sm:$0xf]
      %v555 = vld [vmem:[%s550 + $0x10] sm:$0xf]
      %v556 = vld [vmem:[%s550 + $0x14] sm:$0xf]
      %v557 = vld [vmem:[%s550 + $0x18] sm:$0xf]
      %v558 = vld [vmem:[%s550 + $0x1c] sm:$0xf]
      %v559 = vld [vmem:[%s550 + $0x20] sm:$0xf]
      %v560 = vld [vmem:[%s550 + $0x24] sm:$0xf]
      %v561 = vld [vmem:[%s550 + $0x28] sm:$0xf]
      %v562 = vld [vmem:[%s550 + $0x2c] sm:$0xf]
      %v563 = vld [vmem:[%s550 + $0x30] sm:$0xf]
      %v564 = vld [vmem:[%s550 + $0x34] sm:$0xf]
      %v565 = vld [vmem:[%s550 + $0x38] sm:$0xf]
      %v566 = vld [vmem:[%s550 + $0x3c] sm:$0xf]
      %s567 = scalar_lea.vmem %s2, 4
      %v568 = vld [vmem:[%s567] sm:$0x1]
      %v570 = vlaneseq
      %v571 = vshrl.u32 %v570, 7
      %v572 = vsub.s32 0, %v571
      %v573 = vrot.slane %v568, %v572
      %v591 = vunpack.c.l.b16 %v551
      %v592 = vunpack.c.l.b16 %v552
      %v593 = vunpack.c.l.b16 %v553
      %v594 = vunpack.c.l.b16 %v554
      %v595 = vunpack.c.l.b16 %v555
      %v596 = vunpack.c.l.b16 %v556
      %v597 = vunpack.c.l.b16 %v557
      %v598 = vunpack.c.l.b16 %v558
      %v599 = vunpack.c.l.b16 %v559
      %v600 = vunpack.c.l.b16 %v560
      %v601 = vunpack.c.l.b16 %v561
      %v602 = vunpack.c.l.b16 %v562
      %v603 = vunpack.c.l.b16 %v563
      %v604 = vunpack.c.l.b16 %v564
      %v605 = vunpack.c.l.b16 %v565
      %v606 = vunpack.c.l.b16 %v566
      %v607 = vpack.c.b16 %v592, %v591
      %v608 = vpack.c.b16 %v594, %v593
      %v609 = vpack.c.b16 %v596, %v595
      %v610 = vpack.c.b16 %v598, %v597
      %v611 = vpack.c.b16 %v600, %v599
      %v612 = vpack.c.b16 %v602, %v601
      %v613 = vpack.c.b16 %v604, %v603
      %v614 = vpack.c.b16 %v606, %v605
      %623 = vmatprep.subr.bf16.mxu0 0
      %624 = vmatpush1.bf16.msra.mxu0 %v607
      %625 = vmatprep.subr.bf16.mxu0 0
      %626 = vmatpush1.bf16.msra.mxu0 %v608
      %627 = vmatprep.subr.bf16.mxu0 0
      %628 = vmatpush1.bf16.msra.mxu0 %v609
      %629 = vmatprep.subr.bf16.mxu0 0
      %630 = vmatpush1.bf16.msra.mxu0 %v610
      %631 = vmatprep.subr.bf16.mxu0 0
      %632 = vmatpush1.bf16.msra.mxu0 %v611
      %633 = vmatprep.subr.bf16.mxu0 0
      %634 = vmatpush1.bf16.msra.mxu0 %v612
      %635 = vmatprep.subr.bf16.mxu0 0
      %636 = vmatpush1.bf16.msra.mxu0 %v613
      %637 = vmatprep.subr.bf16.mxu0 0
      %638 = vmatpush1.bf16.msra.mxu0 %v614
      %639 = vmatprep.subr.bf16.mxu0 0
      %640 = vmatpush1.bf16.msra.mxu0 0
      %641 = vmatprep.subr.bf16.mxu0 0
      %642 = vmatpush1.bf16.msra.mxu0 0
      %643 = vmatprep.subr.bf16.mxu0 0
      %644 = vmatpush1.bf16.msra.mxu0 0
      %645 = vmatprep.subr.bf16.mxu0 0
      %646 = vmatpush1.bf16.msra.mxu0 0
      %647 = vmatprep.subr.bf16.mxu0 0
      %648 = vmatpush1.bf16.msra.mxu0 0
      %649 = vmatprep.subr.bf16.mxu0 0
      %650 = vmatpush1.bf16.msra.mxu0 0
      %651 = vmatprep.subr.bf16.mxu0 0
      %652 = vmatpush1.bf16.msra.mxu0 0
      %653 = vmatprep.subr.bf16.mxu0 0
      %654 = vmatpush1.bf16.msra.mxu0 0
      %655 = vmatprep.mubr.bf16.mxu0 0
      %656 = vmatmul.mubr.bf16.gmra.mrb[0].mxu0 %v438
      %v657 = vpop.f32.mrb[0].mxu0
      %v658 = vadd.f32 %v573, %v657
      %v659 = vpop.f32.mrb[0].mxu0
      %v660 = vpop.f32.mrb[0].mxu0
      %v661 = vpop.f32.mrb[0].mxu0
      %662 = vdwg.mxu0
      %s663 = scalar_lea.vmem %s1, 512
      %v664 = vld [vmem:[%s663] sm:$0xf]
      %v665 = vld [vmem:[%s663 + $0x4] sm:$0xf]
      %v666 = vld [vmem:[%s663 + $0x8] sm:$0xf]
      %v667 = vld [vmem:[%s663 + $0xc] sm:$0xf]
      %v668 = vld [vmem:[%s663 + $0x10] sm:$0xf]
      %v669 = vld [vmem:[%s663 + $0x14] sm:$0xf]
      %v670 = vld [vmem:[%s663 + $0x18] sm:$0xf]
      %v671 = vld [vmem:[%s663 + $0x1c] sm:$0xf]
      %v672 = vld [vmem:[%s663 + $0x20] sm:$0xf]
      %v673 = vld [vmem:[%s663 + $0x24] sm:$0xf]
      %v674 = vld [vmem:[%s663 + $0x28] sm:$0xf]
      %v675 = vld [vmem:[%s663 + $0x2c] sm:$0xf]
      %v676 = vld [vmem:[%s663 + $0x30] sm:$0xf]
      %v677 = vld [vmem:[%s663 + $0x34] sm:$0xf]
      %v678 = vld [vmem:[%s663 + $0x38] sm:$0xf]
      %v679 = vld [vmem:[%s663 + $0x3c] sm:$0xf]
      %s680 = scalar_lea.vmem %s2, 8
      %v681 = vld [vmem:[%s680] sm:$0x1]
      %v683 = vlaneseq
      %v684 = vshrl.u32 %v683, 7
      %v685 = vsub.s32 0, %v684
      %v686 = vrot.slane %v681, %v685
      %v704 = vunpack.c.l.b16 %v664
      %v705 = vunpack.c.l.b16 %v665
      %v706 = vunpack.c.l.b16 %v666
      %v707 = vunpack.c.l.b16 %v667
      %v708 = vunpack.c.l.b16 %v668
      %v709 = vunpack.c.l.b16 %v669
      %v710 = vunpack.c.l.b16 %v670
      %v711 = vunpack.c.l.b16 %v671
      %v712 = vunpack.c.l.b16 %v672
      %v713 = vunpack.c.l.b16 %v673
      %v714 = vunpack.c.l.b16 %v674
      %v715 = vunpack.c.l.b16 %v675
      %v716 = vunpack.c.l.b16 %v676
      %v717 = vunpack.c.l.b16 %v677
      %v718 = vunpack.c.l.b16 %v678
      %v719 = vunpack.c.l.b16 %v679
      %v720 = vpack.c.b16 %v705, %v704
      %v721 = vpack.c.b16 %v707, %v706
      %v722 = vpack.c.b16 %v709, %v708
      %v723 = vpack.c.b16 %v711, %v710
      %v724 = vpack.c.b16 %v713, %v712
      %v725 = vpack.c.b16 %v715, %v714
      %v726 = vpack.c.b16 %v717, %v716
      %v727 = vpack.c.b16 %v719, %v718
      %736 = vmatprep.subr.bf16.mxu0 0
      %737 = vmatpush1.bf16.msra.mxu0 %v720
      %738 = vmatprep.subr.bf16.mxu0 0
      %739 = vmatpush1.bf16.msra.mxu0 %v721
      %740 = vmatprep.subr.bf16.mxu0 0
      %741 = vmatpush1.bf16.msra.mxu0 %v722
      %742 = vmatprep.subr.bf16.mxu0 0
      %743 = vmatpush1.bf16.msra.mxu0 %v723
      %744 = vmatprep.subr.bf16.mxu0 0
      %745 = vmatpush1.bf16.msra.mxu0 %v724
      %746 = vmatprep.subr.bf16.mxu0 0
      %747 = vmatpush1.bf16.msra.mxu0 %v725
      %748 = vmatprep.subr.bf16.mxu0 0
      %749 = vmatpush1.bf16.msra.mxu0 %v726
      %750 = vmatprep.subr.bf16.mxu0 0
      %751 = vmatpush1.bf16.msra.mxu0 %v727
      %752 = vmatprep.subr.bf16.mxu0 0
      %753 = vmatpush1.bf16.msra.mxu0 0
      %754 = vmatprep.subr.bf16.mxu0 0
      %755 = vmatpush1.bf16.msra.mxu0 0
      %756 = vmatprep.subr.bf16.mxu0 0
      %757 = vmatpush1.bf16.msra.mxu0 0
      %758 = vmatprep.subr.bf16.mxu0 0
      %759 = vmatpush1.bf16.msra.mxu0 0
      %760 = vmatprep.subr.bf16.mxu0 0
      %761 = vmatpush1.bf16.msra.mxu0 0
      %762 = vmatprep.subr.bf16.mxu0 0
      %763 = vmatpush1.bf16.msra.mxu0 0
      %764 = vmatprep.subr.bf16.mxu0 0
      %765 = vmatpush1.bf16.msra.mxu0 0
      %766 = vmatprep.subr.bf16.mxu0 0
      %767 = vmatpush1.bf16.msra.mxu0 0
      %768 = vmatprep.mubr.bf16.mxu0 0
      %769 = vmatmul.mubr.bf16.gmra.mrb[0].mxu0 %v438
      %v770 = vpop.f32.mrb[0].mxu0
      %v771 = vadd.f32 %v686, %v770
      %v772 = vpop.f32.mrb[0].mxu0
      %v773 = vpop.f32.mrb[0].mxu0
      %v774 = vpop.f32.mrb[0].mxu0
      %775 = vdwg.mxu0
      %v776 = vpack.c.bf16 %v545, %v545
      %v777 = vpack.c.bf16 %v658, %v658
      %vm778 = vcmask 261120
      %v780 = vsel %vm778, %v776, 0
      %v783 = vsel %vm778, %v777, 0
      %785 = vmatprep.subr.bf16.mxu0 0
      %786 = vmatpush1.bf16.xpose.msra.mxu0 %v783
      %787 = vmatprep.subr.bf16.mxu0 0
      %788 = vmatpush1.bf16.xpose.msra.mxu0 0
      %789 = vmatprep.subr.bf16.mxu0 0
      %790 = vmatpush1.bf16.xpose.msra.mxu0 0
      %791 = vmatprep.subr.bf16.mxu0 0
      %792 = vmatpush1.bf16.xpose.msra.mxu0 0
      %793 = vmatprep.subr.bf16.mxu0 0
      %794 = vmatpush1.bf16.xpose.msra.mxu0 0
      %795 = vmatprep.subr.bf16.mxu0 0
      %796 = vmatpush1.bf16.xpose.msra.mxu0 0
      %797 = vmatprep.subr.bf16.mxu0 0
      %798 = vmatpush1.bf16.xpose.msra.mxu0 0
      %799 = vmatprep.subr.bf16.mxu0 0
      %800 = vmatpush1.bf16.xpose.msra.mxu0 0
      %801 = vmatprep.subr.bf16.mxu0 0
      %802 = vmatpush1.bf16.xpose.msra.mxu0 0
      %803 = vmatprep.subr.bf16.mxu0 0
      %804 = vmatpush1.bf16.xpose.msra.mxu0 0
      %805 = vmatprep.subr.bf16.mxu0 0
      %806 = vmatpush1.bf16.xpose.msra.mxu0 0
      %807 = vmatprep.subr.bf16.mxu0 0
      %808 = vmatpush1.bf16.xpose.msra.mxu0 0
      %809 = vmatprep.subr.bf16.mxu0 0
      %810 = vmatpush1.bf16.xpose.msra.mxu0 0
      %811 = vmatprep.subr.bf16.mxu0 0
      %812 = vmatpush1.bf16.xpose.msra.mxu0 0
      %813 = vmatprep.subr.bf16.mxu0 0
      %814 = vmatpush1.bf16.xpose.msra.mxu0 0
      %815 = vmatprep.subr.bf16.mxu0 0
      %816 = vmatpush1.bf16.xpose.msra.mxu0 0
      %817 = vmatprep.mubr.bf16.mxu0 0
      %818 = vmatmul.mubr.bf16.gmra.mrb[0].mxu0 %v780
      %v819 = vpop.f32.mrb[0].mxu0
      %v820 = vadd.f32 0.0, %v819
      %v821 = vpop.f32.mrb[0].mxu0
      %v822 = vpop.f32.mrb[0].mxu0
      %v823 = vpop.f32.mrb[0].mxu0
      %824 = vdwg.mxu0
      %v825 = vmul.f32 %v820, 0.17677669
      %vm826 = vcmask 64512
      %v827 = vsel %vm826, %v825, -inf
      %828 = vmax.xlane.f32.xlu0 %v827
      %v829 = vpop.xlane.xlu0 %828
      %v830 = vsub.f32 %v825, %v829
      %v831 = vmul.f32 %v830, 1.442695
      %v832 = vpow.pop %v831
      %v833 = vsel %vm826, %v832, 0.0
      %834 = vadd.xlane.f32.xlu0 %v833
      %v835 = vpop.xlane.xlu0 %834
      %v836 = vrcp.pop %v835
      %v837 = vmul.f32 %v832, %v836
      %v838 = vpack.c.bf16 %v837, %v837
      %v839 = vpack.c.bf16 %v771, %v771
      %v841 = vsel %vm826, %v838, 0
      %vm843 = vcmask 1043456
      %v845 = vsel %vm843, %v839, 0
      %847 = vmatprep.subr.bf16.mxu0 0
      %848 = vmatpush1.bf16.msra.mxu0 %v845
      %849 = vmatprep.subr.bf16.mxu0 0
      %850 = vmatpush1.bf16.msra.mxu0 0
      %851 = vmatprep.subr.bf16.mxu0 0
      %852 = vmatpush1.bf16.msra.mxu0 0
      %853 = vmatprep.subr.bf16.mxu0 0
      %854 = vmatpush1.bf16.msra.mxu0 0
      %855 = vmatprep.subr.bf16.mxu0 0
      %856 = vmatpush1.bf16.msra.mxu0 0
      %857 = vmatprep.subr.bf16.mxu0 0
      %858 = vmatpush1.bf16.msra.mxu0 0
      %859 = vmatprep.subr.bf16.mxu0 0
      %860 = vmatpush1.bf16.msra.mxu0 0
      %861 = vmatprep.subr.bf16.mxu0 0
      %862 = vmatpush1.bf16.msra.mxu0 0
      %863 = vmatprep.subr.bf16.mxu0 0
      %864 = vmatpush1.bf16.msra.mxu0 0
      %865 = vmatprep.subr.bf16.mxu0 0
      %866 = vmatpush1.bf16.msra.mxu0 0
      %867 = vmatprep.subr.bf16.mxu0 0
      %868 = vmatpush1.bf16.msra.mxu0 0
      %869 = vmatprep.subr.bf16.mxu0 0
      %870 = vmatpush1.bf16.msra.mxu0 0
      %871 = vmatprep.subr.bf16.mxu0 0
      %872 = vmatpush1.bf16.msra.mxu0 0
      %873 = vmatprep.subr.bf16.mxu0 0
      %874 = vmatpush1.bf16.msra.mxu0 0
      %875 = vmatprep.subr.bf16.mxu0 0
      %876 = vmatpush1.bf16.msra.mxu0 0
      %877 = vmatprep.subr.bf16.mxu0 0
      %878 = vmatpush1.bf16.msra.mxu0 0
      %879 = vmatprep.mubr.bf16.mxu0 0
      %880 = vmatmul.mubr.bf16.gmra.mrb[0].mxu0 %v841
      %v881 = vpop.f32.mrb[0].mxu0
      %v882 = vadd.f32 0.0, %v881
      %v883 = vpop.f32.mrb[0].mxu0
      %v884 = vpop.f32.mrb[0].mxu0
      %v885 = vpop.f32.mrb[0].mxu0
      %886 = vdwg.mxu0
      %v887 = vpack.c.bf16 %v882, %v882
      %v888 = vld [vmem:[%s3] sm:$0xf]
      %v889 = vld [vmem:[%s3 + $0x4] sm:$0xf]
      %v890 = vld [vmem:[%s3 + $0x8] sm:$0xf]
      %v891 = vld [vmem:[%s3 + $0xc] sm:$0xf]
      %s892 = scalar_lea.vmem %s1, 64
      %v893 = vld [vmem:[%s892] sm:$0xf]
      %v894 = vld [vmem:[%s892 + $0x4] sm:$0xf]
      %v895 = vld [vmem:[%s892 + $0x8] sm:$0xf]
      %v896 = vld [vmem:[%s892 + $0xc] sm:$0xf]
      %v897 = vld [vmem:[%s892 + $0x10] sm:$0xf]
      %v898 = vld [vmem:[%s892 + $0x14] sm:$0xf]
      %v899 = vld [vmem:[%s892 + $0x18] sm:$0xf]
      %v900 = vld [vmem:[%s892 + $0x1c] sm:$0xf]
      %v901 = vld [vmem:[%s892 + $0x20] sm:$0xf]
      %v902 = vld [vmem:[%s892 + $0x24] sm:$0xf]
      %v903 = vld [vmem:[%s892 + $0x28] sm:$0xf]
      %v904 = vld [vmem:[%s892 + $0x2c] sm:$0xf]
      %v905 = vld [vmem:[%s892 + $0x30] sm:$0xf]
      %v906 = vld [vmem:[%s892 + $0x34] sm:$0xf]
      %v907 = vld [vmem:[%s892 + $0x38] sm:$0xf]
      %v908 = vld [vmem:[%s892 + $0x3c] sm:$0xf]
      %s909 = scalar_lea.vmem %s2, 1
      %v910 = vld [vmem:[%s909] sm:$0x1]
      %v912 = vlaneseq
      %v913 = vshrl.u32 %v912, 7
      %v914 = vsub.s32 0, %v913
      %v915 = vrot.slane %v910, %v914
      %v933 = vunpack.c.l.b16 %v893
      %v934 = vunpack.c.l.b16 %v894
      %v935 = vunpack.c.l.b16 %v895
      %v936 = vunpack.c.l.b16 %v896
      %v937 = vunpack.c.l.b16 %v897
      %v938 = vunpack.c.l.b16 %v898
      %v939 = vunpack.c.l.b16 %v899
      %v940 = vunpack.c.l.b16 %v900
      %v941 = vunpack.c.l.b16 %v901
      %v942 = vunpack.c.l.b16 %v902
      %v943 = vunpack.c.l.b16 %v903
      %v944 = vunpack.c.l.b16 %v904
      %v945 = vunpack.c.l.b16 %v905
      %v946 = vunpack.c.l.b16 %v906
      %v947 = vunpack.c.l.b16 %v907
      %v948 = vunpack.c.l.b16 %v908
      %v949 = vpack.c.b16 %v934, %v933
      %v950 = vpack.c.b16 %v936, %v935
      %v951 = vpack.c.b16 %v938, %v937
      %v952 = vpack.c.b16 %v940, %v939
      %v953 = vpack.c.b16 %v942, %v941
      %v954 = vpack.c.b16 %v944, %v943
      %v955 = vpack.c.b16 %v946, %v945
      %v956 = vpack.c.b16 %v948, %v947
      %965 = vmatprep.subr.bf16.mxu0 0
      %966 = vmatpush1.bf16.msra.mxu0 %v949
      %967 = vmatprep.subr.bf16.mxu0 0
      %968 = vmatpush1.bf16.msra.mxu0 %v950
      %969 = vmatprep.subr.bf16.mxu0 0
      %970 = vmatpush1.bf16.msra.mxu0 %v951
      %971 = vmatprep.subr.bf16.mxu0 0
      %972 = vmatpush1.bf16.msra.mxu0 %v952
      %973 = vmatprep.subr.bf16.mxu0 0
      %974 = vmatpush1.bf16.msra.mxu0 %v953
      %975 = vmatprep.subr.bf16.mxu0 0
      %976 = vmatpush1.bf16.msra.mxu0 %v954
      %977 = vmatprep.subr.bf16.mxu0 0
      %978 = vmatpush1.bf16.msra.mxu0 %v955
      %979 = vmatprep.subr.bf16.mxu0 0
      %980 = vmatpush1.bf16.msra.mxu0 %v956
      %981 = vmatprep.subr.bf16.mxu0 0
      %982 = vmatpush1.bf16.msra.mxu0 0
      %983 = vmatprep.subr.bf16.mxu0 0
      %984 = vmatpush1.bf16.msra.mxu0 0
      %985 = vmatprep.subr.bf16.mxu0 0
      %986 = vmatpush1.bf16.msra.mxu0 0
      %987 = vmatprep.subr.bf16.mxu0 0
      %988 = vmatpush1.bf16.msra.mxu0 0
      %989 = vmatprep.subr.bf16.mxu0 0
      %990 = vmatpush1.bf16.msra.mxu0 0
      %991 = vmatprep.subr.bf16.mxu0 0
      %992 = vmatpush1.bf16.msra.mxu0 0
      %993 = vmatprep.subr.bf16.mxu0 0
      %994 = vmatpush1.bf16.msra.mxu0 0
      %995 = vmatprep.subr.bf16.mxu0 0
      %996 = vmatpush1.bf16.msra.mxu0 0
      %997 = vmatprep.mubr.bf16.mxu0 0
      %998 = vmatmul.mubr.bf16.gmra.mrb[0].mxu0 %v438
      %v999 = vpop.f32.mrb[0].mxu0
      %v1000 = vadd.f32 %v915, %v999
      %v1001 = vpop.f32.mrb[0].mxu0
      %v1002 = vpop.f32.mrb[0].mxu0
      %v1003 = vpop.f32.mrb[0].mxu0
      %1004 = vdwg.mxu0
      %s1005 = scalar_lea.vmem %s1, 320
      %v1006 = vld [vmem:[%s1005] sm:$0xf]
      %v1007 = vld [vmem:[%s1005 + $0x4] sm:$0xf]
      %v1008 = vld [vmem:[%s1005 + $0x8] sm:$0xf]
      %v1009 = vld [vmem:[%s1005 + $0xc] sm:$0xf]
      %v1010 = vld [vmem:[%s1005 + $0x10] sm:$0xf]
      %v1011 = vld [vmem:[%s1005 + $0x14] sm:$0xf]
      %v1012 = vld [vmem:[%s1005 + $0x18] sm:$0xf]
      %v1013 = vld [vmem:[%s1005 + $0x1c] sm:$0xf]
      %v1014 = vld [vmem:[%s1005 + $0x20] sm:$0xf]
      %v1015 = vld [vmem:[%s1005 + $0x24] sm:$0xf]
      %v1016 = vld [vmem:[%s1005 + $0x28] sm:$0xf]
      %v1017 = vld [vmem:[%s1005 + $0x2c] sm:$0xf]
      %v1018 = vld [vmem:[%s1005 + $0x30] sm:$0xf]
      %v1019 = vld [vmem:[%s1005 + $0x34] sm:$0xf]
      %v1020 = vld [vmem:[%s1005 + $0x38] sm:$0xf]
      %v1021 = vld [vmem:[%s1005 + $0x3c] sm:$0xf]
      %s1022 = scalar_lea.vmem %s2, 5
      %v1023 = vld [vmem:[%s1022] sm:$0x1]
      %v1025 = vlaneseq
      %v1026 = vshrl.u32 %v1025, 7
      %v1027 = vsub.s32 0, %v1026
      %v1028 = vrot.slane %v1023, %v1027
      %v1046 = vunpack.c.l.b16 %v1006
      %v1047 = vunpack.c.l.b16 %v1007
      %v1048 = vunpack.c.l.b16 %v1008
      %v1049 = vunpack.c.l.b16 %v1009
      %v1050 = vunpack.c.l.b16 %v1010
      %v1051 = vunpack.c.l.b16 %v1011
      %v1052 = vunpack.c.l.b16 %v1012
      %v1053 = vunpack.c.l.b16 %v1013
      %v1054 = vunpack.c.l.b16 %v1014
      %v1055 = vunpack.c.l.b16 %v1015
      %v1056 = vunpack.c.l.b16 %v1016
      %v1057 = vunpack.c.l.b16 %v1017
      %v1058 = vunpack.c.l.b16 %v1018
      %v1059 = vunpack.c.l.b16 %v1019
      %v1060 = vunpack.c.l.b16 %v1020
      %v1061 = vunpack.c.l.b16 %v1021
      %v1062 = vpack.c.b16 %v1047, %v1046
      %v1063 = vpack.c.b16 %v1049, %v1048
      %v1064 = vpack.c.b16 %v1051, %v1050
      %v1065 = vpack.c.b16 %v1053, %v1052
      %v1066 = vpack.c.b16 %v1055, %v1054
      %v1067 = vpack.c.b16 %v1057, %v1056
      %v1068 = vpack.c.b16 %v1059, %v1058
      %v1069 = vpack.c.b16 %v1061, %v1060
      %1078 = vmatprep.subr.bf16.mxu0 0
      %1079 = vmatpush1.bf16.msra.mxu0 %v1062
      %1080 = vmatprep.subr.bf16.mxu0 0
      %1081 = vmatpush1.bf16.msra.mxu0 %v1063
      %1082 = vmatprep.subr.bf16.mxu0 0
      %1083 = vmatpush1.bf16.msra.mxu0 %v1064
      %1084 = vmatprep.subr.bf16.mxu0 0
      %1085 = vmatpush1.bf16.msra.mxu0 %v1065
      %1086 = vmatprep.subr.bf16.mxu0 0
      %1087 = vmatpush1.bf16.msra.mxu0 %v1066
      %1088 = vmatprep.subr.bf16.mxu0 0
      %1089 = vmatpush1.bf16.msra.mxu0 %v1067
      %1090 = vmatprep.subr.bf16.mxu0 0
      %1091 = vmatpush1.bf16.msra.mxu0 %v1068
      %1092 = vmatprep.subr.bf16.mxu0 0
      %1093 = vmatpush1.bf16.msra.mxu0 %v1069
      %1094 = vmatprep.subr.bf16.mxu0 0
      %1095 = vmatpush1.bf16.msra.mxu0 0
      %1096 = vmatprep.subr.bf16.mxu0 0
      %1097 = vmatpush1.bf16.msra.mxu0 0
      %1098 = vmatprep.subr.bf16.mxu0 0
      %1099 = vmatpush1.bf16.msra.mxu0 0
      %1100 = vmatprep.subr.bf16.mxu0 0
      %1101 = vmatpush1.bf16.msra.mxu0 0
      %1102 = vmatprep.subr.bf16.mxu0 0
      %1103 = vmatpush1.bf16.msra.mxu0 0
      %1104 = vmatprep.subr.bf16.mxu0 0
      %1105 = vmatpush1.bf16.msra.mxu0 0
      %1106 = vmatprep.subr.bf16.mxu0 0
      %1107 = vmatpush1.bf16.msra.mxu0 0
      %1108 = vmatprep.subr.bf16.mxu0 0
      %1109 = vmatpush1.bf16.msra.mxu0 0
      %1110 = vmatprep.mubr.bf16.mxu0 0
      %1111 = vmatmul.mubr.bf16.gmra.mrb[0].mxu0 %v438
      %v1112 = vpop.f32.mrb[0].mxu0
      %v1113 = vadd.f32 %v1028, %v1112
      %v1114 = vpop.f32.mrb[0].mxu0
      %v1115 = vpop.f32.mrb[0].mxu0
      %v1116 = vpop.f32.mrb[0].mxu0
      %1117 = vdwg.mxu0
      %s1118 = scalar_lea.vmem %s1, 576
      %v1119 = vld [vmem:[%s1118] sm:$0xf]
      %v1120 = vld [vmem:[%s1118 + $0x4] sm:$0xf]
      %v1121 = vld [vmem:[%s1118 + $0x8] sm:$0xf]
      %v1122 = vld [vmem:[%s1118 + $0xc] sm:$0xf]
      %v1123 = vld [vmem:[%s1118 + $0x10] sm:$0xf]
      %v1124 = vld [vmem:[%s1118 + $0x14] sm:$0xf]
      %v1125 = vld [vmem:[%s1118 + $0x18] sm:$0xf]
      %v1126 = vld [vmem:[%s1118 + $0x1c] sm:$0xf]
      %v1127 = vld [vmem:[%s1118 + $0x20] sm:$0xf]
      %v1128 = vld [vmem:[%s1118 + $0x24] sm:$0xf]
      %v1129 = vld [vmem:[%s1118 + $0x28] sm:$0xf]
      %v1130 = vld [vmem:[%s1118 + $0x2c] sm:$0xf]
      %v1131 = vld [vmem:[%s1118 + $0x30] sm:$0xf]
      %v1132 = vld [vmem:[%s1118 + $0x34] sm:$0xf]
      %v1133 = vld [vmem:[%s1118 + $0x38] sm:$0xf]
      %v1134 = vld [vmem:[%s1118 + $0x3c] sm:$0xf]
      %s1135 = scalar_lea.vmem %s2, 9
      %v1136 = vld [vmem:[%s1135] sm:$0x1]
      %v1138 = vlaneseq
      %v1139 = vshrl.u32 %v1138, 7
      %v1140 = vsub.s32 0, %v1139
      %v1141 = vrot.slane %v1136, %v1140
      %v1159 = vunpack.c.l.b16 %v1119
      %v1160 = vunpack.c.l.b16 %v1120
      %v1161 = vunpack.c.l.b16 %v1121
      %v1162 = vunpack.c.l.b16 %v1122
      %v1163 = vunpack.c.l.b16 %v1123
      %v1164 = vunpack.c.l.b16 %v1124
      %v1165 = vunpack.c.l.b16 %v1125
      %v1166 = vunpack.c.l.b16 %v1126
      %v1167 = vunpack.c.l.b16 %v1127
      %v1168 = vunpack.c.l.b16 %v1128
      %v1169 = vunpack.c.l.b16 %v1129
      %v1170 = vunpack.c.l.b16 %v1130
      %v1171 = vunpack.c.l.b16 %v1131
      %v1172 = vunpack.c.l.b16 %v1132
      %v1173 = vunpack.c.l.b16 %v1133
      %v1174 = vunpack.c.l.b16 %v1134
      %v1175 = vpack.c.b16 %v1160, %v1159
      %v1176 = vpack.c.b16 %v1162, %v1161
      %v1177 = vpack.c.b16 %v1164, %v1163
      %v1178 = vpack.c.b16 %v1166, %v1165
      %v1179 = vpack.c.b16 %v1168, %v1167
      %v1180 = vpack.c.b16 %v1170, %v1169
      %v1181 = vpack.c.b16 %v1172, %v1171
      %v1182 = vpack.c.b16 %v1174, %v1173
      %1191 = vmatprep.subr.bf16.mxu0 0
      %1192 = vmatpush1.bf16.msra.mxu0 %v1175
      %1193 = vmatprep.subr.bf16.mxu0 0
      %1194 = vmatpush1.bf16.msra.mxu0 %v1176
      %1195 = vmatprep.subr.bf16.mxu0 0
      %1196 = vmatpush1.bf16.msra.mxu0 %v1177
      %1197 = vmatprep.subr.bf16.mxu0 0
      %1198 = vmatpush1.bf16.msra.mxu0 %v1178
      %1199 = vmatprep.subr.bf16.mxu0 0
      %1200 = vmatpush1.bf16.msra.mxu0 %v1179
      %1201 = vmatprep.subr.bf16.mxu0 0
      %1202 = vmatpush1.bf16.msra.mxu0 %v1180
      %1203 = vmatprep.subr.bf16.mxu0 0
      %1204 = vmatpush1.bf16.msra.mxu0 %v1181
      %1205 = vmatprep.subr.bf16.mxu0 0
      %1206 = vmatpush1.bf16.msra.mxu0 %v1182
      %1207 = vmatprep.subr.bf16.mxu0 0
      %1208 = vmatpush1.bf16.msra.mxu0 0
      %1209 = vmatprep.subr.bf16.mxu0 0
      %1210 = vmatpush1.bf16.msra.mxu0 0
      %1211 = vmatprep.subr.bf16.mxu0 0
      %1212 = vmatpush1.bf16.msra.mxu0 0
      %1213 = vmatprep.subr.bf16.mxu0 0
      %1214 = vmatpush1.bf16.msra.mxu0 0
      %1215 = vmatprep.subr.bf16.mxu0 0
      %1216 = vmatpush1.bf16.msra.mxu0 0
      %1217 = vmatprep.subr.bf16.mxu0 0
      %1218 = vmatpush1.bf16.msra.mxu0 0
      %1219 = vmatprep.subr.bf16.mxu0 0
      %1220 = vmatpush1.bf16.msra.mxu0 0
      %1221 = vmatprep.subr.bf16.mxu0 0
      %1222 = vmatpush1.bf16.msra.mxu0 0
      %1223 = vmatprep.mubr.bf16.mxu0 0
      %1224 = vmatmul.mubr.bf16.gmra.mrb[0].mxu0 %v438
      %v1225 = vpop.f32.mrb[0].mxu0
      %v1226 = vadd.f32 %v1141, %v1225
      %v1227 = vpop.f32.mrb[0].mxu0
      %v1228 = vpop.f32.mrb[0].mxu0
      %v1229 = vpop.f32.mrb[0].mxu0
      %1230 = vdwg.mxu0
      %v1231 = vpack.c.bf16 %v1000, %v1000
      %v1232 = vpack.c.bf16 %v1113, %v1113
      %v1234 = vsel %vm778, %v1231, 0
      %v1237 = vsel %vm778, %v1232, 0
      %1239 = vmatprep.subr.bf16.mxu0 0
      %1240 = vmatpush1.bf16.xpose.msra.mxu0 %v1237
      %1241 = vmatprep.subr.bf16.mxu0 0
      %1242 = vmatpush1.bf16.xpose.msra.mxu0 0
      %1243 = vmatprep.subr.bf16.mxu0 0
      %1244 = vmatpush1.bf16.xpose.msra.mxu0 0
      %1245 = vmatprep.subr.bf16.mxu0 0
      %1246 = vmatpush1.bf16.xpose.msra.mxu0 0
      %1247 = vmatprep.subr.bf16.mxu0 0
      %1248 = vmatpush1.bf16.xpose.msra.mxu0 0
      %1249 = vmatprep.subr.bf16.mxu0 0
      %1250 = vmatpush1.bf16.xpose.msra.mxu0 0
      %1251 = vmatprep.subr.bf16.mxu0 0
      %1252 = vmatpush1.bf16.xpose.msra.mxu0 0
      %1253 = vmatprep.subr.bf16.mxu0 0
      %1254 = vmatpush1.bf16.xpose.msra.mxu0 0
      %1255 = vmatprep.subr.bf16.mxu0 0
      %1256 = vmatpush1.bf16.xpose.msra.mxu0 0
      %1257 = vmatprep.subr.bf16.mxu0 0
      %1258 = vmatpush1.bf16.xpose.msra.mxu0 0
      %1259 = vmatprep.subr.bf16.mxu0 0
      %1260 = vmatpush1.bf16.xpose.msra.mxu0 0
      %1261 = vmatprep.subr.bf16.mxu0 0
      %1262 = vmatpush1.bf16.xpose.msra.mxu0 0
      %1263 = vmatprep.subr.bf16.mxu0 0
      %1264 = vmatpush1.bf16.xpose.msra.mxu0 0
      %1265 = vmatprep.subr.bf16.mxu0 0
      %1266 = vmatpush1.bf16.xpose.msra.mxu0 0
      %1267 = vmatprep.subr.bf16.mxu0 0
      %1268 = vmatpush1.bf16.xpose.msra.mxu0 0
      %1269 = vmatprep.subr.bf16.mxu0 0
      %1270 = vmatpush1.bf16.xpose.msra.mxu0 0
      %1271 = vmatprep.mubr.bf16.mxu0 0
      %1272 = vmatmul.mubr.bf16.gmra.mrb[0].mxu0 %v1234
      %v1273 = vpop.f32.mrb[0].mxu0
      %v1274 = vadd.f32 0.0, %v1273
      %v1275 = vpop.f32.mrb[0].mxu0
      %v1276 = vpop.f32.mrb[0].mxu0
      %v1277 = vpop.f32.mrb[0].mxu0
      %1278 = vdwg.mxu0
      %v1279 = vmul.f32 %v1274, 0.17677669
      %v1280 = vsel %vm826, %v1279, -inf
      %1281 = vmax.xlane.f32.xlu0 %v1280
      %v1282 = vpop.xlane.xlu0 %1281
      %v1283 = vsub.f32 %v1279, %v1282
      %v1284 = vmul.f32 %v1283, 1.442695
      %v1285 = vpow.pop %v1284
      %v1286 = vsel %vm826, %v1285, 0.0
      %1287 = vadd.xlane.f32.xlu0 %v1286
      %v1288 = vpop.xlane.xlu0 %1287
      %v1289 = vrcp.pop %v1288
      %v1290 = vmul.f32 %v1285, %v1289
      %v1291 = vpack.c.bf16 %v1290, %v1290
      %v1292 = vpack.c.bf16 %v1226, %v1226
      %v1294 = vsel %vm826, %v1291, 0
      %v1297 = vsel %vm843, %v1292, 0
      %1299 = vmatprep.subr.bf16.mxu0 0
      %1300 = vmatpush1.bf16.msra.mxu0 %v1297
      %1301 = vmatprep.subr.bf16.mxu0 0
      %1302 = vmatpush1.bf16.msra.mxu0 0
      %1303 = vmatprep.subr.bf16.mxu0 0
      %1304 = vmatpush1.bf16.msra.mxu0 0
      %1305 = vmatprep.subr.bf16.mxu0 0
      %1306 = vmatpush1.bf16.msra.mxu0 0
      %1307 = vmatprep.subr.bf16.mxu0 0
      %1308 = vmatpush1.bf16.msra.mxu0 0
      %1309 = vmatprep.subr.bf16.mxu0 0
      %1310 = vmatpush1.bf16.msra.mxu0 0
      %1311 = vmatprep.subr.bf16.mxu0 0
      %1312 = vmatpush1.bf16.msra.mxu0 0
      %1313 = vmatprep.subr.bf16.mxu0 0
      %1314 = vmatpush1.bf16.msra.mxu0 0
      %1315 = vmatprep.subr.bf16.mxu0 0
      %1316 = vmatpush1.bf16.msra.mxu0 0
      %1317 = vmatprep.subr.bf16.mxu0 0
      %1318 = vmatpush1.bf16.msra.mxu0 0
      %1319 = vmatprep.subr.bf16.mxu0 0
      %1320 = vmatpush1.bf16.msra.mxu0 0
      %1321 = vmatprep.subr.bf16.mxu0 0
      %1322 = vmatpush1.bf16.msra.mxu0 0
      %1323 = vmatprep.subr.bf16.mxu0 0
      %1324 = vmatpush1.bf16.msra.mxu0 0
      %1325 = vmatprep.subr.bf16.mxu0 0
      %1326 = vmatpush1.bf16.msra.mxu0 0
      %1327 = vmatprep.subr.bf16.mxu0 0
      %1328 = vmatpush1.bf16.msra.mxu0 0
      %1329 = vmatprep.subr.bf16.mxu0 0
      %1330 = vmatpush1.bf16.msra.mxu0 0
      %1331 = vmatprep.mubr.bf16.mxu0 0
      %1332 = vmatmul.mubr.bf16.gmra.mrb[0].mxu0 %v1294
      %v1333 = vpop.f32.mrb[0].mxu0
      %v1334 = vadd.f32 0.0, %v1333
      %v1335 = vpop.f32.mrb[0].mxu0
      %v1336 = vpop.f32.mrb[0].mxu0
      %v1337 = vpop.f32.mrb[0].mxu0
      %1338 = vdwg.mxu0
      %v1339 = vpack.c.bf16 %v1334, %v1334
      %s1340 = scalar_lea.vmem %s3, 16
      %v1341 = vld [vmem:[%s1340] sm:$0xf]
      %v1342 = vld [vmem:[%s1340 + $0x4] sm:$0xf]
      %v1343 = vld [vmem:[%s1340 + $0x8] sm:$0xf]
      %v1344 = vld [vmem:[%s1340 + $0xc] sm:$0xf]
      %v1349 = vunpack.c.l.b16 %v1341
      %v1350 = vunpack.c.l.b16 %v1342
      %v1351 = vunpack.c.l.b16 %v1343
      %v1352 = vunpack.c.l.b16 %v1344
      %v1353 = vpack.c.b16 %v1350, %v1349
      %v1354 = vpack.c.b16 %v1352, %v1351
      %v1358 = vsel %vm778, %v1339, 0
      %1360 = vmatprep.subr.bf16.mxu0 0
      %1361 = vmatpush1.bf16.msra.mxu0 %v1353
      %1362 = vmatprep.subr.bf16.mxu0 0
      %1363 = vmatpush1.bf16.msra.mxu0 %v1354
      %1364 = vmatprep.subr.bf16.mxu0 0
      %1365 = vmatpush1.bf16.msra.mxu0 0
      %1366 = vmatprep.subr.bf16.mxu0 0
      %1367 = vmatpush1.bf16.msra.mxu0 0
      %1368 = vmatprep.subr.bf16.mxu0 0
      %1369 = vmatpush1.bf16.msra.mxu0 0
      %1370 = vmatprep.subr.bf16.mxu0 0
      %1371 = vmatpush1.bf16.msra.mxu0 0
      %1372 = vmatprep.subr.bf16.mxu0 0
      %1373 = vmatpush1.bf16.msra.mxu0 0
      %1374 = vmatprep.subr.bf16.mxu0 0
      %1375 = vmatpush1.bf16.msra.mxu0 0
      %1376 = vmatprep.subr.bf16.mxu0 0
      %1377 = vmatpush1.bf16.msra.mxu0 0
      %1378 = vmatprep.subr.bf16.mxu0 0
      %1379 = vmatpush1.bf16.msra.mxu0 0
      %1380 = vmatprep.subr.bf16.mxu0 0
      %1381 = vmatpush1.bf16.msra.mxu0 0
      %1382 = vmatprep.subr.bf16.mxu0 0
      %1383 = vmatpush1.bf16.msra.mxu0 0
      %1384 = vmatprep.subr.bf16.mxu0 0
      %1385 = vmatpush1.bf16.msra.mxu0 0
      %1386 = vmatprep.subr.bf16.mxu0 0
      %1387 = vmatpush1.bf16.msra.mxu0 0
      %1388 = vmatprep.subr.bf16.mxu0 0
      %1389 = vmatpush1.bf16.msra.mxu0 0
      %1390 = vmatprep.subr.bf16.mxu0 0
      %1391 = vmatpush1.bf16.msra.mxu0 0
      %1392 = vmatprep.mubr.bf16.mxu0 0
      %1393 = vmatmul.mubr.bf16.gmra.mrb[0].mxu0 %v1358
      %v1394 = vpop.f32.mrb[0].mxu0
      %v1395 = vadd.f32 0.0, %v1394
      %v1396 = vpop.f32.mrb[0].mxu0
      %v1397 = vpop.f32.mrb[0].mxu0
      %v1398 = vpop.f32.mrb[0].mxu0
      %1399 = vdwg.mxu0
      %v1404 = vunpack.c.l.b16 %v888
      %v1405 = vunpack.c.l.b16 %v889
      %v1406 = vunpack.c.l.b16 %v890
      %v1407 = vunpack.c.l.b16 %v891
      %v1408 = vpack.c.b16 %v1405, %v1404
      %v1409 = vpack.c.b16 %v1407, %v1406
      %v1413 = vsel %vm778, %v887, 0
      %1415 = vmatprep.subr.bf16.mxu0 0
      %1416 = vmatpush1.bf16.msra.mxu0 %v1408
      %1417 = vmatprep.subr.bf16.mxu0 0
      %1418 = vmatpush1.bf16.msra.mxu0 %v1409
      %1419 = vmatprep.subr.bf16.mxu0 0
      %1420 = vmatpush1.bf16.msra.mxu0 0
      %1421 = vmatprep.subr.bf16.mxu0 0
      %1422 = vmatpush1.bf16.msra.mxu0 0
      %1423 = vmatprep.subr.bf16.mxu0 0
      %1424 = vmatpush1.bf16.msra.mxu0 0
      %1425 = vmatprep.subr.bf16.mxu0 0
      %1426 = vmatpush1.bf16.msra.mxu0 0
      %1427 = vmatprep.subr.bf16.mxu0 0
      %1428 = vmatpush1.bf16.msra.mxu0 0
      %1429 = vmatprep.subr.bf16.mxu0 0
      %1430 = vmatpush1.bf16.msra.mxu0 0
      %1431 = vmatprep.subr.bf16.mxu0 0
      %1432 = vmatpush1.bf16.msra.mxu0 0
      %1433 = vmatprep.subr.bf16.mxu0 0
      %1434 = vmatpush1.bf16.msra.mxu0 0
      %1435 = vmatprep.subr.bf16.mxu0 0
      %1436 = vmatpush1.bf16.msra.mxu0 0
      %1437 = vmatprep.subr.bf16.mxu0 0
      %1438 = vmatpush1.bf16.msra.mxu0 0
      %1439 = vmatprep.subr.bf16.mxu0 0
      %1440 = vmatpush1.bf16.msra.mxu0 0
      %1441 = vmatprep.subr.bf16.mxu0 0
      %1442 = vmatpush1.bf16.msra.mxu0 0
      %1443 = vmatprep.subr.bf16.mxu0 0
      %1444 = vmatpush1.bf16.msra.mxu0 0
      %1445 = vmatprep.subr.bf16.mxu0 0
      %1446 = vmatpush1.bf16.msra.mxu0 0
      %1447 = vmatprep.mubr.bf16.mxu0 0
      %1448 = vmatmul.mubr.bf16.gmra.mrb[0].mxu0 %v1413
      %v1449 = vpop.f32.mrb[0].mxu0
      %v1450 = vadd.f32 %v1395, %v1449
      %v1451 = vpop.f32.mrb[0].mxu0
      %v1452 = vpop.f32.mrb[0].mxu0
      %v1453 = vpop.f32.mrb[0].mxu0
      %1454 = vdwg.mxu0
      %s1455 = scalar_lea.vmem %s1, 128
      %v1456 = vld [vmem:[%s1455] sm:$0xf]
      %v1457 = vld [vmem:[%s1455 + $0x4] sm:$0xf]
      %v1458 = vld [vmem:[%s1455 + $0x8] sm:$0xf]
      %v1459 = vld [vmem:[%s1455 + $0xc] sm:$0xf]
      %v1460 = vld [vmem:[%s1455 + $0x10] sm:$0xf]
      %v1461 = vld [vmem:[%s1455 + $0x14] sm:$0xf]
      %v1462 = vld [vmem:[%s1455 + $0x18] sm:$0xf]
      %v1463 = vld [vmem:[%s1455 + $0x1c] sm:$0xf]
      %v1464 = vld [vmem:[%s1455 + $0x20] sm:$0xf]
      %v1465 = vld [vmem:[%s1455 + $0x24] sm:$0xf]
      %v1466 = vld [vmem:[%s1455 + $0x28] sm:$0xf]
      %v1467 = vld [vmem:[%s1455 + $0x2c] sm:$0xf]
      %v1468 = vld [vmem:[%s1455 + $0x30] sm:$0xf]
      %v1469 = vld [vmem:[%s1455 + $0x34] sm:$0xf]
      %v1470 = vld [vmem:[%s1455 + $0x38] sm:$0xf]
      %v1471 = vld [vmem:[%s1455 + $0x3c] sm:$0xf]
      %s1472 = scalar_lea.vmem %s2, 2
      %v1473 = vld [vmem:[%s1472] sm:$0x1]
      %v1475 = vlaneseq
      %v1476 = vshrl.u32 %v1475, 7
      %v1477 = vsub.s32 0, %v1476
      %v1478 = vrot.slane %v1473, %v1477
      %v1496 = vunpack.c.l.b16 %v1456
      %v1497 = vunpack.c.l.b16 %v1457
      %v1498 = vunpack.c.l.b16 %v1458
      %v1499 = vunpack.c.l.b16 %v1459
      %v1500 = vunpack.c.l.b16 %v1460
      %v1501 = vunpack.c.l.b16 %v1461
      %v1502 = vunpack.c.l.b16 %v1462
      %v1503 = vunpack.c.l.b16 %v1463
      %v1504 = vunpack.c.l.b16 %v1464
      %v1505 = vunpack.c.l.b16 %v1465
      %v1506 = vunpack.c.l.b16 %v1466
      %v1507 = vunpack.c.l.b16 %v1467
      %v1508 = vunpack.c.l.b16 %v1468
      %v1509 = vunpack.c.l.b16 %v1469
      %v1510 = vunpack.c.l.b16 %v1470
      %v1511 = vunpack.c.l.b16 %v1471
      %v1512 = vpack.c.b16 %v1497, %v1496
      %v1513 = vpack.c.b16 %v1499, %v1498
      %v1514 = vpack.c.b16 %v1501, %v1500
      %v1515 = vpack.c.b16 %v1503, %v1502
      %v1516 = vpack.c.b16 %v1505, %v1504
      %v1517 = vpack.c.b16 %v1507, %v1506
      %v1518 = vpack.c.b16 %v1509, %v1508
      %v1519 = vpack.c.b16 %v1511, %v1510
      %1528 = vmatprep.subr.bf16.mxu0 0
      %1529 = vmatpush1.bf16.msra.mxu0 %v1512
      %1530 = vmatprep.subr.bf16.mxu0 0
      %1531 = vmatpush1.bf16.msra.mxu0 %v1513
      %1532 = vmatprep.subr.bf16.mxu0 0
      %1533 = vmatpush1.bf16.msra.mxu0 %v1514
      %1534 = vmatprep.subr.bf16.mxu0 0
      %1535 = vmatpush1.bf16.msra.mxu0 %v1515
      %1536 = vmatprep.subr.bf16.mxu0 0
      %1537 = vmatpush1.bf16.msra.mxu0 %v1516
      %1538 = vmatprep.subr.bf16.mxu0 0
      %1539 = vmatpush1.bf16.msra.mxu0 %v1517
      %1540 = vmatprep.subr.bf16.mxu0 0
      %1541 = vmatpush1.bf16.msra.mxu0 %v1518
      %1542 = vmatprep.subr.bf16.mxu0 0
      %1543 = vmatpush1.bf16.msra.mxu0 %v1519
      %1544 = vmatprep.subr.bf16.mxu0 0
      %1545 = vmatpush1.bf16.msra.mxu0 0
      %1546 = vmatprep.subr.bf16.mxu0 0
      %1547 = vmatpush1.bf16.msra.mxu0 0
      %1548 = vmatprep.subr.bf16.mxu0 0
      %1549 = vmatpush1.bf16.msra.mxu0 0
      %1550 = vmatprep.subr.bf16.mxu0 0
      %1551 = vmatpush1.bf16.msra.mxu0 0
      %1552 = vmatprep.subr.bf16.mxu0 0
      %1553 = vmatpush1.bf16.msra.mxu0 0
      %1554 = vmatprep.subr.bf16.mxu0 0
      %1555 = vmatpush1.bf16.msra.mxu0 0
      %1556 = vmatprep.subr.bf16.mxu0 0
      %1557 = vmatpush1.bf16.msra.mxu0 0
      %1558 = vmatprep.subr.bf16.mxu0 0
      %1559 = vmatpush1.bf16.msra.mxu0 0
      %1560 = vmatprep.mubr.bf16.mxu0 0
      %1561 = vmatmul.mubr.bf16.gmra.mrb[0].mxu0 %v438
      %v1562 = vpop.f32.mrb[0].mxu0
      %v1563 = vadd.f32 %v1478, %v1562
      %v1564 = vpop.f32.mrb[0].mxu0
      %v1565 = vpop.f32.mrb[0].mxu0
      %v1566 = vpop.f32.mrb[0].mxu0
      %1567 = vdwg.mxu0
      %s1568 = scalar_lea.vmem %s1, 384
      %v1569 = vld [vmem:[%s1568] sm:$0xf]
      %v1570 = vld [vmem:[%s1568 + $0x4] sm:$0xf]
      %v1571 = vld [vmem:[%s1568 + $0x8] sm:$0xf]
      %v1572 = vld [vmem:[%s1568 + $0xc] sm:$0xf]
      %v1573 = vld [vmem:[%s1568 + $0x10] sm:$0xf]
      %v1574 = vld [vmem:[%s1568 + $0x14] sm:$0xf]
      %v1575 = vld [vmem:[%s1568 + $0x18] sm:$0xf]
      %v1576 = vld [vmem:[%s1568 + $0x1c] sm:$0xf]
      %v1577 = vld [vmem:[%s1568 + $0x20] sm:$0xf]
      %v1578 = vld [vmem:[%s1568 + $0x24] sm:$0xf]
      %v1579 = vld [vmem:[%s1568 + $0x28] sm:$0xf]
      %v1580 = vld [vmem:[%s1568 + $0x2c] sm:$0xf]
      %v1581 = vld [vmem:[%s1568 + $0x30] sm:$0xf]
      %v1582 = vld [vmem:[%s1568 + $0x34] sm:$0xf]
      %v1583 = vld [vmem:[%s1568 + $0x38] sm:$0xf]
      %v1584 = vld [vmem:[%s1568 + $0x3c] sm:$0xf]
      %s1585 = scalar_lea.vmem %s2, 6
      %v1586 = vld [vmem:[%s1585] sm:$0x1]
      %v1588 = vlaneseq
      %v1589 = vshrl.u32 %v1588, 7
      %v1590 = vsub.s32 0, %v1589
      %v1591 = vrot.slane %v1586, %v1590
      %v1609 = vunpack.c.l.b16 %v1569
      %v1610 = vunpack.c.l.b16 %v1570
      %v1611 = vunpack.c.l.b16 %v1571
      %v1612 = vunpack.c.l.b16 %v1572
      %v1613 = vunpack.c.l.b16 %v1573
      %v1614 = vunpack.c.l.b16 %v1574
      %v1615 = vunpack.c.l.b16 %v1575
      %v1616 = vunpack.c.l.b16 %v1576
      %v1617 = vunpack.c.l.b16 %v1577
      %v1618 = vunpack.c.l.b16 %v1578
      %v1619 = vunpack.c.l.b16 %v1579
      %v1620 = vunpack.c.l.b16 %v1580
      %v1621 = vunpack.c.l.b16 %v1581
      %v1622 = vunpack.c.l.b16 %v1582
      %v1623 = vunpack.c.l.b16 %v1583
      %v1624 = vunpack.c.l.b16 %v1584
      %v1625 = vpack.c.b16 %v1610, %v1609
      %v1626 = vpack.c.b16 %v1612, %v1611
      %v1627 = vpack.c.b16 %v1614, %v1613
      %v1628 = vpack.c.b16 %v1616, %v1615
      %v1629 = vpack.c.b16 %v1618, %v1617
      %v1630 = vpack.c.b16 %v1620, %v1619
      %v1631 = vpack.c.b16 %v1622, %v1621
      %v1632 = vpack.c.b16 %v1624, %v1623
      %1641 = vmatprep.subr.bf16.mxu0 0
      %1642 = vmatpush1.bf16.msra.mxu0 %v1625
      %1643 = vmatprep.subr.bf16.mxu0 0
      %1644 = vmatpush1.bf16.msra.mxu0 %v1626
      %1645 = vmatprep.subr.bf16.mxu0 0
      %1646 = vmatpush1.bf16.msra.mxu0 %v1627
      %1647 = vmatprep.subr.bf16.mxu0 0
      %1648 = vmatpush1.bf16.msra.mxu0 %v1628
      %1649 = vmatprep.subr.bf16.mxu0 0
      %1650 = vmatpush1.bf16.msra.mxu0 %v1629
      %1651 = vmatprep.subr.bf16.mxu0 0
      %1652 = vmatpush1.bf16.msra.mxu0 %v1630
      %1653 = vmatprep.subr.bf16.mxu0 0
      %1654 = vmatpush1.bf16.msra.mxu0 %v1631
      %1655 = vmatprep.subr.bf16.mxu0 0
      %1656 = vmatpush1.bf16.msra.mxu0 %v1632
      %1657 = vmatprep.subr.bf16.mxu0 0
      %1658 = vmatpush1.bf16.msra.mxu0 0
      %1659 = vmatprep.subr.bf16.mxu0 0
      %1660 = vmatpush1.bf16.msra.mxu0 0
      %1661 = vmatprep.subr.bf16.mxu0 0
      %1662 = vmatpush1.bf16.msra.mxu0 0
      %1663 = vmatprep.subr.bf16.mxu0 0
      %1664 = vmatpush1.bf16.msra.mxu0 0
      %1665 = vmatprep.subr.bf16.mxu0 0
      %1666 = vmatpush1.bf16.msra.mxu0 0
      %1667 = vmatprep.subr.bf16.mxu0 0
      %1668 = vmatpush1.bf16.msra.mxu0 0
      %1669 = vmatprep.subr.bf16.mxu0 0
      %1670 = vmatpush1.bf16.msra.mxu0 0
      %1671 = vmatprep.subr.bf16.mxu0 0
      %1672 = vmatpush1.bf16.msra.mxu0 0
      %1673 = vmatprep.mubr.bf16.mxu0 0
      %1674 = vmatmul.mubr.bf16.gmra.mrb[0].mxu0 %v438
      %v1675 = vpop.f32.mrb[0].mxu0
      %v1676 = vadd.f32 %v1591, %v1675
      %v1677 = vpop.f32.mrb[0].mxu0
      %v1678 = vpop.f32.mrb[0].mxu0
      %v1679 = vpop.f32.mrb[0].mxu0
      %1680 = vdwg.mxu0
      %s1681 = scalar_lea.vmem %s1, 640
      %v1682 = vld [vmem:[%s1681] sm:$0xf]
      %v1683 = vld [vmem:[%s1681 + $0x4] sm:$0xf]
      %v1684 = vld [vmem:[%s1681 + $0x8] sm:$0xf]
      %v1685 = vld [vmem:[%s1681 + $0xc] sm:$0xf]
      %v1686 = vld [vmem:[%s1681 + $0x10] sm:$0xf]
      %v1687 = vld [vmem:[%s1681 + $0x14] sm:$0xf]
      %v1688 = vld [vmem:[%s1681 + $0x18] sm:$0xf]
      %v1689 = vld [vmem:[%s1681 + $0x1c] sm:$0xf]
      %v1690 = vld [vmem:[%s1681 + $0x20] sm:$0xf]
      %v1691 = vld [vmem:[%s1681 + $0x24] sm:$0xf]
      %v1692 = vld [vmem:[%s1681 + $0x28] sm:$0xf]
      %v1693 = vld [vmem:[%s1681 + $0x2c] sm:$0xf]
      %v1694 = vld [vmem:[%s1681 + $0x30] sm:$0xf]
      %v1695 = vld [vmem:[%s1681 + $0x34] sm:$0xf]
      %v1696 = vld [vmem:[%s1681 + $0x38] sm:$0xf]
      %v1697 = vld [vmem:[%s1681 + $0x3c] sm:$0xf]
      %s1698 = scalar_lea.vmem %s2, 10
      %v1699 = vld [vmem:[%s1698] sm:$0x1]
      %v1701 = vlaneseq
      %v1702 = vshrl.u32 %v1701, 7
      %v1703 = vsub.s32 0, %v1702
      %v1704 = vrot.slane %v1699, %v1703
      %v1722 = vunpack.c.l.b16 %v1682
      %v1723 = vunpack.c.l.b16 %v1683
      %v1724 = vunpack.c.l.b16 %v1684
      %v1725 = vunpack.c.l.b16 %v1685
      %v1726 = vunpack.c.l.b16 %v1686
      %v1727 = vunpack.c.l.b16 %v1687
      %v1728 = vunpack.c.l.b16 %v1688
      %v1729 = vunpack.c.l.b16 %v1689
      %v1730 = vunpack.c.l.b16 %v1690
      %v1731 = vunpack.c.l.b16 %v1691
      %v1732 = vunpack.c.l.b16 %v1692
      %v1733 = vunpack.c.l.b16 %v1693
      %v1734 = vunpack.c.l.b16 %v1694
      %v1735 = vunpack.c.l.b16 %v1695
      %v1736 = vunpack.c.l.b16 %v1696
      %v1737 = vunpack.c.l.b16 %v1697
      %v1738 = vpack.c.b16 %v1723, %v1722
      %v1739 = vpack.c.b16 %v1725, %v1724
      %v1740 = vpack.c.b16 %v1727, %v1726
      %v1741 = vpack.c.b16 %v1729, %v1728
      %v1742 = vpack.c.b16 %v1731, %v1730
      %v1743 = vpack.c.b16 %v1733, %v1732
      %v1744 = vpack.c.b16 %v1735, %v1734
      %v1745 = vpack.c.b16 %v1737, %v1736
      %1754 = vmatprep.subr.bf16.mxu0 0
      %1755 = vmatpush1.bf16.msra.mxu0 %v1738
      %1756 = vmatprep.subr.bf16.mxu0 0
      %1757 = vmatpush1.bf16.msra.mxu0 %v1739
      %1758 = vmatprep.subr.bf16.mxu0 0
      %1759 = vmatpush1.bf16.msra.mxu0 %v1740
      %1760 = vmatprep.subr.bf16.mxu0 0
      %1761 = vmatpush1.bf16.msra.mxu0 %v1741
      %1762 = vmatprep.subr.bf16.mxu0 0
      %1763 = vmatpush1.bf16.msra.mxu0 %v1742
      %1764 = vmatprep.subr.bf16.mxu0 0
      %1765 = vmatpush1.bf16.msra.mxu0 %v1743
      %1766 = vmatprep.subr.bf16.mxu0 0
      %1767 = vmatpush1.bf16.msra.mxu0 %v1744
      %1768 = vmatprep.subr.bf16.mxu0 0
      %1769 = vmatpush1.bf16.msra.mxu0 %v1745
      %1770 = vmatprep.subr.bf16.mxu0 0
      %1771 = vmatpush1.bf16.msra.mxu0 0
      %1772 = vmatprep.subr.bf16.mxu0 0
      %1773 = vmatpush1.bf16.msra.mxu0 0
      %1774 = vmatprep.subr.bf16.mxu0 0
      %1775 = vmatpush1.bf16.msra.mxu0 0
      %1776 = vmatprep.subr.bf16.mxu0 0
      %1777 = vmatpush1.bf16.msra.mxu0 0
      %1778 = vmatprep.subr.bf16.mxu0 0
      %1779 = vmatpush1.bf16.msra.mxu0 0
      %1780 = vmatprep.subr.bf16.mxu0 0
      %1781 = vmatpush1.bf16.msra.mxu0 0
      %1782 = vmatprep.subr.bf16.mxu0 0
      %1783 = vmatpush1.bf16.msra.mxu0 0
      %1784 = vmatprep.subr.bf16.mxu0 0
      %1785 = vmatpush1.bf16.msra.mxu0 0
      %1786 = vmatprep.mubr.bf16.mxu0 0
      %1787 = vmatmul.mubr.bf16.gmra.mrb[0].mxu0 %v438
      %v1788 = vpop.f32.mrb[0].mxu0
      %v1789 = vadd.f32 %v1704, %v1788
      %v1790 = vpop.f32.mrb[0].mxu0
      %v1791 = vpop.f32.mrb[0].mxu0
      %v1792 = vpop.f32.mrb[0].mxu0
      %1793 = vdwg.mxu0
      %v1794 = vpack.c.bf16 %v1563, %v1563
      %v1795 = vpack.c.bf16 %v1676, %v1676
      %v1797 = vsel %vm778, %v1794, 0
      %v1800 = vsel %vm778, %v1795, 0
      %1802 = vmatprep.subr.bf16.mxu0 0
      %1803 = vmatpush1.bf16.xpose.msra.mxu0 %v1800
      %1804 = vmatprep.subr.bf16.mxu0 0
      %1805 = vmatpush1.bf16.xpose.msra.mxu0 0
      %1806 = vmatprep.subr.bf16.mxu0 0
      %1807 = vmatpush1.bf16.xpose.msra.mxu0 0
      %1808 = vmatprep.subr.bf16.mxu0 0
      %1809 = vmatpush1.bf16.xpose.msra.mxu0 0
      %1810 = vmatprep.subr.bf16.mxu0 0
      %1811 = vmatpush1.bf16.xpose.msra.mxu0 0
      %1812 = vmatprep.subr.bf16.mxu0 0
      %1813 = vmatpush1.bf16.xpose.msra.mxu0 0
      %1814 = vmatprep.subr.bf16.mxu0 0
      %1815 = vmatpush1.bf16.xpose.msra.mxu0 0
      %1816 = vmatprep.subr.bf16.mxu0 0
      %1817 = vmatpush1.bf16.xpose.msra.mxu0 0
      %1818 = vmatprep.subr.bf16.mxu0 0
      %1819 = vmatpush1.bf16.xpose.msra.mxu0 0
      %1820 = vmatprep.subr.bf16.mxu0 0
      %1821 = vmatpush1.bf16.xpose.msra.mxu0 0
      %1822 = vmatprep.subr.bf16.mxu0 0
      %1823 = vmatpush1.bf16.xpose.msra.mxu0 0
      %1824 = vmatprep.subr.bf16.mxu0 0
      %1825 = vmatpush1.bf16.xpose.msra.mxu0 0
      %1826 = vmatprep.subr.bf16.mxu0 0
      %1827 = vmatpush1.bf16.xpose.msra.mxu0 0
      %1828 = vmatprep.subr.bf16.mxu0 0
      %1829 = vmatpush1.bf16.xpose.msra.mxu0 0
      %1830 = vmatprep.subr.bf16.mxu0 0
      %1831 = vmatpush1.bf16.xpose.msra.mxu0 0
      %1832 = vmatprep.subr.bf16.mxu0 0
      %1833 = vmatpush1.bf16.xpose.msra.mxu0 0
      %1834 = vmatprep.mubr.bf16.mxu0 0
      %1835 = vmatmul.mubr.bf16.gmra.mrb[0].mxu0 %v1797
      %v1836 = vpop.f32.mrb[0].mxu0
      %v1837 = vadd.f32 0.0, %v1836
      %v1838 = vpop.f32.mrb[0].mxu0
      %v1839 = vpop.f32.mrb[0].mxu0
      %v1840 = vpop.f32.mrb[0].mxu0
      %1841 = vdwg.mxu0
      %v1842 = vmul.f32 %v1837, 0.17677669
      %v1843 = vsel %vm826, %v1842, -inf
      %1844 = vmax.xlane.f32.xlu0 %v1843
      %v1845 = vpop.xlane.xlu0 %1844
      %v1846 = vsub.f32 %v1842, %v1845
      %v1847 = vmul.f32 %v1846, 1.442695
      %v1848 = vpow.pop %v1847
      %v1849 = vsel %vm826, %v1848, 0.0
      %1850 = vadd.xlane.f32.xlu0 %v1849
      %v1851 = vpop.xlane.xlu0 %1850
      %v1852 = vrcp.pop %v1851
      %v1853 = vmul.f32 %v1848, %v1852
      %v1854 = vpack.c.bf16 %v1853, %v1853
      %v1855 = vpack.c.bf16 %v1789, %v1789
      %v1857 = vsel %vm826, %v1854, 0
      %v1860 = vsel %vm843, %v1855, 0
      %1862 = vmatprep.subr.bf16.mxu0 0
      %1863 = vmatpush1.bf16.msra.mxu0 %v1860
      %1864 = vmatprep.subr.bf16.mxu0 0
      %1865 = vmatpush1.bf16.msra.mxu0 0
      %1866 = vmatprep.subr.bf16.mxu0 0
      %1867 = vmatpush1.bf16.msra.mxu0 0
      %1868 = vmatprep.subr.bf16.mxu0 0
      %1869 = vmatpush1.bf16.msra.mxu0 0
      %1870 = vmatprep.subr.bf16.mxu0 0
      %1871 = vmatpush1.bf16.msra.mxu0 0
      %1872 = vmatprep.subr.bf16.mxu0 0
      %1873 = vmatpush1.bf16.msra.mxu0 0
      %1874 = vmatprep.subr.bf16.mxu0 0
      %1875 = vmatpush1.bf16.msra.mxu0 0
      %1876 = vmatprep.subr.bf16.mxu0 0
      %1877 = vmatpush1.bf16.msra.mxu0 0
      %1878 = vmatprep.subr.bf16.mxu0 0
      %1879 = vmatpush1.bf16.msra.mxu0 0
      %1880 = vmatprep.subr.bf16.mxu0 0
      %1881 = vmatpush1.bf16.msra.mxu0 0
      %1882 = vmatprep.subr.bf16.mxu0 0
      %1883 = vmatpush1.bf16.msra.mxu0 0
      %1884 = vmatprep.subr.bf16.mxu0 0
      %1885 = vmatpush1.bf16.msra.mxu0 0
      %1886 = vmatprep.subr.bf16.mxu0 0
      %1887 = vmatpush1.bf16.msra.mxu0 0
      %1888 = vmatprep.subr.bf16.mxu0 0
      %1889 = vmatpush1.bf16.msra.mxu0 0
      %1890 = vmatprep.subr.bf16.mxu0 0
      %1891 = vmatpush1.bf16.msra.mxu0 0
      %1892 = vmatprep.subr.bf16.mxu0 0
      %1893 = vmatpush1.bf16.msra.mxu0 0
      %1894 = vmatprep.mubr.bf16.mxu0 0
      %1895 = vmatmul.mubr.bf16.gmra.mrb[0].mxu0 %v1857
      %v1896 = vpop.f32.mrb[0].mxu0
      %v1897 = vadd.f32 0.0, %v1896
      %v1898 = vpop.f32.mrb[0].mxu0
      %v1899 = vpop.f32.mrb[0].mxu0
      %v1900 = vpop.f32.mrb[0].mxu0
      %1901 = vdwg.mxu0
      %v1902 = vpack.c.bf16 %v1897, %v1897
      %s1903 = scalar_lea.vmem %s3, 32
      %v1904 = vld [vmem:[%s1903] sm:$0xf]
      %v1905 = vld [vmem:[%s1903 + $0x4] sm:$0xf]
      %v1906 = vld [vmem:[%s1903 + $0x8] sm:$0xf]
      %v1907 = vld [vmem:[%s1903 + $0xc] sm:$0xf]
      %v1912 = vunpack.c.l.b16 %v1904
      %v1913 = vunpack.c.l.b16 %v1905
      %v1914 = vunpack.c.l.b16 %v1906
      %v1915 = vunpack.c.l.b16 %v1907
      %v1916 = vpack.c.b16 %v1913, %v1912
      %v1917 = vpack.c.b16 %v1915, %v1914
      %v1921 = vsel %vm778, %v1902, 0
      %1923 = vmatprep.subr.bf16.mxu0 0
      %1924 = vmatpush1.bf16.msra.mxu0 %v1916
      %1925 = vmatprep.subr.bf16.mxu0 0
      %1926 = vmatpush1.bf16.msra.mxu0 %v1917
      %1927 = vmatprep.subr.bf16.mxu0 0
      %1928 = vmatpush1.bf16.msra.mxu0 0
      %1929 = vmatprep.subr.bf16.mxu0 0
      %1930 = vmatpush1.bf16.msra.mxu0 0
      %1931 = vmatprep.subr.bf16.mxu0 0
      %1932 = vmatpush1.bf16.msra.mxu0 0
      %1933 = vmatprep.subr.bf16.mxu0 0
      %1934 = vmatpush1.bf16.msra.mxu0 0
      %1935 = vmatprep.subr.bf16.mxu0 0
      %1936 = vmatpush1.bf16.msra.mxu0 0
      %1937 = vmatprep.subr.bf16.mxu0 0
      %1938 = vmatpush1.bf16.msra.mxu0 0
      %1939 = vmatprep.subr.bf16.mxu0 0
      %1940 = vmatpush1.bf16.msra.mxu0 0
      %1941 = vmatprep.subr.bf16.mxu0 0
      %1942 = vmatpush1.bf16.msra.mxu0 0
      %1943 = vmatprep.subr.bf16.mxu0 0
      %1944 = vmatpush1.bf16.msra.mxu0 0
      %1945 = vmatprep.subr.bf16.mxu0 0
      %1946 = vmatpush1.bf16.msra.mxu0 0
      %1947 = vmatprep.subr.bf16.mxu0 0
      %1948 = vmatpush1.bf16.msra.mxu0 0
      %1949 = vmatprep.subr.bf16.mxu0 0
      %1950 = vmatpush1.bf16.msra.mxu0 0
      %1951 = vmatprep.subr.bf16.mxu0 0
      %1952 = vmatpush1.bf16.msra.mxu0 0
      %1953 = vmatprep.subr.bf16.mxu0 0
      %1954 = vmatpush1.bf16.msra.mxu0 0
      %1955 = vmatprep.mubr.bf16.mxu0 0
      %1956 = vmatmul.mubr.bf16.gmra.mrb[0].mxu0 %v1921
      %v1957 = vpop.f32.mrb[0].mxu0
      %v1958 = vadd.f32 0.0, %v1957
      %v1959 = vpop.f32.mrb[0].mxu0
      %v1960 = vpop.f32.mrb[0].mxu0
      %v1961 = vpop.f32.mrb[0].mxu0
      %1962 = vdwg.mxu0
      %v1963 = vadd.f32 %v1450, %v1958
      %s1964 = scalar_lea.vmem %s1, 192
      %v1965 = vld [vmem:[%s1964] sm:$0xf]
      %v1966 = vld [vmem:[%s1964 + $0x4] sm:$0xf]
      %v1967 = vld [vmem:[%s1964 + $0x8] sm:$0xf]
      %v1968 = vld [vmem:[%s1964 + $0xc] sm:$0xf]
      %v1969 = vld [vmem:[%s1964 + $0x10] sm:$0xf]
      %v1970 = vld [vmem:[%s1964 + $0x14] sm:$0xf]
      %v1971 = vld [vmem:[%s1964 + $0x18] sm:$0xf]
      %v1972 = vld [vmem:[%s1964 + $0x1c] sm:$0xf]
      %v1973 = vld [vmem:[%s1964 + $0x20] sm:$0xf]
      %v1974 = vld [vmem:[%s1964 + $0x24] sm:$0xf]
      %v1975 = vld [vmem:[%s1964 + $0x28] sm:$0xf]
      %v1976 = vld [vmem:[%s1964 + $0x2c] sm:$0xf]
      %v1977 = vld [vmem:[%s1964 + $0x30] sm:$0xf]
      %v1978 = vld [vmem:[%s1964 + $0x34] sm:$0xf]
      %v1979 = vld [vmem:[%s1964 + $0x38] sm:$0xf]
      %v1980 = vld [vmem:[%s1964 + $0x3c] sm:$0xf]
      %s1981 = scalar_lea.vmem %s2, 3
      %v1982 = vld [vmem:[%s1981] sm:$0x1]
      %v1984 = vlaneseq
      %v1985 = vshrl.u32 %v1984, 7
      %v1986 = vsub.s32 0, %v1985
      %v1987 = vrot.slane %v1982, %v1986
      %v2005 = vunpack.c.l.b16 %v1965
      %v2006 = vunpack.c.l.b16 %v1966
      %v2007 = vunpack.c.l.b16 %v1967
      %v2008 = vunpack.c.l.b16 %v1968
      %v2009 = vunpack.c.l.b16 %v1969
      %v2010 = vunpack.c.l.b16 %v1970
      %v2011 = vunpack.c.l.b16 %v1971
      %v2012 = vunpack.c.l.b16 %v1972
      %v2013 = vunpack.c.l.b16 %v1973
      %v2014 = vunpack.c.l.b16 %v1974
      %v2015 = vunpack.c.l.b16 %v1975
      %v2016 = vunpack.c.l.b16 %v1976
      %v2017 = vunpack.c.l.b16 %v1977
      %v2018 = vunpack.c.l.b16 %v1978
      %v2019 = vunpack.c.l.b16 %v1979
      %v2020 = vunpack.c.l.b16 %v1980
      %v2021 = vpack.c.b16 %v2006, %v2005
      %v2022 = vpack.c.b16 %v2008, %v2007
      %v2023 = vpack.c.b16 %v2010, %v2009
      %v2024 = vpack.c.b16 %v2012, %v2011
      %v2025 = vpack.c.b16 %v2014, %v2013
      %v2026 = vpack.c.b16 %v2016, %v2015
      %v2027 = vpack.c.b16 %v2018, %v2017
      %v2028 = vpack.c.b16 %v2020, %v2019
      %2037 = vmatprep.subr.bf16.mxu0 0
      %2038 = vmatpush1.bf16.msra.mxu0 %v2021
      %2039 = vmatprep.subr.bf16.mxu0 0
      %2040 = vmatpush1.bf16.msra.mxu0 %v2022
      %2041 = vmatprep.subr.bf16.mxu0 0
      %2042 = vmatpush1.bf16.msra.mxu0 %v2023
      %2043 = vmatprep.subr.bf16.mxu0 0
      %2044 = vmatpush1.bf16.msra.mxu0 %v2024
      %2045 = vmatprep.subr.bf16.mxu0 0
      %2046 = vmatpush1.bf16.msra.mxu0 %v2025
      %2047 = vmatprep.subr.bf16.mxu0 0
      %2048 = vmatpush1.bf16.msra.mxu0 %v2026
      %2049 = vmatprep.subr.bf16.mxu0 0
      %2050 = vmatpush1.bf16.msra.mxu0 %v2027
      %2051 = vmatprep.subr.bf16.mxu0 0
      %2052 = vmatpush1.bf16.msra.mxu0 %v2028
      %2053 = vmatprep.subr.bf16.mxu0 0
      %2054 = vmatpush1.bf16.msra.mxu0 0
      %2055 = vmatprep.subr.bf16.mxu0 0
      %2056 = vmatpush1.bf16.msra.mxu0 0
      %2057 = vmatprep.subr.bf16.mxu0 0
      %2058 = vmatpush1.bf16.msra.mxu0 0
      %2059 = vmatprep.subr.bf16.mxu0 0
      %2060 = vmatpush1.bf16.msra.mxu0 0
      %2061 = vmatprep.subr.bf16.mxu0 0
      %2062 = vmatpush1.bf16.msra.mxu0 0
      %2063 = vmatprep.subr.bf16.mxu0 0
      %2064 = vmatpush1.bf16.msra.mxu0 0
      %2065 = vmatprep.subr.bf16.mxu0 0
      %2066 = vmatpush1.bf16.msra.mxu0 0
      %2067 = vmatprep.subr.bf16.mxu0 0
      %2068 = vmatpush1.bf16.msra.mxu0 0
      %2069 = vmatprep.mubr.bf16.mxu0 0
      %2070 = vmatmul.mubr.bf16.gmra.mrb[0].mxu0 %v438
      %v2071 = vpop.f32.mrb[0].mxu0
      %v2072 = vadd.f32 %v1987, %v2071
      %v2073 = vpop.f32.mrb[0].mxu0
      %v2074 = vpop.f32.mrb[0].mxu0
      %v2075 = vpop.f32.mrb[0].mxu0
      %2076 = vdwg.mxu0
      %s2077 = scalar_lea.vmem %s1, 448
      %v2078 = vld [vmem:[%s2077] sm:$0xf]
      %v2079 = vld [vmem:[%s2077 + $0x4] sm:$0xf]
      %v2080 = vld [vmem:[%s2077 + $0x8] sm:$0xf]
      %v2081 = vld [vmem:[%s2077 + $0xc] sm:$0xf]
      %v2082 = vld [vmem:[%s2077 + $0x10] sm:$0xf]
      %v2083 = vld [vmem:[%s2077 + $0x14] sm:$0xf]
      %v2084 = vld [vmem:[%s2077 + $0x18] sm:$0xf]
      %v2085 = vld [vmem:[%s2077 + $0x1c] sm:$0xf]
      %v2086 = vld [vmem:[%s2077 + $0x20] sm:$0xf]
      %v2087 = vld [vmem:[%s2077 + $0x24] sm:$0xf]
      %v2088 = vld [vmem:[%s2077 + $0x28] sm:$0xf]
      %v2089 = vld [vmem:[%s2077 + $0x2c] sm:$0xf]
      %v2090 = vld [vmem:[%s2077 + $0x30] sm:$0xf]
      %v2091 = vld [vmem:[%s2077 + $0x34] sm:$0xf]
      %v2092 = vld [vmem:[%s2077 + $0x38] sm:$0xf]
      %v2093 = vld [vmem:[%s2077 + $0x3c] sm:$0xf]
      %s2094 = scalar_lea.vmem %s2, 7
      %v2095 = vld [vmem:[%s2094] sm:$0x1]
      %v2097 = vlaneseq
      %v2098 = vshrl.u32 %v2097, 7
      %v2099 = vsub.s32 0, %v2098
      %v2100 = vrot.slane %v2095, %v2099
      %v2118 = vunpack.c.l.b16 %v2078
      %v2119 = vunpack.c.l.b16 %v2079
      %v2120 = vunpack.c.l.b16 %v2080
      %v2121 = vunpack.c.l.b16 %v2081
      %v2122 = vunpack.c.l.b16 %v2082
      %v2123 = vunpack.c.l.b16 %v2083
      %v2124 = vunpack.c.l.b16 %v2084
      %v2125 = vunpack.c.l.b16 %v2085
      %v2126 = vunpack.c.l.b16 %v2086
      %v2127 = vunpack.c.l.b16 %v2087
      %v2128 = vunpack.c.l.b16 %v2088
      %v2129 = vunpack.c.l.b16 %v2089
      %v2130 = vunpack.c.l.b16 %v2090
      %v2131 = vunpack.c.l.b16 %v2091
      %v2132 = vunpack.c.l.b16 %v2092
      %v2133 = vunpack.c.l.b16 %v2093
      %v2134 = vpack.c.b16 %v2119, %v2118
      %v2135 = vpack.c.b16 %v2121, %v2120
      %v2136 = vpack.c.b16 %v2123, %v2122
      %v2137 = vpack.c.b16 %v2125, %v2124
      %v2138 = vpack.c.b16 %v2127, %v2126
      %v2139 = vpack.c.b16 %v2129, %v2128
      %v2140 = vpack.c.b16 %v2131, %v2130
      %v2141 = vpack.c.b16 %v2133, %v2132
      %2150 = vmatprep.subr.bf16.mxu0 0
      %2151 = vmatpush1.bf16.msra.mxu0 %v2134
      %2152 = vmatprep.subr.bf16.mxu0 0
      %2153 = vmatpush1.bf16.msra.mxu0 %v2135
      %2154 = vmatprep.subr.bf16.mxu0 0
      %2155 = vmatpush1.bf16.msra.mxu0 %v2136
      %2156 = vmatprep.subr.bf16.mxu0 0
      %2157 = vmatpush1.bf16.msra.mxu0 %v2137
      %2158 = vmatprep.subr.bf16.mxu0 0
      %2159 = vmatpush1.bf16.msra.mxu0 %v2138
      %2160 = vmatprep.subr.bf16.mxu0 0
      %2161 = vmatpush1.bf16.msra.mxu0 %v2139
      %2162 = vmatprep.subr.bf16.mxu0 0
      %2163 = vmatpush1.bf16.msra.mxu0 %v2140
      %2164 = vmatprep.subr.bf16.mxu0 0
      %2165 = vmatpush1.bf16.msra.mxu0 %v2141
      %2166 = vmatprep.subr.bf16.mxu0 0
      %2167 = vmatpush1.bf16.msra.mxu0 0
      %2168 = vmatprep.subr.bf16.mxu0 0
      %2169 = vmatpush1.bf16.msra.mxu0 0
      %2170 = vmatprep.subr.bf16.mxu0 0
      %2171 = vmatpush1.bf16.msra.mxu0 0
      %2172 = vmatprep.subr.bf16.mxu0 0
      %2173 = vmatpush1.bf16.msra.mxu0 0
      %2174 = vmatprep.subr.bf16.mxu0 0
      %2175 = vmatpush1.bf16.msra.mxu0 0
      %2176 = vmatprep.subr.bf16.mxu0 0
      %2177 = vmatpush1.bf16.msra.mxu0 0
      %2178 = vmatprep.subr.bf16.mxu0 0
      %2179 = vmatpush1.bf16.msra.mxu0 0
      %2180 = vmatprep.subr.bf16.mxu0 0
      %2181 = vmatpush1.bf16.msra.mxu0 0
      %2182 = vmatprep.mubr.bf16.mxu0 0
      %2183 = vmatmul.mubr.bf16.gmra.mrb[0].mxu0 %v438
      %v2184 = vpop.f32.mrb[0].mxu0
      %v2185 = vadd.f32 %v2100, %v2184
      %v2186 = vpop.f32.mrb[0].mxu0
      %v2187 = vpop.f32.mrb[0].mxu0
      %v2188 = vpop.f32.mrb[0].mxu0
      %2189 = vdwg.mxu0
      %s2190 = scalar_lea.vmem %s1, 704
      %v2191 = vld [vmem:[%s2190] sm:$0xf]
      %v2192 = vld [vmem:[%s2190 + $0x4] sm:$0xf]
      %v2193 = vld [vmem:[%s2190 + $0x8] sm:$0xf]
      %v2194 = vld [vmem:[%s2190 + $0xc] sm:$0xf]
      %v2195 = vld [vmem:[%s2190 + $0x10] sm:$0xf]
      %v2196 = vld [vmem:[%s2190 + $0x14] sm:$0xf]
      %v2197 = vld [vmem:[%s2190 + $0x18] sm:$0xf]
      %v2198 = vld [vmem:[%s2190 + $0x1c] sm:$0xf]
      %v2199 = vld [vmem:[%s2190 + $0x20] sm:$0xf]
      %v2200 = vld [vmem:[%s2190 + $0x24] sm:$0xf]
      %v2201 = vld [vmem:[%s2190 + $0x28] sm:$0xf]
      %v2202 = vld [vmem:[%s2190 + $0x2c] sm:$0xf]
      %v2203 = vld [vmem:[%s2190 + $0x30] sm:$0xf]
      %v2204 = vld [vmem:[%s2190 + $0x34] sm:$0xf]
      %v2205 = vld [vmem:[%s2190 + $0x38] sm:$0xf]
      %v2206 = vld [vmem:[%s2190 + $0x3c] sm:$0xf]
      %s2207 = scalar_lea.vmem %s2, 11
      %v2208 = vld [vmem:[%s2207] sm:$0x1]
      %v2210 = vlaneseq
      %v2211 = vshrl.u32 %v2210, 7
      %v2212 = vsub.s32 0, %v2211
      %v2213 = vrot.slane %v2208, %v2212
      %v2231 = vunpack.c.l.b16 %v2191
      %v2232 = vunpack.c.l.b16 %v2192
      %v2233 = vunpack.c.l.b16 %v2193
      %v2234 = vunpack.c.l.b16 %v2194
      %v2235 = vunpack.c.l.b16 %v2195
      %v2236 = vunpack.c.l.b16 %v2196
      %v2237 = vunpack.c.l.b16 %v2197
      %v2238 = vunpack.c.l.b16 %v2198
      %v2239 = vunpack.c.l.b16 %v2199
      %v2240 = vunpack.c.l.b16 %v2200
      %v2241 = vunpack.c.l.b16 %v2201
      %v2242 = vunpack.c.l.b16 %v2202
      %v2243 = vunpack.c.l.b16 %v2203
      %v2244 = vunpack.c.l.b16 %v2204
      %v2245 = vunpack.c.l.b16 %v2205
      %v2246 = vunpack.c.l.b16 %v2206
      %v2247 = vpack.c.b16 %v2232, %v2231
      %v2248 = vpack.c.b16 %v2234, %v2233
      %v2249 = vpack.c.b16 %v2236, %v2235
      %v2250 = vpack.c.b16 %v2238, %v2237
      %v2251 = vpack.c.b16 %v2240, %v2239
      %v2252 = vpack.c.b16 %v2242, %v2241
      %v2253 = vpack.c.b16 %v2244, %v2243
      %v2254 = vpack.c.b16 %v2246, %v2245
      %2263 = vmatprep.subr.bf16.mxu0 0
      %2264 = vmatpush1.bf16.msra.mxu0 %v2247
      %2265 = vmatprep.subr.bf16.mxu0 0
      %2266 = vmatpush1.bf16.msra.mxu0 %v2248
      %2267 = vmatprep.subr.bf16.mxu0 0
      %2268 = vmatpush1.bf16.msra.mxu0 %v2249
      %2269 = vmatprep.subr.bf16.mxu0 0
      %2270 = vmatpush1.bf16.msra.mxu0 %v2250
      %2271 = vmatprep.subr.bf16.mxu0 0
      %2272 = vmatpush1.bf16.msra.mxu0 %v2251
      %2273 = vmatprep.subr.bf16.mxu0 0
      %2274 = vmatpush1.bf16.msra.mxu0 %v2252
      %2275 = vmatprep.subr.bf16.mxu0 0
      %2276 = vmatpush1.bf16.msra.mxu0 %v2253
      %2277 = vmatprep.subr.bf16.mxu0 0
      %2278 = vmatpush1.bf16.msra.mxu0 %v2254
      %2279 = vmatprep.subr.bf16.mxu0 0
      %2280 = vmatpush1.bf16.msra.mxu0 0
      %2281 = vmatprep.subr.bf16.mxu0 0
      %2282 = vmatpush1.bf16.msra.mxu0 0
      %2283 = vmatprep.subr.bf16.mxu0 0
      %2284 = vmatpush1.bf16.msra.mxu0 0
      %2285 = vmatprep.subr.bf16.mxu0 0
      %2286 = vmatpush1.bf16.msra.mxu0 0
      %2287 = vmatprep.subr.bf16.mxu0 0
      %2288 = vmatpush1.bf16.msra.mxu0 0
      %2289 = vmatprep.subr.bf16.mxu0 0
      %2290 = vmatpush1.bf16.msra.mxu0 0
      %2291 = vmatprep.subr.bf16.mxu0 0
      %2292 = vmatpush1.bf16.msra.mxu0 0
      %2293 = vmatprep.subr.bf16.mxu0 0
      %2294 = vmatpush1.bf16.msra.mxu0 0
      %2295 = vmatprep.mubr.bf16.mxu0 0
      %2296 = vmatmul.mubr.bf16.gmra.mrb[0].mxu0 %v438
      %v2297 = vpop.f32.mrb[0].mxu0
      %v2298 = vadd.f32 %v2213, %v2297
      %v2299 = vpop.f32.mrb[0].mxu0
      %v2300 = vpop.f32.mrb[0].mxu0
      %v2301 = vpop.f32.mrb[0].mxu0
      %2302 = vdwg.mxu0
      %v2303 = vpack.c.bf16 %v2072, %v2072
      %v2304 = vpack.c.bf16 %v2185, %v2185
      %v2306 = vsel %vm778, %v2303, 0
      %v2309 = vsel %vm778, %v2304, 0
      %2311 = vmatprep.subr.bf16.mxu0 0
      %2312 = vmatpush1.bf16.xpose.msra.mxu0 %v2309
      %2313 = vmatprep.subr.bf16.mxu0 0
      %2314 = vmatpush1.bf16.xpose.msra.mxu0 0
      %2315 = vmatprep.subr.bf16.mxu0 0
      %2316 = vmatpush1.bf16.xpose.msra.mxu0 0
      %2317 = vmatprep.subr.bf16.mxu0 0
      %2318 = vmatpush1.bf16.xpose.msra.mxu0 0
      %2319 = vmatprep.subr.bf16.mxu0 0
      %2320 = vmatpush1.bf16.xpose.msra.mxu0 0
      %2321 = vmatprep.subr.bf16.mxu0 0
      %2322 = vmatpush1.bf16.xpose.msra.mxu0 0
      %2323 = vmatprep.subr.bf16.mxu0 0
      %2324 = vmatpush1.bf16.xpose.msra.mxu0 0
      %2325 = vmatprep.subr.bf16.mxu0 0
      %2326 = vmatpush1.bf16.xpose.msra.mxu0 0
      %2327 = vmatprep.subr.bf16.mxu0 0
      %2328 = vmatpush1.bf16.xpose.msra.mxu0 0
      %2329 = vmatprep.subr.bf16.mxu0 0
      %2330 = vmatpush1.bf16.xpose.msra.mxu0 0
      %2331 = vmatprep.subr.bf16.mxu0 0
      %2332 = vmatpush1.bf16.xpose.msra.mxu0 0
      %2333 = vmatprep.subr.bf16.mxu0 0
      %2334 = vmatpush1.bf16.xpose.msra.mxu0 0
      %2335 = vmatprep.subr.bf16.mxu0 0
      %2336 = vmatpush1.bf16.xpose.msra.mxu0 0
      %2337 = vmatprep.subr.bf16.mxu0 0
      %2338 = vmatpush1.bf16.xpose.msra.mxu0 0
      %2339 = vmatprep.subr.bf16.mxu0 0
      %2340 = vmatpush1.bf16.xpose.msra.mxu0 0
      %2341 = vmatprep.subr.bf16.mxu0 0
      %2342 = vmatpush1.bf16.xpose.msra.mxu0 0
      %2343 = vmatprep.mubr.bf16.mxu0 0
      %2344 = vmatmul.mubr.bf16.gmra.mrb[0].mxu0 %v2306
      %v2345 = vpop.f32.mrb[0].mxu0
      %v2346 = vadd.f32 0.0, %v2345
      %v2347 = vpop.f32.mrb[0].mxu0
      %v2348 = vpop.f32.mrb[0].mxu0
      %v2349 = vpop.f32.mrb[0].mxu0
      %2350 = vdwg.mxu0
      %v2351 = vmul.f32 %v2346, 0.17677669
      %v2352 = vsel %vm826, %v2351, -inf
      %2353 = vmax.xlane.f32.xlu0 %v2352
      %v2354 = vpop.xlane.xlu0 %2353
      %v2355 = vsub.f32 %v2351, %v2354
      %v2356 = vmul.f32 %v2355, 1.442695
      %v2357 = vpow.pop %v2356
      %v2358 = vsel %vm826, %v2357, 0.0
      %2359 = vadd.xlane.f32.xlu0 %v2358
      %v2360 = vpop.xlane.xlu0 %2359
      %v2361 = vrcp.pop %v2360
      %v2362 = vmul.f32 %v2357, %v2361
      %v2363 = vpack.c.bf16 %v2362, %v2362
      %v2364 = vpack.c.bf16 %v2298, %v2298
      %v2366 = vsel %vm826, %v2363, 0
      %v2369 = vsel %vm843, %v2364, 0
      %2371 = vmatprep.subr.bf16.mxu0 0
      %2372 = vmatpush1.bf16.msra.mxu0 %v2369
      %2373 = vmatprep.subr.bf16.mxu0 0
      %2374 = vmatpush1.bf16.msra.mxu0 0
      %2375 = vmatprep.subr.bf16.mxu0 0
      %2376 = vmatpush1.bf16.msra.mxu0 0
      %2377 = vmatprep.subr.bf16.mxu0 0
      %2378 = vmatpush1.bf16.msra.mxu0 0
      %2379 = vmatprep.subr.bf16.mxu0 0
      %2380 = vmatpush1.bf16.msra.mxu0 0
      %2381 = vmatprep.subr.bf16.mxu0 0
      %2382 = vmatpush1.bf16.msra.mxu0 0
      %2383 = vmatprep.subr.bf16.mxu0 0
      %2384 = vmatpush1.bf16.msra.mxu0 0
      %2385 = vmatprep.subr.bf16.mxu0 0
      %2386 = vmatpush1.bf16.msra.mxu0 0
      %2387 = vmatprep.subr.bf16.mxu0 0
      %2388 = vmatpush1.bf16.msra.mxu0 0
      %2389 = vmatprep.subr.bf16.mxu0 0
      %2390 = vmatpush1.bf16.msra.mxu0 0
      %2391 = vmatprep.subr.bf16.mxu0 0
      %2392 = vmatpush1.bf16.msra.mxu0 0
      %2393 = vmatprep.subr.bf16.mxu0 0
      %2394 = vmatpush1.bf16.msra.mxu0 0
      %2395 = vmatprep.subr.bf16.mxu0 0
      %2396 = vmatpush1.bf16.msra.mxu0 0
      %2397 = vmatprep.subr.bf16.mxu0 0
      %2398 = vmatpush1.bf16.msra.mxu0 0
      %2399 = vmatprep.subr.bf16.mxu0 0
      %2400 = vmatpush1.bf16.msra.mxu0 0
      %2401 = vmatprep.subr.bf16.mxu0 0
      %2402 = vmatpush1.bf16.msra.mxu0 0
      %2403 = vmatprep.mubr.bf16.mxu0 0
      %2404 = vmatmul.mubr.bf16.gmra.mrb[0].mxu0 %v2366
      %v2405 = vpop.f32.mrb[0].mxu0
      %v2406 = vadd.f32 0.0, %v2405
      %v2407 = vpop.f32.mrb[0].mxu0
      %v2408 = vpop.f32.mrb[0].mxu0
      %v2409 = vpop.f32.mrb[0].mxu0
      %2410 = vdwg.mxu0
      %v2411 = vpack.c.bf16 %v2406, %v2406
      %s2412 = scalar_lea.vmem %s3, 48
      %v2413 = vld [vmem:[%s2412] sm:$0xf]
      %v2414 = vld [vmem:[%s2412 + $0x4] sm:$0xf]
      %v2415 = vld [vmem:[%s2412 + $0x8] sm:$0xf]
      %v2416 = vld [vmem:[%s2412 + $0xc] sm:$0xf]
      %v2421 = vunpack.c.l.b16 %v2413
      %v2422 = vunpack.c.l.b16 %v2414
      %v2423 = vunpack.c.l.b16 %v2415
      %v2424 = vunpack.c.l.b16 %v2416
      %v2425 = vpack.c.b16 %v2422, %v2421
      %v2426 = vpack.c.b16 %v2424, %v2423
      %v2430 = vsel %vm778, %v2411, 0
      %2432 = vmatprep.subr.bf16.mxu0 0
      %2433 = vmatpush1.bf16.msra.mxu0 %v2425
      %2434 = vmatprep.subr.bf16.mxu0 0
      %2435 = vmatpush1.bf16.msra.mxu0 %v2426
      %2436 = vmatprep.subr.bf16.mxu0 0
      %2437 = vmatpush1.bf16.msra.mxu0 0
      %2438 = vmatprep.subr.bf16.mxu0 0
      %2439 = vmatpush1.bf16.msra.mxu0 0
      %2440 = vmatprep.subr.bf16.mxu0 0
      %2441 = vmatpush1.bf16.msra.mxu0 0
      %2442 = vmatprep.subr.bf16.mxu0 0
      %2443 = vmatpush1.bf16.msra.mxu0 0
      %2444 = vmatprep.subr.bf16.mxu0 0
      %2445 = vmatpush1.bf16.msra.mxu0 0
      %2446 = vmatprep.subr.bf16.mxu0 0
      %2447 = vmatpush1.bf16.msra.mxu0 0
      %2448 = vmatprep.subr.bf16.mxu0 0
      %2449 = vmatpush1.bf16.msra.mxu0 0
      %2450 = vmatprep.subr.bf16.mxu0 0
      %2451 = vmatpush1.bf16.msra.mxu0 0
      %2452 = vmatprep.subr.bf16.mxu0 0
      %2453 = vmatpush1.bf16.msra.mxu0 0
      %2454 = vmatprep.subr.bf16.mxu0 0
      %2455 = vmatpush1.bf16.msra.mxu0 0
      %2456 = vmatprep.subr.bf16.mxu0 0
      %2457 = vmatpush1.bf16.msra.mxu0 0
      %2458 = vmatprep.subr.bf16.mxu0 0
      %2459 = vmatpush1.bf16.msra.mxu0 0
      %2460 = vmatprep.subr.bf16.mxu0 0
      %2461 = vmatpush1.bf16.msra.mxu0 0
      %2462 = vmatprep.subr.bf16.mxu0 0
      %2463 = vmatpush1.bf16.msra.mxu0 0
      %2464 = vmatprep.mubr.bf16.mxu0 0
      %2465 = vmatmul.mubr.bf16.gmra.mrb[0].mxu0 %v2430
      %v2466 = vpop.f32.mrb[0].mxu0
      %v2467 = vadd.f32 0.0, %v2466
      %v2468 = vpop.f32.mrb[0].mxu0
      %v2469 = vpop.f32.mrb[0].mxu0
      %v2470 = vpop.f32.mrb[0].mxu0
      %2471 = vdwg.mxu0
      %v2472 = vadd.f32 %v1963, %v2467
      %v2473 = vld [vmem:[%s4] sm:$0x1]
      %v2475 = vlaneseq
      %v2476 = vshrl.u32 %v2475, 7
      %v2477 = vsub.s32 0, %v2476
      %v2478 = vrot.slane %v2473, %v2477
      %v2480 = vadd.f32 %v2472, %v2478
      %v2481 = vadd.f32 %v437, %v2480
      %v2482 = vld [vmem:[%s5] sm:$0x1]
      %v2483 = vld [vmem:[%s6] sm:$0x1]
      %2484 = vadd.xlane.f32.xlu0 %v2481
      %v2485 = vpop.xlane.xlu0 %2484
      %v2486 = vrcp.pop 128.0
      %v2487 = vmul.f32 %v2485, %v2486
      %v2488 = vsub.f32 %v2481, %v2487
      %v2489 = vmul.f32 %v2488, %v2488
      %2490 = vadd.xlane.f32.xlu0 %v2489
      %v2491 = vpop.xlane.xlu0 %2490
      %v2492 = vmul.f32 %v2491, %v2486
      %v2493 = vadd.f32 %v2492, 1e-05
      %v2494 = vrsqrt.pop %v2493
      %v2495 = vmul.f32 %v2488, %v2494
      %v2497 = vlaneseq
      %v2498 = vshrl.u32 %v2497, 7
      %v2499 = vsub.s32 0, %v2498
      %v2500 = vrot.slane %v2482, %v2499
      %v2502 = vmul.f32 %v2495, %v2500
      %v2504 = vlaneseq
      %v2505 = vshrl.u32 %v2504, 7
      %v2506 = vsub.s32 0, %v2505
      %v2507 = vrot.slane %v2483, %v2506
      %v2509 = vadd.f32 %v2502, %v2507
      %v2510 = vpack.c.bf16 %v2509, %v2509
      %v2511 = vld [vmem:[%s7] sm:$0xff]
      %v2512 = vld [vmem:[%s7 + $0x8] sm:$0xff]
      %v2513 = vld [vmem:[%s7 + $0x10] sm:$0xff]
      %v2514 = vld [vmem:[%s7 + $0x18] sm:$0xff]
      %v2515 = vld [vmem:[%s7 + $0x20] sm:$0xff]
      %v2516 = vld [vmem:[%s7 + $0x28] sm:$0xff]
      %v2517 = vld [vmem:[%s7 + $0x30] sm:$0xff]
      %v2518 = vld [vmem:[%s7 + $0x38] sm:$0xff]
      %v2519 = vld [vmem:[%s7 + $0x40] sm:$0xff]
      %v2520 = vld [vmem:[%s7 + $0x48] sm:$0xff]
      %v2521 = vld [vmem:[%s7 + $0x50] sm:$0xff]
      %v2522 = vld [vmem:[%s7 + $0x58] sm:$0xff]
      %v2523 = vld [vmem:[%s7 + $0x60] sm:$0xff]
      %v2524 = vld [vmem:[%s7 + $0x68] sm:$0xff]
      %v2525 = vld [vmem:[%s7 + $0x70] sm:$0xff]
      %v2526 = vld [vmem:[%s7 + $0x78] sm:$0xff]
      %v2527 = vld [vmem:[%s8] sm:$0x3]
      %v2529 = vlaneseq
      %v2530 = vshrl.u32 %v2529, 7
      %v2531 = vsub.s32 0, %v2530
      %v2532 = vrot.slane %v2527, %v2531
      %v2533 = vlaneseq
      %v2534 = vshrl.u32 %v2533, 7
      %v2535 = vsub.s32 1, %v2534
      %v2536 = vrot.slane %v2527, %v2535
      %v2555 = vunpack.c.l.b16 %v2511
      %v2556 = vunpack.c.h.b16 %v2511
      %v2557 = vunpack.c.l.b16 %v2512
      %v2558 = vunpack.c.h.b16 %v2512
      %v2559 = vunpack.c.l.b16 %v2513
      %v2560 = vunpack.c.h.b16 %v2513
      %v2561 = vunpack.c.l.b16 %v2514
      %v2562 = vunpack.c.h.b16 %v2514
      %v2563 = vunpack.c.l.b16 %v2515
      %v2564 = vunpack.c.h.b16 %v2515
      %v2565 = vunpack.c.l.b16 %v2516
      %v2566 = vunpack.c.h.b16 %v2516
      %v2567 = vunpack.c.l.b16 %v2517
      %v2568 = vunpack.c.h.b16 %v2517
      %v2569 = vunpack.c.l.b16 %v2518
      %v2570 = vunpack.c.h.b16 %v2518
      %v2571 = vunpack.c.l.b16 %v2519
      %v2572 = vunpack.c.h.b16 %v2519
      %v2573 = vunpack.c.l.b16 %v2520
      %v2574 = vunpack.c.h.b16 %v2520
      %v2575 = vunpack.c.l.b16 %v2521
      %v2576 = vunpack.c.h.b16 %v2521
      %v2577 = vunpack.c.l.b16 %v2522
      %v2578 = vunpack.c.h.b16 %v2522
      %v2579 = vunpack.c.l.b16 %v2523
      %v2580 = vunpack.c.h.b16 %v2523
      %v2581 = vunpack.c.l.b16 %v2524
      %v2582 = vunpack.c.h.b16 %v2524
      %v2583 = vunpack.c.l.b16 %v2525
      %v2584 = vunpack.c.h.b16 %v2525
      %v2585 = vunpack.c.l.b16 %v2526
      %v2586 = vunpack.c.h.b16 %v2526
      %v2587 = vpack.c.b16 %v2557, %v2555
      %v2588 = vpack.c.b16 %v2558, %v2556
      %v2589 = vpack.c.b16 %v2561, %v2559
      %v2590 = vpack.c.b16 %v2562, %v2560
      %v2591 = vpack.c.b16 %v2565, %v2563
      %v2592 = vpack.c.b16 %v2566, %v2564
      %v2593 = vpack.c.b16 %v2569, %v2567
      %v2594 = vpack.c.b16 %v2570, %v2568
      %v2595 = vpack.c.b16 %v2573, %v2571
      %v2596 = vpack.c.b16 %v2574, %v2572
      %v2597 = vpack.c.b16 %v2577, %v2575
      %v2598 = vpack.c.b16 %v2578, %v2576
      %v2599 = vpack.c.b16 %v2581, %v2579
      %v2600 = vpack.c.b16 %v2582, %v2580
      %v2601 = vpack.c.b16 %v2585, %v2583
      %v2602 = vpack.c.b16 %v2586, %v2584
      %2619 = vmatprep.subr.bf16.mxu0 %v2588
      %2620 = vmatpush1.bf16.msra.mxu0 %v2587
      %2621 = vmatprep.subr.bf16.mxu0 %v2590
      %2622 = vmatpush1.bf16.msra.mxu0 %v2589
      %2623 = vmatprep.subr.bf16.mxu0 %v2592
      %2624 = vmatpush1.bf16.msra.mxu0 %v2591
      %2625 = vmatprep.subr.bf16.mxu0 %v2594
      %2626 = vmatpush1.bf16.msra.mxu0 %v2593
      %2627 = vmatprep.subr.bf16.mxu0 %v2596
      %2628 = vmatpush1.bf16.msra.mxu0 %v2595
      %2629 = vmatprep.subr.bf16.mxu0 %v2598
      %2630 = vmatpush1.bf16.msra.mxu0 %v2597
      %2631 = vmatprep.subr.bf16.mxu0 %v2600
      %2632 = vmatpush1.bf16.msra.mxu0 %v2599
      %2633 = vmatprep.subr.bf16.mxu0 %v2602
      %2634 = vmatpush1.bf16.msra.mxu0 %v2601
      %2635 = vmatprep.subr.bf16.mxu0 0
      %2636 = vmatpush1.bf16.msra.mxu0 0
      %2637 = vmatprep.subr.bf16.mxu0 0
      %2638 = vmatpush1.bf16.msra.mxu0 0
      %2639 = vmatprep.subr.bf16.mxu0 0
      %2640 = vmatpush1.bf16.msra.mxu0 0
      %2641 = vmatprep.subr.bf16.mxu0 0
      %2642 = vmatpush1.bf16.msra.mxu0 0
      %2643 = vmatprep.subr.bf16.mxu0 0
      %2644 = vmatpush1.bf16.msra.mxu0 0
      %2645 = vmatprep.subr.bf16.mxu0 0
      %2646 = vmatpush1.bf16.msra.mxu0 0
      %2647 = vmatprep.subr.bf16.mxu0 0
      %2648 = vmatpush1.bf16.msra.mxu0 0
      %2649 = vmatprep.subr.bf16.mxu0 0
      %2650 = vmatpush1.bf16.msra.mxu0 0
      %2651 = vmatprep.mubr.bf16.mxu0 0
      %2652 = vmatmul.mubr.bf16.gmra.mrb[0].mxu0 %v2510
      %v2653 = vpop.f32.mrb[0].mxu0
      %v2654 = vadd.f32 %v2532, %v2653
      %v2655 = vpop.f32.mrb[0].mxu0
      %v2656 = vadd.f32 %v2536, %v2655
      %v2657 = vpop.f32.mrb[0].mxu0
      %v2658 = vpop.f32.mrb[0].mxu0
      %2659 = vdwg.mxu0
      %v2660 = vmax.f32 %v2654, 0.0
      %v2661 = vmax.f32 %v2656, 0.0
      %v2662 = vpack.c.bf16 %v2660, %v2660
      %v2663 = vpack.c.bf16 %v2661, %v2661
      %v2664 = vld [vmem:[%s9] sm:$0xf]
      %v2665 = vld [vmem:[%s9 + $0x4] sm:$0xf]
      %v2666 = vld [vmem:[%s9 + $0x8] sm:$0xf]
      %v2667 = vld [vmem:[%s9 + $0xc] sm:$0xf]
      %v2668 = vld [vmem:[%s9 + $0x10] sm:$0xf]
      %v2669 = vld [vmem:[%s9 + $0x14] sm:$0xf]
      %v2670 = vld [vmem:[%s9 + $0x18] sm:$0xf]
      %v2671 = vld [vmem:[%s9 + $0x1c] sm:$0xf]
      %v2672 = vld [vmem:[%s9 + $0x20] sm:$0xf]
      %v2673 = vld [vmem:[%s9 + $0x24] sm:$0xf]
      %v2674 = vld [vmem:[%s9 + $0x28] sm:$0xf]
      %v2675 = vld [vmem:[%s9 + $0x2c] sm:$0xf]
      %v2676 = vld [vmem:[%s9 + $0x30] sm:$0xf]
      %v2677 = vld [vmem:[%s9 + $0x34] sm:$0xf]
      %v2678 = vld [vmem:[%s9 + $0x38] sm:$0xf]
      %v2679 = vld [vmem:[%s9 + $0x3c] sm:$0xf]
      %v2680 = vld [vmem:[%s9 + $0x40] sm:$0xf]
      %v2681 = vld [vmem:[%s9 + $0x44] sm:$0xf]
      %v2682 = vld [vmem:[%s9 + $0x48] sm:$0xf]
      %v2683 = vld [vmem:[%s9 + $0x4c] sm:$0xf]
      %v2684 = vld [vmem:[%s9 + $0x50] sm:$0xf]
      %v2685 = vld [vmem:[%s9 + $0x54] sm:$0xf]
      %v2686 = vld [vmem:[%s9 + $0x58] sm:$0xf]
      %v2687 = vld [vmem:[%s9 + $0x5c] sm:$0xf]
      %v2688 = vld [vmem:[%s9 + $0x60] sm:$0xf]
      %v2689 = vld [vmem:[%s9 + $0x64] sm:$0xf]
      %v2690 = vld [vmem:[%s9 + $0x68] sm:$0xf]
      %v2691 = vld [vmem:[%s9 + $0x6c] sm:$0xf]
      %v2692 = vld [vmem:[%s9 + $0x70] sm:$0xf]
      %v2693 = vld [vmem:[%s9 + $0x74] sm:$0xf]
      %v2694 = vld [vmem:[%s9 + $0x78] sm:$0xf]
      %v2695 = vld [vmem:[%s9 + $0x7c] sm:$0xf]
      %v2696 = vld [vmem:[%s10] sm:$0x1]
      %v2698 = vlaneseq
      %v2699 = vshrl.u32 %v2698, 7
      %v2700 = vsub.s32 0, %v2699
      %v2701 = vrot.slane %v2696, %v2700
      %v2735 = vunpack.c.l.b16 %v2664
      %v2736 = vunpack.c.l.b16 %v2665
      %v2737 = vunpack.c.l.b16 %v2666
      %v2738 = vunpack.c.l.b16 %v2667
      %v2739 = vunpack.c.l.b16 %v2668
      %v2740 = vunpack.c.l.b16 %v2669
      %v2741 = vunpack.c.l.b16 %v2670
      %v2742 = vunpack.c.l.b16 %v2671
      %v2743 = vunpack.c.l.b16 %v2672
      %v2744 = vunpack.c.l.b16 %v2673
      %v2745 = vunpack.c.l.b16 %v2674
      %v2746 = vunpack.c.l.b16 %v2675
      %v2747 = vunpack.c.l.b16 %v2676
      %v2748 = vunpack.c.l.b16 %v2677
      %v2749 = vunpack.c.l.b16 %v2678
      %v2750 = vunpack.c.l.b16 %v2679
      %v2751 = vunpack.c.l.b16 %v2680
      %v2752 = vunpack.c.l.b16 %v2681
      %v2753 = vunpack.c.l.b16 %v2682
      %v2754 = vunpack.c.l.b16 %v2683
      %v2755 = vunpack.c.l.b16 %v2684
      %v2756 = vunpack.c.l.b16 %v2685
      %v2757 = vunpack.c.l.b16 %v2686
      %v2758 = vunpack.c.l.b16 %v2687
      %v2759 = vunpack.c.l.b16 %v2688
      %v2760 = vunpack.c.l.b16 %v2689
      %v2761 = vunpack.c.l.b16 %v2690
      %v2762 = vunpack.c.l.b16 %v2691
      %v2763 = vunpack.c.l.b16 %v2692
      %v2764 = vunpack.c.l.b16 %v2693
      %v2765 = vunpack.c.l.b16 %v2694
      %v2766 = vunpack.c.l.b16 %v2695
      %v2767 = vpack.c.b16 %v2736, %v2735
      %v2768 = vpack.c.b16 %v2738, %v2737
      %v2769 = vpack.c.b16 %v2740, %v2739
      %v2770 = vpack.c.b16 %v2742, %v2741
      %v2771 = vpack.c.b16 %v2744, %v2743
      %v2772 = vpack.c.b16 %v2746, %v2745
      %v2773 = vpack.c.b16 %v2748, %v2747
      %v2774 = vpack.c.b16 %v2750, %v2749
      %v2775 = vpack.c.b16 %v2752, %v2751
      %v2776 = vpack.c.b16 %v2754, %v2753
      %v2777 = vpack.c.b16 %v2756, %v2755
      %v2778 = vpack.c.b16 %v2758, %v2757
      %v2779 = vpack.c.b16 %v2760, %v2759
      %v2780 = vpack.c.b16 %v2762, %v2761
      %v2781 = vpack.c.b16 %v2764, %v2763
      %v2782 = vpack.c.b16 %v2766, %v2765
      %2799 = vmatprep.subr.bf16.mxu0 0
      %2800 = vmatpush1.bf16.msra.mxu0 %v2767
      %2801 = vmatprep.subr.bf16.mxu0 0
      %2802 = vmatpush1.bf16.msra.mxu0 %v2768
      %2803 = vmatprep.subr.bf16.mxu0 0
      %2804 = vmatpush1.bf16.msra.mxu0 %v2769
      %2805 = vmatprep.subr.bf16.mxu0 0
      %2806 = vmatpush1.bf16.msra.mxu0 %v2770
      %2807 = vmatprep.subr.bf16.mxu0 0
      %2808 = vmatpush1.bf16.msra.mxu0 %v2771
      %2809 = vmatprep.subr.bf16.mxu0 0
      %2810 = vmatpush1.bf16.msra.mxu0 %v2772
      %2811 = vmatprep.subr.bf16.mxu0 0
      %2812 = vmatpush1.bf16.msra.mxu0 %v2773
      %2813 = vmatprep.subr.bf16.mxu0 0
      %2814 = vmatpush1.bf16.msra.mxu0 %v2774
      %2815 = vmatprep.subr.bf16.mxu0 0
      %2816 = vmatpush1.bf16.msra.mxu0 %v2775
      %2817 = vmatprep.subr.bf16.mxu0 0
      %2818 = vmatpush1.bf16.msra.mxu0 %v2776
      %2819 = vmatprep.subr.bf16.mxu0 0
      %2820 = vmatpush1.bf16.msra.mxu0 %v2777
      %2821 = vmatprep.subr.bf16.mxu0 0
      %2822 = vmatpush1.bf16.msra.mxu0 %v2778
      %2823 = vmatprep.subr.bf16.mxu0 0
      %2824 = vmatpush1.bf16.msra.mxu0 %v2779
      %2825 = vmatprep.subr.bf16.mxu0 0
      %2826 = vmatpush1.bf16.msra.mxu0 %v2780
      %2827 = vmatprep.subr.bf16.mxu0 0
      %2828 = vmatpush1.bf16.msra.mxu0 %v2781
      %2829 = vmatprep.subr.bf16.mxu0 0
      %2830 = vmatpush1.bf16.msra.mxu0 %v2782
      %2831 = vmatprep.mubr.bf16.mxu0 %v2663
      %2832 = vmatmul.mubr.bf16.gmra.mrb[0].mxu0 %v2662
      %v2833 = vpop.f32.mrb[0].mxu0
      %v2834 = vadd.f32 %v2701, %v2833
      %v2835 = vpop.f32.mrb[0].mxu0
      %v2836 = vpop.f32.mrb[0].mxu0
      %v2837 = vpop.f32.mrb[0].mxu0
      %2838 = vdwg.mxu0
      %v2839 = vadd.f32 %v2509, %v2834
      %v2840 = vld [vmem:[%s11] sm:$0x1]
      %v2841 = vld [vmem:[%s12] sm:$0x1]
      %2842 = vadd.xlane.f32.xlu0 %v2839
      %v2843 = vpop.xlane.xlu0 %2842
      %v2844 = vmul.f32 %v2843, %v2486
      %v2845 = vsub.f32 %v2839, %v2844
      %v2846 = vmul.f32 %v2845, %v2845
      %2847 = vadd.xlane.f32.xlu0 %v2846
      %v2848 = vpop.xlane.xlu0 %2847
      %v2849 = vmul.f32 %v2848, %v2486
      %v2850 = vadd.f32 %v2849, 1e-05
      %v2851 = vrsqrt.pop %v2850
      %v2852 = vmul.f32 %v2845, %v2851
      %v2854 = vlaneseq
      %v2855 = vshrl.u32 %v2854, 7
      %v2856 = vsub.s32 0, %v2855
      %v2857 = vrot.slane %v2840, %v2856
      %v2859 = vmul.f32 %v2852, %v2857
      %v2861 = vlaneseq
      %v2862 = vshrl.u32 %v2861, 7
      %v2863 = vsub.s32 0, %v2862
      %v2864 = vrot.slane %v2841, %v2863
      %v2866 = vadd.f32 %v2859, %v2864
      %2867 = vst [vmem:[%s435] sm:$0xff] %v2866
      %p2868 = scmp.lt.s32.totalorder %s24, 1
      %s2869 = scalar_select %p2868, %s24, 1
      %s2870 = smul.addr %s2869, 8
      %s2871 = scalar_lea.vmem %s13, %s2870
      // Predicated region
      $region73: #{transformer_question_encoder_forward.4} parent=71 // pred_check
        %p2872 = pneg %p320
      $region74: #{transformer_question_encoder_forward.4} parent=71 // pred_check_branch
        %2874 = sbr.rel (%p2872) target = $region76
      $region75: #{transformer_question_encoder_forward.4} parent=71 // pred_region
        _
      $region76: #{transformer_question_encoder_forward.4} parent=71 // pred_fallthru
        _
    $region72: #{transformer_question_encoder_forward.4} parent=5 // pred_fallthru
      _
    %p2875 = scmp.le.s32.totalorder 2, %s19
    // Predicated region
    $region77: #{transformer_question_encoder_forward.4} parent=5 // pred_check
      %p2876 = pneg %p2875
    $region78: #{transformer_question_encoder_forward.4} parent=5 // pred_check_branch
      %2878 = sbr.rel (%p2876) target = $region80
    $region79: #{transformer_question_encoder_forward.4} parent=5 // pred_region
      %s2879 = ssub.s32 %s19, 2
      // Predicated region
      $region81: #{transformer_question_encoder_forward.4} parent=79 // pred_check
        %p2880 = pneg %p326
      $region82: #{transformer_question_encoder_forward.4} parent=79 // pred_check_branch
        %2882 = sbr.rel (%p2880) target = $region84
      $region83: #{transformer_question_encoder_forward.4} parent=79 // pred_region
        %p2883 = scmp.lt.s32.totalorder %s25, 1
        %s2884 = scalar_select %p2883, %s25, 1
        %s2885 = smul.addr %s2884, 8
        %s2886 = scalar_lea.vmem %s13, %s2885
      $region84: #{transformer_question_encoder_forward.4} parent=79 // pred_fallthru
        _
    $region80: #{transformer_question_encoder_forward.4} parent=5 // pred_fallthru
      _
  $region6: #{transformer_question_encoder_forward.4} parent=0 // loop_footer
    %s23 = sadd.s32 1, %s19
  $region7: #{transformer_question_encoder_forward.4} parent=0 // loop_footer_branch
    %18 = sbr.rel target = $region3
  $region8: #{transformer_question_encoder_forward.4} parent=0 // loop_exit
    _

// kernel: transformer_question_encoder_forward.5
$region0: #{transformer_question_encoder_forward.5}
  #allocation0 [shape = 'u32[]', space=smem, size = 0x4, offset = 0x4, fixed_abs, tag = 'smem constant byte address 0x4 - core index']
  #allocation1 [shape = 'u32[144,128]{1,0:T(1,128)}', space=vmem, size = 0x12000, scoped, tag = 'internal scratch']
  %s0 = inlined_call_operand.vmem [shape: f32[2,8,128], index: 0, kind: input, shape index: {}, may-alias: {0,15}]
  %s1 = inlined_call_operand.vmem [shape: bf16[12,128,32], index: 1, kind: input, shape index: {}]
  %s2 = inlined_call_operand.vmem [shape: f32[12,1,32], index: 2, kind: input, shape index: {}]
  %s3 = inlined_call_operand.vmem [shape: bf16[4,32,128], index: 3, kind: input, shape index: {}]
  %s4 = inlined_call_operand.vmem [shape: f32[1,128], index: 4, kind: input, shape index: {}]
  %s5 = inlined_call_operand.vmem [shape: f32[1,128], index: 5, kind: input, shape index: {}]
  %s6 = inlined_call_operand.vmem [shape: f32[1,128], index: 6, kind: input, shape index: {}]
  %s7 = inlined_call_operand.vmem [shape: bf16[128,256], index: 7, kind: input, shape index: {}]
  %s8 = inlined_call_operand.vmem [shape: f32[1,256], index: 8, kind: input, shape index: {}]
  %s9 = inlined_call_operand.vmem [shape: bf16[256,128], index: 9, kind: input, shape index: {}]
  %s10 = inlined_call_operand.vmem [shape: f32[1,128], index: 10, kind: input, shape index: {}]
  %s11 = inlined_call_operand.vmem [shape: f32[1,128], index: 11, kind: input, shape index: {}]
  %s12 = inlined_call_operand.vmem [shape: f32[1,128], index: 12, kind: input, shape index: {}]
  %s13 = inlined_call_operand.vmem [shape: f32[1,128], index: 13, kind: input, shape index: {}]
  %s14 = inlined_call_operand.vmem [shape: f32[1,128], index: 14, kind: input, shape index: {}]
  %s15 = inlined_call_operand.vmem [shape: f32[2,8,128], index: 15, kind: output, shape index: {}, may-alias: {0,15}]
  %s16 = sld [smem:[#allocation0]]
  $region93: #{transformer_question_encoder_forward.5} parent=0
    _
  %s18 = ssub.s32 1, %s16
  %s19 = scalar_select 0, %s18, %s16
  loop: start=0, step=1, limit=4
  $region2: #{transformer_question_encoder_forward.5} parent=0 // loop_pre_header
    _
  $region3: #{transformer_question_encoder_forward.5} parent=0 // loop_header
    %s21 = sphi 0, %s25
    %p22 = scmp.ge.s32.totalorder %s21, 4
    %s31 = sphi 0, %s33
    %s34 = sphi 0, %s31
    %s35 = sphi 0, %s34
    %s51 = sphi 0, %s35
    %s55 = sphi 0, %s55
    %s57 = sphi 0, %s55
    %s58 = sphi 0, %s57
    %s72 = sphi 0, %s58
    %s76 = sphi 0, %s76
    %s78 = sphi 0, %s76
    %s79 = sphi 0, %s78
    %s93 = sphi 0, %s79
    %s97 = sphi 0, %s97
    %s99 = sphi 0, %s97
    %s100 = sphi 0, %s99
    %s114 = sphi 0, %s100
    %s118 = sphi 0, %s118
    %s120 = sphi 0, %s118
    %s121 = sphi 0, %s120
    %s135 = sphi 0, %s121
    %s139 = sphi 0, %s139
    %s141 = sphi 0, %s139
    %s142 = sphi 0, %s141
    %s156 = sphi 0, %s142
    %s160 = sphi 0, %s160
    %s162 = sphi 0, %s160
    %s163 = sphi 0, %s162
    %s177 = sphi 0, %s163
    %s181 = sphi 0, %s181
    %s183 = sphi 0, %s181
    %s184 = sphi 0, %s183
    %s198 = sphi 0, %s184
    %s202 = sphi 0, %s202
    %s204 = sphi 0, %s202
    %s205 = sphi 0, %s204
    %s219 = sphi 0, %s205
    %s223 = sphi 0, %s223
    %s225 = sphi 0, %s223
    %s226 = sphi 0, %s225
    %s240 = sphi 0, %s226
    %s244 = sphi 0, %s244
    %s246 = sphi 0, %s244
    %s247 = sphi 0, %s246
    %s261 = sphi 0, %s247
    %s265 = sphi 0, %s265
    %s267 = sphi 0, %s265
    %s268 = sphi 0, %s267
    %s282 = sphi 0, %s268
    %s286 = sphi 0, %s286
    %s288 = sphi 0, %s286
    %s289 = sphi 0, %s288
    %s303 = sphi 0, %s289
    %s307 = sphi 0, %s307
    %s309 = sphi 0, %s307
    %s310 = sphi 0, %s309
    %s324 = sphi 0, %s310
    %s328 = sphi 0, %s328
    %s330 = sphi 0, %s328
    %s331 = sphi 0, %s330
    %s345 = sphi 0, %s331
    %s351 = sphi 0, %s353
    %s354 = sphi 0, %s351
    %s355 = sphi 0, %s354
    %s371 = sphi 0, %s355
  $region4: #{transformer_question_encoder_forward.5} parent=0 // loop_header_branch
    %24 = sbr.rel (%p22) target = $region8
  $region5: #{transformer_question_encoder_forward.5} parent=0 // loop_body
    %s26 = ssub.s32 %s21, 1
    %s27 = ssub.s32 %s21, 2
    %s28 = sadd.s32 %s21, 1
    %s29 = ssub.s32 %s21, %s28
    %p30 = scmp.eq.s32.totalorder %s29, 0
    %s32 = sadd.s32 %s31, 1
    %s33 = scalar_select %p30, %s31, %s32
    %p36 = pneg %p30
    %p37 = scmp.eq.s32.totalorder %s21, 1
    %p38 = por %p36, %p37
    %p39 = scmp.ne.s32.totalorder %s31, %s34
    %p40 = scmp.eq.s32.totalorder %s21, 0
    %p41 = por %p39, %p40
    %p42 = scmp.ne.s32.totalorder %s31, %s34
    %p43 = scmp.eq.s32.totalorder %s26, 1
    %p44 = por %p42, %p43
    %p45 = scmp.ne.s32.totalorder %s34, %s35
    %p46 = scmp.eq.s32.totalorder %s26, 0
    %p47 = por %p45, %p46
    %p48 = scmp.ne.s32.totalorder %s34, %s35
    %p49 = scmp.eq.s32.totalorder %s27, 1
    %p50 = por %p48, %p49
    %p52 = scmp.ne.s32.totalorder %s35, %s51
    %p53 = scmp.eq.s32.totalorder %s27, 0
    %p54 = por %p52, %p53
    %s56 = sadd.s32 %s55, 1
    %p59 = scmp.eq.s32.totalorder %s21, 1
    %p60 = scmp.ne.s32.totalorder %s55, %s57
    %p61 = scmp.eq.s32.totalorder %s21, 0
    %p62 = por %p60, %p61
    %p63 = scmp.ne.s32.totalorder %s55, %s57
    %p64 = scmp.eq.s32.totalorder %s26, 1
    %p65 = por %p63, %p64
    %p66 = scmp.ne.s32.totalorder %s57, %s58
    %p67 = scmp.eq.s32.totalorder %s26, 0
    %p68 = por %p66, %p67
    %p69 = scmp.ne.s32.totalorder %s57, %s58
    %p70 = scmp.eq.s32.totalorder %s27, 1
    %p71 = por %p69, %p70
    %p73 = scmp.ne.s32.totalorder %s58, %s72
    %p74 = scmp.eq.s32.totalorder %s27, 0
    %p75 = por %p73, %p74
    %s77 = sadd.s32 %s76, 1
    %p80 = scmp.eq.s32.totalorder %s21, 1
    %p81 = scmp.ne.s32.totalorder %s76, %s78
    %p82 = scmp.eq.s32.totalorder %s21, 0
    %p83 = por %p81, %p82
    %p84 = scmp.ne.s32.totalorder %s76, %s78
    %p85 = scmp.eq.s32.totalorder %s26, 1
    %p86 = por %p84, %p85
    %p87 = scmp.ne.s32.totalorder %s78, %s79
    %p88 = scmp.eq.s32.totalorder %s26, 0
    %p89 = por %p87, %p88
    %p90 = scmp.ne.s32.totalorder %s78, %s79
    %p91 = scmp.eq.s32.totalorder %s27, 1
    %p92 = por %p90, %p91
    %p94 = scmp.ne.s32.totalorder %s79, %s93
    %p95 = scmp.eq.s32.totalorder %s27, 0
    %p96 = por %p94, %p95
    %s98 = sadd.s32 %s97, 1
    %p101 = scmp.eq.s32.totalorder %s21, 1
    %p102 = scmp.ne.s32.totalorder %s97, %s99
    %p103 = scmp.eq.s32.totalorder %s21, 0
    %p104 = por %p102, %p103
    %p105 = scmp.ne.s32.totalorder %s97, %s99
    %p106 = scmp.eq.s32.totalorder %s26, 1
    %p107 = por %p105, %p106
    %p108 = scmp.ne.s32.totalorder %s99, %s100
    %p109 = scmp.eq.s32.totalorder %s26, 0
    %p110 = por %p108, %p109
    %p111 = scmp.ne.s32.totalorder %s99, %s100
    %p112 = scmp.eq.s32.totalorder %s27, 1
    %p113 = por %p111, %p112
    %p115 = scmp.ne.s32.totalorder %s100, %s114
    %p116 = scmp.eq.s32.totalorder %s27, 0
    %p117 = por %p115, %p116
    %s119 = sadd.s32 %s118, 1
    %p122 = scmp.eq.s32.totalorder %s21, 1
    %p123 = scmp.ne.s32.totalorder %s118, %s120
    %p124 = scmp.eq.s32.totalorder %s21, 0
    %p125 = por %p123, %p124
    %p126 = scmp.ne.s32.totalorder %s118, %s120
    %p127 = scmp.eq.s32.totalorder %s26, 1
    %p128 = por %p126, %p127
    %p129 = scmp.ne.s32.totalorder %s120, %s121
    %p130 = scmp.eq.s32.totalorder %s26, 0
    %p131 = por %p129, %p130
    %p132 = scmp.ne.s32.totalorder %s120, %s121
    %p133 = scmp.eq.s32.totalorder %s27, 1
    %p134 = por %p132, %p133
    %p136 = scmp.ne.s32.totalorder %s121, %s135
    %p137 = scmp.eq.s32.totalorder %s27, 0
    %p138 = por %p136, %p137
    %s140 = sadd.s32 %s139, 1
    %p143 = scmp.eq.s32.totalorder %s21, 1
    %p144 = scmp.ne.s32.totalorder %s139, %s141
    %p145 = scmp.eq.s32.totalorder %s21, 0
    %p146 = por %p144, %p145
    %p147 = scmp.ne.s32.totalorder %s139, %s141
    %p148 = scmp.eq.s32.totalorder %s26, 1
    %p149 = por %p147, %p148
    %p150 = scmp.ne.s32.totalorder %s141, %s142
    %p151 = scmp.eq.s32.totalorder %s26, 0
    %p152 = por %p150, %p151
    %p153 = scmp.ne.s32.totalorder %s141, %s142
    %p154 = scmp.eq.s32.totalorder %s27, 1
    %p155 = por %p153, %p154
    %p157 = scmp.ne.s32.totalorder %s142, %s156
    %p158 = scmp.eq.s32.totalorder %s27, 0
    %p159 = por %p157, %p158
    %s161 = sadd.s32 %s160, 1
    %p164 = scmp.eq.s32.totalorder %s21, 1
    %p165 = scmp.ne.s32.totalorder %s160, %s162
    %p166 = scmp.eq.s32.totalorder %s21, 0
    %p167 = por %p165, %p166
    %p168 = scmp.ne.s32.totalorder %s160, %s162
    %p169 = scmp.eq.s32.totalorder %s26, 1
    %p170 = por %p168, %p169
    %p171 = scmp.ne.s32.totalorder %s162, %s163
    %p172 = scmp.eq.s32.totalorder %s26, 0
    %p173 = por %p171, %p172
    %p174 = scmp.ne.s32.totalorder %s162, %s163
    %p175 = scmp.eq.s32.totalorder %s27, 1
    %p176 = por %p174, %p175
    %p178 = scmp.ne.s32.totalorder %s163, %s177
    %p179 = scmp.eq.s32.totalorder %s27, 0
    %p180 = por %p178, %p179
    %s182 = sadd.s32 %s181, 1
    %p185 = scmp.eq.s32.totalorder %s21, 1
    %p186 = scmp.ne.s32.totalorder %s181, %s183
    %p187 = scmp.eq.s32.totalorder %s21, 0
    %p188 = por %p186, %p187
    %p189 = scmp.ne.s32.totalorder %s181, %s183
    %p190 = scmp.eq.s32.totalorder %s26, 1
    %p191 = por %p189, %p190
    %p192 = scmp.ne.s32.totalorder %s183, %s184
    %p193 = scmp.eq.s32.totalorder %s26, 0
    %p194 = por %p192, %p193
    %p195 = scmp.ne.s32.totalorder %s183, %s184
    %p196 = scmp.eq.s32.totalorder %s27, 1
    %p197 = por %p195, %p196
    %p199 = scmp.ne.s32.totalorder %s184, %s198
    %p200 = scmp.eq.s32.totalorder %s27, 0
    %p201 = por %p199, %p200
    %s203 = sadd.s32 %s202, 1
    %p206 = scmp.eq.s32.totalorder %s21, 1
    %p207 = scmp.ne.s32.totalorder %s202, %s204
    %p208 = scmp.eq.s32.totalorder %s21, 0
    %p209 = por %p207, %p208
    %p210 = scmp.ne.s32.totalorder %s202, %s204
    %p211 = scmp.eq.s32.totalorder %s26, 1
    %p212 = por %p210, %p211
    %p213 = scmp.ne.s32.totalorder %s204, %s205
    %p214 = scmp.eq.s32.totalorder %s26, 0
    %p215 = por %p213, %p214
    %p216 = scmp.ne.s32.totalorder %s204, %s205
    %p217 = scmp.eq.s32.totalorder %s27, 1
    %p218 = por %p216, %p217
    %p220 = scmp.ne.s32.totalorder %s205, %s219
    %p221 = scmp.eq.s32.totalorder %s27, 0
    %p222 = por %p220, %p221
    %s224 = sadd.s32 %s223, 1
    %p227 = scmp.eq.s32.totalorder %s21, 1
    %p228 = scmp.ne.s32.totalorder %s223, %s225
    %p229 = scmp.eq.s32.totalorder %s21, 0
    %p230 = por %p228, %p229
    %p231 = scmp.ne.s32.totalorder %s223, %s225
    %p232 = scmp.eq.s32.totalorder %s26, 1
    %p233 = por %p231, %p232
    %p234 = scmp.ne.s32.totalorder %s225, %s226
    %p235 = scmp.eq.s32.totalorder %s26, 0
    %p236 = por %p234, %p235
    %p237 = scmp.ne.s32.totalorder %s225, %s226
    %p238 = scmp.eq.s32.totalorder %s27, 1
    %p239 = por %p237, %p238
    %p241 = scmp.ne.s32.totalorder %s226, %s240
    %p242 = scmp.eq.s32.totalorder %s27, 0
    %p243 = por %p241, %p242
    %s245 = sadd.s32 %s244, 1
    %p248 = scmp.eq.s32.totalorder %s21, 1
    %p249 = scmp.ne.s32.totalorder %s244, %s246
    %p250 = scmp.eq.s32.totalorder %s21, 0
    %p251 = por %p249, %p250
    %p252 = scmp.ne.s32.totalorder %s244, %s246
    %p253 = scmp.eq.s32.totalorder %s26, 1
    %p254 = por %p252, %p253
    %p255 = scmp.ne.s32.totalorder %s246, %s247
    %p256 = scmp.eq.s32.totalorder %s26, 0
    %p257 = por %p255, %p256
    %p258 = scmp.ne.s32.totalorder %s246, %s247
    %p259 = scmp.eq.s32.totalorder %s27, 1
    %p260 = por %p258, %p259
    %p262 = scmp.ne.s32.totalorder %s247, %s261
    %p263 = scmp.eq.s32.totalorder %s27, 0
    %p264 = por %p262, %p263
    %s266 = sadd.s32 %s265, 1
    %p269 = scmp.eq.s32.totalorder %s21, 1
    %p270 = scmp.ne.s32.totalorder %s265, %s267
    %p271 = scmp.eq.s32.totalorder %s21, 0
    %p272 = por %p270, %p271
    %p273 = scmp.ne.s32.totalorder %s265, %s267
    %p274 = scmp.eq.s32.totalorder %s26, 1
    %p275 = por %p273, %p274
    %p276 = scmp.ne.s32.totalorder %s267, %s268
    %p277 = scmp.eq.s32.totalorder %s26, 0
    %p278 = por %p276, %p277
    %p279 = scmp.ne.s32.totalorder %s267, %s268
    %p280 = scmp.eq.s32.totalorder %s27, 1
    %p281 = por %p279, %p280
    %p283 = scmp.ne.s32.totalorder %s268, %s282
    %p284 = scmp.eq.s32.totalorder %s27, 0
    %p285 = por %p283, %p284
    %s287 = sadd.s32 %s286, 1
    %p290 = scmp.eq.s32.totalorder %s21, 1
    %p291 = scmp.ne.s32.totalorder %s286, %s288
    %p292 = scmp.eq.s32.totalorder %s21, 0
    %p293 = por %p291, %p292
    %p294 = scmp.ne.s32.totalorder %s286, %s288
    %p295 = scmp.eq.s32.totalorder %s26, 1
    %p296 = por %p294, %p295
    %p297 = scmp.ne.s32.totalorder %s288, %s289
    %p298 = scmp.eq.s32.totalorder %s26, 0
    %p299 = por %p297, %p298
    %p300 = scmp.ne.s32.totalorder %s288, %s289
    %p301 = scmp.eq.s32.totalorder %s27, 1
    %p302 = por %p300, %p301
    %p304 = scmp.ne.s32.totalorder %s289, %s303
    %p305 = scmp.eq.s32.totalorder %s27, 0
    %p306 = por %p304, %p305
    %s308 = sadd.s32 %s307, 1
    %p311 = scmp.eq.s32.totalorder %s21, 1
    %p312 = scmp.ne.s32.totalorder %s307, %s309
    %p313 = scmp.eq.s32.totalorder %s21, 0
    %p314 = por %p312, %p313
    %p315 = scmp.ne.s32.totalorder %s307, %s309
    %p316 = scmp.eq.s32.totalorder %s26, 1
    %p317 = por %p315, %p316
    %p318 = scmp.ne.s32.totalorder %s309, %s310
    %p319 = scmp.eq.s32.totalorder %s26, 0
    %p320 = por %p318, %p319
    %p321 = scmp.ne.s32.totalorder %s309, %s310
    %p322 = scmp.eq.s32.totalorder %s27, 1
    %p323 = por %p321, %p322
    %p325 = scmp.ne.s32.totalorder %s310, %s324
    %p326 = scmp.eq.s32.totalorder %s27, 0
    %p327 = por %p325, %p326
    %s329 = sadd.s32 %s328, 1
    %p332 = scmp.eq.s32.totalorder %s21, 1
    %p333 = scmp.ne.s32.totalorder %s328, %s330
    %p334 = scmp.eq.s32.totalorder %s21, 0
    %p335 = por %p333, %p334
    %p336 = scmp.ne.s32.totalorder %s328, %s330
    %p337 = scmp.eq.s32.totalorder %s26, 1
    %p338 = por %p336, %p337
    %p339 = scmp.ne.s32.totalorder %s330, %s331
    %p340 = scmp.eq.s32.totalorder %s26, 0
    %p341 = por %p339, %p340
    %p342 = scmp.ne.s32.totalorder %s330, %s331
    %p343 = scmp.eq.s32.totalorder %s27, 1
    %p344 = por %p342, %p343
    %p346 = scmp.ne.s32.totalorder %s331, %s345
    %p347 = scmp.eq.s32.totalorder %s27, 0
    %p348 = por %p346, %p347
    %s349 = ssub.s32 %s21, %s28
    %p350 = scmp.eq.s32.totalorder %s349, 0
    %s352 = sadd.s32 %s351, 1
    %s353 = scalar_select %p350, %s351, %s352
    %p356 = pneg %p350
    %p357 = scmp.eq.s32.totalorder %s21, 1
    %p358 = por %p356, %p357
    %p359 = scmp.ne.s32.totalorder %s351, %s354
    %p360 = scmp.eq.s32.totalorder %s21, 0
    %p361 = por %p359, %p360
    %p362 = scmp.ne.s32.totalorder %s351, %s354
    %p363 = scmp.eq.s32.totalorder %s26, 1
    %p364 = por %p362, %p363
    %p365 = scmp.ne.s32.totalorder %s354, %s355
    %p366 = scmp.eq.s32.totalorder %s26, 0
    %p367 = por %p365, %p366
    %p368 = scmp.ne.s32.totalorder %s354, %s355
    %p369 = scmp.eq.s32.totalorder %s27, 1
    %p370 = por %p368, %p369
    %p372 = scmp.ne.s32.totalorder %s355, %s371
    %p373 = scmp.eq.s32.totalorder %s27, 0
    %p374 = por %p372, %p373
    %p375 = scmp.le.s32.totalorder 1, %s21
    %p376 = scmp.lt.s32.totalorder %s21, 3
    %p377 = pnand %p375, %p376
    %p378 = pneg %p377
    // Predicated region
    $region9: #{transformer_question_encoder_forward.5} parent=5 // pred_check
      _
    $region10: #{transformer_question_encoder_forward.5} parent=5 // pred_check_branch
      %380 = sbr.rel (%p377) target = $region12
    $region11: #{transformer_question_encoder_forward.5} parent=5 // pred_region
      %s381 = ssub.s32 %s21, 1
      // Predicated region
      $region13: #{transformer_question_encoder_forward.5} parent=11 // pred_check
        %p382 = pneg %p68
      $region14: #{transformer_question_encoder_forward.5} parent=11 // pred_check_branch
        %384 = sbr.rel (%p382) target = $region16
      $region15: #{transformer_question_encoder_forward.5} parent=11 // pred_region
        _
      $region16: #{transformer_question_encoder_forward.5} parent=11 // pred_fallthru
        _
      // Predicated region
      $region17: #{transformer_question_encoder_forward.5} parent=11 // pred_check
        %p385 = pneg %p89
      $region18: #{transformer_question_encoder_forward.5} parent=11 // pred_check_branch
        %387 = sbr.rel (%p385) target = $region20
      $region19: #{transformer_question_encoder_forward.5} parent=11 // pred_region
        _
      $region20: #{transformer_question_encoder_forward.5} parent=11 // pred_fallthru
        _
      // Predicated region
      $region21: #{transformer_question_encoder_forward.5} parent=11 // pred_check
        %p388 = pneg %p110
      $region22: #{transformer_question_encoder_forward.5} parent=11 // pred_check_branch
        %390 = sbr.rel (%p388) target = $region24
      $region23: #{transformer_question_encoder_forward.5} parent=11 // pred_region
        _
      $region24: #{transformer_question_encoder_forward.5} parent=11 // pred_fallthru
        _
      // Predicated region
      $region25: #{transformer_question_encoder_forward.5} parent=11 // pred_check
        %p391 = pneg %p131
      $region26: #{transformer_question_encoder_forward.5} parent=11 // pred_check_branch
        %393 = sbr.rel (%p391) target = $region28
      $region27: #{transformer_question_encoder_forward.5} parent=11 // pred_region
        _
      $region28: #{transformer_question_encoder_forward.5} parent=11 // pred_fallthru
        _
      // Predicated region
      $region29: #{transformer_question_encoder_forward.5} parent=11 // pred_check
        %p394 = pneg %p152
      $region30: #{transformer_question_encoder_forward.5} parent=11 // pred_check_branch
        %396 = sbr.rel (%p394) target = $region32
      $region31: #{transformer_question_encoder_forward.5} parent=11 // pred_region
        _
      $region32: #{transformer_question_encoder_forward.5} parent=11 // pred_fallthru
        _
      // Predicated region
      $region33: #{transformer_question_encoder_forward.5} parent=11 // pred_check
        %p397 = pneg %p173
      $region34: #{transformer_question_encoder_forward.5} parent=11 // pred_check_branch
        %399 = sbr.rel (%p397) target = $region36
      $region35: #{transformer_question_encoder_forward.5} parent=11 // pred_region
        _
      $region36: #{transformer_question_encoder_forward.5} parent=11 // pred_fallthru
        _
      // Predicated region
      $region37: #{transformer_question_encoder_forward.5} parent=11 // pred_check
        %p400 = pneg %p194
      $region38: #{transformer_question_encoder_forward.5} parent=11 // pred_check_branch
        %402 = sbr.rel (%p400) target = $region40
      $region39: #{transformer_question_encoder_forward.5} parent=11 // pred_region
        _
      $region40: #{transformer_question_encoder_forward.5} parent=11 // pred_fallthru
        _
      // Predicated region
      $region41: #{transformer_question_encoder_forward.5} parent=11 // pred_check
        %p403 = pneg %p215
      $region42: #{transformer_question_encoder_forward.5} parent=11 // pred_check_branch
        %405 = sbr.rel (%p403) target = $region44
      $region43: #{transformer_question_encoder_forward.5} parent=11 // pred_region
        _
      $region44: #{transformer_question_encoder_forward.5} parent=11 // pred_fallthru
        _
      // Predicated region
      $region45: #{transformer_question_encoder_forward.5} parent=11 // pred_check
        %p406 = pneg %p236
      $region46: #{transformer_question_encoder_forward.5} parent=11 // pred_check_branch
        %408 = sbr.rel (%p406) target = $region48
      $region47: #{transformer_question_encoder_forward.5} parent=11 // pred_region
        _
      $region48: #{transformer_question_encoder_forward.5} parent=11 // pred_fallthru
        _
      // Predicated region
      $region49: #{transformer_question_encoder_forward.5} parent=11 // pred_check
        %p409 = pneg %p257
      $region50: #{transformer_question_encoder_forward.5} parent=11 // pred_check_branch
        %411 = sbr.rel (%p409) target = $region52
      $region51: #{transformer_question_encoder_forward.5} parent=11 // pred_region
        _
      $region52: #{transformer_question_encoder_forward.5} parent=11 // pred_fallthru
        _
      // Predicated region
      $region53: #{transformer_question_encoder_forward.5} parent=11 // pred_check
        %p412 = pneg %p278
      $region54: #{transformer_question_encoder_forward.5} parent=11 // pred_check_branch
        %414 = sbr.rel (%p412) target = $region56
      $region55: #{transformer_question_encoder_forward.5} parent=11 // pred_region
        _
      $region56: #{transformer_question_encoder_forward.5} parent=11 // pred_fallthru
        _
      // Predicated region
      $region57: #{transformer_question_encoder_forward.5} parent=11 // pred_check
        %p415 = pneg %p299
      $region58: #{transformer_question_encoder_forward.5} parent=11 // pred_check_branch
        %417 = sbr.rel (%p415) target = $region60
      $region59: #{transformer_question_encoder_forward.5} parent=11 // pred_region
        _
      $region60: #{transformer_question_encoder_forward.5} parent=11 // pred_fallthru
        _
      // Predicated region
      $region61: #{transformer_question_encoder_forward.5} parent=11 // pred_check
        %p418 = pneg %p320
      $region62: #{transformer_question_encoder_forward.5} parent=11 // pred_check_branch
        %420 = sbr.rel (%p418) target = $region64
      $region63: #{transformer_question_encoder_forward.5} parent=11 // pred_region
        _
      $region64: #{transformer_question_encoder_forward.5} parent=11 // pred_fallthru
        _
      // Predicated region
      $region65: #{transformer_question_encoder_forward.5} parent=11 // pred_check
        %p421 = pneg %p341
      $region66: #{transformer_question_encoder_forward.5} parent=11 // pred_check_branch
        %423 = sbr.rel (%p421) target = $region68
      $region67: #{transformer_question_encoder_forward.5} parent=11 // pred_region
        _
      $region68: #{transformer_question_encoder_forward.5} parent=11 // pred_fallthru
        _
    $region12: #{transformer_question_encoder_forward.5} parent=5 // pred_fallthru
      _
    %p424 = scmp.lt.s32.totalorder %s21, 2
    // Predicated region
    $region69: #{transformer_question_encoder_forward.5} parent=5 // pred_check
      %p425 = pneg %p424
    $region70: #{transformer_question_encoder_forward.5} parent=5 // pred_check_branch
      %427 = sbr.rel (%p425) target = $region72
    $region71: #{transformer_question_encoder_forward.5} parent=5 // pred_region
      // Predicated region
      $region73: #{transformer_question_encoder_forward.5} parent=71 // pred_check
        %p428 = pneg %p41
      $region74: #{transformer_question_encoder_forward.5} parent=71 // pred_check_branch
        %430 = sbr.rel (%p428) target = $region76
      $region75: #{transformer_question_encoder_forward.5} parent=71 // pred_region
        %p431 = scmp.lt.s32.totalorder %s21, 1
        %s432 = scalar_select %p431, %s21, 1
        %s433 = smul.addr %s432, 8
        %s434 = scalar_lea.vmem %s0, %s433
      $region76: #{transformer_question_encoder_forward.5} parent=71 // pred_fallthru
        _
    $region72: #{transformer_question_encoder_forward.5} parent=5 // pred_fallthru
      _
    %p435 = scmp.le.s32.totalorder 1, %s21
    %p436 = scmp.lt.s32.totalorder %s21, 3
    %p437 = pnand %p435, %p436
    %p438 = pneg %p437
    // Predicated region
    $region77: #{transformer_question_encoder_forward.5} parent=5 // pred_check
      _
    $region78: #{transformer_question_encoder_forward.5} parent=5 // pred_check_branch
      %440 = sbr.rel (%p437) target = $region80
    $region79: #{transformer_question_encoder_forward.5} parent=5 // pred_region
      %s441 = ssub.s32 %s21, 1
      %p442 = scmp.lt.s32.totalorder %s26, 1
      %s443 = scalar_select %p442, %s26, 1
      %s444 = smul.addr %s443, 8
      %s445 = scalar_lea.vmem %s0, %s444
      %p446 = pneg %p47
      %p447 = pneg %p44
      %p448 = pneg %p68
      %p449 = pneg %p65
      %p450 = pneg %p89
      %p451 = pneg %p86
      %p452 = pneg %p110
      %p453 = pneg %p107
      %p454 = pneg %p131
      %p455 = pneg %p128
      %p456 = pneg %p152
      %p457 = pneg %p149
      %p458 = pneg %p173
      %p459 = pneg %p170
      %p460 = pneg %p194
      %p461 = pneg %p191
      %p462 = pneg %p215
      %p463 = pneg %p212
      %p464 = pneg %p236
      %p465 = pneg %p233
      %p466 = pneg %p257
      %p467 = pneg %p254
      %p468 = pneg %p278
      %p469 = pneg %p275
      %p470 = pneg %p299
      %p471 = pneg %p296
      %p472 = pneg %p320
      %p473 = pneg %p317
      %p474 = pneg %p341
      %p475 = pneg %p338
      %p476 = pneg %p367
      %p477 = pneg %p364
      %p478 = scmp.lt.s32.totalorder %s26, 1
      %s479 = scalar_select %p478, %s26, 1
      %s480 = smul.addr %s479, 8
      %s481 = scalar_lea.vmem %s15, %s480
      %p482 = scmp.lt.s32.totalorder %s26, 1
      %s483 = scalar_select %p482, %s26, 1
      %s484 = smul.addr %s483, 8
      %s485 = scalar_lea.vmem %s0, %s484
      %p486 = scmp.lt.s32.totalorder %s26, 1
      %s487 = scalar_select %p486, %s26, 1
      %s488 = smul.addr %s487, 8
      %s489 = scalar_lea.vmem %s15, %s488
      %v491 = vld [vmem:[%s485] sm:$0xff]
      %v492 = vpack.c.bf16 %v491, %v491
      %v493 = vld [vmem:[%s1] sm:$0xf]
      %v494 = vld [vmem:[%s1 + $0x4] sm:$0xf]
      %v495 = vld [vmem:[%s1 + $0x8] sm:$0xf]
      %v496 = vld [vmem:[%s1 + $0xc] sm:$0xf]
      %v497 = vld [vmem:[%s1 + $0x10] sm:$0xf]
      %v498 = vld [vmem:[%s1 + $0x14] sm:$0xf]
      %v499 = vld [vmem:[%s1 + $0x18] sm:$0xf]
      %v500 = vld [vmem:[%s1 + $0x1c] sm:$0xf]
      %v501 = vld [vmem:[%s1 + $0x20] sm:$0xf]
      %v502 = vld [vmem:[%s1 + $0x24] sm:$0xf]
      %v503 = vld [vmem:[%s1 + $0x28] sm:$0xf]
      %v504 = vld [vmem:[%s1 + $0x2c] sm:$0xf]
      %v505 = vld [vmem:[%s1 + $0x30] sm:$0xf]
      %v506 = vld [vmem:[%s1 + $0x34] sm:$0xf]
      %v507 = vld [vmem:[%s1 + $0x38] sm:$0xf]
      %v508 = vld [vmem:[%s1 + $0x3c] sm:$0xf]
      %v509 = vld [vmem:[%s2] sm:$0x1]
      %v511 = vlaneseq
      %v512 = vshrl.u32 %v511, 7
      %v513 = vsub.s32 0, %v512
      %v514 = vrot.slane %v509, %v513
      %v532 = vunpack.c.l.b16 %v493
      %v533 = vunpack.c.l.b16 %v494
      %v534 = vunpack.c.l.b16 %v495
      %v535 = vunpack.c.l.b16 %v496
      %v536 = vunpack.c.l.b16 %v497
      %v537 = vunpack.c.l.b16 %v498
      %v538 = vunpack.c.l.b16 %v499
      %v539 = vunpack.c.l.b16 %v500
      %v540 = vunpack.c.l.b16 %v501
      %v541 = vunpack.c.l.b16 %v502
      %v542 = vunpack.c.l.b16 %v503
      %v543 = vunpack.c.l.b16 %v504
      %v544 = vunpack.c.l.b16 %v505
      %v545 = vunpack.c.l.b16 %v506
      %v546 = vunpack.c.l.b16 %v507
      %v547 = vunpack.c.l.b16 %v508
      %v548 = vpack.c.b16 %v533, %v532
      %v549 = vpack.c.b16 %v535, %v534
      %v550 = vpack.c.b16 %v537, %v536
      %v551 = vpack.c.b16 %v539, %v538
      %v552 = vpack.c.b16 %v541, %v540
      %v553 = vpack.c.b16 %v543, %v542
      %v554 = vpack.c.b16 %v545, %v544
      %v555 = vpack.c.b16 %v547, %v546
      %564 = vmatprep.subr.bf16.mxu0 0
      %565 = vmatpush1.bf16.msra.mxu0 %v548
      %566 = vmatprep.subr.bf16.mxu0 0
      %567 = vmatpush1.bf16.msra.mxu0 %v549
      %568 = vmatprep.subr.bf16.mxu0 0
      %569 = vmatpush1.bf16.msra.mxu0 %v550
      %570 = vmatprep.subr.bf16.mxu0 0
      %571 = vmatpush1.bf16.msra.mxu0 %v551
      %572 = vmatprep.subr.bf16.mxu0 0
      %573 = vmatpush1.bf16.msra.mxu0 %v552
      %574 = vmatprep.subr.bf16.mxu0 0
      %575 = vmatpush1.bf16.msra.mxu0 %v553
      %576 = vmatprep.subr.bf16.mxu0 0
      %577 = vmatpush1.bf16.msra.mxu0 %v554
      %578 = vmatprep.subr.bf16.mxu0 0
      %579 = vmatpush1.bf16.msra.mxu0 %v555
      %580 = vmatprep.subr.bf16.mxu0 0
      %581 = vmatpush1.bf16.msra.mxu0 0
      %582 = vmatprep.subr.bf16.mxu0 0
      %583 = vmatpush1.bf16.msra.mxu0 0
      %584 = vmatprep.subr.bf16.mxu0 0
      %585 = vmatpush1.bf16.msra.mxu0 0
      %586 = vmatprep.subr.bf16.mxu0 0
      %587 = vmatpush1.bf16.msra.mxu0 0
      %588 = vmatprep.subr.bf16.mxu0 0
      %589 = vmatpush1.bf16.msra.mxu0 0
      %590 = vmatprep.subr.bf16.mxu0 0
      %591 = vmatpush1.bf16.msra.mxu0 0
      %592 = vmatprep.subr.bf16.mxu0 0
      %593 = vmatpush1.bf16.msra.mxu0 0
      %594 = vmatprep.subr.bf16.mxu0 0
      %595 = vmatpush1.bf16.msra.mxu0 0
      %596 = vmatprep.mubr.bf16.mxu0 0
      %597 = vmatmul.mubr.bf16.gmra.mrb[0].mxu0 %v492
      %v598 = vpop.f32.mrb[0].mxu0
      %v599 = vadd.f32 %v514, %v598
      %v600 = vpop.f32.mrb[0].mxu0
      %v601 = vpop.f32.mrb[0].mxu0
      %v602 = vpop.f32.mrb[0].mxu0
      %603 = vdwg.mxu0
      %s604 = scalar_lea.vmem %s1, 256
      %v605 = vld [vmem:[%s604] sm:$0xf]
      %v606 = vld [vmem:[%s604 + $0x4] sm:$0xf]
      %v607 = vld [vmem:[%s604 + $0x8] sm:$0xf]
      %v608 = vld [vmem:[%s604 + $0xc] sm:$0xf]
      %v609 = vld [vmem:[%s604 + $0x10] sm:$0xf]
      %v610 = vld [vmem:[%s604 + $0x14] sm:$0xf]
      %v611 = vld [vmem:[%s604 + $0x18] sm:$0xf]
      %v612 = vld [vmem:[%s604 + $0x1c] sm:$0xf]
      %v613 = vld [vmem:[%s604 + $0x20] sm:$0xf]
      %v614 = vld [vmem:[%s604 + $0x24] sm:$0xf]
      %v615 = vld [vmem:[%s604 + $0x28] sm:$0xf]
      %v616 = vld [vmem:[%s604 + $0x2c] sm:$0xf]
      %v617 = vld [vmem:[%s604 + $0x30] sm:$0xf]
      %v618 = vld [vmem:[%s604 + $0x34] sm:$0xf]
      %v619 = vld [vmem:[%s604 + $0x38] sm:$0xf]
      %v620 = vld [vmem:[%s604 + $0x3c] sm:$0xf]
      %s621 = scalar_lea.vmem %s2, 4
      %v622 = vld [vmem:[%s621] sm:$0x1]
      %v624 = vlaneseq
      %v625 = vshrl.u32 %v624, 7
      %v626 = vsub.s32 0, %v625
      %v627 = vrot.slane %v622, %v626
      %v645 = vunpack.c.l.b16 %v605
      %v646 = vunpack.c.l.b16 %v606
      %v647 = vunpack.c.l.b16 %v607
      %v648 = vunpack.c.l.b16 %v608
      %v649 = vunpack.c.l.b16 %v609
      %v650 = vunpack.c.l.b16 %v610
      %v651 = vunpack.c.l.b16 %v611
      %v652 = vunpack.c.l.b16 %v612
      %v653 = vunpack.c.l.b16 %v613
      %v654 = vunpack.c.l.b16 %v614
      %v655 = vunpack.c.l.b16 %v615
      %v656 = vunpack.c.l.b16 %v616
      %v657 = vunpack.c.l.b16 %v617
      %v658 = vunpack.c.l.b16 %v618
      %v659 = vunpack.c.l.b16 %v619
      %v660 = vunpack.c.l.b16 %v620
      %v661 = vpack.c.b16 %v646, %v645
      %v662 = vpack.c.b16 %v648, %v647
      %v663 = vpack.c.b16 %v650, %v649
      %v664 = vpack.c.b16 %v652, %v651
      %v665 = vpack.c.b16 %v654, %v653
      %v666 = vpack.c.b16 %v656, %v655
      %v667 = vpack.c.b16 %v658, %v657
      %v668 = vpack.c.b16 %v660, %v659
      %677 = vmatprep.subr.bf16.mxu0 0
      %678 = vmatpush1.bf16.msra.mxu0 %v661
      %679 = vmatprep.subr.bf16.mxu0 0
      %680 = vmatpush1.bf16.msra.mxu0 %v662
      %681 = vmatprep.subr.bf16.mxu0 0
      %682 = vmatpush1.bf16.msra.mxu0 %v663
      %683 = vmatprep.subr.bf16.mxu0 0
      %684 = vmatpush1.bf16.msra.mxu0 %v664
      %685 = vmatprep.subr.bf16.mxu0 0
      %686 = vmatpush1.bf16.msra.mxu0 %v665
      %687 = vmatprep.subr.bf16.mxu0 0
      %688 = vmatpush1.bf16.msra.mxu0 %v666
      %689 = vmatprep.subr.bf16.mxu0 0
      %690 = vmatpush1.bf16.msra.mxu0 %v667
      %691 = vmatprep.subr.bf16.mxu0 0
      %692 = vmatpush1.bf16.msra.mxu0 %v668
      %693 = vmatprep.subr.bf16.mxu0 0
      %694 = vmatpush1.bf16.msra.mxu0 0
      %695 = vmatprep.subr.bf16.mxu0 0
      %696 = vmatpush1.bf16.msra.mxu0 0
      %697 = vmatprep.subr.bf16.mxu0 0
      %698 = vmatpush1.bf16.msra.mxu0 0
      %699 = vmatprep.subr.bf16.mxu0 0
      %700 = vmatpush1.bf16.msra.mxu0 0
      %701 = vmatprep.subr.bf16.mxu0 0
      %702 = vmatpush1.bf16.msra.mxu0 0
      %703 = vmatprep.subr.bf16.mxu0 0
      %704 = vmatpush1.bf16.msra.mxu0 0
      %705 = vmatprep.subr.bf16.mxu0 0
      %706 = vmatpush1.bf16.msra.mxu0 0
      %707 = vmatprep.subr.bf16.mxu0 0
      %708 = vmatpush1.bf16.msra.mxu0 0
      %709 = vmatprep.mubr.bf16.mxu0 0
      %710 = vmatmul.mubr.bf16.gmra.mrb[0].mxu0 %v492
      %v711 = vpop.f32.mrb[0].mxu0
      %v712 = vadd.f32 %v627, %v711
      %v713 = vpop.f32.mrb[0].mxu0
      %v714 = vpop.f32.mrb[0].mxu0
      %v715 = vpop.f32.mrb[0].mxu0
      %716 = vdwg.mxu0
      %s717 = scalar_lea.vmem %s1, 512
      %v718 = vld [vmem:[%s717] sm:$0xf]
      %v719 = vld [vmem:[%s717 + $0x4] sm:$0xf]
      %v720 = vld [vmem:[%s717 + $0x8] sm:$0xf]
      %v721 = vld [vmem:[%s717 + $0xc] sm:$0xf]
      %v722 = vld [vmem:[%s717 + $0x10] sm:$0xf]
      %v723 = vld [vmem:[%s717 + $0x14] sm:$0xf]
      %v724 = vld [vmem:[%s717 + $0x18] sm:$0xf]
      %v725 = vld [vmem:[%s717 + $0x1c] sm:$0xf]
      %v726 = vld [vmem:[%s717 + $0x20] sm:$0xf]
      %v727 = vld [vmem:[%s717 + $0x24] sm:$0xf]
      %v728 = vld [vmem:[%s717 + $0x28] sm:$0xf]
      %v729 = vld [vmem:[%s717 + $0x2c] sm:$0xf]
      %v730 = vld [vmem:[%s717 + $0x30] sm:$0xf]
      %v731 = vld [vmem:[%s717 + $0x34] sm:$0xf]
      %v732 = vld [vmem:[%s717 + $0x38] sm:$0xf]
      %v733 = vld [vmem:[%s717 + $0x3c] sm:$0xf]
      %s734 = scalar_lea.vmem %s2, 8
      %v735 = vld [vmem:[%s734] sm:$0x1]
      %v737 = vlaneseq
      %v738 = vshrl.u32 %v737, 7
      %v739 = vsub.s32 0, %v738
      %v740 = vrot.slane %v735, %v739
      %v758 = vunpack.c.l.b16 %v718
      %v759 = vunpack.c.l.b16 %v719
      %v760 = vunpack.c.l.b16 %v720
      %v761 = vunpack.c.l.b16 %v721
      %v762 = vunpack.c.l.b16 %v722
      %v763 = vunpack.c.l.b16 %v723
      %v764 = vunpack.c.l.b16 %v724
      %v765 = vunpack.c.l.b16 %v725
      %v766 = vunpack.c.l.b16 %v726
      %v767 = vunpack.c.l.b16 %v727
      %v768 = vunpack.c.l.b16 %v728
      %v769 = vunpack.c.l.b16 %v729
      %v770 = vunpack.c.l.b16 %v730
      %v771 = vunpack.c.l.b16 %v731
      %v772 = vunpack.c.l.b16 %v732
      %v773 = vunpack.c.l.b16 %v733
      %v774 = vpack.c.b16 %v759, %v758
      %v775 = vpack.c.b16 %v761, %v760
      %v776 = vpack.c.b16 %v763, %v762
      %v777 = vpack.c.b16 %v765, %v764
      %v778 = vpack.c.b16 %v767, %v766
      %v779 = vpack.c.b16 %v769, %v768
      %v780 = vpack.c.b16 %v771, %v770
      %v781 = vpack.c.b16 %v773, %v772
      %790 = vmatprep.subr.bf16.mxu0 0
      %791 = vmatpush1.bf16.msra.mxu0 %v774
      %792 = vmatprep.subr.bf16.mxu0 0
      %793 = vmatpush1.bf16.msra.mxu0 %v775
      %794 = vmatprep.subr.bf16.mxu0 0
      %795 = vmatpush1.bf16.msra.mxu0 %v776
      %796 = vmatprep.subr.bf16.mxu0 0
      %797 = vmatpush1.bf16.msra.mxu0 %v777
      %798 = vmatprep.subr.bf16.mxu0 0
      %799 = vmatpush1.bf16.msra.mxu0 %v778
      %800 = vmatprep.subr.bf16.mxu0 0
      %801 = vmatpush1.bf16.msra.mxu0 %v779
      %802 = vmatprep.subr.bf16.mxu0 0
      %803 = vmatpush1.bf16.msra.mxu0 %v780
      %804 = vmatprep.subr.bf16.mxu0 0
      %805 = vmatpush1.bf16.msra.mxu0 %v781
      %806 = vmatprep.subr.bf16.mxu0 0
      %807 = vmatpush1.bf16.msra.mxu0 0
      %808 = vmatprep.subr.bf16.mxu0 0
      %809 = vmatpush1.bf16.msra.mxu0 0
      %810 = vmatprep.subr.bf16.mxu0 0
      %811 = vmatpush1.bf16.msra.mxu0 0
      %812 = vmatprep.subr.bf16.mxu0 0
      %813 = vmatpush1.bf16.msra.mxu0 0
      %814 = vmatprep.subr.bf16.mxu0 0
      %815 = vmatpush1.bf16.msra.mxu0 0
      %816 = vmatprep.subr.bf16.mxu0 0
      %817 = vmatpush1.bf16.msra.mxu0 0
      %818 = vmatprep.subr.bf16.mxu0 0
      %819 = vmatpush1.bf16.msra.mxu0 0
      %820 = vmatprep.subr.bf16.mxu0 0
      %821 = vmatpush1.bf16.msra.mxu0 0
      %822 = vmatprep.mubr.bf16.mxu0 0
      %823 = vmatmul.mubr.bf16.gmra.mrb[0].mxu0 %v492
      %v824 = vpop.f32.mrb[0].mxu0
      %v825 = vadd.f32 %v740, %v824
      %v826 = vpop.f32.mrb[0].mxu0
      %v827 = vpop.f32.mrb[0].mxu0
      %v828 = vpop.f32.mrb[0].mxu0
      %829 = vdwg.mxu0
      %v830 = vpack.c.bf16 %v599, %v599
      %v831 = vpack.c.bf16 %v712, %v712
      %vm832 = vcmask 261120
      %v834 = vsel %vm832, %v830, 0
      %v837 = vsel %vm832, %v831, 0
      %839 = vmatprep.subr.bf16.mxu0 0
      %840 = vmatpush1.bf16.xpose.msra.mxu0 %v837
      %841 = vmatprep.subr.bf16.mxu0 0
      %842 = vmatpush1.bf16.xpose.msra.mxu0 0
      %843 = vmatprep.subr.bf16.mxu0 0
      %844 = vmatpush1.bf16.xpose.msra.mxu0 0
      %845 = vmatprep.subr.bf16.mxu0 0
      %846 = vmatpush1.bf16.xpose.msra.mxu0 0
      %847 = vmatprep.subr.bf16.mxu0 0
      %848 = vmatpush1.bf16.xpose.msra.mxu0 0
      %849 = vmatprep.subr.bf16.mxu0 0
      %850 = vmatpush1.bf16.xpose.msra.mxu0 0
      %851 = vmatprep.subr.bf16.mxu0 0
      %852 = vmatpush1.bf16.xpose.msra.mxu0 0
      %853 = vmatprep.subr.bf16.mxu0 0
      %854 = vmatpush1.bf16.xpose.msra.mxu0 0
      %855 = vmatprep.subr.bf16.mxu0 0
      %856 = vmatpush1.bf16.xpose.msra.mxu0 0
      %857 = vmatprep.subr.bf16.mxu0 0
      %858 = vmatpush1.bf16.xpose.msra.mxu0 0
      %859 = vmatprep.subr.bf16.mxu0 0
      %860 = vmatpush1.bf16.xpose.msra.mxu0 0
      %861 = vmatprep.subr.bf16.mxu0 0
      %862 = vmatpush1.bf16.xpose.msra.mxu0 0
      %863 = vmatprep.subr.bf16.mxu0 0
      %864 = vmatpush1.bf16.xpose.msra.mxu0 0
      %865 = vmatprep.subr.bf16.mxu0 0
      %866 = vmatpush1.bf16.xpose.msra.mxu0 0
      %867 = vmatprep.subr.bf16.mxu0 0
      %868 = vmatpush1.bf16.xpose.msra.mxu0 0
      %869 = vmatprep.subr.bf16.mxu0 0
      %870 = vmatpush1.bf16.xpose.msra.mxu0 0
      %871 = vmatprep.mubr.bf16.mxu0 0
      %872 = vmatmul.mubr.bf16.gmra.mrb[0].mxu0 %v834
      %v873 = vpop.f32.mrb[0].mxu0
      %v874 = vadd.f32 0.0, %v873
      %v875 = vpop.f32.mrb[0].mxu0
      %v876 = vpop.f32.mrb[0].mxu0
      %v877 = vpop.f32.mrb[0].mxu0
      %878 = vdwg.mxu0
      %v879 = vmul.f32 %v874, 0.17677669
      %vm880 = vcmask 64512
      %v881 = vsel %vm880, %v879, -inf
      %882 = vmax.xlane.f32.xlu0 %v881
      %v883 = vpop.xlane.xlu0 %882
      %v884 = vsub.f32 %v879, %v883
      %v885 = vmul.f32 %v884, 1.442695
      %v886 = vpow.pop %v885
      %v887 = vsel %vm880, %v886, 0.0
      %888 = vadd.xlane.f32.xlu0 %v887
      %v889 = vpop.xlane.xlu0 %888
      %v890 = vrcp.pop %v889
      %v891 = vmul.f32 %v886, %v890
      %v892 = vpack.c.bf16 %v891, %v891
      %v893 = vpack.c.bf16 %v825, %v825
      %v895 = vsel %vm880, %v892, 0
      %vm897 = vcmask 1043456
      %v899 = vsel %vm897, %v893, 0
      %901 = vmatprep.subr.bf16.mxu0 0
      %902 = vmatpush1.bf16.msra.mxu0 %v899
      %903 = vmatprep.subr.bf16.mxu0 0
      %904 = vmatpush1.bf16.msra.mxu0 0
      %905 = vmatprep.subr.bf16.mxu0 0
      %906 = vmatpush1.bf16.msra.mxu0 0
      %907 = vmatprep.subr.bf16.mxu0 0
      %908 = vmatpush1.bf16.msra.mxu0 0
      %909 = vmatprep.subr.bf16.mxu0 0
      %910 = vmatpush1.bf16.msra.mxu0 0
      %911 = vmatprep.subr.bf16.mxu0 0
      %912 = vmatpush1.bf16.msra.mxu0 0
      %913 = vmatprep.subr.bf16.mxu0 0
      %914 = vmatpush1.bf16.msra.mxu0 0
      %915 = vmatprep.subr.bf16.mxu0 0
      %916 = vmatpush1.bf16.msra.mxu0 0
      %917 = vmatprep.subr.bf16.mxu0 0
      %918 = vmatpush1.bf16.msra.mxu0 0
      %919 = vmatprep.subr.bf16.mxu0 0
      %920 = vmatpush1.bf16.msra.mxu0 0
      %921 = vmatprep.subr.bf16.mxu0 0
      %922 = vmatpush1.bf16.msra.mxu0 0
      %923 = vmatprep.subr.bf16.mxu0 0
      %924 = vmatpush1.bf16.msra.mxu0 0
      %925 = vmatprep.subr.bf16.mxu0 0
      %926 = vmatpush1.bf16.msra.mxu0 0
      %927 = vmatprep.subr.bf16.mxu0 0
      %928 = vmatpush1.bf16.msra.mxu0 0
      %929 = vmatprep.subr.bf16.mxu0 0
      %930 = vmatpush1.bf16.msra.mxu0 0
      %931 = vmatprep.subr.bf16.mxu0 0
      %932 = vmatpush1.bf16.msra.mxu0 0
      %933 = vmatprep.mubr.bf16.mxu0 0
      %934 = vmatmul.mubr.bf16.gmra.mrb[0].mxu0 %v895
      %v935 = vpop.f32.mrb[0].mxu0
      %v936 = vadd.f32 0.0, %v935
      %v937 = vpop.f32.mrb[0].mxu0
      %v938 = vpop.f32.mrb[0].mxu0
      %v939 = vpop.f32.mrb[0].mxu0
      %940 = vdwg.mxu0
      %v941 = vpack.c.bf16 %v936, %v936
      %v942 = vld [vmem:[%s3] sm:$0xf]
      %v943 = vld [vmem:[%s3 + $0x4] sm:$0xf]
      %v944 = vld [vmem:[%s3 + $0x8] sm:$0xf]
      %v945 = vld [vmem:[%s3 + $0xc] sm:$0xf]
      %s946 = scalar_lea.vmem %s1, 64
      %v947 = vld [vmem:[%s946] sm:$0xf]
      %v948 = vld [vmem:[%s946 + $0x4] sm:$0xf]
      %v949 = vld [vmem:[%s946 + $0x8] sm:$0xf]
      %v950 = vld [vmem:[%s946 + $0xc] sm:$0xf]
      %v951 = vld [vmem:[%s946 + $0x10] sm:$0xf]
      %v952 = vld [vmem:[%s946 + $0x14] sm:$0xf]
      %v953 = vld [vmem:[%s946 + $0x18] sm:$0xf]
      %v954 = vld [vmem:[%s946 + $0x1c] sm:$0xf]
      %v955 = vld [vmem:[%s946 + $0x20] sm:$0xf]
      %v956 = vld [vmem:[%s946 + $0x24] sm:$0xf]
      %v957 = vld [vmem:[%s946 + $0x28] sm:$0xf]
      %v958 = vld [vmem:[%s946 + $0x2c] sm:$0xf]
      %v959 = vld [vmem:[%s946 + $0x30] sm:$0xf]
      %v960 = vld [vmem:[%s946 + $0x34] sm:$0xf]
      %v961 = vld [vmem:[%s946 + $0x38] sm:$0xf]
      %v962 = vld [vmem:[%s946 + $0x3c] sm:$0xf]
      %s963 = scalar_lea.vmem %s2, 1
      %v964 = vld [vmem:[%s963] sm:$0x1]
      %v966 = vlaneseq
      %v967 = vshrl.u32 %v966, 7
      %v968 = vsub.s32 0, %v967
      %v969 = vrot.slane %v964, %v968
      %v987 = vunpack.c.l.b16 %v947
      %v988 = vunpack.c.l.b16 %v948
      %v989 = vunpack.c.l.b16 %v949
      %v990 = vunpack.c.l.b16 %v950
      %v991 = vunpack.c.l.b16 %v951
      %v992 = vunpack.c.l.b16 %v952
      %v993 = vunpack.c.l.b16 %v953
      %v994 = vunpack.c.l.b16 %v954
      %v995 = vunpack.c.l.b16 %v955
      %v996 = vunpack.c.l.b16 %v956
      %v997 = vunpack.c.l.b16 %v957
      %v998 = vunpack.c.l.b16 %v958
      %v999 = vunpack.c.l.b16 %v959
      %v1000 = vunpack.c.l.b16 %v960
      %v1001 = vunpack.c.l.b16 %v961
      %v1002 = vunpack.c.l.b16 %v962
      %v1003 = vpack.c.b16 %v988, %v987
      %v1004 = vpack.c.b16 %v990, %v989
      %v1005 = vpack.c.b16 %v992, %v991
      %v1006 = vpack.c.b16 %v994, %v993
      %v1007 = vpack.c.b16 %v996, %v995
      %v1008 = vpack.c.b16 %v998, %v997
      %v1009 = vpack.c.b16 %v1000, %v999
      %v1010 = vpack.c.b16 %v1002, %v1001
      %1019 = vmatprep.subr.bf16.mxu0 0
      %1020 = vmatpush1.bf16.msra.mxu0 %v1003
      %1021 = vmatprep.subr.bf16.mxu0 0
      %1022 = vmatpush1.bf16.msra.mxu0 %v1004
      %1023 = vmatprep.subr.bf16.mxu0 0
      %1024 = vmatpush1.bf16.msra.mxu0 %v1005
      %1025 = vmatprep.subr.bf16.mxu0 0
      %1026 = vmatpush1.bf16.msra.mxu0 %v1006
      %1027 = vmatprep.subr.bf16.mxu0 0
      %1028 = vmatpush1.bf16.msra.mxu0 %v1007
      %1029 = vmatprep.subr.bf16.mxu0 0
      %1030 = vmatpush1.bf16.msra.mxu0 %v1008
      %1031 = vmatprep.subr.bf16.mxu0 0
      %1032 = vmatpush1.bf16.msra.mxu0 %v1009
      %1033 = vmatprep.subr.bf16.mxu0 0
      %1034 = vmatpush1.bf16.msra.mxu0 %v1010
      %1035 = vmatprep.subr.bf16.mxu0 0
      %1036 = vmatpush1.bf16.msra.mxu0 0
      %1037 = vmatprep.subr.bf16.mxu0 0
      %1038 = vmatpush1.bf16.msra.mxu0 0
      %1039 = vmatprep.subr.bf16.mxu0 0
      %1040 = vmatpush1.bf16.msra.mxu0 0
      %1041 = vmatprep.subr.bf16.mxu0 0
      %1042 = vmatpush1.bf16.msra.mxu0 0
      %1043 = vmatprep.subr.bf16.mxu0 0
      %1044 = vmatpush1.bf16.msra.mxu0 0
      %1045 = vmatprep.subr.bf16.mxu0 0
      %1046 = vmatpush1.bf16.msra.mxu0 0
      %1047 = vmatprep.subr.bf16.mxu0 0
      %1048 = vmatpush1.bf16.msra.mxu0 0
      %1049 = vmatprep.subr.bf16.mxu0 0
      %1050 = vmatpush1.bf16.msra.mxu0 0
      %1051 = vmatprep.mubr.bf16.mxu0 0
      %1052 = vmatmul.mubr.bf16.gmra.mrb[0].mxu0 %v492
      %v1053 = vpop.f32.mrb[0].mxu0
      %v1054 = vadd.f32 %v969, %v1053
      %v1055 = vpop.f32.mrb[0].mxu0
      %v1056 = vpop.f32.mrb[0].mxu0
      %v1057 = vpop.f32.mrb[0].mxu0
      %1058 = vdwg.mxu0
      %s1059 = scalar_lea.vmem %s1, 320
      %v1060 = vld [vmem:[%s1059] sm:$0xf]
      %v1061 = vld [vmem:[%s1059 + $0x4] sm:$0xf]
      %v1062 = vld [vmem:[%s1059 + $0x8] sm:$0xf]
      %v1063 = vld [vmem:[%s1059 + $0xc] sm:$0xf]
      %v1064 = vld [vmem:[%s1059 + $0x10] sm:$0xf]
      %v1065 = vld [vmem:[%s1059 + $0x14] sm:$0xf]
      %v1066 = vld [vmem:[%s1059 + $0x18] sm:$0xf]
      %v1067 = vld [vmem:[%s1059 + $0x1c] sm:$0xf]
      %v1068 = vld [vmem:[%s1059 + $0x20] sm:$0xf]
      %v1069 = vld [vmem:[%s1059 + $0x24] sm:$0xf]
      %v1070 = vld [vmem:[%s1059 + $0x28] sm:$0xf]
      %v1071 = vld [vmem:[%s1059 + $0x2c] sm:$0xf]
      %v1072 = vld [vmem:[%s1059 + $0x30] sm:$0xf]
      %v1073 = vld [vmem:[%s1059 + $0x34] sm:$0xf]
      %v1074 = vld [vmem:[%s1059 + $0x38] sm:$0xf]
      %v1075 = vld [vmem:[%s1059 + $0x3c] sm:$0xf]
      %s1076 = scalar_lea.vmem %s2, 5
      %v1077 = vld [vmem:[%s1076] sm:$0x1]
      %v1079 = vlaneseq
      %v1080 = vshrl.u32 %v1079, 7
      %v1081 = vsub.s32 0, %v1080
      %v1082 = vrot.slane %v1077, %v1081
      %v1100 = vunpack.c.l.b16 %v1060
      %v1101 = vunpack.c.l.b16 %v1061
      %v1102 = vunpack.c.l.b16 %v1062
      %v1103 = vunpack.c.l.b16 %v1063
      %v1104 = vunpack.c.l.b16 %v1064
      %v1105 = vunpack.c.l.b16 %v1065
      %v1106 = vunpack.c.l.b16 %v1066
      %v1107 = vunpack.c.l.b16 %v1067
      %v1108 = vunpack.c.l.b16 %v1068
      %v1109 = vunpack.c.l.b16 %v1069
      %v1110 = vunpack.c.l.b16 %v1070
      %v1111 = vunpack.c.l.b16 %v1071
      %v1112 = vunpack.c.l.b16 %v1072
      %v1113 = vunpack.c.l.b16 %v1073
      %v1114 = vunpack.c.l.b16 %v1074
      %v1115 = vunpack.c.l.b16 %v1075
      %v1116 = vpack.c.b16 %v1101, %v1100
      %v1117 = vpack.c.b16 %v1103, %v1102
      %v1118 = vpack.c.b16 %v1105, %v1104
      %v1119 = vpack.c.b16 %v1107, %v1106
      %v1120 = vpack.c.b16 %v1109, %v1108
      %v1121 = vpack.c.b16 %v1111, %v1110
      %v1122 = vpack.c.b16 %v1113, %v1112
      %v1123 = vpack.c.b16 %v1115, %v1114
      %1132 = vmatprep.subr.bf16.mxu0 0
      %1133 = vmatpush1.bf16.msra.mxu0 %v1116
      %1134 = vmatprep.subr.bf16.mxu0 0
      %1135 = vmatpush1.bf16.msra.mxu0 %v1117
      %1136 = vmatprep.subr.bf16.mxu0 0
      %1137 = vmatpush1.bf16.msra.mxu0 %v1118
      %1138 = vmatprep.subr.bf16.mxu0 0
      %1139 = vmatpush1.bf16.msra.mxu0 %v1119
      %1140 = vmatprep.subr.bf16.mxu0 0
      %1141 = vmatpush1.bf16.msra.mxu0 %v1120
      %1142 = vmatprep.subr.bf16.mxu0 0
      %1143 = vmatpush1.bf16.msra.mxu0 %v1121
      %1144 = vmatprep.subr.bf16.mxu0 0
      %1145 = vmatpush1.bf16.msra.mxu0 %v1122
      %1146 = vmatprep.subr.bf16.mxu0 0
      %1147 = vmatpush1.bf16.msra.mxu0 %v1123
      %1148 = vmatprep.subr.bf16.mxu0 0
      %1149 = vmatpush1.bf16.msra.mxu0 0
      %1150 = vmatprep.subr.bf16.mxu0 0
      %1151 = vmatpush1.bf16.msra.mxu0 0
      %1152 = vmatprep.subr.bf16.mxu0 0
      %1153 = vmatpush1.bf16.msra.mxu0 0
      %1154 = vmatprep.subr.bf16.mxu0 0
      %1155 = vmatpush1.bf16.msra.mxu0 0
      %1156 = vmatprep.subr.bf16.mxu0 0
      %1157 = vmatpush1.bf16.msra.mxu0 0
      %1158 = vmatprep.subr.bf16.mxu0 0
      %1159 = vmatpush1.bf16.msra.mxu0 0
      %1160 = vmatprep.subr.bf16.mxu0 0
      %1161 = vmatpush1.bf16.msra.mxu0 0
      %1162 = vmatprep.subr.bf16.mxu0 0
      %1163 = vmatpush1.bf16.msra.mxu0 0
      %1164 = vmatprep.mubr.bf16.mxu0 0
      %1165 = vmatmul.mubr.bf16.gmra.mrb[0].mxu0 %v492
      %v1166 = vpop.f32.mrb[0].mxu0
      %v1167 = vadd.f32 %v1082, %v1166
      %v1168 = vpop.f32.mrb[0].mxu0
      %v1169 = vpop.f32.mrb[0].mxu0
      %v1170 = vpop.f32.mrb[0].mxu0
      %1171 = vdwg.mxu0
      %s1172 = scalar_lea.vmem %s1, 576
      %v1173 = vld [vmem:[%s1172] sm:$0xf]
      %v1174 = vld [vmem:[%s1172 + $0x4] sm:$0xf]
      %v1175 = vld [vmem:[%s1172 + $0x8] sm:$0xf]
      %v1176 = vld [vmem:[%s1172 + $0xc] sm:$0xf]
      %v1177 = vld [vmem:[%s1172 + $0x10] sm:$0xf]
      %v1178 = vld [vmem:[%s1172 + $0x14] sm:$0xf]
      %v1179 = vld [vmem:[%s1172 + $0x18] sm:$0xf]
      %v1180 = vld [vmem:[%s1172 + $0x1c] sm:$0xf]
      %v1181 = vld [vmem:[%s1172 + $0x20] sm:$0xf]
      %v1182 = vld [vmem:[%s1172 + $0x24] sm:$0xf]
      %v1183 = vld [vmem:[%s1172 + $0x28] sm:$0xf]
      %v1184 = vld [vmem:[%s1172 + $0x2c] sm:$0xf]
      %v1185 = vld [vmem:[%s1172 + $0x30] sm:$0xf]
      %v1186 = vld [vmem:[%s1172 + $0x34] sm:$0xf]
      %v1187 = vld [vmem:[%s1172 + $0x38] sm:$0xf]
      %v1188 = vld [vmem:[%s1172 + $0x3c] sm:$0xf]
      %s1189 = scalar_lea.vmem %s2, 9
      %v1190 = vld [vmem:[%s1189] sm:$0x1]
      %v1192 = vlaneseq
      %v1193 = vshrl.u32 %v1192, 7
      %v1194 = vsub.s32 0, %v1193
      %v1195 = vrot.slane %v1190, %v1194
      %v1213 = vunpack.c.l.b16 %v1173
      %v1214 = vunpack.c.l.b16 %v1174
      %v1215 = vunpack.c.l.b16 %v1175
      %v1216 = vunpack.c.l.b16 %v1176
      %v1217 = vunpack.c.l.b16 %v1177
      %v1218 = vunpack.c.l.b16 %v1178
      %v1219 = vunpack.c.l.b16 %v1179
      %v1220 = vunpack.c.l.b16 %v1180
      %v1221 = vunpack.c.l.b16 %v1181
      %v1222 = vunpack.c.l.b16 %v1182
      %v1223 = vunpack.c.l.b16 %v1183
      %v1224 = vunpack.c.l.b16 %v1184
      %v1225 = vunpack.c.l.b16 %v1185
      %v1226 = vunpack.c.l.b16 %v1186
      %v1227 = vunpack.c.l.b16 %v1187
      %v1228 = vunpack.c.l.b16 %v1188
      %v1229 = vpack.c.b16 %v1214, %v1213
      %v1230 = vpack.c.b16 %v1216, %v1215
      %v1231 = vpack.c.b16 %v1218, %v1217
      %v1232 = vpack.c.b16 %v1220, %v1219
      %v1233 = vpack.c.b16 %v1222, %v1221
      %v1234 = vpack.c.b16 %v1224, %v1223
      %v1235 = vpack.c.b16 %v1226, %v1225
      %v1236 = vpack.c.b16 %v1228, %v1227
      %1245 = vmatprep.subr.bf16.mxu0 0
      %1246 = vmatpush1.bf16.msra.mxu0 %v1229
      %1247 = vmatprep.subr.bf16.mxu0 0
      %1248 = vmatpush1.bf16.msra.mxu0 %v1230
      %1249 = vmatprep.subr.bf16.mxu0 0
      %1250 = vmatpush1.bf16.msra.mxu0 %v1231
      %1251 = vmatprep.subr.bf16.mxu0 0
      %1252 = vmatpush1.bf16.msra.mxu0 %v1232
      %1253 = vmatprep.subr.bf16.mxu0 0
      %1254 = vmatpush1.bf16.msra.mxu0 %v1233
      %1255 = vmatprep.subr.bf16.mxu0 0
      %1256 = vmatpush1.bf16.msra.mxu0 %v1234
      %1257 = vmatprep.subr.bf16.mxu0 0
      %1258 = vmatpush1.bf16.msra.mxu0 %v1235
      %1259 = vmatprep.subr.bf16.mxu0 0
      %1260 = vmatpush1.bf16.msra.mxu0 %v1236
      %1261 = vmatprep.subr.bf16.mxu0 0
      %1262 = vmatpush1.bf16.msra.mxu0 0
      %1263 = vmatprep.subr.bf16.mxu0 0
      %1264 = vmatpush1.bf16.msra.mxu0 0
      %1265 = vmatprep.subr.bf16.mxu0 0
      %1266 = vmatpush1.bf16.msra.mxu0 0
      %1267 = vmatprep.subr.bf16.mxu0 0
      %1268 = vmatpush1.bf16.msra.mxu0 0
      %1269 = vmatprep.subr.bf16.mxu0 0
      %1270 = vmatpush1.bf16.msra.mxu0 0
      %1271 = vmatprep.subr.bf16.mxu0 0
      %1272 = vmatpush1.bf16.msra.mxu0 0
      %1273 = vmatprep.subr.bf16.mxu0 0
      %1274 = vmatpush1.bf16.msra.mxu0 0
      %1275 = vmatprep.subr.bf16.mxu0 0
      %1276 = vmatpush1.bf16.msra.mxu0 0
      %1277 = vmatprep.mubr.bf16.mxu0 0
      %1278 = vmatmul.mubr.bf16.gmra.mrb[0].mxu0 %v492
      %v1279 = vpop.f32.mrb[0].mxu0
      %v1280 = vadd.f32 %v1195, %v1279
      %v1281 = vpop.f32.mrb[0].mxu0
      %v1282 = vpop.f32.mrb[0].mxu0
      %v1283 = vpop.f32.mrb[0].mxu0
      %1284 = vdwg.mxu0
      %v1285 = vpack.c.bf16 %v1054, %v1054
      %v1286 = vpack.c.bf16 %v1167, %v1167
      %v1288 = vsel %vm832, %v1285, 0
      %v1291 = vsel %vm832, %v1286, 0
      %1293 = vmatprep.subr.bf16.mxu0 0
      %1294 = vmatpush1.bf16.xpose.msra.mxu0 %v1291
      %1295 = vmatprep.subr.bf16.mxu0 0
      %1296 = vmatpush1.bf16.xpose.msra.mxu0 0
      %1297 = vmatprep.subr.bf16.mxu0 0
      %1298 = vmatpush1.bf16.xpose.msra.mxu0 0
      %1299 = vmatprep.subr.bf16.mxu0 0
      %1300 = vmatpush1.bf16.xpose.msra.mxu0 0
      %1301 = vmatprep.subr.bf16.mxu0 0
      %1302 = vmatpush1.bf16.xpose.msra.mxu0 0
      %1303 = vmatprep.subr.bf16.mxu0 0
      %1304 = vmatpush1.bf16.xpose.msra.mxu0 0
      %1305 = vmatprep.subr.bf16.mxu0 0
      %1306 = vmatpush1.bf16.xpose.msra.mxu0 0
      %1307 = vmatprep.subr.bf16.mxu0 0
      %1308 = vmatpush1.bf16.xpose.msra.mxu0 0
      %1309 = vmatprep.subr.bf16.mxu0 0
      %1310 = vmatpush1.bf16.xpose.msra.mxu0 0
      %1311 = vmatprep.subr.bf16.mxu0 0
      %1312 = vmatpush1.bf16.xpose.msra.mxu0 0
      %1313 = vmatprep.subr.bf16.mxu0 0
      %1314 = vmatpush1.bf16.xpose.msra.mxu0 0
      %1315 = vmatprep.subr.bf16.mxu0 0
      %1316 = vmatpush1.bf16.xpose.msra.mxu0 0
      %1317 = vmatprep.subr.bf16.mxu0 0
      %1318 = vmatpush1.bf16.xpose.msra.mxu0 0
      %1319 = vmatprep.subr.bf16.mxu0 0
      %1320 = vmatpush1.bf16.xpose.msra.mxu0 0
      %1321 = vmatprep.subr.bf16.mxu0 0
      %1322 = vmatpush1.bf16.xpose.msra.mxu0 0
      %1323 = vmatprep.subr.bf16.mxu0 0
      %1324 = vmatpush1.bf16.xpose.msra.mxu0 0
      %1325 = vmatprep.mubr.bf16.mxu0 0
      %1326 = vmatmul.mubr.bf16.gmra.mrb[0].mxu0 %v1288
      %v1327 = vpop.f32.mrb[0].mxu0
      %v1328 = vadd.f32 0.0, %v1327
      %v1329 = vpop.f32.mrb[0].mxu0
      %v1330 = vpop.f32.mrb[0].mxu0
      %v1331 = vpop.f32.mrb[0].mxu0
      %1332 = vdwg.mxu0
      %v1333 = vmul.f32 %v1328, 0.17677669
      %v1334 = vsel %vm880, %v1333, -inf
      %1335 = vmax.xlane.f32.xlu0 %v1334
      %v1336 = vpop.xlane.xlu0 %1335
      %v1337 = vsub.f32 %v1333, %v1336
      %v1338 = vmul.f32 %v1337, 1.442695
      %v1339 = vpow.pop %v1338
      %v1340 = vsel %vm880, %v1339, 0.0
      %1341 = vadd.xlane.f32.xlu0 %v1340
      %v1342 = vpop.xlane.xlu0 %1341
      %v1343 = vrcp.pop %v1342
      %v1344 = vmul.f32 %v1339, %v1343
      %v1345 = vpack.c.bf16 %v1344, %v1344
      %v1346 = vpack.c.bf16 %v1280, %v1280
      %v1348 = vsel %vm880, %v1345, 0
      %v1351 = vsel %vm897, %v1346, 0
      %1353 = vmatprep.subr.bf16.mxu0 0
      %1354 = vmatpush1.bf16.msra.mxu0 %v1351
      %1355 = vmatprep.subr.bf16.mxu0 0
      %1356 = vmatpush1.bf16.msra.mxu0 0
      %1357 = vmatprep.subr.bf16.mxu0 0
      %1358 = vmatpush1.bf16.msra.mxu0 0
      %1359 = vmatprep.subr.bf16.mxu0 0
      %1360 = vmatpush1.bf16.msra.mxu0 0
      %1361 = vmatprep.subr.bf16.mxu0 0
      %1362 = vmatpush1.bf16.msra.mxu0 0
      %1363 = vmatprep.subr.bf16.mxu0 0
      %1364 = vmatpush1.bf16.msra.mxu0 0
      %1365 = vmatprep.subr.bf16.mxu0 0
      %1366 = vmatpush1.bf16.msra.mxu0 0
      %1367 = vmatprep.subr.bf16.mxu0 0
      %1368 = vmatpush1.bf16.msra.mxu0 0
      %1369 = vmatprep.subr.bf16.mxu0 0
      %1370 = vmatpush1.bf16.msra.mxu0 0
      %1371 = vmatprep.subr.bf16.mxu0 0
      %1372 = vmatpush1.bf16.msra.mxu0 0
      %1373 = vmatprep.subr.bf16.mxu0 0
      %1374 = vmatpush1.bf16.msra.mxu0 0
      %1375 = vmatprep.subr.bf16.mxu0 0
      %1376 = vmatpush1.bf16.msra.mxu0 0
      %1377 = vmatprep.subr.bf16.mxu0 0
      %1378 = vmatpush1.bf16.msra.mxu0 0
      %1379 = vmatprep.subr.bf16.mxu0 0
      %1380 = vmatpush1.bf16.msra.mxu0 0
      %1381 = vmatprep.subr.bf16.mxu0 0
      %1382 = vmatpush1.bf16.msra.mxu0 0
      %1383 = vmatprep.subr.bf16.mxu0 0
      %1384 = vmatpush1.bf16.msra.mxu0 0
      %1385 = vmatprep.mubr.bf16.mxu0 0
      %1386 = vmatmul.mubr.bf16.gmra.mrb[0].mxu0 %v1348
      %v1387 = vpop.f32.mrb[0].mxu0
      %v1388 = vadd.f32 0.0, %v1387
      %v1389 = vpop.f32.mrb[0].mxu0
      %v1390 = vpop.f32.mrb[0].mxu0
      %v1391 = vpop.f32.mrb[0].mxu0
      %1392 = vdwg.mxu0
      %v1393 = vpack.c.bf16 %v1388, %v1388
      %s1394 = scalar_lea.vmem %s3, 16
      %v1395 = vld [vmem:[%s1394] sm:$0xf]
      %v1396 = vld [vmem:[%s1394 + $0x4] sm:$0xf]
      %v1397 = vld [vmem:[%s1394 + $0x8] sm:$0xf]
      %v1398 = vld [vmem:[%s1394 + $0xc] sm:$0xf]
      %v1403 = vunpack.c.l.b16 %v1395
      %v1404 = vunpack.c.l.b16 %v1396
      %v1405 = vunpack.c.l.b16 %v1397
      %v1406 = vunpack.c.l.b16 %v1398
      %v1407 = vpack.c.b16 %v1404, %v1403
      %v1408 = vpack.c.b16 %v1406, %v1405
      %v1412 = vsel %vm832, %v1393, 0
      %1414 = vmatprep.subr.bf16.mxu0 0
      %1415 = vmatpush1.bf16.msra.mxu0 %v1407
      %1416 = vmatprep.subr.bf16.mxu0 0
      %1417 = vmatpush1.bf16.msra.mxu0 %v1408
      %1418 = vmatprep.subr.bf16.mxu0 0
      %1419 = vmatpush1.bf16.msra.mxu0 0
      %1420 = vmatprep.subr.bf16.mxu0 0
      %1421 = vmatpush1.bf16.msra.mxu0 0
      %1422 = vmatprep.subr.bf16.mxu0 0
      %1423 = vmatpush1.bf16.msra.mxu0 0
      %1424 = vmatprep.subr.bf16.mxu0 0
      %1425 = vmatpush1.bf16.msra.mxu0 0
      %1426 = vmatprep.subr.bf16.mxu0 0
      %1427 = vmatpush1.bf16.msra.mxu0 0
      %1428 = vmatprep.subr.bf16.mxu0 0
      %1429 = vmatpush1.bf16.msra.mxu0 0
      %1430 = vmatprep.subr.bf16.mxu0 0
      %1431 = vmatpush1.bf16.msra.mxu0 0
      %1432 = vmatprep.subr.bf16.mxu0 0
      %1433 = vmatpush1.bf16.msra.mxu0 0
      %1434 = vmatprep.subr.bf16.mxu0 0
      %1435 = vmatpush1.bf16.msra.mxu0 0
      %1436 = vmatprep.subr.bf16.mxu0 0
      %1437 = vmatpush1.bf16.msra.mxu0 0
      %1438 = vmatprep.subr.bf16.mxu0 0
      %1439 = vmatpush1.bf16.msra.mxu0 0
      %1440 = vmatprep.subr.bf16.mxu0 0
      %1441 = vmatpush1.bf16.msra.mxu0 0
      %1442 = vmatprep.subr.bf16.mxu0 0
      %1443 = vmatpush1.bf16.msra.mxu0 0
      %1444 = vmatprep.subr.bf16.mxu0 0
      %1445 = vmatpush1.bf16.msra.mxu0 0
      %1446 = vmatprep.mubr.bf16.mxu0 0
      %1447 = vmatmul.mubr.bf16.gmra.mrb[0].mxu0 %v1412
      %v1448 = vpop.f32.mrb[0].mxu0
      %v1449 = vadd.f32 0.0, %v1448
      %v1450 = vpop.f32.mrb[0].mxu0
      %v1451 = vpop.f32.mrb[0].mxu0
      %v1452 = vpop.f32.mrb[0].mxu0
      %1453 = vdwg.mxu0
      %v1458 = vunpack.c.l.b16 %v942
      %v1459 = vunpack.c.l.b16 %v943
      %v1460 = vunpack.c.l.b16 %v944
      %v1461 = vunpack.c.l.b16 %v945
      %v1462 = vpack.c.b16 %v1459, %v1458
      %v1463 = vpack.c.b16 %v1461, %v1460
      %v1467 = vsel %vm832, %v941, 0
      %1469 = vmatprep.subr.bf16.mxu0 0
      %1470 = vmatpush1.bf16.msra.mxu0 %v1462
      %1471 = vmatprep.subr.bf16.mxu0 0
      %1472 = vmatpush1.bf16.msra.mxu0 %v1463
      %1473 = vmatprep.subr.bf16.mxu0 0
      %1474 = vmatpush1.bf16.msra.mxu0 0
      %1475 = vmatprep.subr.bf16.mxu0 0
      %1476 = vmatpush1.bf16.msra.mxu0 0
      %1477 = vmatprep.subr.bf16.mxu0 0
      %1478 = vmatpush1.bf16.msra.mxu0 0
      %1479 = vmatprep.subr.bf16.mxu0 0
      %1480 = vmatpush1.bf16.msra.mxu0 0
      %1481 = vmatprep.subr.bf16.mxu0 0
      %1482 = vmatpush1.bf16.msra.mxu0 0
      %1483 = vmatprep.subr.bf16.mxu0 0
      %1484 = vmatpush1.bf16.msra.mxu0 0
      %1485 = vmatprep.subr.bf16.mxu0 0
      %1486 = vmatpush1.bf16.msra.mxu0 0
      %1487 = vmatprep.subr.bf16.mxu0 0
      %1488 = vmatpush1.bf16.msra.mxu0 0
      %1489 = vmatprep.subr.bf16.mxu0 0
      %1490 = vmatpush1.bf16.msra.mxu0 0
      %1491 = vmatprep.subr.bf16.mxu0 0
      %1492 = vmatpush1.bf16.msra.mxu0 0
      %1493 = vmatprep.subr.bf16.mxu0 0
      %1494 = vmatpush1.bf16.msra.mxu0 0
      %1495 = vmatprep.subr.bf16.mxu0 0
      %1496 = vmatpush1.bf16.msra.mxu0 0
      %1497 = vmatprep.subr.bf16.mxu0 0
      %1498 = vmatpush1.bf16.msra.mxu0 0
      %1499 = vmatprep.subr.bf16.mxu0 0
      %1500 = vmatpush1.bf16.msra.mxu0 0
      %1501 = vmatprep.mubr.bf16.mxu0 0
      %1502 = vmatmul.mubr.bf16.gmra.mrb[0].mxu0 %v1467
      %v1503 = vpop.f32.mrb[0].mxu0
      %v1504 = vadd.f32 %v1449, %v1503
      %v1505 = vpop.f32.mrb[0].mxu0
      %v1506 = vpop.f32.mrb[0].mxu0
      %v1507 = vpop.f32.mrb[0].mxu0
      %1508 = vdwg.mxu0
      %s1509 = scalar_lea.vmem %s1, 128
      %v1510 = vld [vmem:[%s1509] sm:$0xf]
      %v1511 = vld [vmem:[%s1509 + $0x4] sm:$0xf]
      %v1512 = vld [vmem:[%s1509 + $0x8] sm:$0xf]
      %v1513 = vld [vmem:[%s1509 + $0xc] sm:$0xf]
      %v1514 = vld [vmem:[%s1509 + $0x10] sm:$0xf]
      %v1515 = vld [vmem:[%s1509 + $0x14] sm:$0xf]
      %v1516 = vld [vmem:[%s1509 + $0x18] sm:$0xf]
      %v1517 = vld [vmem:[%s1509 + $0x1c] sm:$0xf]
      %v1518 = vld [vmem:[%s1509 + $0x20] sm:$0xf]
      %v1519 = vld [vmem:[%s1509 + $0x24] sm:$0xf]
      %v1520 = vld [vmem:[%s1509 + $0x28] sm:$0xf]
      %v1521 = vld [vmem:[%s1509 + $0x2c] sm:$0xf]
      %v1522 = vld [vmem:[%s1509 + $0x30] sm:$0xf]
      %v1523 = vld [vmem:[%s1509 + $0x34] sm:$0xf]
      %v1524 = vld [vmem:[%s1509 + $0x38] sm:$0xf]
      %v1525 = vld [vmem:[%s1509 + $0x3c] sm:$0xf]
      %s1526 = scalar_lea.vmem %s2, 2
      %v1527 = vld [vmem:[%s1526] sm:$0x1]
      %v1529 = vlaneseq
      %v1530 = vshrl.u32 %v1529, 7
      %v1531 = vsub.s32 0, %v1530
      %v1532 = vrot.slane %v1527, %v1531
      %v1550 = vunpack.c.l.b16 %v1510
      %v1551 = vunpack.c.l.b16 %v1511
      %v1552 = vunpack.c.l.b16 %v1512
      %v1553 = vunpack.c.l.b16 %v1513
      %v1554 = vunpack.c.l.b16 %v1514
      %v1555 = vunpack.c.l.b16 %v1515
      %v1556 = vunpack.c.l.b16 %v1516
      %v1557 = vunpack.c.l.b16 %v1517
      %v1558 = vunpack.c.l.b16 %v1518
      %v1559 = vunpack.c.l.b16 %v1519
      %v1560 = vunpack.c.l.b16 %v1520
      %v1561 = vunpack.c.l.b16 %v1521
      %v1562 = vunpack.c.l.b16 %v1522
      %v1563 = vunpack.c.l.b16 %v1523
      %v1564 = vunpack.c.l.b16 %v1524
      %v1565 = vunpack.c.l.b16 %v1525
      %v1566 = vpack.c.b16 %v1551, %v1550
      %v1567 = vpack.c.b16 %v1553, %v1552
      %v1568 = vpack.c.b16 %v1555, %v1554
      %v1569 = vpack.c.b16 %v1557, %v1556
      %v1570 = vpack.c.b16 %v1559, %v1558
      %v1571 = vpack.c.b16 %v1561, %v1560
      %v1572 = vpack.c.b16 %v1563, %v1562
      %v1573 = vpack.c.b16 %v1565, %v1564
      %1582 = vmatprep.subr.bf16.mxu0 0
      %1583 = vmatpush1.bf16.msra.mxu0 %v1566
      %1584 = vmatprep.subr.bf16.mxu0 0
      %1585 = vmatpush1.bf16.msra.mxu0 %v1567
      %1586 = vmatprep.subr.bf16.mxu0 0
      %1587 = vmatpush1.bf16.msra.mxu0 %v1568
      %1588 = vmatprep.subr.bf16.mxu0 0
      %1589 = vmatpush1.bf16.msra.mxu0 %v1569
      %1590 = vmatprep.subr.bf16.mxu0 0
      %1591 = vmatpush1.bf16.msra.mxu0 %v1570
      %1592 = vmatprep.subr.bf16.mxu0 0
      %1593 = vmatpush1.bf16.msra.mxu0 %v1571
      %1594 = vmatprep.subr.bf16.mxu0 0
      %1595 = vmatpush1.bf16.msra.mxu0 %v1572
      %1596 = vmatprep.subr.bf16.mxu0 0
      %1597 = vmatpush1.bf16.msra.mxu0 %v1573
      %1598 = vmatprep.subr.bf16.mxu0 0
      %1599 = vmatpush1.bf16.msra.mxu0 0
      %1600 = vmatprep.subr.bf16.mxu0 0
      %1601 = vmatpush1.bf16.msra.mxu0 0
      %1602 = vmatprep.subr.bf16.mxu0 0
      %1603 = vmatpush1.bf16.msra.mxu0 0
      %1604 = vmatprep.subr.bf16.mxu0 0
      %1605 = vmatpush1.bf16.msra.mxu0 0
      %1606 = vmatprep.subr.bf16.mxu0 0
      %1607 = vmatpush1.bf16.msra.mxu0 0
      %1608 = vmatprep.subr.bf16.mxu0 0
      %1609 = vmatpush1.bf16.msra.mxu0 0
      %1610 = vmatprep.subr.bf16.mxu0 0
      %1611 = vmatpush1.bf16.msra.mxu0 0
      %1612 = vmatprep.subr.bf16.mxu0 0
      %1613 = vmatpush1.bf16.msra.mxu0 0
      %1614 = vmatprep.mubr.bf16.mxu0 0
      %1615 = vmatmul.mubr.bf16.gmra.mrb[0].mxu0 %v492
      %v1616 = vpop.f32.mrb[0].mxu0
      %v1617 = vadd.f32 %v1532, %v1616
      %v1618 = vpop.f32.mrb[0].mxu0
      %v1619 = vpop.f32.mrb[0].mxu0
      %v1620 = vpop.f32.mrb[0].mxu0
      %1621 = vdwg.mxu0
      %s1622 = scalar_lea.vmem %s1, 384
      %v1623 = vld [vmem:[%s1622] sm:$0xf]
      %v1624 = vld [vmem:[%s1622 + $0x4] sm:$0xf]
      %v1625 = vld [vmem:[%s1622 + $0x8] sm:$0xf]
      %v1626 = vld [vmem:[%s1622 + $0xc] sm:$0xf]
      %v1627 = vld [vmem:[%s1622 + $0x10] sm:$0xf]
      %v1628 = vld [vmem:[%s1622 + $0x14] sm:$0xf]
      %v1629 = vld [vmem:[%s1622 + $0x18] sm:$0xf]
      %v1630 = vld [vmem:[%s1622 + $0x1c] sm:$0xf]
      %v1631 = vld [vmem:[%s1622 + $0x20] sm:$0xf]
      %v1632 = vld [vmem:[%s1622 + $0x24] sm:$0xf]
      %v1633 = vld [vmem:[%s1622 + $0x28] sm:$0xf]
      %v1634 = vld [vmem:[%s1622 + $0x2c] sm:$0xf]
      %v1635 = vld [vmem:[%s1622 + $0x30] sm:$0xf]
      %v1636 = vld [vmem:[%s1622 + $0x34] sm:$0xf]
      %v1637 = vld [vmem:[%s1622 + $0x38] sm:$0xf]
      %v1638 = vld [vmem:[%s1622 + $0x3c] sm:$0xf]
      %s1639 = scalar_lea.vmem %s2, 6
      %v1640 = vld [vmem:[%s1639] sm:$0x1]
      %v1642 = vlaneseq
      %v1643 = vshrl.u32 %v1642, 7
      %v1644 = vsub.s32 0, %v1643
      %v1645 = vrot.slane %v1640, %v1644
      %v1663 = vunpack.c.l.b16 %v1623
      %v1664 = vunpack.c.l.b16 %v1624
      %v1665 = vunpack.c.l.b16 %v1625
      %v1666 = vunpack.c.l.b16 %v1626
      %v1667 = vunpack.c.l.b16 %v1627
      %v1668 = vunpack.c.l.b16 %v1628
      %v1669 = vunpack.c.l.b16 %v1629
      %v1670 = vunpack.c.l.b16 %v1630
      %v1671 = vunpack.c.l.b16 %v1631
      %v1672 = vunpack.c.l.b16 %v1632
      %v1673 = vunpack.c.l.b16 %v1633
      %v1674 = vunpack.c.l.b16 %v1634
      %v1675 = vunpack.c.l.b16 %v1635
      %v1676 = vunpack.c.l.b16 %v1636
      %v1677 = vunpack.c.l.b16 %v1637
      %v1678 = vunpack.c.l.b16 %v1638
      %v1679 = vpack.c.b16 %v1664, %v1663
      %v1680 = vpack.c.b16 %v1666, %v1665
      %v1681 = vpack.c.b16 %v1668, %v1667
      %v1682 = vpack.c.b16 %v1670, %v1669
      %v1683 = vpack.c.b16 %v1672, %v1671
      %v1684 = vpack.c.b16 %v1674, %v1673
      %v1685 = vpack.c.b16 %v1676, %v1675
      %v1686 = vpack.c.b16 %v1678, %v1677
      %1695 = vmatprep.subr.bf16.mxu0 0
      %1696 = vmatpush1.bf16.msra.mxu0 %v1679
      %1697 = vmatprep.subr.bf16.mxu0 0
      %1698 = vmatpush1.bf16.msra.mxu0 %v1680
      %1699 = vmatprep.subr.bf16.mxu0 0
      %1700 = vmatpush1.bf16.msra.mxu0 %v1681
      %1701 = vmatprep.subr.bf16.mxu0 0
      %1702 = vmatpush1.bf16.msra.mxu0 %v1682
      %1703 = vmatprep.subr.bf16.mxu0 0
      %1704 = vmatpush1.bf16.msra.mxu0 %v1683
      %1705 = vmatprep.subr.bf16.mxu0 0
      %1706 = vmatpush1.bf16.msra.mxu0 %v1684
      %1707 = vmatprep.subr.bf16.mxu0 0
      %1708 = vmatpush1.bf16.msra.mxu0 %v1685
      %1709 = vmatprep.subr.bf16.mxu0 0
      %1710 = vmatpush1.bf16.msra.mxu0 %v1686
      %1711 = vmatprep.subr.bf16.mxu0 0
      %1712 = vmatpush1.bf16.msra.mxu0 0
      %1713 = vmatprep.subr.bf16.mxu0 0
      %1714 = vmatpush1.bf16.msra.mxu0 0
      %1715 = vmatprep.subr.bf16.mxu0 0
      %1716 = vmatpush1.bf16.msra.mxu0 0
      %1717 = vmatprep.subr.bf16.mxu0 0
      %1718 = vmatpush1.bf16.msra.mxu0 0
      %1719 = vmatprep.subr.bf16.mxu0 0
      %1720 = vmatpush1.bf16.msra.mxu0 0
      %1721 = vmatprep.subr.bf16.mxu0 0
      %1722 = vmatpush1.bf16.msra.mxu0 0
      %1723 = vmatprep.subr.bf16.mxu0 0
      %1724 = vmatpush1.bf16.msra.mxu0 0
      %1725 = vmatprep.subr.bf16.mxu0 0
      %1726 = vmatpush1.bf16.msra.mxu0 0
      %1727 = vmatprep.mubr.bf16.mxu0 0
      %1728 = vmatmul.mubr.bf16.gmra.mrb[0].mxu0 %v492
      %v1729 = vpop.f32.mrb[0].mxu0
      %v1730 = vadd.f32 %v1645, %v1729
      %v1731 = vpop.f32.mrb[0].mxu0
      %v1732 = vpop.f32.mrb[0].mxu0
      %v1733 = vpop.f32.mrb[0].mxu0
      %1734 = vdwg.mxu0
      %s1735 = scalar_lea.vmem %s1, 640
      %v1736 = vld [vmem:[%s1735] sm:$0xf]
      %v1737 = vld [vmem:[%s1735 + $0x4] sm:$0xf]
      %v1738 = vld [vmem:[%s1735 + $0x8] sm:$0xf]
      %v1739 = vld [vmem:[%s1735 + $0xc] sm:$0xf]
      %v1740 = vld [vmem:[%s1735 + $0x10] sm:$0xf]
      %v1741 = vld [vmem:[%s1735 + $0x14] sm:$0xf]
      %v1742 = vld [vmem:[%s1735 + $0x18] sm:$0xf]
      %v1743 = vld [vmem:[%s1735 + $0x1c] sm:$0xf]
      %v1744 = vld [vmem:[%s1735 + $0x20] sm:$0xf]
      %v1745 = vld [vmem:[%s1735 + $0x24] sm:$0xf]
      %v1746 = vld [vmem:[%s1735 + $0x28] sm:$0xf]
      %v1747 = vld [vmem:[%s1735 + $0x2c] sm:$0xf]
      %v1748 = vld [vmem:[%s1735 + $0x30] sm:$0xf]
      %v1749 = vld [vmem:[%s1735 + $0x34] sm:$0xf]
      %v1750 = vld [vmem:[%s1735 + $0x38] sm:$0xf]
      %v1751 = vld [vmem:[%s1735 + $0x3c] sm:$0xf]
      %s1752 = scalar_lea.vmem %s2, 10
      %v1753 = vld [vmem:[%s1752] sm:$0x1]
      %v1755 = vlaneseq
      %v1756 = vshrl.u32 %v1755, 7
      %v1757 = vsub.s32 0, %v1756
      %v1758 = vrot.slane %v1753, %v1757
      %v1776 = vunpack.c.l.b16 %v1736
      %v1777 = vunpack.c.l.b16 %v1737
      %v1778 = vunpack.c.l.b16 %v1738
      %v1779 = vunpack.c.l.b16 %v1739
      %v1780 = vunpack.c.l.b16 %v1740
      %v1781 = vunpack.c.l.b16 %v1741
      %v1782 = vunpack.c.l.b16 %v1742
      %v1783 = vunpack.c.l.b16 %v1743
      %v1784 = vunpack.c.l.b16 %v1744
      %v1785 = vunpack.c.l.b16 %v1745
      %v1786 = vunpack.c.l.b16 %v1746
      %v1787 = vunpack.c.l.b16 %v1747
      %v1788 = vunpack.c.l.b16 %v1748
      %v1789 = vunpack.c.l.b16 %v1749
      %v1790 = vunpack.c.l.b16 %v1750
      %v1791 = vunpack.c.l.b16 %v1751
      %v1792 = vpack.c.b16 %v1777, %v1776
      %v1793 = vpack.c.b16 %v1779, %v1778
      %v1794 = vpack.c.b16 %v1781, %v1780
      %v1795 = vpack.c.b16 %v1783, %v1782
      %v1796 = vpack.c.b16 %v1785, %v1784
      %v1797 = vpack.c.b16 %v1787, %v1786
      %v1798 = vpack.c.b16 %v1789, %v1788
      %v1799 = vpack.c.b16 %v1791, %v1790
      %1808 = vmatprep.subr.bf16.mxu0 0
      %1809 = vmatpush1.bf16.msra.mxu0 %v1792
      %1810 = vmatprep.subr.bf16.mxu0 0
      %1811 = vmatpush1.bf16.msra.mxu0 %v1793
      %1812 = vmatprep.subr.bf16.mxu0 0
      %1813 = vmatpush1.bf16.msra.mxu0 %v1794
      %1814 = vmatprep.subr.bf16.mxu0 0
      %1815 = vmatpush1.bf16.msra.mxu0 %v1795
      %1816 = vmatprep.subr.bf16.mxu0 0
      %1817 = vmatpush1.bf16.msra.mxu0 %v1796
      %1818 = vmatprep.subr.bf16.mxu0 0
      %1819 = vmatpush1.bf16.msra.mxu0 %v1797
      %1820 = vmatprep.subr.bf16.mxu0 0
      %1821 = vmatpush1.bf16.msra.mxu0 %v1798
      %1822 = vmatprep.subr.bf16.mxu0 0
      %1823 = vmatpush1.bf16.msra.mxu0 %v1799
      %1824 = vmatprep.subr.bf16.mxu0 0
      %1825 = vmatpush1.bf16.msra.mxu0 0
      %1826 = vmatprep.subr.bf16.mxu0 0
      %1827 = vmatpush1.bf16.msra.mxu0 0
      %1828 = vmatprep.subr.bf16.mxu0 0
      %1829 = vmatpush1.bf16.msra.mxu0 0
      %1830 = vmatprep.subr.bf16.mxu0 0
      %1831 = vmatpush1.bf16.msra.mxu0 0
      %1832 = vmatprep.subr.bf16.mxu0 0
      %1833 = vmatpush1.bf16.msra.mxu0 0
      %1834 = vmatprep.subr.bf16.mxu0 0
      %1835 = vmatpush1.bf16.msra.mxu0 0
      %1836 = vmatprep.subr.bf16.mxu0 0
      %1837 = vmatpush1.bf16.msra.mxu0 0
      %1838 = vmatprep.subr.bf16.mxu0 0
      %1839 = vmatpush1.bf16.msra.mxu0 0
      %1840 = vmatprep.mubr.bf16.mxu0 0
      %1841 = vmatmul.mubr.bf16.gmra.mrb[0].mxu0 %v492
      %v1842 = vpop.f32.mrb[0].mxu0
      %v1843 = vadd.f32 %v1758, %v1842
      %v1844 = vpop.f32.mrb[0].mxu0
      %v1845 = vpop.f32.mrb[0].mxu0
      %v1846 = vpop.f32.mrb[0].mxu0
      %1847 = vdwg.mxu0
      %v1848 = vpack.c.bf16 %v1617, %v1617
      %v1849 = vpack.c.bf16 %v1730, %v1730
      %v1851 = vsel %vm832, %v1848, 0
      %v1854 = vsel %vm832, %v1849, 0
      %1856 = vmatprep.subr.bf16.mxu0 0
      %1857 = vmatpush1.bf16.xpose.msra.mxu0 %v1854
      %1858 = vmatprep.subr.bf16.mxu0 0
      %1859 = vmatpush1.bf16.xpose.msra.mxu0 0
      %1860 = vmatprep.subr.bf16.mxu0 0
      %1861 = vmatpush1.bf16.xpose.msra.mxu0 0
      %1862 = vmatprep.subr.bf16.mxu0 0
      %1863 = vmatpush1.bf16.xpose.msra.mxu0 0
      %1864 = vmatprep.subr.bf16.mxu0 0
      %1865 = vmatpush1.bf16.xpose.msra.mxu0 0
      %1866 = vmatprep.subr.bf16.mxu0 0
      %1867 = vmatpush1.bf16.xpose.msra.mxu0 0
      %1868 = vmatprep.subr.bf16.mxu0 0
      %1869 = vmatpush1.bf16.xpose.msra.mxu0 0
      %1870 = vmatprep.subr.bf16.mxu0 0
      %1871 = vmatpush1.bf16.xpose.msra.mxu0 0
      %1872 = vmatprep.subr.bf16.mxu0 0
      %1873 = vmatpush1.bf16.xpose.msra.mxu0 0
      %1874 = vmatprep.subr.bf16.mxu0 0
      %1875 = vmatpush1.bf16.xpose.msra.mxu0 0
      %1876 = vmatprep.subr.bf16.mxu0 0
      %1877 = vmatpush1.bf16.xpose.msra.mxu0 0
      %1878 = vmatprep.subr.bf16.mxu0 0
      %1879 = vmatpush1.bf16.xpose.msra.mxu0 0
      %1880 = vmatprep.subr.bf16.mxu0 0
      %1881 = vmatpush1.bf16.xpose.msra.mxu0 0
      %1882 = vmatprep.subr.bf16.mxu0 0
      %1883 = vmatpush1.bf16.xpose.msra.mxu0 0
      %1884 = vmatprep.subr.bf16.mxu0 0
      %1885 = vmatpush1.bf16.xpose.msra.mxu0 0
      %1886 = vmatprep.subr.bf16.mxu0 0
      %1887 = vmatpush1.bf16.xpose.msra.mxu0 0
      %1888 = vmatprep.mubr.bf16.mxu0 0
      %1889 = vmatmul.mubr.bf16.gmra.mrb[0].mxu0 %v1851
      %v1890 = vpop.f32.mrb[0].mxu0
      %v1891 = vadd.f32 0.0, %v1890
      %v1892 = vpop.f32.mrb[0].mxu0
      %v1893 = vpop.f32.mrb[0].mxu0
      %v1894 = vpop.f32.mrb[0].mxu0
      %1895 = vdwg.mxu0
      %v1896 = vmul.f32 %v1891, 0.17677669
      %v1897 = vsel %vm880, %v1896, -inf
      %1898 = vmax.xlane.f32.xlu0 %v1897
      %v1899 = vpop.xlane.xlu0 %1898
      %v1900 = vsub.f32 %v1896, %v1899
      %v1901 = vmul.f32 %v1900, 1.442695
      %v1902 = vpow.pop %v1901
      %v1903 = vsel %vm880, %v1902, 0.0
      %1904 = vadd.xlane.f32.xlu0 %v1903
      %v1905 = vpop.xlane.xlu0 %1904
      %v1906 = vrcp.pop %v1905
      %v1907 = vmul.f32 %v1902, %v1906
      %v1908 = vpack.c.bf16 %v1907, %v1907
      %v1909 = vpack.c.bf16 %v1843, %v1843
      %v1911 = vsel %vm880, %v1908, 0
      %v1914 = vsel %vm897, %v1909, 0
      %1916 = vmatprep.subr.bf16.mxu0 0
      %1917 = vmatpush1.bf16.msra.mxu0 %v1914
      %1918 = vmatprep.subr.bf16.mxu0 0
      %1919 = vmatpush1.bf16.msra.mxu0 0
      %1920 = vmatprep.subr.bf16.mxu0 0
      %1921 = vmatpush1.bf16.msra.mxu0 0
      %1922 = vmatprep.subr.bf16.mxu0 0
      %1923 = vmatpush1.bf16.msra.mxu0 0
      %1924 = vmatprep.subr.bf16.mxu0 0
      %1925 = vmatpush1.bf16.msra.mxu0 0
      %1926 = vmatprep.subr.bf16.mxu0 0
      %1927 = vmatpush1.bf16.msra.mxu0 0
      %1928 = vmatprep.subr.bf16.mxu0 0
      %1929 = vmatpush1.bf16.msra.mxu0 0
      %1930 = vmatprep.subr.bf16.mxu0 0
      %1931 = vmatpush1.bf16.msra.mxu0 0
      %1932 = vmatprep.subr.bf16.mxu0 0
      %1933 = vmatpush1.bf16.msra.mxu0 0
      %1934 = vmatprep.subr.bf16.mxu0 0
      %1935 = vmatpush1.bf16.msra.mxu0 0
      %1936 = vmatprep.subr.bf16.mxu0 0
      %1937 = vmatpush1.bf16.msra.mxu0 0
      %1938 = vmatprep.subr.bf16.mxu0 0
      %1939 = vmatpush1.bf16.msra.mxu0 0
      %1940 = vmatprep.subr.bf16.mxu0 0
      %1941 = vmatpush1.bf16.msra.mxu0 0
      %1942 = vmatprep.subr.bf16.mxu0 0
      %1943 = vmatpush1.bf16.msra.mxu0 0
      %1944 = vmatprep.subr.bf16.mxu0 0
      %1945 = vmatpush1.bf16.msra.mxu0 0
      %1946 = vmatprep.subr.bf16.mxu0 0
      %1947 = vmatpush1.bf16.msra.mxu0 0
      %1948 = vmatprep.mubr.bf16.mxu0 0
      %1949 = vmatmul.mubr.bf16.gmra.mrb[0].mxu0 %v1911
      %v1950 = vpop.f32.mrb[0].mxu0
      %v1951 = vadd.f32 0.0, %v1950
      %v1952 = vpop.f32.mrb[0].mxu0
      %v1953 = vpop.f32.mrb[0].mxu0
      %v1954 = vpop.f32.mrb[0].mxu0
      %1955 = vdwg.mxu0
      %v1956 = vpack.c.bf16 %v1951, %v1951
      %s1957 = scalar_lea.vmem %s3, 32
      %v1958 = vld [vmem:[%s1957] sm:$0xf]
      %v1959 = vld [vmem:[%s1957 + $0x4] sm:$0xf]
      %v1960 = vld [vmem:[%s1957 + $0x8] sm:$0xf]
      %v1961 = vld [vmem:[%s1957 + $0xc] sm:$0xf]
      %v1966 = vunpack.c.l.b16 %v1958
      %v1967 = vunpack.c.l.b16 %v1959
      %v1968 = vunpack.c.l.b16 %v1960
      %v1969 = vunpack.c.l.b16 %v1961
      %v1970 = vpack.c.b16 %v1967, %v1966
      %v1971 = vpack.c.b16 %v1969, %v1968
      %v1975 = vsel %vm832, %v1956, 0
      %1977 = vmatprep.subr.bf16.mxu0 0
      %1978 = vmatpush1.bf16.msra.mxu0 %v1970
      %1979 = vmatprep.subr.bf16.mxu0 0
      %1980 = vmatpush1.bf16.msra.mxu0 %v1971
      %1981 = vmatprep.subr.bf16.mxu0 0
      %1982 = vmatpush1.bf16.msra.mxu0 0
      %1983 = vmatprep.subr.bf16.mxu0 0
      %1984 = vmatpush1.bf16.msra.mxu0 0
      %1985 = vmatprep.subr.bf16.mxu0 0
      %1986 = vmatpush1.bf16.msra.mxu0 0
      %1987 = vmatprep.subr.bf16.mxu0 0
      %1988 = vmatpush1.bf16.msra.mxu0 0
      %1989 = vmatprep.subr.bf16.mxu0 0
      %1990 = vmatpush1.bf16.msra.mxu0 0
      %1991 = vmatprep.subr.bf16.mxu0 0
      %1992 = vmatpush1.bf16.msra.mxu0 0
      %1993 = vmatprep.subr.bf16.mxu0 0
      %1994 = vmatpush1.bf16.msra.mxu0 0
      %1995 = vmatprep.subr.bf16.mxu0 0
      %1996 = vmatpush1.bf16.msra.mxu0 0
      %1997 = vmatprep.subr.bf16.mxu0 0
      %1998 = vmatpush1.bf16.msra.mxu0 0
      %1999 = vmatprep.subr.bf16.mxu0 0
      %2000 = vmatpush1.bf16.msra.mxu0 0
      %2001 = vmatprep.subr.bf16.mxu0 0
      %2002 = vmatpush1.bf16.msra.mxu0 0
      %2003 = vmatprep.subr.bf16.mxu0 0
      %2004 = vmatpush1.bf16.msra.mxu0 0
      %2005 = vmatprep.subr.bf16.mxu0 0
      %2006 = vmatpush1.bf16.msra.mxu0 0
      %2007 = vmatprep.subr.bf16.mxu0 0
      %2008 = vmatpush1.bf16.msra.mxu0 0
      %2009 = vmatprep.mubr.bf16.mxu0 0
      %2010 = vmatmul.mubr.bf16.gmra.mrb[0].mxu0 %v1975
      %v2011 = vpop.f32.mrb[0].mxu0
      %v2012 = vadd.f32 0.0, %v2011
      %v2013 = vpop.f32.mrb[0].mxu0
      %v2014 = vpop.f32.mrb[0].mxu0
      %v2015 = vpop.f32.mrb[0].mxu0
      %2016 = vdwg.mxu0
      %v2017 = vadd.f32 %v1504, %v2012
      %s2018 = scalar_lea.vmem %s1, 192
      %v2019 = vld [vmem:[%s2018] sm:$0xf]
      %v2020 = vld [vmem:[%s2018 + $0x4] sm:$0xf]
      %v2021 = vld [vmem:[%s2018 + $0x8] sm:$0xf]
      %v2022 = vld [vmem:[%s2018 + $0xc] sm:$0xf]
      %v2023 = vld [vmem:[%s2018 + $0x10] sm:$0xf]
      %v2024 = vld [vmem:[%s2018 + $0x14] sm:$0xf]
      %v2025 = vld [vmem:[%s2018 + $0x18] sm:$0xf]
      %v2026 = vld [vmem:[%s2018 + $0x1c] sm:$0xf]
      %v2027 = vld [vmem:[%s2018 + $0x20] sm:$0xf]
      %v2028 = vld [vmem:[%s2018 + $0x24] sm:$0xf]
      %v2029 = vld [vmem:[%s2018 + $0x28] sm:$0xf]
      %v2030 = vld [vmem:[%s2018 + $0x2c] sm:$0xf]
      %v2031 = vld [vmem:[%s2018 + $0x30] sm:$0xf]
      %v2032 = vld [vmem:[%s2018 + $0x34] sm:$0xf]
      %v2033 = vld [vmem:[%s2018 + $0x38] sm:$0xf]
      %v2034 = vld [vmem:[%s2018 + $0x3c] sm:$0xf]
      %s2035 = scalar_lea.vmem %s2, 3
      %v2036 = vld [vmem:[%s2035] sm:$0x1]
      %v2038 = vlaneseq
      %v2039 = vshrl.u32 %v2038, 7
      %v2040 = vsub.s32 0, %v2039
      %v2041 = vrot.slane %v2036, %v2040
      %v2059 = vunpack.c.l.b16 %v2019
      %v2060 = vunpack.c.l.b16 %v2020
      %v2061 = vunpack.c.l.b16 %v2021
      %v2062 = vunpack.c.l.b16 %v2022
      %v2063 = vunpack.c.l.b16 %v2023
      %v2064 = vunpack.c.l.b16 %v2024
      %v2065 = vunpack.c.l.b16 %v2025
      %v2066 = vunpack.c.l.b16 %v2026
      %v2067 = vunpack.c.l.b16 %v2027
      %v2068 = vunpack.c.l.b16 %v2028
      %v2069 = vunpack.c.l.b16 %v2029
      %v2070 = vunpack.c.l.b16 %v2030
      %v2071 = vunpack.c.l.b16 %v2031
      %v2072 = vunpack.c.l.b16 %v2032
      %v2073 = vunpack.c.l.b16 %v2033
      %v2074 = vunpack.c.l.b16 %v2034
      %v2075 = vpack.c.b16 %v2060, %v2059
      %v2076 = vpack.c.b16 %v2062, %v2061
      %v2077 = vpack.c.b16 %v2064, %v2063
      %v2078 = vpack.c.b16 %v2066, %v2065
      %v2079 = vpack.c.b16 %v2068, %v2067
      %v2080 = vpack.c.b16 %v2070, %v2069
      %v2081 = vpack.c.b16 %v2072, %v2071
      %v2082 = vpack.c.b16 %v2074, %v2073
      %2091 = vmatprep.subr.bf16.mxu0 0
      %2092 = vmatpush1.bf16.msra.mxu0 %v2075
      %2093 = vmatprep.subr.bf16.mxu0 0
      %2094 = vmatpush1.bf16.msra.mxu0 %v2076
      %2095 = vmatprep.subr.bf16.mxu0 0
      %2096 = vmatpush1.bf16.msra.mxu0 %v2077
      %2097 = vmatprep.subr.bf16.mxu0 0
      %2098 = vmatpush1.bf16.msra.mxu0 %v2078
      %2099 = vmatprep.subr.bf16.mxu0 0
      %2100 = vmatpush1.bf16.msra.mxu0 %v2079
      %2101 = vmatprep.subr.bf16.mxu0 0
      %2102 = vmatpush1.bf16.msra.mxu0 %v2080
      %2103 = vmatprep.subr.bf16.mxu0 0
      %2104 = vmatpush1.bf16.msra.mxu0 %v2081
      %2105 = vmatprep.subr.bf16.mxu0 0
      %2106 = vmatpush1.bf16.msra.mxu0 %v2082
      %2107 = vmatprep.subr.bf16.mxu0 0
      %2108 = vmatpush1.bf16.msra.mxu0 0
      %2109 = vmatprep.subr.bf16.mxu0 0
      %2110 = vmatpush1.bf16.msra.mxu0 0
      %2111 = vmatprep.subr.bf16.mxu0 0
      %2112 = vmatpush1.bf16.msra.mxu0 0
      %2113 = vmatprep.subr.bf16.mxu0 0
      %2114 = vmatpush1.bf16.msra.mxu0 0
      %2115 = vmatprep.subr.bf16.mxu0 0
      %2116 = vmatpush1.bf16.msra.mxu0 0
      %2117 = vmatprep.subr.bf16.mxu0 0
      %2118 = vmatpush1.bf16.msra.mxu0 0
      %2119 = vmatprep.subr.bf16.mxu0 0
      %2120 = vmatpush1.bf16.msra.mxu0 0
      %2121 = vmatprep.subr.bf16.mxu0 0
      %2122 = vmatpush1.bf16.msra.mxu0 0
      %2123 = vmatprep.mubr.bf16.mxu0 0
      %2124 = vmatmul.mubr.bf16.gmra.mrb[0].mxu0 %v492
      %v2125 = vpop.f32.mrb[0].mxu0
      %v2126 = vadd.f32 %v2041, %v2125
      %v2127 = vpop.f32.mrb[0].mxu0
      %v2128 = vpop.f32.mrb[0].mxu0
      %v2129 = vpop.f32.mrb[0].mxu0
      %2130 = vdwg.mxu0
      %s2131 = scalar_lea.vmem %s1, 448
      %v2132 = vld [vmem:[%s2131] sm:$0xf]
      %v2133 = vld [vmem:[%s2131 + $0x4] sm:$0xf]
      %v2134 = vld [vmem:[%s2131 + $0x8] sm:$0xf]
      %v2135 = vld [vmem:[%s2131 + $0xc] sm:$0xf]
      %v2136 = vld [vmem:[%s2131 + $0x10] sm:$0xf]
      %v2137 = vld [vmem:[%s2131 + $0x14] sm:$0xf]
      %v2138 = vld [vmem:[%s2131 + $0x18] sm:$0xf]
      %v2139 = vld [vmem:[%s2131 + $0x1c] sm:$0xf]
      %v2140 = vld [vmem:[%s2131 + $0x20] sm:$0xf]
      %v2141 = vld [vmem:[%s2131 + $0x24] sm:$0xf]
      %v2142 = vld [vmem:[%s2131 + $0x28] sm:$0xf]
      %v2143 = vld [vmem:[%s2131 + $0x2c] sm:$0xf]
      %v2144 = vld [vmem:[%s2131 + $0x30] sm:$0xf]
      %v2145 = vld [vmem:[%s2131 + $0x34] sm:$0xf]
      %v2146 = vld [vmem:[%s2131 + $0x38] sm:$0xf]
      %v2147 = vld [vmem:[%s2131 + $0x3c] sm:$0xf]
      %s2148 = scalar_lea.vmem %s2, 7
      %v2149 = vld [vmem:[%s2148] sm:$0x1]
      %v2151 = vlaneseq
      %v2152 = vshrl.u32 %v2151, 7
      %v2153 = vsub.s32 0, %v2152
      %v2154 = vrot.slane %v2149, %v2153
      %v2172 = vunpack.c.l.b16 %v2132
      %v2173 = vunpack.c.l.b16 %v2133
      %v2174 = vunpack.c.l.b16 %v2134
      %v2175 = vunpack.c.l.b16 %v2135
      %v2176 = vunpack.c.l.b16 %v2136
      %v2177 = vunpack.c.l.b16 %v2137
      %v2178 = vunpack.c.l.b16 %v2138
      %v2179 = vunpack.c.l.b16 %v2139
      %v2180 = vunpack.c.l.b16 %v2140
      %v2181 = vunpack.c.l.b16 %v2141
      %v2182 = vunpack.c.l.b16 %v2142
      %v2183 = vunpack.c.l.b16 %v2143
      %v2184 = vunpack.c.l.b16 %v2144
      %v2185 = vunpack.c.l.b16 %v2145
      %v2186 = vunpack.c.l.b16 %v2146
      %v2187 = vunpack.c.l.b16 %v2147
      %v2188 = vpack.c.b16 %v2173, %v2172
      %v2189 = vpack.c.b16 %v2175, %v2174
      %v2190 = vpack.c.b16 %v2177, %v2176
      %v2191 = vpack.c.b16 %v2179, %v2178
      %v2192 = vpack.c.b16 %v2181, %v2180
      %v2193 = vpack.c.b16 %v2183, %v2182
      %v2194 = vpack.c.b16 %v2185, %v2184
      %v2195 = vpack.c.b16 %v2187, %v2186
      %2204 = vmatprep.subr.bf16.mxu0 0
      %2205 = vmatpush1.bf16.msra.mxu0 %v2188
      %2206 = vmatprep.subr.bf16.mxu0 0
      %2207 = vmatpush1.bf16.msra.mxu0 %v2189
      %2208 = vmatprep.subr.bf16.mxu0 0
      %2209 = vmatpush1.bf16.msra.mxu0 %v2190
      %2210 = vmatprep.subr.bf16.mxu0 0
      %2211 = vmatpush1.bf16.msra.mxu0 %v2191
      %2212 = vmatprep.subr.bf16.mxu0 0
      %2213 = vmatpush1.bf16.msra.mxu0 %v2192
      %2214 = vmatprep.subr.bf16.mxu0 0
      %2215 = vmatpush1.bf16.msra.mxu0 %v2193
      %2216 = vmatprep.subr.bf16.mxu0 0
      %2217 = vmatpush1.bf16.msra.mxu0 %v2194
      %2218 = vmatprep.subr.bf16.mxu0 0
      %2219 = vmatpush1.bf16.msra.mxu0 %v2195
      %2220 = vmatprep.subr.bf16.mxu0 0
      %2221 = vmatpush1.bf16.msra.mxu0 0
      %2222 = vmatprep.subr.bf16.mxu0 0
      %2223 = vmatpush1.bf16.msra.mxu0 0
      %2224 = vmatprep.subr.bf16.mxu0 0
      %2225 = vmatpush1.bf16.msra.mxu0 0
      %2226 = vmatprep.subr.bf16.mxu0 0
      %2227 = vmatpush1.bf16.msra.mxu0 0
      %2228 = vmatprep.subr.bf16.mxu0 0
      %2229 = vmatpush1.bf16.msra.mxu0 0
      %2230 = vmatprep.subr.bf16.mxu0 0
      %2231 = vmatpush1.bf16.msra.mxu0 0
      %2232 = vmatprep.subr.bf16.mxu0 0
      %2233 = vmatpush1.bf16.msra.mxu0 0
      %2234 = vmatprep.subr.bf16.mxu0 0
      %2235 = vmatpush1.bf16.msra.mxu0 0
      %2236 = vmatprep.mubr.bf16.mxu0 0
      %2237 = vmatmul.mubr.bf16.gmra.mrb[0].mxu0 %v492
      %v2238 = vpop.f32.mrb[0].mxu0
      %v2239 = vadd.f32 %v2154, %v2238
      %v2240 = vpop.f32.mrb[0].mxu0
      %v2241 = vpop.f32.mrb[0].mxu0
      %v2242 = vpop.f32.mrb[0].mxu0
      %2243 = vdwg.mxu0
      %s2244 = scalar_lea.vmem %s1, 704
      %v2245 = vld [vmem:[%s2244] sm:$0xf]
      %v2246 = vld [vmem:[%s2244 + $0x4] sm:$0xf]
      %v2247 = vld [vmem:[%s2244 + $0x8] sm:$0xf]
      %v2248 = vld [vmem:[%s2244 + $0xc] sm:$0xf]
      %v2249 = vld [vmem:[%s2244 + $0x10] sm:$0xf]
      %v2250 = vld [vmem:[%s2244 + $0x14] sm:$0xf]
      %v2251 = vld [vmem:[%s2244 + $0x18] sm:$0xf]
      %v2252 = vld [vmem:[%s2244 + $0x1c] sm:$0xf]
      %v2253 = vld [vmem:[%s2244 + $0x20] sm:$0xf]
      %v2254 = vld [vmem:[%s2244 + $0x24] sm:$0xf]
      %v2255 = vld [vmem:[%s2244 + $0x28] sm:$0xf]
      %v2256 = vld [vmem:[%s2244 + $0x2c] sm:$0xf]
      %v2257 = vld [vmem:[%s2244 + $0x30] sm:$0xf]
      %v2258 = vld [vmem:[%s2244 + $0x34] sm:$0xf]
      %v2259 = vld [vmem:[%s2244 + $0x38] sm:$0xf]
      %v2260 = vld [vmem:[%s2244 + $0x3c] sm:$0xf]
      %s2261 = scalar_lea.vmem %s2, 11
      %v2262 = vld [vmem:[%s2261] sm:$0x1]
      %v2264 = vlaneseq
      %v2265 = vshrl.u32 %v2264, 7
      %v2266 = vsub.s32 0, %v2265
      %v2267 = vrot.slane %v2262, %v2266
      %v2285 = vunpack.c.l.b16 %v2245
      %v2286 = vunpack.c.l.b16 %v2246
      %v2287 = vunpack.c.l.b16 %v2247
      %v2288 = vunpack.c.l.b16 %v2248
      %v2289 = vunpack.c.l.b16 %v2249
      %v2290 = vunpack.c.l.b16 %v2250
      %v2291 = vunpack.c.l.b16 %v2251
      %v2292 = vunpack.c.l.b16 %v2252
      %v2293 = vunpack.c.l.b16 %v2253
      %v2294 = vunpack.c.l.b16 %v2254
      %v2295 = vunpack.c.l.b16 %v2255
      %v2296 = vunpack.c.l.b16 %v2256
      %v2297 = vunpack.c.l.b16 %v2257
      %v2298 = vunpack.c.l.b16 %v2258
      %v2299 = vunpack.c.l.b16 %v2259
      %v2300 = vunpack.c.l.b16 %v2260
      %v2301 = vpack.c.b16 %v2286, %v2285
      %v2302 = vpack.c.b16 %v2288, %v2287
      %v2303 = vpack.c.b16 %v2290, %v2289
      %v2304 = vpack.c.b16 %v2292, %v2291
      %v2305 = vpack.c.b16 %v2294, %v2293
      %v2306 = vpack.c.b16 %v2296, %v2295
      %v2307 = vpack.c.b16 %v2298, %v2297
      %v2308 = vpack.c.b16 %v2300, %v2299
      %2317 = vmatprep.subr.bf16.mxu0 0
      %2318 = vmatpush1.bf16.msra.mxu0 %v2301
      %2319 = vmatprep.subr.bf16.mxu0 0
      %2320 = vmatpush1.bf16.msra.mxu0 %v2302
      %2321 = vmatprep.subr.bf16.mxu0 0
      %2322 = vmatpush1.bf16.msra.mxu0 %v2303
      %2323 = vmatprep.subr.bf16.mxu0 0
      %2324 = vmatpush1.bf16.msra.mxu0 %v2304
      %2325 = vmatprep.subr.bf16.mxu0 0
      %2326 = vmatpush1.bf16.msra.mxu0 %v2305
      %2327 = vmatprep.subr.bf16.mxu0 0
      %2328 = vmatpush1.bf16.msra.mxu0 %v2306
      %2329 = vmatprep.subr.bf16.mxu0 0
      %2330 = vmatpush1.bf16.msra.mxu0 %v2307
      %2331 = vmatprep.subr.bf16.mxu0 0
      %2332 = vmatpush1.bf16.msra.mxu0 %v2308
      %2333 = vmatprep.subr.bf16.mxu0 0
      %2334 = vmatpush1.bf16.msra.mxu0 0
      %2335 = vmatprep.subr.bf16.mxu0 0
      %2336 = vmatpush1.bf16.msra.mxu0 0
      %2337 = vmatprep.subr.bf16.mxu0 0
      %2338 = vmatpush1.bf16.msra.mxu0 0
      %2339 = vmatprep.subr.bf16.mxu0 0
      %2340 = vmatpush1.bf16.msra.mxu0 0
      %2341 = vmatprep.subr.bf16.mxu0 0
      %2342 = vmatpush1.bf16.msra.mxu0 0
      %2343 = vmatprep.subr.bf16.mxu0 0
      %2344 = vmatpush1.bf16.msra.mxu0 0
      %2345 = vmatprep.subr.bf16.mxu0 0
      %2346 = vmatpush1.bf16.msra.mxu0 0
      %2347 = vmatprep.subr.bf16.mxu0 0
      %2348 = vmatpush1.bf16.msra.mxu0 0
      %2349 = vmatprep.mubr.bf16.mxu0 0
      %2350 = vmatmul.mubr.bf16.gmra.mrb[0].mxu0 %v492
      %v2351 = vpop.f32.mrb[0].mxu0
      %v2352 = vadd.f32 %v2267, %v2351
      %v2353 = vpop.f32.mrb[0].mxu0
      %v2354 = vpop.f32.mrb[0].mxu0
      %v2355 = vpop.f32.mrb[0].mxu0
      %2356 = vdwg.mxu0
      %v2357 = vpack.c.bf16 %v2126, %v2126
      %v2358 = vpack.c.bf16 %v2239, %v2239
      %v2360 = vsel %vm832, %v2357, 0
      %v2363 = vsel %vm832, %v2358, 0
      %2365 = vmatprep.subr.bf16.mxu0 0
      %2366 = vmatpush1.bf16.xpose.msra.mxu0 %v2363
      %2367 = vmatprep.subr.bf16.mxu0 0
      %2368 = vmatpush1.bf16.xpose.msra.mxu0 0
      %2369 = vmatprep.subr.bf16.mxu0 0
      %2370 = vmatpush1.bf16.xpose.msra.mxu0 0
      %2371 = vmatprep.subr.bf16.mxu0 0
      %2372 = vmatpush1.bf16.xpose.msra.mxu0 0
      %2373 = vmatprep.subr.bf16.mxu0 0
      %2374 = vmatpush1.bf16.xpose.msra.mxu0 0
      %2375 = vmatprep.subr.bf16.mxu0 0
      %2376 = vmatpush1.bf16.xpose.msra.mxu0 0
      %2377 = vmatprep.subr.bf16.mxu0 0
      %2378 = vmatpush1.bf16.xpose.msra.mxu0 0
      %2379 = vmatprep.subr.bf16.mxu0 0
      %2380 = vmatpush1.bf16.xpose.msra.mxu0 0
      %2381 = vmatprep.subr.bf16.mxu0 0
      %2382 = vmatpush1.bf16.xpose.msra.mxu0 0
      %2383 = vmatprep.subr.bf16.mxu0 0
      %2384 = vmatpush1.bf16.xpose.msra.mxu0 0
      %2385 = vmatprep.subr.bf16.mxu0 0
      %2386 = vmatpush1.bf16.xpose.msra.mxu0 0
      %2387 = vmatprep.subr.bf16.mxu0 0
      %2388 = vmatpush1.bf16.xpose.msra.mxu0 0
      %2389 = vmatprep.subr.bf16.mxu0 0
      %2390 = vmatpush1.bf16.xpose.msra.mxu0 0
      %2391 = vmatprep.subr.bf16.mxu0 0
      %2392 = vmatpush1.bf16.xpose.msra.mxu0 0
      %2393 = vmatprep.subr.bf16.mxu0 0
      %2394 = vmatpush1.bf16.xpose.msra.mxu0 0
      %2395 = vmatprep.subr.bf16.mxu0 0
      %2396 = vmatpush1.bf16.xpose.msra.mxu0 0
      %2397 = vmatprep.mubr.bf16.mxu0 0
      %2398 = vmatmul.mubr.bf16.gmra.mrb[0].mxu0 %v2360
      %v2399 = vpop.f32.mrb[0].mxu0
      %v2400 = vadd.f32 0.0, %v2399
      %v2401 = vpop.f32.mrb[0].mxu0
      %v2402 = vpop.f32.mrb[0].mxu0
      %v2403 = vpop.f32.mrb[0].mxu0
      %2404 = vdwg.mxu0
      %v2405 = vmul.f32 %v2400, 0.17677669
      %v2406 = vsel %vm880, %v2405, -inf
      %2407 = vmax.xlane.f32.xlu0 %v2406
      %v2408 = vpop.xlane.xlu0 %2407
      %v2409 = vsub.f32 %v2405, %v2408
      %v2410 = vmul.f32 %v2409, 1.442695
      %v2411 = vpow.pop %v2410
      %v2412 = vsel %vm880, %v2411, 0.0
      %2413 = vadd.xlane.f32.xlu0 %v2412
      %v2414 = vpop.xlane.xlu0 %2413
      %v2415 = vrcp.pop %v2414
      %v2416 = vmul.f32 %v2411, %v2415
      %v2417 = vpack.c.bf16 %v2416, %v2416
      %v2418 = vpack.c.bf16 %v2352, %v2352
      %v2420 = vsel %vm880, %v2417, 0
      %v2423 = vsel %vm897, %v2418, 0
      %2425 = vmatprep.subr.bf16.mxu0 0
      %2426 = vmatpush1.bf16.msra.mxu0 %v2423
      %2427 = vmatprep.subr.bf16.mxu0 0
      %2428 = vmatpush1.bf16.msra.mxu0 0
      %2429 = vmatprep.subr.bf16.mxu0 0
      %2430 = vmatpush1.bf16.msra.mxu0 0
      %2431 = vmatprep.subr.bf16.mxu0 0
      %2432 = vmatpush1.bf16.msra.mxu0 0
      %2433 = vmatprep.subr.bf16.mxu0 0
      %2434 = vmatpush1.bf16.msra.mxu0 0
      %2435 = vmatprep.subr.bf16.mxu0 0
      %2436 = vmatpush1.bf16.msra.mxu0 0
      %2437 = vmatprep.subr.bf16.mxu0 0
      %2438 = vmatpush1.bf16.msra.mxu0 0
      %2439 = vmatprep.subr.bf16.mxu0 0
      %2440 = vmatpush1.bf16.msra.mxu0 0
      %2441 = vmatprep.subr.bf16.mxu0 0
      %2442 = vmatpush1.bf16.msra.mxu0 0
      %2443 = vmatprep.subr.bf16.mxu0 0
      %2444 = vmatpush1.bf16.msra.mxu0 0
      %2445 = vmatprep.subr.bf16.mxu0 0
      %2446 = vmatpush1.bf16.msra.mxu0 0
      %2447 = vmatprep.subr.bf16.mxu0 0
      %2448 = vmatpush1.bf16.msra.mxu0 0
      %2449 = vmatprep.subr.bf16.mxu0 0
      %2450 = vmatpush1.bf16.msra.mxu0 0
      %2451 = vmatprep.subr.bf16.mxu0 0
      %2452 = vmatpush1.bf16.msra.mxu0 0
      %2453 = vmatprep.subr.bf16.mxu0 0
      %2454 = vmatpush1.bf16.msra.mxu0 0
      %2455 = vmatprep.subr.bf16.mxu0 0
      %2456 = vmatpush1.bf16.msra.mxu0 0
      %2457 = vmatprep.mubr.bf16.mxu0 0
      %2458 = vmatmul.mubr.bf16.gmra.mrb[0].mxu0 %v2420
      %v2459 = vpop.f32.mrb[0].mxu0
      %v2460 = vadd.f32 0.0, %v2459
      %v2461 = vpop.f32.mrb[0].mxu0
      %v2462 = vpop.f32.mrb[0].mxu0
      %v2463 = vpop.f32.mrb[0].mxu0
      %2464 = vdwg.mxu0
      %v2465 = vpack.c.bf16 %v2460, %v2460
      %s2466 = scalar_lea.vmem %s3, 48
      %v2467 = vld [vmem:[%s2466] sm:$0xf]
      %v2468 = vld [vmem:[%s2466 + $0x4] sm:$0xf]
      %v2469 = vld [vmem:[%s2466 + $0x8] sm:$0xf]
      %v2470 = vld [vmem:[%s2466 + $0xc] sm:$0xf]
      %v2475 = vunpack.c.l.b16 %v2467
      %v2476 = vunpack.c.l.b16 %v2468
      %v2477 = vunpack.c.l.b16 %v2469
      %v2478 = vunpack.c.l.b16 %v2470
      %v2479 = vpack.c.b16 %v2476, %v2475
      %v2480 = vpack.c.b16 %v2478, %v2477
      %v2484 = vsel %vm832, %v2465, 0
      %2486 = vmatprep.subr.bf16.mxu0 0
      %2487 = vmatpush1.bf16.msra.mxu0 %v2479
      %2488 = vmatprep.subr.bf16.mxu0 0
      %2489 = vmatpush1.bf16.msra.mxu0 %v2480
      %2490 = vmatprep.subr.bf16.mxu0 0
      %2491 = vmatpush1.bf16.msra.mxu0 0
      %2492 = vmatprep.subr.bf16.mxu0 0
      %2493 = vmatpush1.bf16.msra.mxu0 0
      %2494 = vmatprep.subr.bf16.mxu0 0
      %2495 = vmatpush1.bf16.msra.mxu0 0
      %2496 = vmatprep.subr.bf16.mxu0 0
      %2497 = vmatpush1.bf16.msra.mxu0 0
      %2498 = vmatprep.subr.bf16.mxu0 0
      %2499 = vmatpush1.bf16.msra.mxu0 0
      %2500 = vmatprep.subr.bf16.mxu0 0
      %2501 = vmatpush1.bf16.msra.mxu0 0
      %2502 = vmatprep.subr.bf16.mxu0 0
      %2503 = vmatpush1.bf16.msra.mxu0 0
      %2504 = vmatprep.subr.bf16.mxu0 0
      %2505 = vmatpush1.bf16.msra.mxu0 0
      %2506 = vmatprep.subr.bf16.mxu0 0
      %2507 = vmatpush1.bf16.msra.mxu0 0
      %2508 = vmatprep.subr.bf16.mxu0 0
      %2509 = vmatpush1.bf16.msra.mxu0 0
      %2510 = vmatprep.subr.bf16.mxu0 0
      %2511 = vmatpush1.bf16.msra.mxu0 0
      %2512 = vmatprep.subr.bf16.mxu0 0
      %2513 = vmatpush1.bf16.msra.mxu0 0
      %2514 = vmatprep.subr.bf16.mxu0 0
      %2515 = vmatpush1.bf16.msra.mxu0 0
      %2516 = vmatprep.subr.bf16.mxu0 0
      %2517 = vmatpush1.bf16.msra.mxu0 0
      %2518 = vmatprep.mubr.bf16.mxu0 0
      %2519 = vmatmul.mubr.bf16.gmra.mrb[0].mxu0 %v2484
      %v2520 = vpop.f32.mrb[0].mxu0
      %v2521 = vadd.f32 0.0, %v2520
      %v2522 = vpop.f32.mrb[0].mxu0
      %v2523 = vpop.f32.mrb[0].mxu0
      %v2524 = vpop.f32.mrb[0].mxu0
      %2525 = vdwg.mxu0
      %v2526 = vadd.f32 %v2017, %v2521
      %v2527 = vld [vmem:[%s4] sm:$0x1]
      %v2529 = vlaneseq
      %v2530 = vshrl.u32 %v2529, 7
      %v2531 = vsub.s32 0, %v2530
      %v2532 = vrot.slane %v2527, %v2531
      %v2534 = vadd.f32 %v2526, %v2532
      %v2535 = vadd.f32 %v491, %v2534
      %v2536 = vld [vmem:[%s5] sm:$0x1]
      %v2537 = vld [vmem:[%s6] sm:$0x1]
      %2538 = vadd.xlane.f32.xlu0 %v2535
      %v2539 = vpop.xlane.xlu0 %2538
      %v2540 = vrcp.pop 128.0
      %v2541 = vmul.f32 %v2539, %v2540
      %v2542 = vsub.f32 %v2535, %v2541
      %v2543 = vmul.f32 %v2542, %v2542
      %2544 = vadd.xlane.f32.xlu0 %v2543
      %v2545 = vpop.xlane.xlu0 %2544
      %v2546 = vmul.f32 %v2545, %v2540
      %v2547 = vadd.f32 %v2546, 1e-05
      %v2548 = vrsqrt.pop %v2547
      %v2549 = vmul.f32 %v2542, %v2548
      %v2551 = vlaneseq
      %v2552 = vshrl.u32 %v2551, 7
      %v2553 = vsub.s32 0, %v2552
      %v2554 = vrot.slane %v2536, %v2553
      %v2556 = vmul.f32 %v2549, %v2554
      %v2558 = vlaneseq
      %v2559 = vshrl.u32 %v2558, 7
      %v2560 = vsub.s32 0, %v2559
      %v2561 = vrot.slane %v2537, %v2560
      %v2563 = vadd.f32 %v2556, %v2561
      %v2564 = vpack.c.bf16 %v2563, %v2563
      %v2565 = vld [vmem:[%s7] sm:$0xff]
      %v2566 = vld [vmem:[%s7 + $0x8] sm:$0xff]
      %v2567 = vld [vmem:[%s7 + $0x10] sm:$0xff]
      %v2568 = vld [vmem:[%s7 + $0x18] sm:$0xff]
      %v2569 = vld [vmem:[%s7 + $0x20] sm:$0xff]
      %v2570 = vld [vmem:[%s7 + $0x28] sm:$0xff]
      %v2571 = vld [vmem:[%s7 + $0x30] sm:$0xff]
      %v2572 = vld [vmem:[%s7 + $0x38] sm:$0xff]
      %v2573 = vld [vmem:[%s7 + $0x40] sm:$0xff]
      %v2574 = vld [vmem:[%s7 + $0x48] sm:$0xff]
      %v2575 = vld [vmem:[%s7 + $0x50] sm:$0xff]
      %v2576 = vld [vmem:[%s7 + $0x58] sm:$0xff]
      %v2577 = vld [vmem:[%s7 + $0x60] sm:$0xff]
      %v2578 = vld [vmem:[%s7 + $0x68] sm:$0xff]
      %v2579 = vld [vmem:[%s7 + $0x70] sm:$0xff]
      %v2580 = vld [vmem:[%s7 + $0x78] sm:$0xff]
      %v2581 = vld [vmem:[%s8] sm:$0x3]
      %v2583 = vlaneseq
      %v2584 = vshrl.u32 %v2583, 7
      %v2585 = vsub.s32 0, %v2584
      %v2586 = vrot.slane %v2581, %v2585
      %v2587 = vlaneseq
      %v2588 = vshrl.u32 %v2587, 7
      %v2589 = vsub.s32 1, %v2588
      %v2590 = vrot.slane %v2581, %v2589
      %v2609 = vunpack.c.l.b16 %v2565
      %v2610 = vunpack.c.h.b16 %v2565
      %v2611 = vunpack.c.l.b16 %v2566
      %v2612 = vunpack.c.h.b16 %v2566
      %v2613 = vunpack.c.l.b16 %v2567
      %v2614 = vunpack.c.h.b16 %v2567
      %v2615 = vunpack.c.l.b16 %v2568
      %v2616 = vunpack.c.h.b16 %v2568
      %v2617 = vunpack.c.l.b16 %v2569
      %v2618 = vunpack.c.h.b16 %v2569
      %v2619 = vunpack.c.l.b16 %v2570
      %v2620 = vunpack.c.h.b16 %v2570
      %v2621 = vunpack.c.l.b16 %v2571
      %v2622 = vunpack.c.h.b16 %v2571
      %v2623 = vunpack.c.l.b16 %v2572
      %v2624 = vunpack.c.h.b16 %v2572
      %v2625 = vunpack.c.l.b16 %v2573
      %v2626 = vunpack.c.h.b16 %v2573
      %v2627 = vunpack.c.l.b16 %v2574
      %v2628 = vunpack.c.h.b16 %v2574
      %v2629 = vunpack.c.l.b16 %v2575
      %v2630 = vunpack.c.h.b16 %v2575
      %v2631 = vunpack.c.l.b16 %v2576
      %v2632 = vunpack.c.h.b16 %v2576
      %v2633 = vunpack.c.l.b16 %v2577
      %v2634 = vunpack.c.h.b16 %v2577
      %v2635 = vunpack.c.l.b16 %v2578
      %v2636 = vunpack.c.h.b16 %v2578
      %v2637 = vunpack.c.l.b16 %v2579
      %v2638 = vunpack.c.h.b16 %v2579
      %v2639 = vunpack.c.l.b16 %v2580
      %v2640 = vunpack.c.h.b16 %v2580
      %v2641 = vpack.c.b16 %v2611, %v2609
      %v2642 = vpack.c.b16 %v2612, %v2610
      %v2643 = vpack.c.b16 %v2615, %v2613
      %v2644 = vpack.c.b16 %v2616, %v2614
      %v2645 = vpack.c.b16 %v2619, %v2617
      %v2646 = vpack.c.b16 %v2620, %v2618
      %v2647 = vpack.c.b16 %v2623, %v2621
      %v2648 = vpack.c.b16 %v2624, %v2622
      %v2649 = vpack.c.b16 %v2627, %v2625
      %v2650 = vpack.c.b16 %v2628, %v2626
      %v2651 = vpack.c.b16 %v2631, %v2629
      %v2652 = vpack.c.b16 %v2632, %v2630
      %v2653 = vpack.c.b16 %v2635, %v2633
      %v2654 = vpack.c.b16 %v2636, %v2634
      %v2655 = vpack.c.b16 %v2639, %v2637
      %v2656 = vpack.c.b16 %v2640, %v2638
      %2673 = vmatprep.subr.bf16.mxu0 %v2642
      %2674 = vmatpush1.bf16.msra.mxu0 %v2641
      %2675 = vmatprep.subr.bf16.mxu0 %v2644
      %2676 = vmatpush1.bf16.msra.mxu0 %v2643
      %2677 = vmatprep.subr.bf16.mxu0 %v2646
      %2678 = vmatpush1.bf16.msra.mxu0 %v2645
      %2679 = vmatprep.subr.bf16.mxu0 %v2648
      %2680 = vmatpush1.bf16.msra.mxu0 %v2647
      %2681 = vmatprep.subr.bf16.mxu0 %v2650
      %2682 = vmatpush1.bf16.msra.mxu0 %v2649
      %2683 = vmatprep.subr.bf16.mxu0 %v2652
      %2684 = vmatpush1.bf16.msra.mxu0 %v2651
      %2685 = vmatprep.subr.bf16.mxu0 %v2654
      %2686 = vmatpush1.bf16.msra.mxu0 %v2653
      %2687 = vmatprep.subr.bf16.mxu0 %v2656
      %2688 = vmatpush1.bf16.msra.mxu0 %v2655
      %2689 = vmatprep.subr.bf16.mxu0 0
      %2690 = vmatpush1.bf16.msra.mxu0 0
      %2691 = vmatprep.subr.bf16.mxu0 0
      %2692 = vmatpush1.bf16.msra.mxu0 0
      %2693 = vmatprep.subr.bf16.mxu0 0
      %2694 = vmatpush1.bf16.msra.mxu0 0
      %2695 = vmatprep.subr.bf16.mxu0 0
      %2696 = vmatpush1.bf16.msra.mxu0 0
      %2697 = vmatprep.subr.bf16.mxu0 0
      %2698 = vmatpush1.bf16.msra.mxu0 0
      %2699 = vmatprep.subr.bf16.mxu0 0
      %2700 = vmatpush1.bf16.msra.mxu0 0
      %2701 = vmatprep.subr.bf16.mxu0 0
      %2702 = vmatpush1.bf16.msra.mxu0 0
      %2703 = vmatprep.subr.bf16.mxu0 0
      %2704 = vmatpush1.bf16.msra.mxu0 0
      %2705 = vmatprep.mubr.bf16.mxu0 0
      %2706 = vmatmul.mubr.bf16.gmra.mrb[0].mxu0 %v2564
      %v2707 = vpop.f32.mrb[0].mxu0
      %v2708 = vadd.f32 %v2586, %v2707
      %v2709 = vpop.f32.mrb[0].mxu0
      %v2710 = vadd.f32 %v2590, %v2709
      %v2711 = vpop.f32.mrb[0].mxu0
      %v2712 = vpop.f32.mrb[0].mxu0
      %2713 = vdwg.mxu0
      %v2714 = vmax.f32 %v2708, 0.0
      %v2715 = vmax.f32 %v2710, 0.0
      %v2716 = vpack.c.bf16 %v2714, %v2714
      %v2717 = vpack.c.bf16 %v2715, %v2715
      %v2718 = vld [vmem:[%s9] sm:$0xf]
      %v2719 = vld [vmem:[%s9 + $0x4] sm:$0xf]
      %v2720 = vld [vmem:[%s9 + $0x8] sm:$0xf]
      %v2721 = vld [vmem:[%s9 + $0xc] sm:$0xf]
      %v2722 = vld [vmem:[%s9 + $0x10] sm:$0xf]
      %v2723 = vld [vmem:[%s9 + $0x14] sm:$0xf]
      %v2724 = vld [vmem:[%s9 + $0x18] sm:$0xf]
      %v2725 = vld [vmem:[%s9 + $0x1c] sm:$0xf]
      %v2726 = vld [vmem:[%s9 + $0x20] sm:$0xf]
      %v2727 = vld [vmem:[%s9 + $0x24] sm:$0xf]
      %v2728 = vld [vmem:[%s9 + $0x28] sm:$0xf]
      %v2729 = vld [vmem:[%s9 + $0x2c] sm:$0xf]
      %v2730 = vld [vmem:[%s9 + $0x30] sm:$0xf]
      %v2731 = vld [vmem:[%s9 + $0x34] sm:$0xf]
      %v2732 = vld [vmem:[%s9 + $0x38] sm:$0xf]
      %v2733 = vld [vmem:[%s9 + $0x3c] sm:$0xf]
      %v2734 = vld [vmem:[%s9 + $0x40] sm:$0xf]
      %v2735 = vld [vmem:[%s9 + $0x44] sm:$0xf]
      %v2736 = vld [vmem:[%s9 + $0x48] sm:$0xf]
      %v2737 = vld [vmem:[%s9 + $0x4c] sm:$0xf]
      %v2738 = vld [vmem:[%s9 + $0x50] sm:$0xf]
      %v2739 = vld [vmem:[%s9 + $0x54] sm:$0xf]
      %v2740 = vld [vmem:[%s9 + $0x58] sm:$0xf]
      %v2741 = vld [vmem:[%s9 + $0x5c] sm:$0xf]
      %v2742 = vld [vmem:[%s9 + $0x60] sm:$0xf]
      %v2743 = vld [vmem:[%s9 + $0x64] sm:$0xf]
      %v2744 = vld [vmem:[%s9 + $0x68] sm:$0xf]
      %v2745 = vld [vmem:[%s9 + $0x6c] sm:$0xf]
      %v2746 = vld [vmem:[%s9 + $0x70] sm:$0xf]
      %v2747 = vld [vmem:[%s9 + $0x74] sm:$0xf]
      %v2748 = vld [vmem:[%s9 + $0x78] sm:$0xf]
      %v2749 = vld [vmem:[%s9 + $0x7c] sm:$0xf]
      %v2750 = vld [vmem:[%s10] sm:$0x1]
      %v2752 = vlaneseq
      %v2753 = vshrl.u32 %v2752, 7
      %v2754 = vsub.s32 0, %v2753
      %v2755 = vrot.slane %v2750, %v2754
      %v2789 = vunpack.c.l.b16 %v2718
      %v2790 = vunpack.c.l.b16 %v2719
      %v2791 = vunpack.c.l.b16 %v2720
      %v2792 = vunpack.c.l.b16 %v2721
      %v2793 = vunpack.c.l.b16 %v2722
      %v2794 = vunpack.c.l.b16 %v2723
      %v2795 = vunpack.c.l.b16 %v2724
      %v2796 = vunpack.c.l.b16 %v2725
      %v2797 = vunpack.c.l.b16 %v2726
      %v2798 = vunpack.c.l.b16 %v2727
      %v2799 = vunpack.c.l.b16 %v2728
      %v2800 = vunpack.c.l.b16 %v2729
      %v2801 = vunpack.c.l.b16 %v2730
      %v2802 = vunpack.c.l.b16 %v2731
      %v2803 = vunpack.c.l.b16 %v2732
      %v2804 = vunpack.c.l.b16 %v2733
      %v2805 = vunpack.c.l.b16 %v2734
      %v2806 = vunpack.c.l.b16 %v2735
      %v2807 = vunpack.c.l.b16 %v2736
      %v2808 = vunpack.c.l.b16 %v2737
      %v2809 = vunpack.c.l.b16 %v2738
      %v2810 = vunpack.c.l.b16 %v2739
      %v2811 = vunpack.c.l.b16 %v2740
      %v2812 = vunpack.c.l.b16 %v2741
      %v2813 = vunpack.c.l.b16 %v2742
      %v2814 = vunpack.c.l.b16 %v2743
      %v2815 = vunpack.c.l.b16 %v2744
      %v2816 = vunpack.c.l.b16 %v2745
      %v2817 = vunpack.c.l.b16 %v2746
      %v2818 = vunpack.c.l.b16 %v2747
      %v2819 = vunpack.c.l.b16 %v2748
      %v2820 = vunpack.c.l.b16 %v2749
      %v2821 = vpack.c.b16 %v2790, %v2789
      %v2822 = vpack.c.b16 %v2792, %v2791
      %v2823 = vpack.c.b16 %v2794, %v2793
      %v2824 = vpack.c.b16 %v2796, %v2795
      %v2825 = vpack.c.b16 %v2798, %v2797
      %v2826 = vpack.c.b16 %v2800, %v2799
      %v2827 = vpack.c.b16 %v2802, %v2801
      %v2828 = vpack.c.b16 %v2804, %v2803
      %v2829 = vpack.c.b16 %v2806, %v2805
      %v2830 = vpack.c.b16 %v2808, %v2807
      %v2831 = vpack.c.b16 %v2810, %v2809
      %v2832 = vpack.c.b16 %v2812, %v2811
      %v2833 = vpack.c.b16 %v2814, %v2813
      %v2834 = vpack.c.b16 %v2816, %v2815
      %v2835 = vpack.c.b16 %v2818, %v2817
      %v2836 = vpack.c.b16 %v2820, %v2819
      %2853 = vmatprep.subr.bf16.mxu0 0
      %2854 = vmatpush1.bf16.msra.mxu0 %v2821
      %2855 = vmatprep.subr.bf16.mxu0 0
      %2856 = vmatpush1.bf16.msra.mxu0 %v2822
      %2857 = vmatprep.subr.bf16.mxu0 0
      %2858 = vmatpush1.bf16.msra.mxu0 %v2823
      %2859 = vmatprep.subr.bf16.mxu0 0
      %2860 = vmatpush1.bf16.msra.mxu0 %v2824
      %2861 = vmatprep.subr.bf16.mxu0 0
      %2862 = vmatpush1.bf16.msra.mxu0 %v2825
      %2863 = vmatprep.subr.bf16.mxu0 0
      %2864 = vmatpush1.bf16.msra.mxu0 %v2826
      %2865 = vmatprep.subr.bf16.mxu0 0
      %2866 = vmatpush1.bf16.msra.mxu0 %v2827
      %2867 = vmatprep.subr.bf16.mxu0 0
      %2868 = vmatpush1.bf16.msra.mxu0 %v2828
      %2869 = vmatprep.subr.bf16.mxu0 0
      %2870 = vmatpush1.bf16.msra.mxu0 %v2829
      %2871 = vmatprep.subr.bf16.mxu0 0
      %2872 = vmatpush1.bf16.msra.mxu0 %v2830
      %2873 = vmatprep.subr.bf16.mxu0 0
      %2874 = vmatpush1.bf16.msra.mxu0 %v2831
      %2875 = vmatprep.subr.bf16.mxu0 0
      %2876 = vmatpush1.bf16.msra.mxu0 %v2832
      %2877 = vmatprep.subr.bf16.mxu0 0
      %2878 = vmatpush1.bf16.msra.mxu0 %v2833
      %2879 = vmatprep.subr.bf16.mxu0 0
      %2880 = vmatpush1.bf16.msra.mxu0 %v2834
      %2881 = vmatprep.subr.bf16.mxu0 0
      %2882 = vmatpush1.bf16.msra.mxu0 %v2835
      %2883 = vmatprep.subr.bf16.mxu0 0
      %2884 = vmatpush1.bf16.msra.mxu0 %v2836
      %2885 = vmatprep.mubr.bf16.mxu0 %v2717
      %2886 = vmatmul.mubr.bf16.gmra.mrb[0].mxu0 %v2716
      %v2887 = vpop.f32.mrb[0].mxu0
      %v2888 = vadd.f32 %v2755, %v2887
      %v2889 = vpop.f32.mrb[0].mxu0
      %v2890 = vpop.f32.mrb[0].mxu0
      %v2891 = vpop.f32.mrb[0].mxu0
      %2892 = vdwg.mxu0
      %v2893 = vadd.f32 %v2563, %v2888
      %v2894 = vld [vmem:[%s11] sm:$0x1]
      %v2895 = vld [vmem:[%s12] sm:$0x1]
      %2896 = vadd.xlane.f32.xlu0 %v2893
      %v2897 = vpop.xlane.xlu0 %2896
      %v2898 = vmul.f32 %v2897, %v2540
      %v2899 = vsub.f32 %v2893, %v2898
      %v2900 = vmul.f32 %v2899, %v2899
      %2901 = vadd.xlane.f32.xlu0 %v2900
      %v2902 = vpop.xlane.xlu0 %2901
      %v2903 = vmul.f32 %v2902, %v2540
      %v2904 = vadd.f32 %v2903, 1e-05
      %v2905 = vrsqrt.pop %v2904
      %v2906 = vmul.f32 %v2899, %v2905
      %v2908 = vlaneseq
      %v2909 = vshrl.u32 %v2908, 7
      %v2910 = vsub.s32 0, %v2909
      %v2911 = vrot.slane %v2894, %v2910
      %v2913 = vmul.f32 %v2906, %v2911
      %v2915 = vlaneseq
      %v2916 = vshrl.u32 %v2915, 7
      %v2917 = vsub.s32 0, %v2916
      %v2918 = vrot.slane %v2895, %v2917
      %v2920 = vadd.f32 %v2913, %v2918
      %v2921 = vld [vmem:[%s13] sm:$0x1]
      %v2922 = vld [vmem:[%s14] sm:$0x1]
      %2923 = vadd.xlane.f32.xlu0 %v2920
      %v2924 = vpop.xlane.xlu0 %2923
      %v2925 = vmul.f32 %v2924, %v2540
      %v2926 = vsub.f32 %v2920, %v2925
      %v2927 = vmul.f32 %v2926, %v2926
      %2928 = vadd.xlane.f32.xlu0 %v2927
      %v2929 = vpop.xlane.xlu0 %2928
      %v2930 = vmul.f32 %v2929, %v2540
      %v2931 = vadd.f32 %v2930, 1e-05
      %v2932 = vrsqrt.pop %v2931
      %v2933 = vmul.f32 %v2926, %v2932
      %v2935 = vlaneseq
      %v2936 = vshrl.u32 %v2935, 7
      %v2937 = vsub.s32 0, %v2936
      %v2938 = vrot.slane %v2921, %v2937
      %v2940 = vmul.f32 %v2933, %v2938
      %v2942 = vlaneseq
      %v2943 = vshrl.u32 %v2942, 7
      %v2944 = vsub.s32 0, %v2943
      %v2945 = vrot.slane %v2922, %v2944
      %v2947 = vadd.f32 %v2940, %v2945
      %2948 = vst [vmem:[%s489] sm:$0xff] %v2947
      %p2949 = scmp.lt.s32.totalorder %s26, 1
      %s2950 = scalar_select %p2949, %s26, 1
      %s2951 = smul.addr %s2950, 8
      %s2952 = scalar_lea.vmem %s15, %s2951
      // Predicated region
      $region81: #{transformer_question_encoder_forward.5} parent=79 // pred_check
        %p2953 = pneg %p364
      $region82: #{transformer_question_encoder_forward.5} parent=79 // pred_check_branch
        %2955 = sbr.rel (%p2953) target = $region84
      $region83: #{transformer_question_encoder_forward.5} parent=79 // pred_region
        _
      $region84: #{transformer_question_encoder_forward.5} parent=79 // pred_fallthru
        _
    $region80: #{transformer_question_encoder_forward.5} parent=5 // pred_fallthru
      _
    %p2956 = scmp.le.s32.totalorder 2, %s21
    // Predicated region
    $region85: #{transformer_question_encoder_forward.5} parent=5 // pred_check
      %p2957 = pneg %p2956
    $region86: #{transformer_question_encoder_forward.5} parent=5 // pred_check_branch
      %2959 = sbr.rel (%p2957) target = $region88
    $region87: #{transformer_question_encoder_forward.5} parent=5 // pred_region
      %s2960 = ssub.s32 %s21, 2
      // Predicated region
      $region89: #{transformer_question_encoder_forward.5} parent=87 // pred_check
        %p2961 = pneg %p370
      $region90: #{transformer_question_encoder_forward.5} parent=87 // pred_check_branch
        %2963 = sbr.rel (%p2961) target = $region92
      $region91: #{transformer_question_encoder_forward.5} parent=87 // pred_region
        %p2964 = scmp.lt.s32.totalorder %s27, 1
        %s2965 = scalar_select %p2964, %s27, 1
        %s2966 = smul.addr %s2965, 8
        %s2967 = scalar_lea.vmem %s15, %s2966
      $region92: #{transformer_question_encoder_forward.5} parent=87 // pred_fallthru
        _
    $region88: #{transformer_question_encoder_forward.5} parent=5 // pred_fallthru
      _
  $region6: #{transformer_question_encoder_forward.5} parent=0 // loop_footer
    %s25 = sadd.s32 1, %s21
  $region7: #{transformer_question_encoder_forward.5} parent=0 // loop_footer_branch
    %20 = sbr.rel target = $region3
  $region8: #{transformer_question_encoder_forward.5} parent=0 // loop_exit
    _

</llo_original>
